<compile_context>
chip_gen: v7x
topology: tpu7x:2x2x1
jax: 0.10.0
libtpu: 0.0.40
codegen_flags: <defaults>
</compile_context>

<pallas_src>
import functools

import jax
import jax.numpy as jnp
from jax import lax
from jax.experimental import pallas as pl
from jax.experimental.pallas import tpu as pltpu


# ------------------------------------------------------------------
# Kernel 1: row-tiled pairwise negative squared distance (eta/phi channels)
#   pd[b, i, j] = -||e_i - e_j||^2
# ------------------------------------------------------------------
def _pdist_kernel(ei_ref, ej_ref, out_ref):
    ei = ei_ref[0]                       # (TILE_R, 2)  rows (i axis)
    ej = ej_ref[0]                       # (2, N)       cols (j axis)
    eta_i = ei[:, 0:1]                   # (TILE_R, 1)
    phi_i = ei[:, 1:2]
    eta_j = ej[0:1, :]                   # (1, N)
    phi_j = ej[1:2, :]
    de = eta_i - eta_j                   # VPU broadcast, no MXU use
    dp = phi_i - phi_j
    out_ref[0] = -(de * de + dp * dp)    # (TILE_R, N)


def pairwise_neg_dist(etaphi, etaphi_t, tile_r):
    B, _, N = etaphi.shape
    return pl.pallas_call(
        _pdist_kernel,
        out_shape=jax.ShapeDtypeStruct((B, N, N), jnp.float32),
        grid=(B, N // tile_r),
        in_specs=[
            pl.BlockSpec((1, tile_r, 2), lambda b, r: (b, r, 0)),
            pl.BlockSpec((1, 2, N), lambda b, r: (b, 0, 0)),
        ],
        out_specs=pl.BlockSpec((1, tile_r, N), lambda b, r: (b, r, 0)),
        compiler_params=pltpu.CompilerParams(
            dimension_semantics=("parallel", "parallel")),
    )(etaphi_t, etaphi)


# ------------------------------------------------------------------
# knn / graph feature construction (glue in plain JAX)
# ------------------------------------------------------------------
def knn_idx(x, k, tile_r):
    etaphi = x[:, :2, :]                                   # (B, 2, N)
    etaphi_t = jnp.transpose(etaphi, (0, 2, 1))            # (B, N, 2)
    # NOTE: the pt/ptcom/ptmin block in the torch knn() is dead code (its
    # result is unused and it only shape-checks when N == 200); omitted.
    pd = pairwise_neg_dist(etaphi, etaphi_t, tile_r)       # Pallas kernel
    # TODO(synk): top-k index selection has no clean Pallas TPU equivalent;
    # done in plain JAX.
    _, idx = lax.top_k(pd, k)                              # (B, N, k)
    return idx


def get_graph_feature_split(x, k, tile_r):
    """Returns centre feats xi (B, N, D) and neighbour feats xj (B, K, N, D),
    both channels-last / k-major, cast to bf16 (MXU input dtype)."""
    B, D, N = x.shape
    idx = knn_idx(x, k, tile_r)                            # (B, N, k)
    x_t = jnp.transpose(x, (0, 2, 1))                      # (B, N, D)
    idx_t = jnp.transpose(idx, (0, 2, 1))                  # (B, k, N)
    # TODO(synk): data-dependent neighbour gather stays in plain JAX (XLA
    # gather); no (B, D, N, N) broadcast intermediate is materialized.
    xj = jax.vmap(lambda pts, ids: pts[ids])(x_t, idx_t)   # (B, k, N, D)
    return x_t.astype(jnp.bfloat16), xj.astype(jnp.bfloat16)


# ------------------------------------------------------------------
# Kernel 2: conv1..conv5 (+folded BN), edge max over k, global max over N
#   grid = (B, N // TILE_N); output block (1, 1, 1024) is the per-batch
#   running max accumulator across the N-tile (reduction) axis.
# ------------------------------------------------------------------
def _conv_stack_kernel(xi_ref, xj_ref,
                       w1a, w1b, b1, w2, b2, w3, b3, w4, b4, w5, b5,
                       out_ref):
    j = pl.program_id(1)

    @pl.when(j == 0)
    def _():
        out_ref[...] = jnp.full(out_ref.shape, -jnp.inf, out_ref.dtype)

    K = xj_ref.shape[1]
    T = xj_ref.shape[2]
    D = xj_ref.shape[3]

    def mm(h, w):                        # bf16 MXU inputs, f32 accumulation
        return jnp.dot(h.astype(jnp.bfloat16), w[...],
                       preferred_element_type=jnp.float32)

    xi = xi_ref[0]                       # (T, D) bf16, centre points
    xj = xj_ref[0].reshape(K * T, D)     # (K*T, D) bf16, k-major rows

    # conv1 (+bn1 +relu): w1 split over the [xi | xj] halves so the centre
    # projection is computed once per point, not K times per edge.
    ci = mm(xi, w1a)                                             # (T, C)
    cj = mm(xj, w1b)                                             # (K*T, C)
    ci_rep = jnp.broadcast_to(ci[None], (K, T, ci.shape[-1])
                              ).reshape(K * T, ci.shape[-1])
    h = jnp.maximum(cj + ci_rep + b1[...], 0.0)
    h = jnp.maximum(mm(h, w2) + b2[...], 0.0)                    # conv2+bn2
    h = jnp.maximum(mm(h, w3) + b3[...], 0.0)                    # conv3+bn3

    # edge max over k: k-major row blocks of T aligned rows (no relayout)
    m = h[0:T]
    for kk in range(1, K):
        m = jnp.maximum(m, h[kk * T:(kk + 1) * T])               # (T, C)

    h = jnp.maximum(mm(m, w4) + b4[...], 0.0)                    # conv4+bn4
    h = jnp.maximum(mm(h, w5) + b5[...], 0.0)                    # conv5+bn5

    tile_max = jnp.max(h, axis=0, keepdims=True)                 # (1, 1024)
    out_ref[...] = jnp.maximum(out_ref[...], tile_max[None])


def conv_stack(xi, xj, conv_params, tile_n):
    B, N, D = xi.shape
    K = xj.shape[1]
    c5 = conv_params[-1].shape[-1]        # b5: (1, 1024)

    def const_spec(a):                    # resident across the whole grid
        return pl.BlockSpec(a.shape, lambda b, j: (0,) * a.ndim)

    in_specs = [
        pl.BlockSpec((1, tile_n, D), lambda b, j: (b, j, 0)),
        pl.BlockSpec((1, K, tile_n, D), lambda b, j: (b, 0, j, 0)),
    ] + [const_spec(a) for a in conv_params]

    pooled = pl.pallas_call(
        _conv_stack_kernel,
        out_shape=jax.ShapeDtypeStruct((B, 1, c5), jnp.float32),
        grid=(B, N // tile_n),
        in_specs=in_specs,
        out_specs=pl.BlockSpec((1, 1, c5), lambda b, j: (b, 0, 0)),
        compiler_params=pltpu.CompilerParams(
            dimension_semantics=("parallel", "arbitrary")),
    )(xi, xj, *conv_params)
    return pooled.reshape(B, c5)


# ------------------------------------------------------------------
# Kernel 3: linear1..linear3 (+folded BN, dropout = identity) + softmax
# ------------------------------------------------------------------
def _head_kernel(g_ref, w6, b6, w7, b7, w8, b8, out_ref):
    def mm(h, w):
        return jnp.dot(h.astype(jnp.bfloat16), w[...],
                       preferred_element_type=jnp.float32)

    h = g_ref[...]                                        # (B, 1024) f32
    h = jnp.maximum(mm(h, w6) + b6[...], 0.0)             # linear1+bn6+relu
    h = jnp.maximum(mm(h, w7) + b7[...], 0.0)             # linear2+bn7+relu
    logits = mm(h, w8) + b8[...]                          # linear3
    m = jnp.max(logits, axis=-1, keepdims=True)           # softmax (dim=-1)
    ez = jnp.exp(logits - m)
    denom = jnp.sum(ez, axis=-1, keepdims=True)
    out_ref[...] = ez * pl.reciprocal(denom)              # exact reciprocal


def mlp_head(g, head_params):
    B, _ = g.shape
    n_out = head_params[-1].shape[-1]     # b8: (1, n_out)
    args = [g] + list(head_params)

    def full_spec(a):
        return pl.BlockSpec(a.shape, lambda *_: (0,) * a.ndim)

    return pl.pallas_call(
        _head_kernel,
        out_shape=jax.ShapeDtypeStruct((B, n_out), jnp.float32),
        grid=(1,),
        in_specs=[full_spec(a) for a in args],
        out_specs=pl.BlockSpec((B, n_out), lambda *_: (0, 0)),
    )(*args)


# ------------------------------------------------------------------
# Deterministic parameter construction (BatchNorm folded, eval mode)
# ------------------------------------------------------------------
def _bn_fold(key, c, eps=1e-5):
    k1, k2, k3, k4 = jax.random.split(key, 4)
    gamma = 1.0 + 0.1 * jax.random.normal(k1, (c,), jnp.float32)
    beta = 0.1 * jax.random.normal(k2, (c,), jnp.float32)
    mean = 0.1 * jax.random.normal(k3, (c,), jnp.float32)
    var = 1.0 + 0.1 * jax.random.uniform(k4, (c,), jnp.float32)
    s = gamma / jnp.sqrt(var + eps)
    t = beta - mean * s
    return s, t


def init_params(key, output_channel=2, num_dims=4, c_pad=128):
    layer_dims = [(2 * num_dims, 64), (64, 64), (64, 64), (64, 128),
                  (128, 1024), (1024, 512), (512, 256), (256, output_channel)]
    has_bias = [False, False, False, False, False, False, True, True]
    has_bn = [True, True, True, True, True, True, True, False]

    raw = []
    keys = jax.random.split(key, len(layer_dims))
    for (cin, cout), bias, bn, kk in zip(layer_dims, has_bias, has_bn, keys):
        kw, kb, kbn = jax.random.split(kk, 3)
        w = 0.1 * jax.random.normal(kw, (cin, cout), jnp.float32)
        b = (0.1 * jax.random.normal(kb, (cout,), jnp.float32)
             if bias else jnp.zeros((cout,), jnp.float32))
        if bn:  # fold eval-mode BN into the preceding matmul
            s, t = _bn_fold(kbn, cout)
            w = w * s[None, :]
            b = b * s + t
        raw.append((w, b.reshape(1, cout)))

    (w1, b1), (w2, b2), (w3, b3), (w4, b4), (w5, b5), \
        (w6, b6), (w7, b7), (w8, b8) = raw

    # split conv1 over the [xi | xj] input halves
    w1a, w1b = w1[:num_dims], w1[num_dims:]

    def pad_c(a, c):   # zero-pad last dim (output channels) to c
        return jnp.pad(a, [(0, 0)] * (a.ndim - 1) + [(0, c - a.shape[-1])])

    def pad_r(w, c):   # zero-pad first dim (input channels) to c
        return jnp.pad(w, [(0, c - w.shape[0])] + [(0, 0)] * (w.ndim - 1))

    # pad 64-wide conv1..conv3 channels to 128 lanes; padded channels are
    # exactly zero through the whole stack, so semantics are unchanged.
    C = c_pad
    w1a_p, w1b_p, b1_p = pad_c(w1a, C), pad_c(w1b, C), pad_c(b1, C)
    w2_p, b2_p = pad_c(pad_r(w2, C), C), pad_c(b2, C)
    w3_p, b3_p = pad_c(pad_r(w3, C), C), pad_c(b3, C)
    w4_p = pad_r(w4, C)

    bf = lambda w: w.astype(jnp.bfloat16)   # bf16 MXU inputs, f32 biases
    conv_params = (bf(w1a_p), bf(w1b_p), b1_p,
                   bf(w2_p), b2_p,
                   bf(w3_p), b3_p,
                   bf(w4_p), b4,
                   bf(w5), b5)
    head_params = (bf(w6), b6, bf(w7), b7, bf(w8), b8)
    return conv_params, head_params


# ------------------------------------------------------------------
# Forward
# ------------------------------------------------------------------
def _fit_tile(n, want):
    for t in (want, 256, 128, 64, 32, 16, 8):
        if t <= n and n % t == 0:
            return t
    return n


@functools.partial(jax.jit, static_argnames=("k", "tile_n", "tile_r"))
def dgcnn_forward(x, params, *, k=20, tile_n=128, tile_r=128):
    conv_params, head_params = params
    _, _, N = x.shape
    tn = _fit_tile(N, tile_n)
    tr = _fit_tile(N, tile_r)
    xi, xj = get_graph_feature_split(x, k, tr)        # (B,N,D), (B,K,N,D)
    pooled = conv_stack(xi, xj, conv_params, tn)      # (B, 1024)
    return mlp_head(pooled, head_params)              # (B, output_channel)


if __name__ == "__main__":
    key = jax.random.PRNGKey(0)
    kx, kp = jax.random.split(key)
    B, D, N, K = 2, 4, 64, 20                          # conv1 in-channels 8 => D = 4
    x = jax.random.normal(kx, (B, D, N), jnp.float32)
    params = init_params(kp, output_channel=2)

    # tile_n / tile_r chosen so the demo exercises multi-tile accumulation
    out = dgcnn_forward(x, params, k=K, tile_n=32, tile_r=32)
    out = jax.block_until_ready(out)

    assert out.shape == (B, 2)
    assert bool(jnp.all(jnp.isfinite(out)))
    # softmax rows should sum to 1
    assert bool(jnp.allclose(jnp.sum(out, axis=-1), 1.0, atol=1e-4))
    print("KERNEL_OK")
</pallas_src>

<mosaic_0001>
module attributes {stable_mosaic.version = 11 : i64} {
  func.func @_pdist_kernel(%arg0: i32, %arg1: i32, %arg2: memref<1x32x2xf32, #tpu.memory_space<vmem>>, %arg3: memref<1x2x64xf32, #tpu.memory_space<vmem>>, %arg4: memref<1x32x64xf32, #tpu.memory_space<vmem>>) attributes {dimension_semantics = [#tpu.dimension_semantics<parallel>, #tpu.dimension_semantics<parallel>], iteration_bounds = array<i64: 2, 2>, scalar_prefetch = 0 : i64, scratch_operands = 0 : i64, tpu.core_type = #tpu.core_type<tc>, window_params = [{transform_indices = @transform_0, window_bounds = array<i64: 1, 32, 2>}, {transform_indices = @transform_1, window_bounds = array<i64: 1, 2, 64>}, {transform_indices = @transform_2, window_bounds = array<i64: 1, 32, 64>}]} {
    %c0 = arith.constant 0 : index
    %c0_0 = arith.constant 0 : index
    %c0_1 = arith.constant 0 : index
    %0 = vector.load %arg2[%c0, %c0_0, %c0_1] : memref<1x32x2xf32, #tpu.memory_space<vmem>>, vector<1x32x2xf32>
    %1 = vector.shape_cast %0 : vector<1x32x2xf32> to vector<32x2xf32>
    %c0_2 = arith.constant 0 : index
    %c0_3 = arith.constant 0 : index
    %c0_4 = arith.constant 0 : index
    %2 = vector.load %arg3[%c0_2, %c0_3, %c0_4] : memref<1x2x64xf32, #tpu.memory_space<vmem>>, vector<1x2x64xf32>
    %3 = vector.shape_cast %2 : vector<1x2x64xf32> to vector<2x64xf32>
    %4 = vector.extract_strided_slice %1 {offsets = [0, 0], sizes = [32, 1], strides = [1, 1]} : vector<32x2xf32> to vector<32x1xf32>
    %5 = vector.extract_strided_slice %1 {offsets = [0, 1], sizes = [32, 1], strides = [1, 1]} : vector<32x2xf32> to vector<32x1xf32>
    %6 = vector.extract_strided_slice %3 {offsets = [0, 0], sizes = [1, 64], strides = [1, 1]} : vector<2x64xf32> to vector<1x64xf32>
    %7 = vector.extract_strided_slice %3 {offsets = [1, 0], sizes = [1, 64], strides = [1, 1]} : vector<2x64xf32> to vector<1x64xf32>
    %8 = vector.broadcast %4 : vector<32x1xf32> to vector<32x64xf32>
    %9 = vector.broadcast %6 : vector<1x64xf32> to vector<32x64xf32>
    %10 = arith.subf %8, %9 : vector<32x64xf32>
    %11 = vector.broadcast %5 : vector<32x1xf32> to vector<32x64xf32>
    %12 = vector.broadcast %7 : vector<1x64xf32> to vector<32x64xf32>
    %13 = arith.subf %11, %12 : vector<32x64xf32>
    %14 = arith.mulf %10, %10 : vector<32x64xf32>
    %15 = arith.mulf %13, %13 : vector<32x64xf32>
    %16 = arith.addf %14, %15 : vector<32x64xf32>
    %cst = arith.constant 0.000000e+00 : f32
    %17 = vector.broadcast %cst : f32 to vector<32x64xf32>
    %18 = arith.subf %17, %16 : vector<32x64xf32>
    %c0_5 = arith.constant 0 : index
    %c0_6 = arith.constant 0 : index
    %c0_7 = arith.constant 0 : index
    %19 = vector.load %arg4[%c0_5, %c0_6, %c0_7] : memref<1x32x64xf32, #tpu.memory_space<vmem>>, vector<1x32x64xf32>
    %20 = vector.shape_cast %19 : vector<1x32x64xf32> to vector<32x64xf32>
    %21 = vector.shape_cast %18 : vector<32x64xf32> to vector<1x32x64xf32>
    tpu.vector_store %arg4[%c0_5, %c0_6, %c0_7], %21 {strides = array<i32>} : memref<1x32x64xf32, #tpu.memory_space<vmem>>, vector<1x32x64xf32>,
    return
  }
  func.func @transform_0(%arg0: i32, %arg1: i32) -> (i32, i32, i32) {
    %c0_i32 = arith.constant 0 : i32
    %c0_i32_0 = arith.constant 0 : i32
    return %arg0, %arg1, %c0_i32 : i32, i32, i32
  }
  func.func @transform_1(%arg0: i32, %arg1: i32) -> (i32, i32, i32) {
    %c0_i32 = arith.constant 0 : i32
    %c0_i32_0 = arith.constant 0 : i32
    %c0_i32_1 = arith.constant 0 : i32
    return %arg0, %c0_i32, %c0_i32_0 : i32, i32, i32
  }
  func.func @transform_2(%arg0: i32, %arg1: i32) -> (i32, i32, i32) {
    %c0_i32 = arith.constant 0 : i32
    %c0_i32_0 = arith.constant 0 : i32
    return %arg0, %arg1, %c0_i32 : i32, i32, i32
  }
}

module attributes {stable_mosaic.version = 11 : i64} {
  func.func @_conv_stack_kernel(%arg0: i32, %arg1: i32, %arg2: memref<1x32x4xbf16, #tpu.memory_space<vmem>>, %arg3: memref<1x20x32x4xbf16, #tpu.memory_space<vmem>>, %arg4: memref<4x128xbf16, #tpu.memory_space<vmem>>, %arg5: memref<4x128xbf16, #tpu.memory_space<vmem>>, %arg6: memref<1x128xf32, #tpu.memory_space<vmem>>, %arg7: memref<128x128xbf16, #tpu.memory_space<vmem>>, %arg8: memref<1x128xf32, #tpu.memory_space<vmem>>, %arg9: memref<128x128xbf16, #tpu.memory_space<vmem>>, %arg10: memref<1x128xf32, #tpu.memory_space<vmem>>, %arg11: memref<128x128xbf16, #tpu.memory_space<vmem>>, %arg12: memref<1x128xf32, #tpu.memory_space<vmem>>, %arg13: memref<128x1024xbf16, #tpu.memory_space<vmem>>, %arg14: memref<1x1024xf32, #tpu.memory_space<vmem>>, %arg15: memref<1x1x1024xf32, #tpu.memory_space<vmem>>) attributes {dimension_semantics = [#tpu.dimension_semantics<parallel>, #tpu.dimension_semantics<arbitrary>], iteration_bounds = array<i64: 2, 2>, scalar_prefetch = 0 : i64, scratch_operands = 0 : i64, tpu.core_type = #tpu.core_type<tc>, window_params = [{transform_indices = @transform_0, window_bounds = array<i64: 1, 32, 4>}, {transform_indices = @transform_1, window_bounds = array<i64: 1, 20, 32, 4>}, {pipeline_mode = #tpu.pipeline_mode<synchronous>, transform_indices = @transform_2, window_bounds = array<i64: 4, 128>}, {pipeline_mode = #tpu.pipeline_mode<synchronous>, transform_indices = @transform_3, window_bounds = array<i64: 4, 128>}, {pipeline_mode = #tpu.pipeline_mode<synchronous>, transform_indices = @transform_4, window_bounds = array<i64: 1, 128>}, {pipeline_mode = #tpu.pipeline_mode<synchronous>, transform_indices = @transform_5, window_bounds = array<i64: 128, 128>}, {pipeline_mode = #tpu.pipeline_mode<synchronous>, transform_indices = @transform_6, window_bounds = array<i64: 1, 128>}, {pipeline_mode = #tpu.pipeline_mode<synchronous>, transform_indices = @transform_7, window_bounds = array<i64: 128, 128>}, {pipeline_mode = #tpu.pipeline_mode<synchronous>, transform_indices = @transform_8, window_bounds = array<i64: 1, 128>}, {pipeline_mode = #tpu.pipeline_mode<synchronous>, transform_indices = @transform_9, window_bounds = array<i64: 128, 128>}, {pipeline_mode = #tpu.pipeline_mode<synchronous>, transform_indices = @transform_10, window_bounds = array<i64: 1, 128>}, {pipeline_mode = #tpu.pipeline_mode<synchronous>, transform_indices = @transform_11, window_bounds = array<i64: 128, 1024>}, {pipeline_mode = #tpu.pipeline_mode<synchronous>, transform_indices = @transform_12, window_bounds = array<i64: 1, 1024>}, {transform_indices = @transform_13, window_bounds = array<i64: 1, 1, 1024>}]} {
    %c0_i32 = arith.constant 0 : i32
    %0 = arith.cmpi eq, %arg1, %c0_i32 : i32
    %1 = arith.extui %0 : i1 to i32
    %c0_i32_0 = arith.constant 0 : i32
    %2 = arith.cmpi ne, %1, %c0_i32_0 : i32
    scf.if %2 {
      %cst_46 = arith.constant 0xFF800000 : f32
      %99 = vector.broadcast %cst_46 : f32 to vector<1x1x1024xf32>
      %c0_47 = arith.constant 0 : index
      %c0_48 = arith.constant 0 : index
      %c0_49 = arith.constant 0 : index
      %100 = vector.load %arg15[%c0_47, %c0_48, %c0_49] : memref<1x1x1024xf32, #tpu.memory_space<vmem>>, vector<1x1x1024xf32>
      tpu.vector_store %arg15[%c0_47, %c0_48, %c0_49], %99 {strides = array<i32>} : memref<1x1x1024xf32, #tpu.memory_space<vmem>>, vector<1x1x1024xf32>,
    } else {
    }
    %c0 = arith.constant 0 : index
    %c0_1 = arith.constant 0 : index
    %c0_2 = arith.constant 0 : index
    %3 = vector.load %arg2[%c0, %c0_1, %c0_2] : memref<1x32x4xbf16, #tpu.memory_space<vmem>>, vector<1x32x4xbf16>
    %4 = vector.shape_cast %3 : vector<1x32x4xbf16> to vector<32x4xbf16>
    %c0_3 = arith.constant 0 : index
    %c0_4 = arith.constant 0 : index
    %c0_5 = arith.constant 0 : index
    %c0_6 = arith.constant 0 : index
    %5 = vector.load %arg3[%c0_3, %c0_4, %c0_5, %c0_6] : memref<1x20x32x4xbf16, #tpu.memory_space<vmem>>, vector<1x20x32x4xbf16>
    %6 = vector.shape_cast %5 : vector<1x20x32x4xbf16> to vector<20x32x4xbf16>
    %7 = vector.shape_cast %6 : vector<20x32x4xbf16> to vector<640x4xbf16>
    %c0_7 = arith.constant 0 : index
    %c0_8 = arith.constant 0 : index
    %8 = vector.load %arg4[%c0_7, %c0_8] : memref<4x128xbf16, #tpu.memory_space<vmem>>, vector<4x128xbf16>
    %cst = arith.constant dense<0.000000e+00> : vector<32x128xf32>
    %9 = tpu.matmul %4, %8, %cst {dimension_numbers = #tpu.dot_dimension_numbers<[1], [0], [0], [1], [0, 0, 1, 1], [], []>} : vector<32x4xbf16>, vector<4x128xbf16>, vector<32x128xf32> -> vector<32x128xf32>
    %c0_9 = arith.constant 0 : index
    %c0_10 = arith.constant 0 : index
    %10 = vector.load %arg5[%c0_9, %c0_10] : memref<4x128xbf16, #tpu.memory_space<vmem>>, vector<4x128xbf16>
    %cst_11 = arith.constant dense<0.000000e+00> : vector<640x128xf32>
    %11 = tpu.matmul %7, %10, %cst_11 {dimension_numbers = #tpu.dot_dimension_numbers<[1], [0], [0], [1], [0, 0, 1, 1], [], []>} : vector<640x4xbf16>, vector<4x128xbf16>, vector<640x128xf32> -> vector<640x128xf32>
    %12 = vector.shape_cast %9 : vector<32x128xf32> to vector<1x32x128xf32>
    %13 = vector.shape_cast %12 : vector<1x32x128xf32> to vector<1x32x128xf32>
    %14 = vector.broadcast %13 : vector<1x32x128xf32> to vector<20x32x128xf32>
    %15 = vector.shape_cast %14 : vector<20x32x128xf32> to vector<640x128xf32>
    %16 = arith.addf %11, %15 : vector<640x128xf32>
    %c0_12 = arith.constant 0 : index
    %c0_13 = arith.constant 0 : index
    %17 = vector.load %arg6[%c0_12, %c0_13] : memref<1x128xf32, #tpu.memory_space<vmem>>, vector<1x128xf32>
    %18 = vector.broadcast %17 : vector<1x128xf32> to vector<640x128xf32>
    %19 = arith.addf %16, %18 : vector<640x128xf32>
    %cst_14 = arith.constant 0.000000e+00 : f32
    %20 = vector.broadcast %cst_14 : f32 to vector<640x128xf32>
    %21 = arith.maximumf %19, %20 : vector<640x128xf32>
    %22 = arith.truncf %21 : vector<640x128xf32> to vector<640x128xbf16>
    %c0_15 = arith.constant 0 : index
    %c0_16 = arith.constant 0 : index
    %23 = vector.load %arg7[%c0_15, %c0_16] : memref<128x128xbf16, #tpu.memory_space<vmem>>, vector<128x128xbf16>
    %cst_17 = arith.constant dense<0.000000e+00> : vector<640x128xf32>
    %24 = tpu.matmul %22, %23, %cst_17 {dimension_numbers = #tpu.dot_dimension_numbers<[1], [0], [0], [1], [0, 0, 1, 1], [], []>} : vector<640x128xbf16>, vector<128x128xbf16>, vector<640x128xf32> -> vector<640x128xf32>
    %c0_18 = arith.constant 0 : index
    %c0_19 = arith.constant 0 : index
    %25 = vector.load %arg8[%c0_18, %c0_19] : memref<1x128xf32, #tpu.memory_space<vmem>>, vector<1x128xf32>
    %26 = vector.broadcast %25 : vector<1x128xf32> to vector<640x128xf32>
    %27 = arith.addf %24, %26 : vector<640x128xf32>
    %cst_20 = arith.constant 0.000000e+00 : f32
    %28 = vector.broadcast %cst_20 : f32 to vector<640x128xf32>
    %29 = arith.maximumf %27, %28 : vector<640x128xf32>
    %30 = arith.truncf %29 : vector<640x128xf32> to vector<640x128xbf16>
    %c0_21 = arith.constant 0 : index
    %c0_22 = arith.constant 0 : index
    %31 = vector.load %arg9[%c0_21, %c0_22] : memref<128x128xbf16, #tpu.memory_space<vmem>>, vector<128x128xbf16>
    %cst_23 = arith.constant dense<0.000000e+00> : vector<640x128xf32>
    %32 = tpu.matmul %30, %31, %cst_23 {dimension_numbers = #tpu.dot_dimension_numbers<[1], [0], [0], [1], [0, 0, 1, 1], [], []>} : vector<640x128xbf16>, vector<128x128xbf16>, vector<640x128xf32> -> vector<640x128xf32>
    %c0_24 = arith.constant 0 : index
    %c0_25 = arith.constant 0 : index
    %33 = vector.load %arg10[%c0_24, %c0_25] : memref<1x128xf32, #tpu.memory_space<vmem>>, vector<1x128xf32>
    %34 = vector.broadcast %33 : vector<1x128xf32> to vector<640x128xf32>
    %35 = arith.addf %32, %34 : vector<640x128xf32>
    %cst_26 = arith.constant 0.000000e+00 : f32
    %36 = vector.broadcast %cst_26 : f32 to vector<640x128xf32>
    %37 = arith.maximumf %35, %36 : vector<640x128xf32>
    %38 = vector.extract_strided_slice %37 {offsets = [0, 0], sizes = [32, 128], strides = [1, 1]} : vector<640x128xf32> to vector<32x128xf32>
    %39 = vector.extract_strided_slice %37 {offsets = [32, 0], sizes = [32, 128], strides = [1, 1]} : vector<640x128xf32> to vector<32x128xf32>
    %40 = arith.maximumf %38, %39 : vector<32x128xf32>
    %41 = vector.extract_strided_slice %37 {offsets = [64, 0], sizes = [32, 128], strides = [1, 1]} : vector<640x128xf32> to vector<32x128xf32>
    %42 = arith.maximumf %40, %41 : vector<32x128xf32>
    %43 = vector.extract_strided_slice %37 {offsets = [96, 0], sizes = [32, 128], strides = [1, 1]} : vector<640x128xf32> to vector<32x128xf32>
    %44 = arith.maximumf %42, %43 : vector<32x128xf32>
    %45 = vector.extract_strided_slice %37 {offsets = [128, 0], sizes = [32, 128], strides = [1, 1]} : vector<640x128xf32> to vector<32x128xf32>
    %46 = arith.maximumf %44, %45 : vector<32x128xf32>
    %47 = vector.extract_strided_slice %37 {offsets = [160, 0], sizes = [32, 128], strides = [1, 1]} : vector<640x128xf32> to vector<32x128xf32>
    %48 = arith.maximumf %46, %47 : vector<32x128xf32>
    %49 = vector.extract_strided_slice %37 {offsets = [192, 0], sizes = [32, 128], strides = [1, 1]} : vector<640x128xf32> to vector<32x128xf32>
    %50 = arith.maximumf %48, %49 : vector<32x128xf32>
    %51 = vector.extract_strided_slice %37 {offsets = [224, 0], sizes = [32, 128], strides = [1, 1]} : vector<640x128xf32> to vector<32x128xf32>
    %52 = arith.maximumf %50, %51 : vector<32x128xf32>
    %53 = vector.extract_strided_slice %37 {offsets = [256, 0], sizes = [32, 128], strides = [1, 1]} : vector<640x128xf32> to vector<32x128xf32>
    %54 = arith.maximumf %52, %53 : vector<32x128xf32>
    %55 = vector.extract_strided_slice %37 {offsets = [288, 0], sizes = [32, 128], strides = [1, 1]} : vector<640x128xf32> to vector<32x128xf32>
    %56 = arith.maximumf %54, %55 : vector<32x128xf32>
    %57 = vector.extract_strided_slice %37 {offsets = [320, 0], sizes = [32, 128], strides = [1, 1]} : vector<640x128xf32> to vector<32x128xf32>
    %58 = arith.maximumf %56, %57 : vector<32x128xf32>
    %59 = vector.extract_strided_slice %37 {offsets = [352, 0], sizes = [32, 128], strides = [1, 1]} : vector<640x128xf32> to vector<32x128xf32>
    %60 = arith.maximumf %58, %59 : vector<32x128xf32>
    %61 = vector.extract_strided_slice %37 {offsets = [384, 0], sizes = [32, 128], strides = [1, 1]} : vector<640x128xf32> to vector<32x128xf32>
    %62 = arith.maximumf %60, %61 : vector<32x128xf32>
    %63 = vector.extract_strided_slice %37 {offsets = [416, 0], sizes = [32, 128], strides = [1, 1]} : vector<640x128xf32> to vector<32x128xf32>
    %64 = arith.maximumf %62, %63 : vector<32x128xf32>
    %65 = vector.extract_strided_slice %37 {offsets = [448, 0], sizes = [32, 128], strides = [1, 1]} : vector<640x128xf32> to vector<32x128xf32>
    %66 = arith.maximumf %64, %65 : vector<32x128xf32>
    %67 = vector.extract_strided_slice %37 {offsets = [480, 0], sizes = [32, 128], strides = [1, 1]} : vector<640x128xf32> to vector<32x128xf32>
    %68 = arith.maximumf %66, %67 : vector<32x128xf32>
    %69 = vector.extract_strided_slice %37 {offsets = [512, 0], sizes = [32, 128], strides = [1, 1]} : vector<640x128xf32> to vector<32x128xf32>
    %70 = arith.maximumf %68, %69 : vector<32x128xf32>
    %71 = vector.extract_strided_slice %37 {offsets = [544, 0], sizes = [32, 128], strides = [1, 1]} : vector<640x128xf32> to vector<32x128xf32>
    %72 = arith.maximumf %70, %71 : vector<32x128xf32>
    %73 = vector.extract_strided_slice %37 {offsets = [576, 0], sizes = [32, 128], strides = [1, 1]} : vector<640x128xf32> to vector<32x128xf32>
    %74 = arith.maximumf %72, %73 : vector<32x128xf32>
    %75 = vector.extract_strided_slice %37 {offsets = [608, 0], sizes = [32, 128], strides = [1, 1]} : vector<640x128xf32> to vector<32x128xf32>
    %76 = arith.maximumf %74, %75 : vector<32x128xf32>
    %77 = arith.truncf %76 : vector<32x128xf32> to vector<32x128xbf16>
    %c0_27 = arith.constant 0 : index
    %c0_28 = arith.constant 0 : index
    %78 = vector.load %arg11[%c0_27, %c0_28] : memref<128x128xbf16, #tpu.memory_space<vmem>>, vector<128x128xbf16>
    %cst_29 = arith.constant dense<0.000000e+00> : vector<32x128xf32>
    %79 = tpu.matmul %77, %78, %cst_29 {dimension_numbers = #tpu.dot_dimension_numbers<[1], [0], [0], [1], [0, 0, 1, 1], [], []>} : vector<32x128xbf16>, vector<128x128xbf16>, vector<32x128xf32> -> vector<32x128xf32>
    %c0_30 = arith.constant 0 : index
    %c0_31 = arith.constant 0 : index
    %80 = vector.load %arg12[%c0_30, %c0_31] : memref<1x128xf32, #tpu.memory_space<vmem>>, vector<1x128xf32>
    %81 = vector.broadcast %80 : vector<1x128xf32> to vector<32x128xf32>
    %82 = arith.addf %79, %81 : vector<32x128xf32>
    %cst_32 = arith.constant 0.000000e+00 : f32
    %83 = vector.broadcast %cst_32 : f32 to vector<32x128xf32>
    %84 = arith.maximumf %82, %83 : vector<32x128xf32>
    %85 = arith.truncf %84 : vector<32x128xf32> to vector<32x128xbf16>
    %c0_33 = arith.constant 0 : index
    %c0_34 = arith.constant 0 : index
    %86 = vector.load %arg13[%c0_33, %c0_34] : memref<128x1024xbf16, #tpu.memory_space<vmem>>, vector<128x1024xbf16>
    %cst_35 = arith.constant dense<0.000000e+00> : vector<32x1024xf32>
    %87 = tpu.matmul %85, %86, %cst_35 {dimension_numbers = #tpu.dot_dimension_numbers<[1], [0], [0], [1], [0, 0, 1, 1], [], []>} : vector<32x128xbf16>, vector<128x1024xbf16>, vector<32x1024xf32> -> vector<32x1024xf32>
    %c0_36 = arith.constant 0 : index
    %c0_37 = arith.constant 0 : index
    %88 = vector.load %arg14[%c0_36, %c0_37] : memref<1x1024xf32, #tpu.memory_space<vmem>>, vector<1x1024xf32>
    %89 = vector.broadcast %88 : vector<1x1024xf32> to vector<32x1024xf32>
    %90 = arith.addf %87, %89 : vector<32x1024xf32>
    %cst_38 = arith.constant 0.000000e+00 : f32
    %91 = vector.broadcast %cst_38 : f32 to vector<32x1024xf32>
    %92 = arith.maximumf %90, %91 : vector<32x1024xf32>
    %cst_39 = arith.constant dense<0xFF800000> : vector<1024xf32>
    %93 = vector.multi_reduction <maximumf>, %92, %cst_39 [0] : vector<32x1024xf32> to vector<1024xf32>
    %94 = vector.shape_cast %93 : vector<1024xf32> to vector<1x1024xf32>
    %c0_40 = arith.constant 0 : index
    %c0_41 = arith.constant 0 : index
    %c0_42 = arith.constant 0 : index
    %95 = vector.load %arg15[%c0_40, %c0_41, %c0_42] : memref<1x1x1024xf32, #tpu.memory_space<vmem>>, vector<1x1x1024xf32>
    %96 = vector.shape_cast %94 : vector<1x1024xf32> to vector<1x1x1024xf32>
    %97 = arith.maximumf %95, %96 : vector<1x1x1024xf32>
    %c0_43 = arith.constant 0 : index
    %c0_44 = arith.constant 0 : index
    %c0_45 = arith.constant 0 : index
    %98 = vector.load %arg15[%c0_43, %c0_44, %c0_45] : memref<1x1x1024xf32, #tpu.memory_space<vmem>>, vector<1x1x1024xf32>
    tpu.vector_store %arg15[%c0_43, %c0_44, %c0_45], %97 {strides = array<i32>} : memref<1x1x1024xf32, #tpu.memory_space<vmem>>, vector<1x1x1024xf32>,
    return
  }
  func.func @transform_0(%arg0: i32, %arg1: i32) -> (i32, i32, i32) {
    %c0_i32 = arith.constant 0 : i32
    %c0_i32_0 = arith.constant 0 : i32
    return %arg0, %arg1, %c0_i32 : i32, i32, i32
  }
  func.func @transform_1(%arg0: i32, %arg1: i32) -> (i32, i32, i32, i32) {
    %c0_i32 = arith.constant 0 : i32
    %c0_i32_0 = arith.constant 0 : i32
    %c0_i32_1 = arith.constant 0 : i32
    return %arg0, %c0_i32, %arg1, %c0_i32_0 : i32, i32, i32, i32
  }
  func.func @transform_2(%arg0: i32, %arg1: i32) -> (i32, i32) {
    %c0_i32 = arith.constant 0 : i32
    %c0_i32_0 = arith.constant 0 : i32
    %c0_i32_1 = arith.constant 0 : i32
    return %c0_i32, %c0_i32_0 : i32, i32
  }
  func.func @transform_3(%arg0: i32, %arg1: i32) -> (i32, i32) {
    %c0_i32 = arith.constant 0 : i32
    %c0_i32_0 = arith.constant 0 : i32
    %c0_i32_1 = arith.constant 0 : i32
    return %c0_i32, %c0_i32_0 : i32, i32
  }
  func.func @transform_4(%arg0: i32, %arg1: i32) -> (i32, i32) {
    %c0_i32 = arith.constant 0 : i32
    %c0_i32_0 = arith.constant 0 : i32
    %c0_i32_1 = arith.constant 0 : i32
    return %c0_i32, %c0_i32_0 : i32, i32
  }
  func.func @transform_5(%arg0: i32, %arg1: i32) -> (i32, i32) {
    %c0_i32 = arith.constant 0 : i32
    %c0_i32_0 = arith.constant 0 : i32
    %c0_i32_1 = arith.constant 0 : i32
    return %c0_i32, %c0_i32_0 : i32, i32
  }
  func.func @transform_6(%arg0: i32, %arg1: i32) -> (i32, i32) {
    %c0_i32 = arith.constant 0 : i32
    %c0_i32_0 = arith.constant 0 : i32
    %c0_i32_1 = arith.constant 0 : i32
    return %c0_i32, %c0_i32_0 : i32, i32
  }
  func.func @transform_7(%arg0: i32, %arg1: i32) -> (i32, i32) {
    %c0_i32 = arith.constant 0 : i32
    %c0_i32_0 = arith.constant 0 : i32
    %c0_i32_1 = arith.constant 0 : i32
    return %c0_i32, %c0_i32_0 : i32, i32
  }
  func.func @transform_8(%arg0: i32, %arg1: i32) -> (i32, i32) {
    %c0_i32 = arith.constant 0 : i32
    %c0_i32_0 = arith.constant 0 : i32
    %c0_i32_1 = arith.constant 0 : i32
    return %c0_i32, %c0_i32_0 : i32, i32
  }
  func.func @transform_9(%arg0: i32, %arg1: i32) -> (i32, i32) {
    %c0_i32 = arith.constant 0 : i32
    %c0_i32_0 = arith.constant 0 : i32
    %c0_i32_1 = arith.constant 0 : i32
    return %c0_i32, %c0_i32_0 : i32, i32
  }
  func.func @transform_10(%arg0: i32, %arg1: i32) -> (i32, i32) {
    %c0_i32 = arith.constant 0 : i32
    %c0_i32_0 = arith.constant 0 : i32
    %c0_i32_1 = arith.constant 0 : i32
    return %c0_i32, %c0_i32_0 : i32, i32
  }
  func.func @transform_11(%arg0: i32, %arg1: i32) -> (i32, i32) {
    %c0_i32 = arith.constant 0 : i32
    %c0_i32_0 = arith.constant 0 : i32
    %c0_i32_1 = arith.constant 0 : i32
    return %c0_i32, %c0_i32_0 : i32, i32
  }
  func.func @transform_12(%arg0: i32, %arg1: i32) -> (i32, i32) {
    %c0_i32 = arith.constant 0 : i32
    %c0_i32_0 = arith.constant 0 : i32
    %c0_i32_1 = arith.constant 0 : i32
    return %c0_i32, %c0_i32_0 : i32, i32
  }
  func.func @transform_13(%arg0: i32, %arg1: i32) -> (i32, i32, i32) {
    %c0_i32 = arith.constant 0 : i32
    %c0_i32_0 = arith.constant 0 : i32
    %c0_i32_1 = arith.constant 0 : i32
    return %arg0, %c0_i32, %c0_i32_0 : i32, i32, i32
  }
}

module attributes {stable_mosaic.version = 11 : i64} {
  func.func @_head_kernel(%arg0: i32, %arg1: memref<2x1024xf32, #tpu.memory_space<vmem>>, %arg2: memref<1024x512xbf16, #tpu.memory_space<vmem>>, %arg3: memref<1x512xf32, #tpu.memory_space<vmem>>, %arg4: memref<512x256xbf16, #tpu.memory_space<vmem>>, %arg5: memref<1x256xf32, #tpu.memory_space<vmem>>, %arg6: memref<256x2xbf16, #tpu.memory_space<vmem>>, %arg7: memref<1x2xf32, #tpu.memory_space<vmem>>, %arg8: memref<2x2xf32, #tpu.memory_space<vmem>>) attributes {dimension_semantics = [#tpu.dimension_semantics<arbitrary>], iteration_bounds = array<i64: 1>, scalar_prefetch = 0 : i64, scratch_operands = 0 : i64, tpu.core_type = #tpu.core_type<tc>, window_params = [{pipeline_mode = #tpu.pipeline_mode<synchronous>, transform_indices = @transform_0, window_bounds = array<i64: 2, 1024>}, {pipeline_mode = #tpu.pipeline_mode<synchronous>, transform_indices = @transform_1, window_bounds = array<i64: 1024, 512>}, {pipeline_mode = #tpu.pipeline_mode<synchronous>, transform_indices = @transform_2, window_bounds = array<i64: 1, 512>}, {pipeline_mode = #tpu.pipeline_mode<synchronous>, transform_indices = @transform_3, window_bounds = array<i64: 512, 256>}, {pipeline_mode = #tpu.pipeline_mode<synchronous>, transform_indices = @transform_4, window_bounds = array<i64: 1, 256>}, {pipeline_mode = #tpu.pipeline_mode<synchronous>, transform_indices = @transform_5, window_bounds = array<i64: 256, 2>}, {pipeline_mode = #tpu.pipeline_mode<synchronous>, transform_indices = @transform_6, window_bounds = array<i64: 1, 2>}, {pipeline_mode = #tpu.pipeline_mode<synchronous>, transform_indices = @transform_7, window_bounds = array<i64: 2, 2>}]} {
    %c0 = arith.constant 0 : index
    %c0_0 = arith.constant 0 : index
    %0 = vector.load %arg1[%c0, %c0_0] : memref<2x1024xf32, #tpu.memory_space<vmem>>, vector<2x1024xf32>
    %1 = arith.truncf %0 : vector<2x1024xf32> to vector<2x1024xbf16>
    %c0_1 = arith.constant 0 : index
    %c0_2 = arith.constant 0 : index
    %2 = vector.load %arg2[%c0_1, %c0_2] : memref<1024x512xbf16, #tpu.memory_space<vmem>>, vector<1024x512xbf16>
    %cst = arith.constant dense<0.000000e+00> : vector<2x512xf32>
    %3 = tpu.matmul %1, %2, %cst {dimension_numbers = #tpu.dot_dimension_numbers<[1], [0], [0], [1], [0, 0, 1, 1], [], []>} : vector<2x1024xbf16>, vector<1024x512xbf16>, vector<2x512xf32> -> vector<2x512xf32>
    %c0_3 = arith.constant 0 : index
    %c0_4 = arith.constant 0 : index
    %4 = vector.load %arg3[%c0_3, %c0_4] : memref<1x512xf32, #tpu.memory_space<vmem>>, vector<1x512xf32>
    %5 = vector.broadcast %4 : vector<1x512xf32> to vector<2x512xf32>
    %6 = arith.addf %3, %5 : vector<2x512xf32>
    %cst_5 = arith.constant 0.000000e+00 : f32
    %7 = vector.broadcast %cst_5 : f32 to vector<2x512xf32>
    %8 = arith.maximumf %6, %7 : vector<2x512xf32>
    %9 = arith.truncf %8 : vector<2x512xf32> to vector<2x512xbf16>
    %c0_6 = arith.constant 0 : index
    %c0_7 = arith.constant 0 : index
    %10 = vector.load %arg4[%c0_6, %c0_7] : memref<512x256xbf16, #tpu.memory_space<vmem>>, vector<512x256xbf16>
    %cst_8 = arith.constant dense<0.000000e+00> : vector<2x256xf32>
    %11 = tpu.matmul %9, %10, %cst_8 {dimension_numbers = #tpu.dot_dimension_numbers<[1], [0], [0], [1], [0, 0, 1, 1], [], []>} : vector<2x512xbf16>, vector<512x256xbf16>, vector<2x256xf32> -> vector<2x256xf32>
    %c0_9 = arith.constant 0 : index
    %c0_10 = arith.constant 0 : index
    %12 = vector.load %arg5[%c0_9, %c0_10] : memref<1x256xf32, #tpu.memory_space<vmem>>, vector<1x256xf32>
    %13 = vector.broadcast %12 : vector<1x256xf32> to vector<2x256xf32>
    %14 = arith.addf %11, %13 : vector<2x256xf32>
    %cst_11 = arith.constant 0.000000e+00 : f32
    %15 = vector.broadcast %cst_11 : f32 to vector<2x256xf32>
    %16 = arith.maximumf %14, %15 : vector<2x256xf32>
    %17 = arith.truncf %16 : vector<2x256xf32> to vector<2x256xbf16>
    %c0_12 = arith.constant 0 : index
    %c0_13 = arith.constant 0 : index
    %18 = vector.load %arg6[%c0_12, %c0_13] : memref<256x2xbf16, #tpu.memory_space<vmem>>, vector<256x2xbf16>
    %cst_14 = arith.constant dense<0.000000e+00> : vector<2x2xf32>
    %19 = tpu.matmul %17, %18, %cst_14 {dimension_numbers = #tpu.dot_dimension_numbers<[1], [0], [0], [1], [0, 0, 1, 1], [], []>} : vector<2x256xbf16>, vector<256x2xbf16>, vector<2x2xf32> -> vector<2x2xf32>
    %c0_15 = arith.constant 0 : index
    %c0_16 = arith.constant 0 : index
    %20 = vector.load %arg7[%c0_15, %c0_16] : memref<1x2xf32, #tpu.memory_space<vmem>>, vector<1x2xf32>
    %21 = vector.broadcast %20 : vector<1x2xf32> to vector<2x2xf32>
    %22 = arith.addf %19, %21 : vector<2x2xf32>
    %cst_17 = arith.constant dense<0xFF800000> : vector<2xf32>
    %23 = vector.multi_reduction <maximumf>, %22, %cst_17 [1] : vector<2x2xf32> to vector<2xf32>
    %24 = vector.shape_cast %23 : vector<2xf32> to vector<2x1xf32>
    %25 = vector.broadcast %24 : vector<2x1xf32> to vector<2x2xf32>
    %26 = arith.subf %22, %25 : vector<2x2xf32>
    %27 = math.exp %26 : vector<2x2xf32>
    %cst_18 = arith.constant dense<0.000000e+00> : vector<2xf32>
    %28 = vector.multi_reduction <add>, %27, %cst_18 [1] : vector<2x2xf32> to vector<2xf32>
    %29 = vector.shape_cast %28 : vector<2xf32> to vector<2x1xf32>
    %30 = tpu.reciprocal %29 : vector<2x1xf32> -> vector<2x1xf32>
    %31 = vector.broadcast %30 : vector<2x1xf32> to vector<2x2xf32>
    %32 = arith.mulf %27, %31 : vector<2x2xf32>
    %c0_19 = arith.constant 0 : index
    %c0_20 = arith.constant 0 : index
    %33 = vector.load %arg8[%c0_19, %c0_20] : memref<2x2xf32, #tpu.memory_space<vmem>>, vector<2x2xf32>
    tpu.vector_store %arg8[%c0_19, %c0_20], %32 {strides = array<i32>} : memref<2x2xf32, #tpu.memory_space<vmem>>, vector<2x2xf32>,
    return
  }
  func.func @transform_0(%arg0: i32) -> (i32, i32) {
    %c0_i32 = arith.constant 0 : i32
    %c0_i32_0 = arith.constant 0 : i32
    %c0_i32_1 = arith.constant 0 : i32
    return %c0_i32, %c0_i32_0 : i32, i32
  }
  func.func @transform_1(%arg0: i32) -> (i32, i32) {
    %c0_i32 = arith.constant 0 : i32
    %c0_i32_0 = arith.constant 0 : i32
    %c0_i32_1 = arith.constant 0 : i32
    return %c0_i32, %c0_i32_0 : i32, i32
  }
  func.func @transform_2(%arg0: i32) -> (i32, i32) {
    %c0_i32 = arith.constant 0 : i32
    %c0_i32_0 = arith.constant 0 : i32
    %c0_i32_1 = arith.constant 0 : i32
    return %c0_i32, %c0_i32_0 : i32, i32
  }
  func.func @transform_3(%arg0: i32) -> (i32, i32) {
    %c0_i32 = arith.constant 0 : i32
    %c0_i32_0 = arith.constant 0 : i32
    %c0_i32_1 = arith.constant 0 : i32
    return %c0_i32, %c0_i32_0 : i32, i32
  }
  func.func @transform_4(%arg0: i32) -> (i32, i32) {
    %c0_i32 = arith.constant 0 : i32
    %c0_i32_0 = arith.constant 0 : i32
    %c0_i32_1 = arith.constant 0 : i32
    return %c0_i32, %c0_i32_0 : i32, i32
  }
  func.func @transform_5(%arg0: i32) -> (i32, i32) {
    %c0_i32 = arith.constant 0 : i32
    %c0_i32_0 = arith.constant 0 : i32
    %c0_i32_1 = arith.constant 0 : i32
    return %c0_i32, %c0_i32_0 : i32, i32
  }
  func.func @transform_6(%arg0: i32) -> (i32, i32) {
    %c0_i32 = arith.constant 0 : i32
    %c0_i32_0 = arith.constant 0 : i32
    %c0_i32_1 = arith.constant 0 : i32
    return %c0_i32, %c0_i32_0 : i32, i32
  }
  func.func @transform_7(%arg0: i32) -> (i32, i32) {
    %c0_i32 = arith.constant 0 : i32
    %c0_i32_0 = arith.constant 0 : i32
    %c0_i32_1 = arith.constant 0 : i32
    return %c0_i32, %c0_i32_0 : i32, i32
  }
}

</mosaic_0001>

<llo_original>
// kernel: dgcnn_forward.3
$region0: #{dgcnn_forward.3}
  #allocation0 [shape = 'u32[]', space=smem, size = 0x4, offset = 0x4, fixed_abs, tag = 'smem constant byte address 0x4 - core index']
  #allocation1 [shape = 'u32[144,128]{1,0:T(1,128)}', space=vmem, size = 0x12000, scoped, tag = 'internal scratch']
  %s0 = inlined_call_operand.vmem [shape: f32[2,64,2], index: 0, kind: input, shape index: {}]
  %s1 = inlined_call_operand.vmem [shape: f32[2,2,64], index: 1, kind: input, shape index: {}]
  %s2 = inlined_call_operand.vmem [shape: f32[2,64,64], index: 2, kind: output, shape index: {}]
  %s3 = sld [smem:[#allocation0]]
  $region41: #{dgcnn_forward.3} parent=0
    _
  %s5 = ssub.s32 1, %s3
  %s6 = scalar_select 0, %s5, %s3
  loop: start=0, step=1, limit=6
  $region2: #{dgcnn_forward.3} parent=0 // loop_pre_header
    _
  $region3: #{dgcnn_forward.3} parent=0 // loop_header
    %s8 = sphi 0, %s12
    %p9 = scmp.ge.s32.totalorder %s8, 6
    %s15 = sphi 0, %s27
    %s16 = sphi 0, %s23
    %s17 = sphi 0, %s15
    %s18 = sphi 0, %s16
    %s19 = sphi 0, %s17
    %s20 = sphi 0, %s18
    %s32 = sphi 0, %s34
    %s35 = sphi 0, %s32
    %s36 = sphi 0, %s35
    %s52 = sphi 0, %s36
    %s58 = sphi 0, %s60
    %s61 = sphi 0, %s58
    %s62 = sphi 0, %s61
    %s78 = sphi 0, %s62
    %s86 = sphi 0, %s88
    %s89 = sphi 0, %s86
    %s90 = sphi 0, %s89
    %s106 = sphi 0, %s90
  $region4: #{dgcnn_forward.3} parent=0 // loop_header_branch
    %11 = sbr.rel (%p9) target = $region8
  $region5: #{dgcnn_forward.3} parent=0 // loop_body
    %s13 = ssub.s32 %s8, 1
    %s14 = ssub.s32 %s8, 2
    %s21 = sadd.s32 1, %s16
    %p22 = scmp.ge.s32.totalorder %s21, 2
    %s23 = scalar_select %p22, 0, %s21
    %s24 = sadd.s32 1, %s15
    %s25 = scalar_select %p22, %s24, %s15
    %p26 = scmp.ge.s32.totalorder %s25, 2
    %s27 = scalar_select %p26, 0, %s25
    %s28 = ssub.s32 %s15, %s27
    %s29 = ssub.s32 %s16, %s23
    %s30 = sor.u32 %s28, %s29
    %p31 = scmp.eq.s32.totalorder %s30, 0
    %s33 = sadd.s32 %s32, 1
    %s34 = scalar_select %p31, %s32, %s33
    %p37 = pneg %p31
    %p38 = scmp.eq.s32.totalorder %s8, 3
    %p39 = por %p37, %p38
    %p40 = scmp.ne.s32.totalorder %s32, %s35
    %p41 = scmp.eq.s32.totalorder %s8, 0
    %p42 = por %p40, %p41
    %p43 = scmp.ne.s32.totalorder %s32, %s35
    %p44 = scmp.eq.s32.totalorder %s13, 3
    %p45 = por %p43, %p44
    %p46 = scmp.ne.s32.totalorder %s35, %s36
    %p47 = scmp.eq.s32.totalorder %s13, 0
    %p48 = por %p46, %p47
    %p49 = scmp.ne.s32.totalorder %s35, %s36
    %p50 = scmp.eq.s32.totalorder %s14, 3
    %p51 = por %p49, %p50
    %p53 = scmp.ne.s32.totalorder %s36, %s52
    %p54 = scmp.eq.s32.totalorder %s14, 0
    %p55 = por %p53, %p54
    %s56 = ssub.s32 %s15, %s27
    %p57 = scmp.eq.s32.totalorder %s56, 0
    %s59 = sadd.s32 %s58, 1
    %s60 = scalar_select %p57, %s58, %s59
    %p63 = pneg %p57
    %p64 = scmp.eq.s32.totalorder %s8, 3
    %p65 = por %p63, %p64
    %p66 = scmp.ne.s32.totalorder %s58, %s61
    %p67 = scmp.eq.s32.totalorder %s8, 0
    %p68 = por %p66, %p67
    %p69 = scmp.ne.s32.totalorder %s58, %s61
    %p70 = scmp.eq.s32.totalorder %s13, 3
    %p71 = por %p69, %p70
    %p72 = scmp.ne.s32.totalorder %s61, %s62
    %p73 = scmp.eq.s32.totalorder %s13, 0
    %p74 = por %p72, %p73
    %p75 = scmp.ne.s32.totalorder %s61, %s62
    %p76 = scmp.eq.s32.totalorder %s14, 3
    %p77 = por %p75, %p76
    %p79 = scmp.ne.s32.totalorder %s62, %s78
    %p80 = scmp.eq.s32.totalorder %s14, 0
    %p81 = por %p79, %p80
    %s82 = ssub.s32 %s15, %s27
    %s83 = ssub.s32 %s16, %s23
    %s84 = sor.u32 %s82, %s83
    %p85 = scmp.eq.s32.totalorder %s84, 0
    %s87 = sadd.s32 %s86, 1
    %s88 = scalar_select %p85, %s86, %s87
    %p91 = pneg %p85
    %p92 = scmp.eq.s32.totalorder %s8, 3
    %p93 = por %p91, %p92
    %p94 = scmp.ne.s32.totalorder %s86, %s89
    %p95 = scmp.eq.s32.totalorder %s8, 0
    %p96 = por %p94, %p95
    %p97 = scmp.ne.s32.totalorder %s86, %s89
    %p98 = scmp.eq.s32.totalorder %s13, 3
    %p99 = por %p97, %p98
    %p100 = scmp.ne.s32.totalorder %s89, %s90
    %p101 = scmp.eq.s32.totalorder %s13, 0
    %p102 = por %p100, %p101
    %p103 = scmp.ne.s32.totalorder %s89, %s90
    %p104 = scmp.eq.s32.totalorder %s14, 3
    %p105 = por %p103, %p104
    %p107 = scmp.ne.s32.totalorder %s90, %s106
    %p108 = scmp.eq.s32.totalorder %s14, 0
    %p109 = por %p107, %p108
    %p110 = scmp.le.s32.totalorder 1, %s8
    %p111 = scmp.lt.s32.totalorder %s8, 5
    %p112 = pnand %p110, %p111
    %p113 = pneg %p112
    // Predicated region
    $region9: #{dgcnn_forward.3} parent=5 // pred_check
      _
    $region10: #{dgcnn_forward.3} parent=5 // pred_check_branch
      %115 = sbr.rel (%p112) target = $region12
    $region11: #{dgcnn_forward.3} parent=5 // pred_region
      %s116 = ssub.s32 %s8, 1
    $region12: #{dgcnn_forward.3} parent=5 // pred_fallthru
      _
    %p117 = scmp.lt.s32.totalorder %s8, 4
    // Predicated region
    $region13: #{dgcnn_forward.3} parent=5 // pred_check
      %p118 = pneg %p117
    $region14: #{dgcnn_forward.3} parent=5 // pred_check_branch
      %120 = sbr.rel (%p118) target = $region16
    $region15: #{dgcnn_forward.3} parent=5 // pred_region
      // Predicated region
      $region17: #{dgcnn_forward.3} parent=15 // pred_check
        %p121 = pneg %p42
      $region18: #{dgcnn_forward.3} parent=15 // pred_check_branch
        %123 = sbr.rel (%p121) target = $region20
      $region19: #{dgcnn_forward.3} parent=15 // pred_region
        %s124 = smul.u32 4, %s16
        %p125 = scmp.lt.s32.totalorder %s15, 1
        %s126 = scalar_select %p125, %s15, 1
        %p127 = scmp.lt.s32.totalorder %s124, 7
        %s128 = scalar_select %p127, %s124, 7
        %s129 = smul.addr %s126, 8
        %s130 = sadd.s32 %s128, %s129
        %s131 = smul.addr %s130, 8
        %s132 = scalar_lea.vmem %s0, %s131
        %s133 = smul.u32 4, %s16
      $region20: #{dgcnn_forward.3} parent=15 // pred_fallthru
        _
      // Predicated region
      $region21: #{dgcnn_forward.3} parent=15 // pred_check
        %p134 = pneg %p68
      $region22: #{dgcnn_forward.3} parent=15 // pred_check_branch
        %136 = sbr.rel (%p134) target = $region24
      $region23: #{dgcnn_forward.3} parent=15 // pred_region
        %p137 = scmp.lt.s32.totalorder %s15, 1
        %s138 = scalar_select %p137, %s15, 1
        %s139 = smul.addr %s138, 2
        %s140 = scalar_lea.vmem %s1, %s139
      $region24: #{dgcnn_forward.3} parent=15 // pred_fallthru
        _
    $region16: #{dgcnn_forward.3} parent=5 // pred_fallthru
      _
    %p141 = scmp.le.s32.totalorder 1, %s8
    %p142 = scmp.lt.s32.totalorder %s8, 5
    %p143 = pnand %p141, %p142
    %p144 = pneg %p143
    // Predicated region
    $region25: #{dgcnn_forward.3} parent=5 // pred_check
      _
    $region26: #{dgcnn_forward.3} parent=5 // pred_check_branch
      %146 = sbr.rel (%p143) target = $region28
    $region27: #{dgcnn_forward.3} parent=5 // pred_region
      %s147 = ssub.s32 %s8, 1
      %s148 = smul.u32 4, %s18
      %p149 = scmp.lt.s32.totalorder %s17, 1
      %s150 = scalar_select %p149, %s17, 1
      %p151 = scmp.lt.s32.totalorder %s148, 7
      %s152 = scalar_select %p151, %s148, 7
      %s153 = smul.addr %s150, 8
      %s154 = sadd.s32 %s152, %s153
      %s155 = smul.addr %s154, 8
      %s156 = scalar_lea.vmem %s0, %s155
      %p157 = pneg %p48
      %p158 = pneg %p45
      %p159 = scmp.lt.s32.totalorder %s17, 1
      %s160 = scalar_select %p159, %s17, 1
      %s161 = smul.addr %s160, 2
      %s162 = scalar_lea.vmem %s1, %s161
      %p163 = pneg %p74
      %p164 = pneg %p71
      %p165 = pneg %p102
      %p166 = pneg %p99
      %s167 = smul.u32 4, %s18
      %p168 = scmp.lt.s32.totalorder %s17, 1
      %s169 = scalar_select %p168, %s17, 1
      %p170 = scmp.lt.s32.totalorder %s167, 7
      %s171 = scalar_select %p170, %s167, 7
      %s172 = smul.addr %s169, 8
      %s173 = sadd.s32 %s171, %s172
      %s174 = smul.addr %s173, 8
      %s175 = scalar_lea.vmem %s2, %s174
      %s176 = smul.u32 4, %s18
      %p177 = scmp.lt.s32.totalorder %s17, 1
      %s178 = scalar_select %p177, %s17, 1
      %p179 = scmp.lt.s32.totalorder %s176, 7
      %s180 = scalar_select %p179, %s176, 7
      %s181 = smul.addr %s178, 8
      %s182 = sadd.s32 %s180, %s181
      %s183 = smul.addr %s182, 8
      %s184 = scalar_lea.vmem %s0, %s183
      %s185 = smul.u32 4, %s18
      %p186 = scmp.lt.s32.totalorder %s17, 1
      %s187 = scalar_select %p186, %s17, 1
      %s188 = smul.addr %s187, 2
      %s189 = scalar_lea.vmem %s1, %s188
      %s190 = smul.u32 4, %s18
      %p191 = scmp.lt.s32.totalorder %s17, 1
      %s192 = scalar_select %p191, %s17, 1
      %p193 = scmp.lt.s32.totalorder %s190, 7
      %s194 = scalar_select %p193, %s190, 7
      %s195 = smul.addr %s192, 8
      %s196 = sadd.s32 %s194, %s195
      %s197 = smul.addr %s196, 8
      %s198 = scalar_lea.vmem %s2, %s197
      %s199 = smul.u32 4, %s18
      %v200 = vld [vmem:[%s184] sm:$0xff]
      %v201 = vld [vmem:[%s184 + $0x8] sm:$0xff]
      %v202 = vld [vmem:[%s184 + $0x10] sm:$0xff]
      %v203 = vld [vmem:[%s184 + $0x18] sm:$0xff]
      %v204 = vld [vmem:[%s189] sm:$0x3]
      %206 = vset.pattern.permute.xlu0 0
      %207 = vperm.xlu0 %206, %v200
      %v208 = vpop.permute.xlu0 %207
      %211 = vset.pattern.permute.xlu0 0
      %212 = vperm.xlu0 %211, %v201
      %v213 = vpop.permute.xlu0 %212
      %216 = vset.pattern.permute.xlu0 0
      %217 = vperm.xlu0 %216, %v202
      %v218 = vpop.permute.xlu0 %217
      %221 = vset.pattern.permute.xlu0 0
      %222 = vperm.xlu0 %221, %v203
      %v223 = vpop.permute.xlu0 %222
      %v225 = vlaneseq
      %v226 = vshrl.u32 %v225, 7
      %v227 = vsub.s32 0, %v226
      %v228 = vrot.slane %v204, %v227
      %v229 = vsub.f32 %v208, %v228
      %v230 = vsub.f32 %v213, %v228
      %v231 = vsub.f32 %v218, %v228
      %v232 = vsub.f32 %v223, %v228
      %233 = vset.pattern.permute.xlu0 1
      %234 = vperm.xlu0 %233, %v200
      %v235 = vpop.permute.xlu0 %234
      %237 = vset.pattern.permute.xlu0 1
      %238 = vperm.xlu0 %237, %v201
      %v239 = vpop.permute.xlu0 %238
      %241 = vset.pattern.permute.xlu0 1
      %242 = vperm.xlu0 %241, %v202
      %v243 = vpop.permute.xlu0 %242
      %245 = vset.pattern.permute.xlu0 1
      %246 = vperm.xlu0 %245, %v203
      %v247 = vpop.permute.xlu0 %246
      %v249 = vlaneseq
      %v250 = vshrl.u32 %v249, 7
      %v251 = vsub.s32 1, %v250
      %v252 = vrot.slane %v204, %v251
      %v253 = vsub.f32 %v235, %v252
      %v254 = vsub.f32 %v239, %v252
      %v255 = vsub.f32 %v243, %v252
      %v256 = vsub.f32 %v247, %v252
      %v257 = vmul.f32 %v229, %v229
      %v258 = vmul.f32 %v230, %v230
      %v259 = vmul.f32 %v231, %v231
      %v260 = vmul.f32 %v232, %v232
      %v261 = vmul.f32 %v253, %v253
      %v262 = vmul.f32 %v254, %v254
      %v263 = vmul.f32 %v255, %v255
      %v264 = vmul.f32 %v256, %v256
      %v265 = vadd.f32 %v257, %v261
      %v266 = vadd.f32 %v258, %v262
      %v267 = vadd.f32 %v259, %v263
      %v268 = vadd.f32 %v260, %v264
      %v269 = vsub.f32 0.0, %v265
      %v270 = vsub.f32 0.0, %v266
      %v271 = vsub.f32 0.0, %v267
      %v272 = vsub.f32 0.0, %v268
      %vm273 = vcmask 523264
      %274 = vst.msk [vmem:[%s198] sm:$0xff] %vm273, %v269
      %275 = vst.msk [vmem:[%s198 + $0x8] sm:$0xff] %vm273, %v270
      %276 = vst.msk [vmem:[%s198 + $0x10] sm:$0xff] %vm273, %v271
      %277 = vst.msk [vmem:[%s198 + $0x18] sm:$0xff] %vm273, %v272
      %s278 = smul.u32 4, %s18
      %p279 = scmp.lt.s32.totalorder %s17, 1
      %s280 = scalar_select %p279, %s17, 1
      %p281 = scmp.lt.s32.totalorder %s278, 7
      %s282 = scalar_select %p281, %s278, 7
      %s283 = smul.addr %s280, 8
      %s284 = sadd.s32 %s282, %s283
      %s285 = smul.addr %s284, 8
      %s286 = scalar_lea.vmem %s2, %s285
      // Predicated region
      $region29: #{dgcnn_forward.3} parent=27 // pred_check
        %p287 = pneg %p99
      $region30: #{dgcnn_forward.3} parent=27 // pred_check_branch
        %289 = sbr.rel (%p287) target = $region32
      $region31: #{dgcnn_forward.3} parent=27 // pred_region
        %s290 = smul.u32 4, %s18
      $region32: #{dgcnn_forward.3} parent=27 // pred_fallthru
        _
    $region28: #{dgcnn_forward.3} parent=5 // pred_fallthru
      _
    %p291 = scmp.le.s32.totalorder 2, %s8
    // Predicated region
    $region33: #{dgcnn_forward.3} parent=5 // pred_check
      %p292 = pneg %p291
    $region34: #{dgcnn_forward.3} parent=5 // pred_check_branch
      %294 = sbr.rel (%p292) target = $region36
    $region35: #{dgcnn_forward.3} parent=5 // pred_region
      %s295 = ssub.s32 %s8, 2
      // Predicated region
      $region37: #{dgcnn_forward.3} parent=35 // pred_check
        %p296 = pneg %p105
      $region38: #{dgcnn_forward.3} parent=35 // pred_check_branch
        %298 = sbr.rel (%p296) target = $region40
      $region39: #{dgcnn_forward.3} parent=35 // pred_region
        %s299 = smul.u32 4, %s20
        %p300 = scmp.lt.s32.totalorder %s19, 1
        %s301 = scalar_select %p300, %s19, 1
        %p302 = scmp.lt.s32.totalorder %s299, 7
        %s303 = scalar_select %p302, %s299, 7
        %s304 = smul.addr %s301, 8
        %s305 = sadd.s32 %s303, %s304
        %s306 = smul.addr %s305, 8
        %s307 = scalar_lea.vmem %s2, %s306
      $region40: #{dgcnn_forward.3} parent=35 // pred_fallthru
        _
    $region36: #{dgcnn_forward.3} parent=5 // pred_fallthru
      _
  $region6: #{dgcnn_forward.3} parent=0 // loop_footer
    %s12 = sadd.s32 1, %s8
  $region7: #{dgcnn_forward.3} parent=0 // loop_footer_branch
    %7 = sbr.rel target = $region3
  $region8: #{dgcnn_forward.3} parent=0 // loop_exit
    _

// kernel: dgcnn_forward.4
$region0: #{dgcnn_forward.4}
  #allocation0 [shape = 'u32[]', space=smem, size = 0x4, offset = 0x4, fixed_abs, tag = 'smem constant byte address 0x4 - core index']
  #allocation1 [shape = 'u32[144,128]{1,0:T(1,128)}', space=vmem, size = 0x12000, scoped, tag = 'internal scratch']
  %s0 = inlined_call_operand.vmem [shape: bf16[2,64,4], index: 0, kind: input, shape index: {}]
  %s1 = inlined_call_operand.vmem [shape: bf16[2,20,64,4], index: 1, kind: input, shape index: {}]
  %s2 = inlined_call_operand.vmem [shape: bf16[4,128], index: 2, kind: input, shape index: {}]
  %s3 = inlined_call_operand.vmem [shape: bf16[4,128], index: 3, kind: input, shape index: {}]
  %s4 = inlined_call_operand.vmem [shape: f32[1,128], index: 4, kind: input, shape index: {}]
  %s5 = inlined_call_operand.vmem [shape: bf16[128,128], index: 5, kind: input, shape index: {}]
  %s6 = inlined_call_operand.vmem [shape: f32[1,128], index: 6, kind: input, shape index: {}]
  %s7 = inlined_call_operand.vmem [shape: bf16[128,128], index: 7, kind: input, shape index: {}]
  %s8 = inlined_call_operand.vmem [shape: f32[1,128], index: 8, kind: input, shape index: {}]
  %s9 = inlined_call_operand.vmem [shape: bf16[128,128], index: 9, kind: input, shape index: {}]
  %s10 = inlined_call_operand.vmem [shape: f32[1,128], index: 10, kind: input, shape index: {}]
  %s11 = inlined_call_operand.vmem [shape: bf16[128,1024], index: 11, kind: input, shape index: {}]
  %s12 = inlined_call_operand.vmem [shape: f32[1,1024], index: 12, kind: input, shape index: {}]
  %s13 = inlined_call_operand.vmem [shape: f32[2,1,1024], index: 13, kind: output, shape index: {}]
  %s14 = sld [smem:[#allocation0]]
  $region130: #{dgcnn_forward.4} parent=0
    _
  %s16 = ssub.s32 1, %s14
  %s17 = scalar_select 0, %s16, %s14
  $region1: #{dgcnn_forward.4} parent=0
    #allocation2 [shape = 'u8[327680]{0}', space=vmem, size = 0x50000, scoped, tag = 'input window, operand 1']
    loop: start=0, step=1, limit=6
    $region2: #{dgcnn_forward.4} parent=1 // loop_pre_header
      _
    $region3: #{dgcnn_forward.4} parent=1 // loop_header
      %s19 = sphi 0, %s23
      %p20 = scmp.ge.s32.totalorder %s19, 6
      %s26 = sphi 0, %s38
      %s27 = sphi 0, %s34
      %s28 = sphi 0, %s26
      %s29 = sphi 0, %s27
      %s30 = sphi 0, %s28
      %s31 = sphi 0, %s29
      %s43 = sphi 0, %s45
      %s46 = sphi 0, %s43
      %s47 = sphi 0, %s46
      %s63 = sphi 0, %s47
      %s71 = sphi 0, %s73
      %s74 = sphi 0, %s71
      %s75 = sphi 0, %s74
      %s91 = sphi 0, %s75
      %s95 = sphi 0, %s95
      %s97 = sphi 0, %s95
      %s98 = sphi 0, %s97
      %s112 = sphi 0, %s98
      %s116 = sphi 0, %s116
      %s118 = sphi 0, %s116
      %s119 = sphi 0, %s118
      %s133 = sphi 0, %s119
      %s137 = sphi 0, %s137
      %s139 = sphi 0, %s137
      %s140 = sphi 0, %s139
      %s154 = sphi 0, %s140
      %s158 = sphi 0, %s158
      %s160 = sphi 0, %s158
      %s161 = sphi 0, %s160
      %s175 = sphi 0, %s161
      %s179 = sphi 0, %s179
      %s181 = sphi 0, %s179
      %s182 = sphi 0, %s181
      %s196 = sphi 0, %s182
      %s200 = sphi 0, %s200
      %s202 = sphi 0, %s200
      %s203 = sphi 0, %s202
      %s217 = sphi 0, %s203
      %s221 = sphi 0, %s221
      %s223 = sphi 0, %s221
      %s224 = sphi 0, %s223
      %s238 = sphi 0, %s224
      %s242 = sphi 0, %s242
      %s244 = sphi 0, %s242
      %s245 = sphi 0, %s244
      %s259 = sphi 0, %s245
      %s263 = sphi 0, %s263
      %s265 = sphi 0, %s263
      %s266 = sphi 0, %s265
      %s280 = sphi 0, %s266
      %s284 = sphi 0, %s284
      %s286 = sphi 0, %s284
      %s287 = sphi 0, %s286
      %s301 = sphi 0, %s287
      %s305 = sphi 0, %s305
      %s307 = sphi 0, %s305
      %s308 = sphi 0, %s307
      %s322 = sphi 0, %s308
      %s328 = sphi 0, %s330
      %s331 = sphi 0, %s328
      %s332 = sphi 0, %s331
      %s348 = sphi 0, %s332
    $region4: #{dgcnn_forward.4} parent=1 // loop_header_branch
      %22 = sbr.rel (%p20) target = $region8
    $region5: #{dgcnn_forward.4} parent=1 // loop_body
      %s24 = ssub.s32 %s19, 1
      %s25 = ssub.s32 %s19, 2
      %s32 = sadd.s32 1, %s27
      %p33 = scmp.ge.s32.totalorder %s32, 2
      %s34 = scalar_select %p33, 0, %s32
      %s35 = sadd.s32 1, %s26
      %s36 = scalar_select %p33, %s35, %s26
      %p37 = scmp.ge.s32.totalorder %s36, 2
      %s38 = scalar_select %p37, 0, %s36
      %s39 = ssub.s32 %s26, %s38
      %s40 = ssub.s32 %s27, %s34
      %s41 = sor.u32 %s39, %s40
      %p42 = scmp.eq.s32.totalorder %s41, 0
      %s44 = sadd.s32 %s43, 1
      %s45 = scalar_select %p42, %s43, %s44
      %p48 = pneg %p42
      %p49 = scmp.eq.s32.totalorder %s19, 3
      %p50 = por %p48, %p49
      %p51 = scmp.ne.s32.totalorder %s43, %s46
      %p52 = scmp.eq.s32.totalorder %s19, 0
      %p53 = por %p51, %p52
      %p54 = scmp.ne.s32.totalorder %s43, %s46
      %p55 = scmp.eq.s32.totalorder %s24, 3
      %p56 = por %p54, %p55
      %p57 = scmp.ne.s32.totalorder %s46, %s47
      %p58 = scmp.eq.s32.totalorder %s24, 0
      %p59 = por %p57, %p58
      %p60 = scmp.ne.s32.totalorder %s46, %s47
      %p61 = scmp.eq.s32.totalorder %s25, 3
      %p62 = por %p60, %p61
      %p64 = scmp.ne.s32.totalorder %s47, %s63
      %p65 = scmp.eq.s32.totalorder %s25, 0
      %p66 = por %p64, %p65
      %s67 = ssub.s32 %s26, %s38
      %s68 = ssub.s32 %s27, %s34
      %s69 = sor.u32 %s67, %s68
      %p70 = scmp.eq.s32.totalorder %s69, 0
      %s72 = sadd.s32 %s71, 1
      %s73 = scalar_select %p70, %s71, %s72
      %p76 = pneg %p70
      %p77 = scmp.eq.s32.totalorder %s19, 3
      %p78 = por %p76, %p77
      %p79 = scmp.ne.s32.totalorder %s71, %s74
      %p80 = scmp.eq.s32.totalorder %s19, 0
      %p81 = por %p79, %p80
      %p82 = scmp.ne.s32.totalorder %s71, %s74
      %p83 = scmp.eq.s32.totalorder %s24, 3
      %p84 = por %p82, %p83
      %p85 = scmp.ne.s32.totalorder %s74, %s75
      %p86 = scmp.eq.s32.totalorder %s24, 0
      %p87 = por %p85, %p86
      %p88 = scmp.ne.s32.totalorder %s74, %s75
      %p89 = scmp.eq.s32.totalorder %s25, 3
      %p90 = por %p88, %p89
      %p92 = scmp.ne.s32.totalorder %s75, %s91
      %p93 = scmp.eq.s32.totalorder %s25, 0
      %p94 = por %p92, %p93
      %s96 = sadd.s32 %s95, 1
      %p99 = scmp.eq.s32.totalorder %s19, 3
      %p100 = scmp.ne.s32.totalorder %s95, %s97
      %p101 = scmp.eq.s32.totalorder %s19, 0
      %p102 = por %p100, %p101
      %p103 = scmp.ne.s32.totalorder %s95, %s97
      %p104 = scmp.eq.s32.totalorder %s24, 3
      %p105 = por %p103, %p104
      %p106 = scmp.ne.s32.totalorder %s97, %s98
      %p107 = scmp.eq.s32.totalorder %s24, 0
      %p108 = por %p106, %p107
      %p109 = scmp.ne.s32.totalorder %s97, %s98
      %p110 = scmp.eq.s32.totalorder %s25, 3
      %p111 = por %p109, %p110
      %p113 = scmp.ne.s32.totalorder %s98, %s112
      %p114 = scmp.eq.s32.totalorder %s25, 0
      %p115 = por %p113, %p114
      %s117 = sadd.s32 %s116, 1
      %p120 = scmp.eq.s32.totalorder %s19, 3
      %p121 = scmp.ne.s32.totalorder %s116, %s118
      %p122 = scmp.eq.s32.totalorder %s19, 0
      %p123 = por %p121, %p122
      %p124 = scmp.ne.s32.totalorder %s116, %s118
      %p125 = scmp.eq.s32.totalorder %s24, 3
      %p126 = por %p124, %p125
      %p127 = scmp.ne.s32.totalorder %s118, %s119
      %p128 = scmp.eq.s32.totalorder %s24, 0
      %p129 = por %p127, %p128
      %p130 = scmp.ne.s32.totalorder %s118, %s119
      %p131 = scmp.eq.s32.totalorder %s25, 3
      %p132 = por %p130, %p131
      %p134 = scmp.ne.s32.totalorder %s119, %s133
      %p135 = scmp.eq.s32.totalorder %s25, 0
      %p136 = por %p134, %p135
      %s138 = sadd.s32 %s137, 1
      %p141 = scmp.eq.s32.totalorder %s19, 3
      %p142 = scmp.ne.s32.totalorder %s137, %s139
      %p143 = scmp.eq.s32.totalorder %s19, 0
      %p144 = por %p142, %p143
      %p145 = scmp.ne.s32.totalorder %s137, %s139
      %p146 = scmp.eq.s32.totalorder %s24, 3
      %p147 = por %p145, %p146
      %p148 = scmp.ne.s32.totalorder %s139, %s140
      %p149 = scmp.eq.s32.totalorder %s24, 0
      %p150 = por %p148, %p149
      %p151 = scmp.ne.s32.totalorder %s139, %s140
      %p152 = scmp.eq.s32.totalorder %s25, 3
      %p153 = por %p151, %p152
      %p155 = scmp.ne.s32.totalorder %s140, %s154
      %p156 = scmp.eq.s32.totalorder %s25, 0
      %p157 = por %p155, %p156
      %s159 = sadd.s32 %s158, 1
      %p162 = scmp.eq.s32.totalorder %s19, 3
      %p163 = scmp.ne.s32.totalorder %s158, %s160
      %p164 = scmp.eq.s32.totalorder %s19, 0
      %p165 = por %p163, %p164
      %p166 = scmp.ne.s32.totalorder %s158, %s160
      %p167 = scmp.eq.s32.totalorder %s24, 3
      %p168 = por %p166, %p167
      %p169 = scmp.ne.s32.totalorder %s160, %s161
      %p170 = scmp.eq.s32.totalorder %s24, 0
      %p171 = por %p169, %p170
      %p172 = scmp.ne.s32.totalorder %s160, %s161
      %p173 = scmp.eq.s32.totalorder %s25, 3
      %p174 = por %p172, %p173
      %p176 = scmp.ne.s32.totalorder %s161, %s175
      %p177 = scmp.eq.s32.totalorder %s25, 0
      %p178 = por %p176, %p177
      %s180 = sadd.s32 %s179, 1
      %p183 = scmp.eq.s32.totalorder %s19, 3
      %p184 = scmp.ne.s32.totalorder %s179, %s181
      %p185 = scmp.eq.s32.totalorder %s19, 0
      %p186 = por %p184, %p185
      %p187 = scmp.ne.s32.totalorder %s179, %s181
      %p188 = scmp.eq.s32.totalorder %s24, 3
      %p189 = por %p187, %p188
      %p190 = scmp.ne.s32.totalorder %s181, %s182
      %p191 = scmp.eq.s32.totalorder %s24, 0
      %p192 = por %p190, %p191
      %p193 = scmp.ne.s32.totalorder %s181, %s182
      %p194 = scmp.eq.s32.totalorder %s25, 3
      %p195 = por %p193, %p194
      %p197 = scmp.ne.s32.totalorder %s182, %s196
      %p198 = scmp.eq.s32.totalorder %s25, 0
      %p199 = por %p197, %p198
      %s201 = sadd.s32 %s200, 1
      %p204 = scmp.eq.s32.totalorder %s19, 3
      %p205 = scmp.ne.s32.totalorder %s200, %s202
      %p206 = scmp.eq.s32.totalorder %s19, 0
      %p207 = por %p205, %p206
      %p208 = scmp.ne.s32.totalorder %s200, %s202
      %p209 = scmp.eq.s32.totalorder %s24, 3
      %p210 = por %p208, %p209
      %p211 = scmp.ne.s32.totalorder %s202, %s203
      %p212 = scmp.eq.s32.totalorder %s24, 0
      %p213 = por %p211, %p212
      %p214 = scmp.ne.s32.totalorder %s202, %s203
      %p215 = scmp.eq.s32.totalorder %s25, 3
      %p216 = por %p214, %p215
      %p218 = scmp.ne.s32.totalorder %s203, %s217
      %p219 = scmp.eq.s32.totalorder %s25, 0
      %p220 = por %p218, %p219
      %s222 = sadd.s32 %s221, 1
      %p225 = scmp.eq.s32.totalorder %s19, 3
      %p226 = scmp.ne.s32.totalorder %s221, %s223
      %p227 = scmp.eq.s32.totalorder %s19, 0
      %p228 = por %p226, %p227
      %p229 = scmp.ne.s32.totalorder %s221, %s223
      %p230 = scmp.eq.s32.totalorder %s24, 3
      %p231 = por %p229, %p230
      %p232 = scmp.ne.s32.totalorder %s223, %s224
      %p233 = scmp.eq.s32.totalorder %s24, 0
      %p234 = por %p232, %p233
      %p235 = scmp.ne.s32.totalorder %s223, %s224
      %p236 = scmp.eq.s32.totalorder %s25, 3
      %p237 = por %p235, %p236
      %p239 = scmp.ne.s32.totalorder %s224, %s238
      %p240 = scmp.eq.s32.totalorder %s25, 0
      %p241 = por %p239, %p240
      %s243 = sadd.s32 %s242, 1
      %p246 = scmp.eq.s32.totalorder %s19, 3
      %p247 = scmp.ne.s32.totalorder %s242, %s244
      %p248 = scmp.eq.s32.totalorder %s19, 0
      %p249 = por %p247, %p248
      %p250 = scmp.ne.s32.totalorder %s242, %s244
      %p251 = scmp.eq.s32.totalorder %s24, 3
      %p252 = por %p250, %p251
      %p253 = scmp.ne.s32.totalorder %s244, %s245
      %p254 = scmp.eq.s32.totalorder %s24, 0
      %p255 = por %p253, %p254
      %p256 = scmp.ne.s32.totalorder %s244, %s245
      %p257 = scmp.eq.s32.totalorder %s25, 3
      %p258 = por %p256, %p257
      %p260 = scmp.ne.s32.totalorder %s245, %s259
      %p261 = scmp.eq.s32.totalorder %s25, 0
      %p262 = por %p260, %p261
      %s264 = sadd.s32 %s263, 1
      %p267 = scmp.eq.s32.totalorder %s19, 3
      %p268 = scmp.ne.s32.totalorder %s263, %s265
      %p269 = scmp.eq.s32.totalorder %s19, 0
      %p270 = por %p268, %p269
      %p271 = scmp.ne.s32.totalorder %s263, %s265
      %p272 = scmp.eq.s32.totalorder %s24, 3
      %p273 = por %p271, %p272
      %p274 = scmp.ne.s32.totalorder %s265, %s266
      %p275 = scmp.eq.s32.totalorder %s24, 0
      %p276 = por %p274, %p275
      %p277 = scmp.ne.s32.totalorder %s265, %s266
      %p278 = scmp.eq.s32.totalorder %s25, 3
      %p279 = por %p277, %p278
      %p281 = scmp.ne.s32.totalorder %s266, %s280
      %p282 = scmp.eq.s32.totalorder %s25, 0
      %p283 = por %p281, %p282
      %s285 = sadd.s32 %s284, 1
      %p288 = scmp.eq.s32.totalorder %s19, 3
      %p289 = scmp.ne.s32.totalorder %s284, %s286
      %p290 = scmp.eq.s32.totalorder %s19, 0
      %p291 = por %p289, %p290
      %p292 = scmp.ne.s32.totalorder %s284, %s286
      %p293 = scmp.eq.s32.totalorder %s24, 3
      %p294 = por %p292, %p293
      %p295 = scmp.ne.s32.totalorder %s286, %s287
      %p296 = scmp.eq.s32.totalorder %s24, 0
      %p297 = por %p295, %p296
      %p298 = scmp.ne.s32.totalorder %s286, %s287
      %p299 = scmp.eq.s32.totalorder %s25, 3
      %p300 = por %p298, %p299
      %p302 = scmp.ne.s32.totalorder %s287, %s301
      %p303 = scmp.eq.s32.totalorder %s25, 0
      %p304 = por %p302, %p303
      %s306 = sadd.s32 %s305, 1
      %p309 = scmp.eq.s32.totalorder %s19, 3
      %p310 = scmp.ne.s32.totalorder %s305, %s307
      %p311 = scmp.eq.s32.totalorder %s19, 0
      %p312 = por %p310, %p311
      %p313 = scmp.ne.s32.totalorder %s305, %s307
      %p314 = scmp.eq.s32.totalorder %s24, 3
      %p315 = por %p313, %p314
      %p316 = scmp.ne.s32.totalorder %s307, %s308
      %p317 = scmp.eq.s32.totalorder %s24, 0
      %p318 = por %p316, %p317
      %p319 = scmp.ne.s32.totalorder %s307, %s308
      %p320 = scmp.eq.s32.totalorder %s25, 3
      %p321 = por %p319, %p320
      %p323 = scmp.ne.s32.totalorder %s308, %s322
      %p324 = scmp.eq.s32.totalorder %s25, 0
      %p325 = por %p323, %p324
      %s326 = ssub.s32 %s26, %s38
      %p327 = scmp.eq.s32.totalorder %s326, 0
      %s329 = sadd.s32 %s328, 1
      %s330 = scalar_select %p327, %s328, %s329
      %p333 = pneg %p327
      %p334 = scmp.eq.s32.totalorder %s19, 3
      %p335 = por %p333, %p334
      %p336 = scmp.ne.s32.totalorder %s328, %s331
      %p337 = scmp.eq.s32.totalorder %s19, 0
      %p338 = por %p336, %p337
      %p339 = scmp.ne.s32.totalorder %s328, %s331
      %p340 = scmp.eq.s32.totalorder %s24, 3
      %p341 = por %p339, %p340
      %p342 = scmp.ne.s32.totalorder %s331, %s332
      %p343 = scmp.eq.s32.totalorder %s24, 0
      %p344 = por %p342, %p343
      %p345 = scmp.ne.s32.totalorder %s331, %s332
      %p346 = scmp.eq.s32.totalorder %s25, 3
      %p347 = por %p345, %p346
      %p349 = scmp.ne.s32.totalorder %s332, %s348
      %p350 = scmp.eq.s32.totalorder %s25, 0
      %p351 = por %p349, %p350
      %p352 = scmp.le.s32.totalorder 1, %s19
      %p353 = scmp.lt.s32.totalorder %s19, 5
      %p354 = pnand %p352, %p353
      %p355 = pneg %p354
      // Predicated region
      $region9: #{dgcnn_forward.4} parent=5 // pred_check
        _
      $region10: #{dgcnn_forward.4} parent=5 // pred_check_branch
        %357 = sbr.rel (%p354) target = $region12
      $region11: #{dgcnn_forward.4} parent=5 // pred_region
        %s358 = ssub.s32 %s19, 1
        // Predicated region
        $region13: #{dgcnn_forward.4} parent=11 // pred_check
          %p359 = pneg %p108
        $region14: #{dgcnn_forward.4} parent=11 // pred_check_branch
          %361 = sbr.rel (%p359) target = $region16
        $region15: #{dgcnn_forward.4} parent=11 // pred_region
          _
        $region16: #{dgcnn_forward.4} parent=11 // pred_fallthru
          _
        // Predicated region
        $region17: #{dgcnn_forward.4} parent=11 // pred_check
          %p362 = pneg %p129
        $region18: #{dgcnn_forward.4} parent=11 // pred_check_branch
          %364 = sbr.rel (%p362) target = $region20
        $region19: #{dgcnn_forward.4} parent=11 // pred_region
          _
        $region20: #{dgcnn_forward.4} parent=11 // pred_fallthru
          _
        // Predicated region
        $region21: #{dgcnn_forward.4} parent=11 // pred_check
          %p365 = pneg %p150
        $region22: #{dgcnn_forward.4} parent=11 // pred_check_branch
          %367 = sbr.rel (%p365) target = $region24
        $region23: #{dgcnn_forward.4} parent=11 // pred_region
          _
        $region24: #{dgcnn_forward.4} parent=11 // pred_fallthru
          _
        // Predicated region
        $region25: #{dgcnn_forward.4} parent=11 // pred_check
          %p368 = pneg %p171
        $region26: #{dgcnn_forward.4} parent=11 // pred_check_branch
          %370 = sbr.rel (%p368) target = $region28
        $region27: #{dgcnn_forward.4} parent=11 // pred_region
          _
        $region28: #{dgcnn_forward.4} parent=11 // pred_fallthru
          _
        // Predicated region
        $region29: #{dgcnn_forward.4} parent=11 // pred_check
          %p371 = pneg %p192
        $region30: #{dgcnn_forward.4} parent=11 // pred_check_branch
          %373 = sbr.rel (%p371) target = $region32
        $region31: #{dgcnn_forward.4} parent=11 // pred_region
          _
        $region32: #{dgcnn_forward.4} parent=11 // pred_fallthru
          _
        // Predicated region
        $region33: #{dgcnn_forward.4} parent=11 // pred_check
          %p374 = pneg %p213
        $region34: #{dgcnn_forward.4} parent=11 // pred_check_branch
          %376 = sbr.rel (%p374) target = $region36
        $region35: #{dgcnn_forward.4} parent=11 // pred_region
          _
        $region36: #{dgcnn_forward.4} parent=11 // pred_fallthru
          _
        // Predicated region
        $region37: #{dgcnn_forward.4} parent=11 // pred_check
          %p377 = pneg %p234
        $region38: #{dgcnn_forward.4} parent=11 // pred_check_branch
          %379 = sbr.rel (%p377) target = $region40
        $region39: #{dgcnn_forward.4} parent=11 // pred_region
          _
        $region40: #{dgcnn_forward.4} parent=11 // pred_fallthru
          _
        // Predicated region
        $region41: #{dgcnn_forward.4} parent=11 // pred_check
          %p380 = pneg %p255
        $region42: #{dgcnn_forward.4} parent=11 // pred_check_branch
          %382 = sbr.rel (%p380) target = $region44
        $region43: #{dgcnn_forward.4} parent=11 // pred_region
          _
        $region44: #{dgcnn_forward.4} parent=11 // pred_fallthru
          _
        // Predicated region
        $region45: #{dgcnn_forward.4} parent=11 // pred_check
          %p383 = pneg %p276
        $region46: #{dgcnn_forward.4} parent=11 // pred_check_branch
          %385 = sbr.rel (%p383) target = $region48
        $region47: #{dgcnn_forward.4} parent=11 // pred_region
          _
        $region48: #{dgcnn_forward.4} parent=11 // pred_fallthru
          _
        // Predicated region
        $region49: #{dgcnn_forward.4} parent=11 // pred_check
          %p386 = pneg %p297
        $region50: #{dgcnn_forward.4} parent=11 // pred_check_branch
          %388 = sbr.rel (%p386) target = $region52
        $region51: #{dgcnn_forward.4} parent=11 // pred_region
          _
        $region52: #{dgcnn_forward.4} parent=11 // pred_fallthru
          _
        // Predicated region
        $region53: #{dgcnn_forward.4} parent=11 // pred_check
          %p389 = pneg %p318
        $region54: #{dgcnn_forward.4} parent=11 // pred_check_branch
          %391 = sbr.rel (%p389) target = $region56
        $region55: #{dgcnn_forward.4} parent=11 // pred_region
          _
        $region56: #{dgcnn_forward.4} parent=11 // pred_fallthru
          _
      $region12: #{dgcnn_forward.4} parent=5 // pred_fallthru
        _
      %p392 = scmp.lt.s32.totalorder %s19, 4
      // Predicated region
      $region57: #{dgcnn_forward.4} parent=5 // pred_check
        %p393 = pneg %p392
      $region58: #{dgcnn_forward.4} parent=5 // pred_check_branch
        %395 = sbr.rel (%p393) target = $region60
      $region59: #{dgcnn_forward.4} parent=5 // pred_region
        // Predicated region
        $region61: #{dgcnn_forward.4} parent=59 // pred_check
          %p396 = pneg %p53
        $region62: #{dgcnn_forward.4} parent=59 // pred_check_branch
          %398 = sbr.rel (%p396) target = $region64
        $region63: #{dgcnn_forward.4} parent=59 // pred_region
          %s399 = smul.u32 4, %s27
          %p400 = scmp.lt.s32.totalorder %s26, 1
          %s401 = scalar_select %p400, %s26, 1
          %p402 = scmp.lt.s32.totalorder %s399, 7
          %s403 = scalar_select %p402, %s399, 7
          %s404 = smul.addr %s401, 8
          %s405 = sadd.s32 %s403, %s404
          %s406 = smul.addr %s405, 4
          %s407 = scalar_lea.vmem %s0, %s406
          %s408 = smul.u32 4, %s27
        $region64: #{dgcnn_forward.4} parent=59 // pred_fallthru
          _
        // Predicated region
        $region65: #{dgcnn_forward.4} parent=59 // pred_check
          %p409 = pneg %p81
        $region66: #{dgcnn_forward.4} parent=59 // pred_check_branch
          %411 = sbr.rel (%p409) target = $region68
        $region67: #{dgcnn_forward.4} parent=59 // pred_region
          %s412 = sand.u32 %s71, 1
          %s413 = sand.u32 %s71, 1
          %s414 = smul.addr %s413, 320
          %s415 = scalar_lea.vmem [#allocation2], %s414
          %s416 = smul.u32 4, %s27
          %s417 = smul.addr %s26, 160
          %s418 = sadd.s32 %s416, %s417
          %s419 = smul.addr %s418, 4
          %s420 = scalar_lea.vmem %s1, %s419
          // Predicated region
          $region69: #{dgcnn_forward.4} parent=67 // pred_check
            _
          $region70: #{dgcnn_forward.4} parent=67 // pred_check_branch
            %422 = sbr.rel (0) target = $region72
          $region71: #{dgcnn_forward.4} parent=67 // pred_region
            // Predicated region
            $region73: #{dgcnn_forward.4} parent=71 // pred_check
              _
            $region74: #{dgcnn_forward.4} parent=71 // pred_check_branch
              %424 = sbr.rel target = $region76
            $region75: #{dgcnn_forward.4} parent=71 // pred_region
              // Predicated region
              $region88: #{dgcnn_forward.4} parent=75 // pred_check
                _
              $region89: #{dgcnn_forward.4} parent=75 // pred_check_branch
                %597 = sbr.rel (0) target = $region91
              $region90: #{dgcnn_forward.4} parent=75 // pred_region
                loop: start=0, step=1, limit=1
                $region92: #{dgcnn_forward.4} parent=90 // loop_pre_header
                  _
                $region93: #{dgcnn_forward.4} parent=90 // loop_header
                  %s599 = sphi 0, %s603
                  %p600 = scmp.ge.s32.totalorder %s599, 1
                  %s604 = sphi %s420, %s420
                  %s605 = sphi %s415, %s415
                $region94: #{dgcnn_forward.4} parent=90 // loop_header_branch
                  %602 = sbr.rel (%p600) target = $region98
                $region95: #{dgcnn_forward.4} parent=90 // loop_body
                  _
                $region96: #{dgcnn_forward.4} parent=90 // loop_footer
                  %s603 = sadd.s32 1, %s599
                $region97: #{dgcnn_forward.4} parent=90 // loop_footer_branch
                  %598 = sbr.rel target = $region93
                $region98: #{dgcnn_forward.4} parent=90 // loop_exit
                  _
                loop: start=0, step=1, limit=1
                $region99: #{dgcnn_forward.4} parent=90 // loop_pre_header
                  _
                $region100: #{dgcnn_forward.4} parent=90 // loop_header
                  %s608 = sphi 0, %s612
                  %p609 = scmp.ge.s32.totalorder %s608, 1
                  %s613 = sphi %s420, %s420
                  %s614 = sphi %s415, %s415
                $region101: #{dgcnn_forward.4} parent=90 // loop_header_branch
                  %611 = sbr.rel (%p609) target = $region105
                $region102: #{dgcnn_forward.4} parent=90 // loop_body
                  %v615 = vld [vmem:[%s613] sm:$0xf]
                  %616 = vst [vmem:[%s614] sm:$0xf] %v615
                  %v617 = vld [vmem:[%s613 + $0x4] sm:$0xf]
                  %618 = vst [vmem:[%s614 + $0x4] sm:$0xf] %v617
                  %v619 = vld [vmem:[%s613 + $0x8] sm:$0xf]
                  %620 = vst [vmem:[%s614 + $0x8] sm:$0xf] %v619
                  %v621 = vld [vmem:[%s613 + $0xc] sm:$0xf]
                  %622 = vst [vmem:[%s614 + $0xc] sm:$0xf] %v621
                  %v623 = vld [vmem:[%s613 + $0x20] sm:$0xf]
                  %624 = vst [vmem:[%s614 + $0x10] sm:$0xf] %v623
                  %v625 = vld [vmem:[%s613 + $0x24] sm:$0xf]
                  %626 = vst [vmem:[%s614 + $0x14] sm:$0xf] %v625
                  %v627 = vld [vmem:[%s613 + $0x28] sm:$0xf]
                  %628 = vst [vmem:[%s614 + $0x18] sm:$0xf] %v627
                  %v629 = vld [vmem:[%s613 + $0x2c] sm:$0xf]
                  %630 = vst [vmem:[%s614 + $0x1c] sm:$0xf] %v629
                  %v631 = vld [vmem:[%s613 + $0x40] sm:$0xf]
                  %632 = vst [vmem:[%s614 + $0x20] sm:$0xf] %v631
                  %v633 = vld [vmem:[%s613 + $0x44] sm:$0xf]
                  %634 = vst [vmem:[%s614 + $0x24] sm:$0xf] %v633
                  %v635 = vld [vmem:[%s613 + $0x48] sm:$0xf]
                  %636 = vst [vmem:[%s614 + $0x28] sm:$0xf] %v635
                  %v637 = vld [vmem:[%s613 + $0x4c] sm:$0xf]
                  %638 = vst [vmem:[%s614 + $0x2c] sm:$0xf] %v637
                  %v639 = vld [vmem:[%s613 + $0x60] sm:$0xf]
                  %640 = vst [vmem:[%s614 + $0x30] sm:$0xf] %v639
                  %v641 = vld [vmem:[%s613 + $0x64] sm:$0xf]
                  %642 = vst [vmem:[%s614 + $0x34] sm:$0xf] %v641
                  %v643 = vld [vmem:[%s613 + $0x68] sm:$0xf]
                  %644 = vst [vmem:[%s614 + $0x38] sm:$0xf] %v643
                  %v645 = vld [vmem:[%s613 + $0x6c] sm:$0xf]
                  %646 = vst [vmem:[%s614 + $0x3c] sm:$0xf] %v645
                  %v647 = vld [vmem:[%s613 + $0x80] sm:$0xf]
                  %648 = vst [vmem:[%s614 + $0x40] sm:$0xf] %v647
                  %v649 = vld [vmem:[%s613 + $0x84] sm:$0xf]
                  %650 = vst [vmem:[%s614 + $0x44] sm:$0xf] %v649
                  %v651 = vld [vmem:[%s613 + $0x88] sm:$0xf]
                  %652 = vst [vmem:[%s614 + $0x48] sm:$0xf] %v651
                  %v653 = vld [vmem:[%s613 + $0x8c] sm:$0xf]
                  %654 = vst [vmem:[%s614 + $0x4c] sm:$0xf] %v653
                  %v655 = vld [vmem:[%s613 + $0xa0] sm:$0xf]
                  %656 = vst [vmem:[%s614 + $0x50] sm:$0xf] %v655
                  %v657 = vld [vmem:[%s613 + $0xa4] sm:$0xf]
                  %658 = vst [vmem:[%s614 + $0x54] sm:$0xf] %v657
                  %v659 = vld [vmem:[%s613 + $0xa8] sm:$0xf]
                  %660 = vst [vmem:[%s614 + $0x58] sm:$0xf] %v659
                  %v661 = vld [vmem:[%s613 + $0xac] sm:$0xf]
                  %662 = vst [vmem:[%s614 + $0x5c] sm:$0xf] %v661
                  %v663 = vld [vmem:[%s613 + $0xc0] sm:$0xf]
                  %664 = vst [vmem:[%s614 + $0x60] sm:$0xf] %v663
                  %v665 = vld [vmem:[%s613 + $0xc4] sm:$0xf]
                  %666 = vst [vmem:[%s614 + $0x64] sm:$0xf] %v665
                  %v667 = vld [vmem:[%s613 + $0xc8] sm:$0xf]
                  %668 = vst [vmem:[%s614 + $0x68] sm:$0xf] %v667
                  %v669 = vld [vmem:[%s613 + $0xcc] sm:$0xf]
                  %670 = vst [vmem:[%s614 + $0x6c] sm:$0xf] %v669
                  %v671 = vld [vmem:[%s613 + $0xe0] sm:$0xf]
                  %672 = vst [vmem:[%s614 + $0x70] sm:$0xf] %v671
                  %v673 = vld [vmem:[%s613 + $0xe4] sm:$0xf]
                  %674 = vst [vmem:[%s614 + $0x74] sm:$0xf] %v673
                  %v675 = vld [vmem:[%s613 + $0xe8] sm:$0xf]
                  %676 = vst [vmem:[%s614 + $0x78] sm:$0xf] %v675
                  %v677 = vld [vmem:[%s613 + $0xec] sm:$0xf]
                  %678 = vst [vmem:[%s614 + $0x7c] sm:$0xf] %v677
                  %v679 = vld [vmem:[%s613 + $0x100] sm:$0xf]
                  %680 = vst [vmem:[%s614 + $0x80] sm:$0xf] %v679
                  %v681 = vld [vmem:[%s613 + $0x104] sm:$0xf]
                  %682 = vst [vmem:[%s614 + $0x84] sm:$0xf] %v681
                  %v683 = vld [vmem:[%s613 + $0x108] sm:$0xf]
                  %684 = vst [vmem:[%s614 + $0x88] sm:$0xf] %v683
                  %v685 = vld [vmem:[%s613 + $0x10c] sm:$0xf]
                  %686 = vst [vmem:[%s614 + $0x8c] sm:$0xf] %v685
                  %v687 = vld [vmem:[%s613 + $0x120] sm:$0xf]
                  %688 = vst [vmem:[%s614 + $0x90] sm:$0xf] %v687
                  %v689 = vld [vmem:[%s613 + $0x124] sm:$0xf]
                  %690 = vst [vmem:[%s614 + $0x94] sm:$0xf] %v689
                  %v691 = vld [vmem:[%s613 + $0x128] sm:$0xf]
                  %692 = vst [vmem:[%s614 + $0x98] sm:$0xf] %v691
                  %v693 = vld [vmem:[%s613 + $0x12c] sm:$0xf]
                  %694 = vst [vmem:[%s614 + $0x9c] sm:$0xf] %v693
                  %v695 = vld [vmem:[%s613 + $0x140] sm:$0xf]
                  %696 = vst [vmem:[%s614 + $0xa0] sm:$0xf] %v695
                  %v697 = vld [vmem:[%s613 + $0x144] sm:$0xf]
                  %698 = vst [vmem:[%s614 + $0xa4] sm:$0xf] %v697
                  %v699 = vld [vmem:[%s613 + $0x148] sm:$0xf]
                  %700 = vst [vmem:[%s614 + $0xa8] sm:$0xf] %v699
                  %v701 = vld [vmem:[%s613 + $0x14c] sm:$0xf]
                  %702 = vst [vmem:[%s614 + $0xac] sm:$0xf] %v701
                  %v703 = vld [vmem:[%s613 + $0x160] sm:$0xf]
                  %704 = vst [vmem:[%s614 + $0xb0] sm:$0xf] %v703
                  %v705 = vld [vmem:[%s613 + $0x164] sm:$0xf]
                  %706 = vst [vmem:[%s614 + $0xb4] sm:$0xf] %v705
                  %v707 = vld [vmem:[%s613 + $0x168] sm:$0xf]
                  %708 = vst [vmem:[%s614 + $0xb8] sm:$0xf] %v707
                  %v709 = vld [vmem:[%s613 + $0x16c] sm:$0xf]
                  %710 = vst [vmem:[%s614 + $0xbc] sm:$0xf] %v709
                  %v711 = vld [vmem:[%s613 + $0x180] sm:$0xf]
                  %712 = vst [vmem:[%s614 + $0xc0] sm:$0xf] %v711
                  %v713 = vld [vmem:[%s613 + $0x184] sm:$0xf]
                  %714 = vst [vmem:[%s614 + $0xc4] sm:$0xf] %v713
                  %v715 = vld [vmem:[%s613 + $0x188] sm:$0xf]
                  %716 = vst [vmem:[%s614 + $0xc8] sm:$0xf] %v715
                  %v717 = vld [vmem:[%s613 + $0x18c] sm:$0xf]
                  %718 = vst [vmem:[%s614 + $0xcc] sm:$0xf] %v717
                  %v719 = vld [vmem:[%s613 + $0x1a0] sm:$0xf]
                  %720 = vst [vmem:[%s614 + $0xd0] sm:$0xf] %v719
                  %v721 = vld [vmem:[%s613 + $0x1a4] sm:$0xf]
                  %722 = vst [vmem:[%s614 + $0xd4] sm:$0xf] %v721
                  %v723 = vld [vmem:[%s613 + $0x1a8] sm:$0xf]
                  %724 = vst [vmem:[%s614 + $0xd8] sm:$0xf] %v723
                  %v725 = vld [vmem:[%s613 + $0x1ac] sm:$0xf]
                  %726 = vst [vmem:[%s614 + $0xdc] sm:$0xf] %v725
                  %v727 = vld [vmem:[%s613 + $0x1c0] sm:$0xf]
                  %728 = vst [vmem:[%s614 + $0xe0] sm:$0xf] %v727
                  %v729 = vld [vmem:[%s613 + $0x1c4] sm:$0xf]
                  %730 = vst [vmem:[%s614 + $0xe4] sm:$0xf] %v729
                  %v731 = vld [vmem:[%s613 + $0x1c8] sm:$0xf]
                  %732 = vst [vmem:[%s614 + $0xe8] sm:$0xf] %v731
                  %v733 = vld [vmem:[%s613 + $0x1cc] sm:$0xf]
                  %734 = vst [vmem:[%s614 + $0xec] sm:$0xf] %v733
                  %v735 = vld [vmem:[%s613 + $0x1e0] sm:$0xf]
                  %736 = vst [vmem:[%s614 + $0xf0] sm:$0xf] %v735
                  %v737 = vld [vmem:[%s613 + $0x1e4] sm:$0xf]
                  %738 = vst [vmem:[%s614 + $0xf4] sm:$0xf] %v737
                  %v739 = vld [vmem:[%s613 + $0x1e8] sm:$0xf]
                  %740 = vst [vmem:[%s614 + $0xf8] sm:$0xf] %v739
                  %v741 = vld [vmem:[%s613 + $0x1ec] sm:$0xf]
                  %742 = vst [vmem:[%s614 + $0xfc] sm:$0xf] %v741
                  %v743 = vld [vmem:[%s613 + $0x200] sm:$0xf]
                  %744 = vst [vmem:[%s614 + $0x100] sm:$0xf] %v743
                  %v745 = vld [vmem:[%s613 + $0x204] sm:$0xf]
                  %746 = vst [vmem:[%s614 + $0x104] sm:$0xf] %v745
                  %v747 = vld [vmem:[%s613 + $0x208] sm:$0xf]
                  %748 = vst [vmem:[%s614 + $0x108] sm:$0xf] %v747
                  %v749 = vld [vmem:[%s613 + $0x20c] sm:$0xf]
                  %750 = vst [vmem:[%s614 + $0x10c] sm:$0xf] %v749
                  %v751 = vld [vmem:[%s613 + $0x220] sm:$0xf]
                  %752 = vst [vmem:[%s614 + $0x110] sm:$0xf] %v751
                  %v753 = vld [vmem:[%s613 + $0x224] sm:$0xf]
                  %754 = vst [vmem:[%s614 + $0x114] sm:$0xf] %v753
                  %v755 = vld [vmem:[%s613 + $0x228] sm:$0xf]
                  %756 = vst [vmem:[%s614 + $0x118] sm:$0xf] %v755
                  %v757 = vld [vmem:[%s613 + $0x22c] sm:$0xf]
                  %758 = vst [vmem:[%s614 + $0x11c] sm:$0xf] %v757
                  %v759 = vld [vmem:[%s613 + $0x240] sm:$0xf]
                  %760 = vst [vmem:[%s614 + $0x120] sm:$0xf] %v759
                  %v761 = vld [vmem:[%s613 + $0x244] sm:$0xf]
                  %762 = vst [vmem:[%s614 + $0x124] sm:$0xf] %v761
                  %v763 = vld [vmem:[%s613 + $0x248] sm:$0xf]
                  %764 = vst [vmem:[%s614 + $0x128] sm:$0xf] %v763
                  %v765 = vld [vmem:[%s613 + $0x24c] sm:$0xf]
                  %766 = vst [vmem:[%s614 + $0x12c] sm:$0xf] %v765
                  %v767 = vld [vmem:[%s613 + $0x260] sm:$0xf]
                  %768 = vst [vmem:[%s614 + $0x130] sm:$0xf] %v767
                  %v769 = vld [vmem:[%s613 + $0x264] sm:$0xf]
                  %770 = vst [vmem:[%s614 + $0x134] sm:$0xf] %v769
                  %v771 = vld [vmem:[%s613 + $0x268] sm:$0xf]
                  %772 = vst [vmem:[%s614 + $0x138] sm:$0xf] %v771
                  %v773 = vld [vmem:[%s613 + $0x26c] sm:$0xf]
                  %774 = vst [vmem:[%s614 + $0x13c] sm:$0xf] %v773
                $region103: #{dgcnn_forward.4} parent=90 // loop_footer
                  %s612 = sadd.s32 1, %s608
                $region104: #{dgcnn_forward.4} parent=90 // loop_footer_branch
                  %607 = sbr.rel target = $region100
                $region105: #{dgcnn_forward.4} parent=90 // loop_exit
                  _
              $region91: #{dgcnn_forward.4} parent=75 // pred_fallthru
                _
            $region76: #{dgcnn_forward.4} parent=71 // pred_fallthru
              _
            // Predicated region
            $region77: #{dgcnn_forward.4} parent=71 // pred_check
              _
            $region78: #{dgcnn_forward.4} parent=71 // pred_check_branch
              %426 = sbr.rel (0) target = $region80
            $region79: #{dgcnn_forward.4} parent=71 // pred_region
              loop: start=0, step=1, limit=1
              $region81: #{dgcnn_forward.4} parent=79 // loop_pre_header
                _
              $region82: #{dgcnn_forward.4} parent=79 // loop_header
                %s429 = sphi 0, %s433
                %p430 = scmp.ge.s32.totalorder %s429, 1
                %s434 = sphi %s420, %s420
                %s435 = sphi %s415, %s415
              $region83: #{dgcnn_forward.4} parent=79 // loop_header_branch
                %432 = sbr.rel (%p430) target = $region87
              $region84: #{dgcnn_forward.4} parent=79 // loop_body
                %v436 = vld [vmem:[%s434] sm:$0xf]
                %437 = vst [vmem:[%s435] sm:$0xf] %v436
                %v438 = vld [vmem:[%s434 + $0x4] sm:$0xf]
                %439 = vst [vmem:[%s435 + $0x4] sm:$0xf] %v438
                %v440 = vld [vmem:[%s434 + $0x8] sm:$0xf]
                %441 = vst [vmem:[%s435 + $0x8] sm:$0xf] %v440
                %v442 = vld [vmem:[%s434 + $0xc] sm:$0xf]
                %443 = vst [vmem:[%s435 + $0xc] sm:$0xf] %v442
                %v444 = vld [vmem:[%s434 + $0x20] sm:$0xf]
                %445 = vst [vmem:[%s435 + $0x10] sm:$0xf] %v444
                %v446 = vld [vmem:[%s434 + $0x24] sm:$0xf]
                %447 = vst [vmem:[%s435 + $0x14] sm:$0xf] %v446
                %v448 = vld [vmem:[%s434 + $0x28] sm:$0xf]
                %449 = vst [vmem:[%s435 + $0x18] sm:$0xf] %v448
                %v450 = vld [vmem:[%s434 + $0x2c] sm:$0xf]
                %451 = vst [vmem:[%s435 + $0x1c] sm:$0xf] %v450
                %v452 = vld [vmem:[%s434 + $0x40] sm:$0xf]
                %453 = vst [vmem:[%s435 + $0x20] sm:$0xf] %v452
                %v454 = vld [vmem:[%s434 + $0x44] sm:$0xf]
                %455 = vst [vmem:[%s435 + $0x24] sm:$0xf] %v454
                %v456 = vld [vmem:[%s434 + $0x48] sm:$0xf]
                %457 = vst [vmem:[%s435 + $0x28] sm:$0xf] %v456
                %v458 = vld [vmem:[%s434 + $0x4c] sm:$0xf]
                %459 = vst [vmem:[%s435 + $0x2c] sm:$0xf] %v458
                %v460 = vld [vmem:[%s434 + $0x60] sm:$0xf]
                %461 = vst [vmem:[%s435 + $0x30] sm:$0xf] %v460
                %v462 = vld [vmem:[%s434 + $0x64] sm:$0xf]
                %463 = vst [vmem:[%s435 + $0x34] sm:$0xf] %v462
                %v464 = vld [vmem:[%s434 + $0x68] sm:$0xf]
                %465 = vst [vmem:[%s435 + $0x38] sm:$0xf] %v464
                %v466 = vld [vmem:[%s434 + $0x6c] sm:$0xf]
                %467 = vst [vmem:[%s435 + $0x3c] sm:$0xf] %v466
                %v468 = vld [vmem:[%s434 + $0x80] sm:$0xf]
                %469 = vst [vmem:[%s435 + $0x40] sm:$0xf] %v468
                %v470 = vld [vmem:[%s434 + $0x84] sm:$0xf]
                %471 = vst [vmem:[%s435 + $0x44] sm:$0xf] %v470
                %v472 = vld [vmem:[%s434 + $0x88] sm:$0xf]
                %473 = vst [vmem:[%s435 + $0x48] sm:$0xf] %v472
                %v474 = vld [vmem:[%s434 + $0x8c] sm:$0xf]
                %475 = vst [vmem:[%s435 + $0x4c] sm:$0xf] %v474
                %v476 = vld [vmem:[%s434 + $0xa0] sm:$0xf]
                %477 = vst [vmem:[%s435 + $0x50] sm:$0xf] %v476
                %v478 = vld [vmem:[%s434 + $0xa4] sm:$0xf]
                %479 = vst [vmem:[%s435 + $0x54] sm:$0xf] %v478
                %v480 = vld [vmem:[%s434 + $0xa8] sm:$0xf]
                %481 = vst [vmem:[%s435 + $0x58] sm:$0xf] %v480
                %v482 = vld [vmem:[%s434 + $0xac] sm:$0xf]
                %483 = vst [vmem:[%s435 + $0x5c] sm:$0xf] %v482
                %v484 = vld [vmem:[%s434 + $0xc0] sm:$0xf]
                %485 = vst [vmem:[%s435 + $0x60] sm:$0xf] %v484
                %v486 = vld [vmem:[%s434 + $0xc4] sm:$0xf]
                %487 = vst [vmem:[%s435 + $0x64] sm:$0xf] %v486
                %v488 = vld [vmem:[%s434 + $0xc8] sm:$0xf]
                %489 = vst [vmem:[%s435 + $0x68] sm:$0xf] %v488
                %v490 = vld [vmem:[%s434 + $0xcc] sm:$0xf]
                %491 = vst [vmem:[%s435 + $0x6c] sm:$0xf] %v490
                %v492 = vld [vmem:[%s434 + $0xe0] sm:$0xf]
                %493 = vst [vmem:[%s435 + $0x70] sm:$0xf] %v492
                %v494 = vld [vmem:[%s434 + $0xe4] sm:$0xf]
                %495 = vst [vmem:[%s435 + $0x74] sm:$0xf] %v494
                %v496 = vld [vmem:[%s434 + $0xe8] sm:$0xf]
                %497 = vst [vmem:[%s435 + $0x78] sm:$0xf] %v496
                %v498 = vld [vmem:[%s434 + $0xec] sm:$0xf]
                %499 = vst [vmem:[%s435 + $0x7c] sm:$0xf] %v498
                %v500 = vld [vmem:[%s434 + $0x100] sm:$0xf]
                %501 = vst [vmem:[%s435 + $0x80] sm:$0xf] %v500
                %v502 = vld [vmem:[%s434 + $0x104] sm:$0xf]
                %503 = vst [vmem:[%s435 + $0x84] sm:$0xf] %v502
                %v504 = vld [vmem:[%s434 + $0x108] sm:$0xf]
                %505 = vst [vmem:[%s435 + $0x88] sm:$0xf] %v504
                %v506 = vld [vmem:[%s434 + $0x10c] sm:$0xf]
                %507 = vst [vmem:[%s435 + $0x8c] sm:$0xf] %v506
                %v508 = vld [vmem:[%s434 + $0x120] sm:$0xf]
                %509 = vst [vmem:[%s435 + $0x90] sm:$0xf] %v508
                %v510 = vld [vmem:[%s434 + $0x124] sm:$0xf]
                %511 = vst [vmem:[%s435 + $0x94] sm:$0xf] %v510
                %v512 = vld [vmem:[%s434 + $0x128] sm:$0xf]
                %513 = vst [vmem:[%s435 + $0x98] sm:$0xf] %v512
                %v514 = vld [vmem:[%s434 + $0x12c] sm:$0xf]
                %515 = vst [vmem:[%s435 + $0x9c] sm:$0xf] %v514
                %v516 = vld [vmem:[%s434 + $0x140] sm:$0xf]
                %517 = vst [vmem:[%s435 + $0xa0] sm:$0xf] %v516
                %v518 = vld [vmem:[%s434 + $0x144] sm:$0xf]
                %519 = vst [vmem:[%s435 + $0xa4] sm:$0xf] %v518
                %v520 = vld [vmem:[%s434 + $0x148] sm:$0xf]
                %521 = vst [vmem:[%s435 + $0xa8] sm:$0xf] %v520
                %v522 = vld [vmem:[%s434 + $0x14c] sm:$0xf]
                %523 = vst [vmem:[%s435 + $0xac] sm:$0xf] %v522
                %v524 = vld [vmem:[%s434 + $0x160] sm:$0xf]
                %525 = vst [vmem:[%s435 + $0xb0] sm:$0xf] %v524
                %v526 = vld [vmem:[%s434 + $0x164] sm:$0xf]
                %527 = vst [vmem:[%s435 + $0xb4] sm:$0xf] %v526
                %v528 = vld [vmem:[%s434 + $0x168] sm:$0xf]
                %529 = vst [vmem:[%s435 + $0xb8] sm:$0xf] %v528
                %v530 = vld [vmem:[%s434 + $0x16c] sm:$0xf]
                %531 = vst [vmem:[%s435 + $0xbc] sm:$0xf] %v530
                %v532 = vld [vmem:[%s434 + $0x180] sm:$0xf]
                %533 = vst [vmem:[%s435 + $0xc0] sm:$0xf] %v532
                %v534 = vld [vmem:[%s434 + $0x184] sm:$0xf]
                %535 = vst [vmem:[%s435 + $0xc4] sm:$0xf] %v534
                %v536 = vld [vmem:[%s434 + $0x188] sm:$0xf]
                %537 = vst [vmem:[%s435 + $0xc8] sm:$0xf] %v536
                %v538 = vld [vmem:[%s434 + $0x18c] sm:$0xf]
                %539 = vst [vmem:[%s435 + $0xcc] sm:$0xf] %v538
                %v540 = vld [vmem:[%s434 + $0x1a0] sm:$0xf]
                %541 = vst [vmem:[%s435 + $0xd0] sm:$0xf] %v540
                %v542 = vld [vmem:[%s434 + $0x1a4] sm:$0xf]
                %543 = vst [vmem:[%s435 + $0xd4] sm:$0xf] %v542
                %v544 = vld [vmem:[%s434 + $0x1a8] sm:$0xf]
                %545 = vst [vmem:[%s435 + $0xd8] sm:$0xf] %v544
                %v546 = vld [vmem:[%s434 + $0x1ac] sm:$0xf]
                %547 = vst [vmem:[%s435 + $0xdc] sm:$0xf] %v546
                %v548 = vld [vmem:[%s434 + $0x1c0] sm:$0xf]
                %549 = vst [vmem:[%s435 + $0xe0] sm:$0xf] %v548
                %v550 = vld [vmem:[%s434 + $0x1c4] sm:$0xf]
                %551 = vst [vmem:[%s435 + $0xe4] sm:$0xf] %v550
                %v552 = vld [vmem:[%s434 + $0x1c8] sm:$0xf]
                %553 = vst [vmem:[%s435 + $0xe8] sm:$0xf] %v552
                %v554 = vld [vmem:[%s434 + $0x1cc] sm:$0xf]
                %555 = vst [vmem:[%s435 + $0xec] sm:$0xf] %v554
                %v556 = vld [vmem:[%s434 + $0x1e0] sm:$0xf]
                %557 = vst [vmem:[%s435 + $0xf0] sm:$0xf] %v556
                %v558 = vld [vmem:[%s434 + $0x1e4] sm:$0xf]
                %559 = vst [vmem:[%s435 + $0xf4] sm:$0xf] %v558
                %v560 = vld [vmem:[%s434 + $0x1e8] sm:$0xf]
                %561 = vst [vmem:[%s435 + $0xf8] sm:$0xf] %v560
                %v562 = vld [vmem:[%s434 + $0x1ec] sm:$0xf]
                %563 = vst [vmem:[%s435 + $0xfc] sm:$0xf] %v562
                %v564 = vld [vmem:[%s434 + $0x200] sm:$0xf]
                %565 = vst [vmem:[%s435 + $0x100] sm:$0xf] %v564
                %v566 = vld [vmem:[%s434 + $0x204] sm:$0xf]
                %567 = vst [vmem:[%s435 + $0x104] sm:$0xf] %v566
                %v568 = vld [vmem:[%s434 + $0x208] sm:$0xf]
                %569 = vst [vmem:[%s435 + $0x108] sm:$0xf] %v568
                %v570 = vld [vmem:[%s434 + $0x20c] sm:$0xf]
                %571 = vst [vmem:[%s435 + $0x10c] sm:$0xf] %v570
                %v572 = vld [vmem:[%s434 + $0x220] sm:$0xf]
                %573 = vst [vmem:[%s435 + $0x110] sm:$0xf] %v572
                %v574 = vld [vmem:[%s434 + $0x224] sm:$0xf]
                %575 = vst [vmem:[%s435 + $0x114] sm:$0xf] %v574
                %v576 = vld [vmem:[%s434 + $0x228] sm:$0xf]
                %577 = vst [vmem:[%s435 + $0x118] sm:$0xf] %v576
                %v578 = vld [vmem:[%s434 + $0x22c] sm:$0xf]
                %579 = vst [vmem:[%s435 + $0x11c] sm:$0xf] %v578
                %v580 = vld [vmem:[%s434 + $0x240] sm:$0xf]
                %581 = vst [vmem:[%s435 + $0x120] sm:$0xf] %v580
                %v582 = vld [vmem:[%s434 + $0x244] sm:$0xf]
                %583 = vst [vmem:[%s435 + $0x124] sm:$0xf] %v582
                %v584 = vld [vmem:[%s434 + $0x248] sm:$0xf]
                %585 = vst [vmem:[%s435 + $0x128] sm:$0xf] %v584
                %v586 = vld [vmem:[%s434 + $0x24c] sm:$0xf]
                %587 = vst [vmem:[%s435 + $0x12c] sm:$0xf] %v586
                %v588 = vld [vmem:[%s434 + $0x260] sm:$0xf]
                %589 = vst [vmem:[%s435 + $0x130] sm:$0xf] %v588
                %v590 = vld [vmem:[%s434 + $0x264] sm:$0xf]
                %591 = vst [vmem:[%s435 + $0x134] sm:$0xf] %v590
                %v592 = vld [vmem:[%s434 + $0x268] sm:$0xf]
                %593 = vst [vmem:[%s435 + $0x138] sm:$0xf] %v592
                %v594 = vld [vmem:[%s434 + $0x26c] sm:$0xf]
                %595 = vst [vmem:[%s435 + $0x13c] sm:$0xf] %v594
              $region85: #{dgcnn_forward.4} parent=79 // loop_footer
                %s433 = sadd.s32 1, %s429
              $region86: #{dgcnn_forward.4} parent=79 // loop_footer_branch
                %428 = sbr.rel target = $region82
              $region87: #{dgcnn_forward.4} parent=79 // loop_exit
                _
            $region80: #{dgcnn_forward.4} parent=71 // pred_fallthru
              _
          $region72: #{dgcnn_forward.4} parent=67 // pred_fallthru
            _
          %775 = vnop
        $region68: #{dgcnn_forward.4} parent=59 // pred_fallthru
          _
      $region60: #{dgcnn_forward.4} parent=5 // pred_fallthru
        _
      %p776 = scmp.le.s32.totalorder 1, %s19
      %p777 = scmp.lt.s32.totalorder %s19, 5
      %p778 = pnand %p776, %p777
      %p779 = pneg %p778
      // Predicated region
      $region106: #{dgcnn_forward.4} parent=5 // pred_check
        _
      $region107: #{dgcnn_forward.4} parent=5 // pred_check_branch
        %781 = sbr.rel (%p778) target = $region109
      $region108: #{dgcnn_forward.4} parent=5 // pred_region
        %s782 = ssub.s32 %s19, 1
        %s783 = sand.u32 %s74, 1
        %s784 = sand.u32 %s74, 1
        %s785 = smul.addr %s784, 320
        %s786 = scalar_lea.vmem [#allocation2], %s785
        // Predicated region
        $region110: #{dgcnn_forward.4} parent=108 // pred_check
          %p787 = pneg %p87
        $region111: #{dgcnn_forward.4} parent=108 // pred_check_branch
          %789 = sbr.rel (%p787) target = $region113
        $region112: #{dgcnn_forward.4} parent=108 // pred_region
          _
        $region113: #{dgcnn_forward.4} parent=108 // pred_fallthru
          _
        %s790 = smul.u32 4, %s29
        %p791 = scmp.lt.s32.totalorder %s28, 1
        %s792 = scalar_select %p791, %s28, 1
        %p793 = scmp.lt.s32.totalorder %s790, 7
        %s794 = scalar_select %p793, %s790, 7
        %s795 = smul.addr %s792, 8
        %s796 = sadd.s32 %s794, %s795
        %s797 = smul.addr %s796, 4
        %s798 = scalar_lea.vmem %s0, %s797
        %p799 = pneg %p59
        %p800 = pneg %p56
        %s801 = sand.u32 %s74, 1
        %s802 = sand.u32 %s74, 1
        %s803 = smul.addr %s802, 320
        %s804 = scalar_lea.vmem [#allocation2], %s803
        %p805 = pneg %p87
        %p806 = pneg %p84
        %p807 = pneg %p108
        %p808 = pneg %p105
        %p809 = pneg %p129
        %p810 = pneg %p126
        %p811 = pneg %p150
        %p812 = pneg %p147
        %p813 = pneg %p171
        %p814 = pneg %p168
        %p815 = pneg %p192
        %p816 = pneg %p189
        %p817 = pneg %p213
        %p818 = pneg %p210
        %p819 = pneg %p234
        %p820 = pneg %p231
        %p821 = pneg %p255
        %p822 = pneg %p252
        %p823 = pneg %p276
        %p824 = pneg %p273
        %p825 = pneg %p297
        %p826 = pneg %p294
        %p827 = pneg %p318
        %p828 = pneg %p315
        %p829 = pneg %p344
        %p830 = pneg %p341
        %p831 = scmp.lt.s32.totalorder %s28, 1
        %s832 = scalar_select %p831, %s28, 1
        %s833 = smul.addr %s832, 8
        %s834 = scalar_lea.vmem %s13, %s833
        %s835 = smul.u32 4, %s29
        %p836 = scmp.lt.s32.totalorder %s28, 1
        %s837 = scalar_select %p836, %s28, 1
        %p838 = scmp.lt.s32.totalorder %s835, 7
        %s839 = scalar_select %p838, %s835, 7
        %s840 = smul.addr %s837, 8
        %s841 = sadd.s32 %s839, %s840
        %s842 = smul.addr %s841, 4
        %s843 = scalar_lea.vmem %s0, %s842
        %s844 = smul.u32 4, %s29
        %s845 = smul.u32 4, %s29
        %p846 = scmp.lt.s32.totalorder %s28, 1
        %s847 = scalar_select %p846, %s28, 1
        %s848 = smul.addr %s847, 8
        %s849 = scalar_lea.vmem %s13, %s848
        %p851 = scmp.eq.s32.totalorder %s29, 0
        // Predicated region
        $region114: #{dgcnn_forward.4} parent=108 // pred_check
          %p852 = pneg %p851
        $region115: #{dgcnn_forward.4} parent=108 // pred_check_branch
          %854 = sbr.rel (%p852) target = $region117
        $region116: #{dgcnn_forward.4} parent=108 // pred_region
          %855 = vst [vmem:[%s849] sm:$0xff] -inf
        $region117: #{dgcnn_forward.4} parent=108 // pred_fallthru
          _
        %v856 = vld [vmem:[%s843] sm:$0xf]
        %v857 = vld [vmem:[%s843 + $0x4] sm:$0xf]
        %v858 = vld [vmem:[%s843 + $0x8] sm:$0xf]
        %v859 = vld [vmem:[%s843 + $0xc] sm:$0xf]
        %v860 = vld [vmem:[%s786] sm:$0xf]
        %v861 = vld [vmem:[%s786 + $0x4] sm:$0xf]
        %v862 = vld [vmem:[%s786 + $0x8] sm:$0xf]
        %v863 = vld [vmem:[%s786 + $0xc] sm:$0xf]
        %v864 = vld [vmem:[%s786 + $0x10] sm:$0xf]
        %v865 = vld [vmem:[%s786 + $0x14] sm:$0xf]
        %v866 = vld [vmem:[%s786 + $0x18] sm:$0xf]
        %v867 = vld [vmem:[%s786 + $0x1c] sm:$0xf]
        %v868 = vld [vmem:[%s786 + $0x20] sm:$0xf]
        %v869 = vld [vmem:[%s786 + $0x24] sm:$0xf]
        %v870 = vld [vmem:[%s786 + $0x28] sm:$0xf]
        %v871 = vld [vmem:[%s786 + $0x2c] sm:$0xf]
        %v872 = vld [vmem:[%s786 + $0x30] sm:$0xf]
        %v873 = vld [vmem:[%s786 + $0x34] sm:$0xf]
        %v874 = vld [vmem:[%s786 + $0x38] sm:$0xf]
        %v875 = vld [vmem:[%s786 + $0x3c] sm:$0xf]
        %v876 = vld [vmem:[%s786 + $0x40] sm:$0xf]
        %v877 = vld [vmem:[%s786 + $0x44] sm:$0xf]
        %v878 = vld [vmem:[%s786 + $0x48] sm:$0xf]
        %v879 = vld [vmem:[%s786 + $0x4c] sm:$0xf]
        %v880 = vld [vmem:[%s786 + $0x50] sm:$0xf]
        %v881 = vld [vmem:[%s786 + $0x54] sm:$0xf]
        %v882 = vld [vmem:[%s786 + $0x58] sm:$0xf]
        %v883 = vld [vmem:[%s786 + $0x5c] sm:$0xf]
        %v884 = vld [vmem:[%s786 + $0x60] sm:$0xf]
        %v885 = vld [vmem:[%s786 + $0x64] sm:$0xf]
        %v886 = vld [vmem:[%s786 + $0x68] sm:$0xf]
        %v887 = vld [vmem:[%s786 + $0x6c] sm:$0xf]
        %v888 = vld [vmem:[%s786 + $0x70] sm:$0xf]
        %v889 = vld [vmem:[%s786 + $0x74] sm:$0xf]
        %v890 = vld [vmem:[%s786 + $0x78] sm:$0xf]
        %v891 = vld [vmem:[%s786 + $0x7c] sm:$0xf]
        %v892 = vld [vmem:[%s786 + $0x80] sm:$0xf]
        %v893 = vld [vmem:[%s786 + $0x84] sm:$0xf]
        %v894 = vld [vmem:[%s786 + $0x88] sm:$0xf]
        %v895 = vld [vmem:[%s786 + $0x8c] sm:$0xf]
        %v896 = vld [vmem:[%s786 + $0x90] sm:$0xf]
        %v897 = vld [vmem:[%s786 + $0x94] sm:$0xf]
        %v898 = vld [vmem:[%s786 + $0x98] sm:$0xf]
        %v899 = vld [vmem:[%s786 + $0x9c] sm:$0xf]
        %v900 = vld [vmem:[%s786 + $0xa0] sm:$0xf]
        %v901 = vld [vmem:[%s786 + $0xa4] sm:$0xf]
        %v902 = vld [vmem:[%s786 + $0xa8] sm:$0xf]
        %v903 = vld [vmem:[%s786 + $0xac] sm:$0xf]
        %v904 = vld [vmem:[%s786 + $0xb0] sm:$0xf]
        %v905 = vld [vmem:[%s786 + $0xb4] sm:$0xf]
        %v906 = vld [vmem:[%s786 + $0xb8] sm:$0xf]
        %v907 = vld [vmem:[%s786 + $0xbc] sm:$0xf]
        %v908 = vld [vmem:[%s786 + $0xc0] sm:$0xf]
        %v909 = vld [vmem:[%s786 + $0xc4] sm:$0xf]
        %v910 = vld [vmem:[%s786 + $0xc8] sm:$0xf]
        %v911 = vld [vmem:[%s786 + $0xcc] sm:$0xf]
        %v912 = vld [vmem:[%s786 + $0xd0] sm:$0xf]
        %v913 = vld [vmem:[%s786 + $0xd4] sm:$0xf]
        %v914 = vld [vmem:[%s786 + $0xd8] sm:$0xf]
        %v915 = vld [vmem:[%s786 + $0xdc] sm:$0xf]
        %v916 = vld [vmem:[%s786 + $0xe0] sm:$0xf]
        %v917 = vld [vmem:[%s786 + $0xe4] sm:$0xf]
        %v918 = vld [vmem:[%s786 + $0xe8] sm:$0xf]
        %v919 = vld [vmem:[%s786 + $0xec] sm:$0xf]
        %v920 = vld [vmem:[%s786 + $0xf0] sm:$0xf]
        %v921 = vld [vmem:[%s786 + $0xf4] sm:$0xf]
        %v922 = vld [vmem:[%s786 + $0xf8] sm:$0xf]
        %v923 = vld [vmem:[%s786 + $0xfc] sm:$0xf]
        %v924 = vld [vmem:[%s786 + $0x100] sm:$0xf]
        %v925 = vld [vmem:[%s786 + $0x104] sm:$0xf]
        %v926 = vld [vmem:[%s786 + $0x108] sm:$0xf]
        %v927 = vld [vmem:[%s786 + $0x10c] sm:$0xf]
        %v928 = vld [vmem:[%s786 + $0x110] sm:$0xf]
        %v929 = vld [vmem:[%s786 + $0x114] sm:$0xf]
        %v930 = vld [vmem:[%s786 + $0x118] sm:$0xf]
        %v931 = vld [vmem:[%s786 + $0x11c] sm:$0xf]
        %v932 = vld [vmem:[%s786 + $0x120] sm:$0xf]
        %v933 = vld [vmem:[%s786 + $0x124] sm:$0xf]
        %v934 = vld [vmem:[%s786 + $0x128] sm:$0xf]
        %v935 = vld [vmem:[%s786 + $0x12c] sm:$0xf]
        %v936 = vld [vmem:[%s786 + $0x130] sm:$0xf]
        %v937 = vld [vmem:[%s786 + $0x134] sm:$0xf]
        %v938 = vld [vmem:[%s786 + $0x138] sm:$0xf]
        %v939 = vld [vmem:[%s786 + $0x13c] sm:$0xf]
        %v940 = vld [vmem:[%s2] sm:$0x3]
        %v945 = vunpack.c.l.b16 %v856
        %v946 = vunpack.c.l.b16 %v857
        %v947 = vunpack.c.l.b16 %v858
        %v948 = vunpack.c.l.b16 %v859
        %v949 = vpack.c.b16 %v946, %v945
        %v950 = vpack.c.b16 %v948, %v947
        %vm951 = vcmask 31744
        %v953 = vsel %vm951, %v949, 0
        %v956 = vsel %vm951, %v950, 0
        %vm958 = vcmask 1041408
        %v960 = vsel %vm958, %v940, 0
        %962 = vmatprep.subr.bf16.mxu0 0
        %963 = vmatpush1.bf16.msra.mxu0 %v960
        %964 = vmatprep.subr.bf16.mxu0 0
        %965 = vmatpush1.bf16.msra.mxu0 0
        %966 = vmatprep.subr.bf16.mxu0 0
        %967 = vmatpush1.bf16.msra.mxu0 0
        %968 = vmatprep.subr.bf16.mxu0 0
        %969 = vmatpush1.bf16.msra.mxu0 0
        %970 = vmatprep.subr.bf16.mxu0 0
        %971 = vmatpush1.bf16.msra.mxu0 0
        %972 = vmatprep.subr.bf16.mxu0 0
        %973 = vmatpush1.bf16.msra.mxu0 0
        %974 = vmatprep.subr.bf16.mxu0 0
        %975 = vmatpush1.bf16.msra.mxu0 0
        %976 = vmatprep.subr.bf16.mxu0 0
        %977 = vmatpush1.bf16.msra.mxu0 0
        %978 = vmatprep.subr.bf16.mxu0 0
        %979 = vmatpush1.bf16.msra.mxu0 0
        %980 = vmatprep.subr.bf16.mxu0 0
        %981 = vmatpush1.bf16.msra.mxu0 0
        %982 = vmatprep.subr.bf16.mxu0 0
        %983 = vmatpush1.bf16.msra.mxu0 0
        %984 = vmatprep.subr.bf16.mxu0 0
        %985 = vmatpush1.bf16.msra.mxu0 0
        %986 = vmatprep.subr.bf16.mxu0 0
        %987 = vmatpush1.bf16.msra.mxu0 0
        %988 = vmatprep.subr.bf16.mxu0 0
        %989 = vmatpush1.bf16.msra.mxu0 0
        %990 = vmatprep.subr.bf16.mxu0 0
        %991 = vmatpush1.bf16.msra.mxu0 0
        %992 = vmatprep.subr.bf16.mxu0 0
        %993 = vmatpush1.bf16.msra.mxu0 0
        %994 = vmatprep.mubr.bf16.mxu0 0
        %995 = vmatmul.mubr.bf16.gmra.mrb[0].mxu0 %v953
        %v996 = vpop.f32.mrb[0].mxu0
        %v997 = vadd.f32 0.0, %v996
        %v998 = vpop.f32.mrb[0].mxu0
        %v999 = vpop.f32.mrb[0].mxu0
        %v1000 = vadd.f32 0.0, %v999
        %v1001 = vpop.f32.mrb[0].mxu0
        %1002 = vmatprep.mubr.bf16.mxu0 0
        %1003 = vmatmul.mubr.bf16.gmra.mrb[0].mxu0 %v956
        %v1004 = vpop.f32.mrb[0].mxu0
        %v1005 = vadd.f32 0.0, %v1004
        %v1006 = vpop.f32.mrb[0].mxu0
        %v1007 = vpop.f32.mrb[0].mxu0
        %v1008 = vadd.f32 0.0, %v1007
        %v1009 = vpop.f32.mrb[0].mxu0
        %1010 = vdwg.mxu0
        %v1011 = vld [vmem:[%s3] sm:$0x3]
        %v1092 = vunpack.c.l.b16 %v860
        %v1093 = vunpack.c.l.b16 %v861
        %v1094 = vunpack.c.l.b16 %v862
        %v1095 = vunpack.c.l.b16 %v863
        %v1096 = vunpack.c.l.b16 %v864
        %v1097 = vunpack.c.l.b16 %v865
        %v1098 = vunpack.c.l.b16 %v866
        %v1099 = vunpack.c.l.b16 %v867
        %v1100 = vunpack.c.l.b16 %v868
        %v1101 = vunpack.c.l.b16 %v869
        %v1102 = vunpack.c.l.b16 %v870
        %v1103 = vunpack.c.l.b16 %v871
        %v1104 = vunpack.c.l.b16 %v872
        %v1105 = vunpack.c.l.b16 %v873
        %v1106 = vunpack.c.l.b16 %v874
        %v1107 = vunpack.c.l.b16 %v875
        %v1108 = vunpack.c.l.b16 %v876
        %v1109 = vunpack.c.l.b16 %v877
        %v1110 = vunpack.c.l.b16 %v878
        %v1111 = vunpack.c.l.b16 %v879
        %v1112 = vunpack.c.l.b16 %v880
        %v1113 = vunpack.c.l.b16 %v881
        %v1114 = vunpack.c.l.b16 %v882
        %v1115 = vunpack.c.l.b16 %v883
        %v1116 = vunpack.c.l.b16 %v884
        %v1117 = vunpack.c.l.b16 %v885
        %v1118 = vunpack.c.l.b16 %v886
        %v1119 = vunpack.c.l.b16 %v887
        %v1120 = vunpack.c.l.b16 %v888
        %v1121 = vunpack.c.l.b16 %v889
        %v1122 = vunpack.c.l.b16 %v890
        %v1123 = vunpack.c.l.b16 %v891
        %v1124 = vunpack.c.l.b16 %v892
        %v1125 = vunpack.c.l.b16 %v893
        %v1126 = vunpack.c.l.b16 %v894
        %v1127 = vunpack.c.l.b16 %v895
        %v1128 = vunpack.c.l.b16 %v896
        %v1129 = vunpack.c.l.b16 %v897
        %v1130 = vunpack.c.l.b16 %v898
        %v1131 = vunpack.c.l.b16 %v899
        %v1132 = vunpack.c.l.b16 %v900
        %v1133 = vunpack.c.l.b16 %v901
        %v1134 = vunpack.c.l.b16 %v902
        %v1135 = vunpack.c.l.b16 %v903
        %v1136 = vunpack.c.l.b16 %v904
        %v1137 = vunpack.c.l.b16 %v905
        %v1138 = vunpack.c.l.b16 %v906
        %v1139 = vunpack.c.l.b16 %v907
        %v1140 = vunpack.c.l.b16 %v908
        %v1141 = vunpack.c.l.b16 %v909
        %v1142 = vunpack.c.l.b16 %v910
        %v1143 = vunpack.c.l.b16 %v911
        %v1144 = vunpack.c.l.b16 %v912
        %v1145 = vunpack.c.l.b16 %v913
        %v1146 = vunpack.c.l.b16 %v914
        %v1147 = vunpack.c.l.b16 %v915
        %v1148 = vunpack.c.l.b16 %v916
        %v1149 = vunpack.c.l.b16 %v917
        %v1150 = vunpack.c.l.b16 %v918
        %v1151 = vunpack.c.l.b16 %v919
        %v1152 = vunpack.c.l.b16 %v920
        %v1153 = vunpack.c.l.b16 %v921
        %v1154 = vunpack.c.l.b16 %v922
        %v1155 = vunpack.c.l.b16 %v923
        %v1156 = vunpack.c.l.b16 %v924
        %v1157 = vunpack.c.l.b16 %v925
        %v1158 = vunpack.c.l.b16 %v926
        %v1159 = vunpack.c.l.b16 %v927
        %v1160 = vunpack.c.l.b16 %v928
        %v1161 = vunpack.c.l.b16 %v929
        %v1162 = vunpack.c.l.b16 %v930
        %v1163 = vunpack.c.l.b16 %v931
        %v1164 = vunpack.c.l.b16 %v932
        %v1165 = vunpack.c.l.b16 %v933
        %v1166 = vunpack.c.l.b16 %v934
        %v1167 = vunpack.c.l.b16 %v935
        %v1168 = vunpack.c.l.b16 %v936
        %v1169 = vunpack.c.l.b16 %v937
        %v1170 = vunpack.c.l.b16 %v938
        %v1171 = vunpack.c.l.b16 %v939
        %v1172 = vpack.c.b16 %v1093, %v1092
        %v1173 = vpack.c.b16 %v1095, %v1094
        %v1174 = vpack.c.b16 %v1097, %v1096
        %v1175 = vpack.c.b16 %v1099, %v1098
        %v1176 = vpack.c.b16 %v1101, %v1100
        %v1177 = vpack.c.b16 %v1103, %v1102
        %v1178 = vpack.c.b16 %v1105, %v1104
        %v1179 = vpack.c.b16 %v1107, %v1106
        %v1180 = vpack.c.b16 %v1109, %v1108
        %v1181 = vpack.c.b16 %v1111, %v1110
        %v1182 = vpack.c.b16 %v1113, %v1112
        %v1183 = vpack.c.b16 %v1115, %v1114
        %v1184 = vpack.c.b16 %v1117, %v1116
        %v1185 = vpack.c.b16 %v1119, %v1118
        %v1186 = vpack.c.b16 %v1121, %v1120
        %v1187 = vpack.c.b16 %v1123, %v1122
        %v1188 = vpack.c.b16 %v1125, %v1124
        %v1189 = vpack.c.b16 %v1127, %v1126
        %v1190 = vpack.c.b16 %v1129, %v1128
        %v1191 = vpack.c.b16 %v1131, %v1130
        %v1192 = vpack.c.b16 %v1133, %v1132
        %v1193 = vpack.c.b16 %v1135, %v1134
        %v1194 = vpack.c.b16 %v1137, %v1136
        %v1195 = vpack.c.b16 %v1139, %v1138
        %v1196 = vpack.c.b16 %v1141, %v1140
        %v1197 = vpack.c.b16 %v1143, %v1142
        %v1198 = vpack.c.b16 %v1145, %v1144
        %v1199 = vpack.c.b16 %v1147, %v1146
        %v1200 = vpack.c.b16 %v1149, %v1148
        %v1201 = vpack.c.b16 %v1151, %v1150
        %v1202 = vpack.c.b16 %v1153, %v1152
        %v1203 = vpack.c.b16 %v1155, %v1154
        %v1204 = vpack.c.b16 %v1157, %v1156
        %v1205 = vpack.c.b16 %v1159, %v1158
        %v1206 = vpack.c.b16 %v1161, %v1160
        %v1207 = vpack.c.b16 %v1163, %v1162
        %v1208 = vpack.c.b16 %v1165, %v1164
        %v1209 = vpack.c.b16 %v1167, %v1166
        %v1210 = vpack.c.b16 %v1169, %v1168
        %v1211 = vpack.c.b16 %v1171, %v1170
        %v1213 = vsel %vm951, %v1172, 0
        %v1216 = vsel %vm951, %v1173, 0
        %v1219 = vsel %vm951, %v1174, 0
        %v1222 = vsel %vm951, %v1175, 0
        %v1225 = vsel %vm951, %v1176, 0
        %v1228 = vsel %vm951, %v1177, 0
        %v1231 = vsel %vm951, %v1178, 0
        %v1234 = vsel %vm951, %v1179, 0
        %v1237 = vsel %vm951, %v1180, 0
        %v1240 = vsel %vm951, %v1181, 0
        %v1243 = vsel %vm951, %v1182, 0
        %v1246 = vsel %vm951, %v1183, 0
        %v1249 = vsel %vm951, %v1184, 0
        %v1252 = vsel %vm951, %v1185, 0
        %v1255 = vsel %vm951, %v1186, 0
        %v1258 = vsel %vm951, %v1187, 0
        %v1261 = vsel %vm951, %v1188, 0
        %v1264 = vsel %vm951, %v1189, 0
        %v1267 = vsel %vm951, %v1190, 0
        %v1270 = vsel %vm951, %v1191, 0
        %v1273 = vsel %vm951, %v1192, 0
        %v1276 = vsel %vm951, %v1193, 0
        %v1279 = vsel %vm951, %v1194, 0
        %v1282 = vsel %vm951, %v1195, 0
        %v1285 = vsel %vm951, %v1196, 0
        %v1288 = vsel %vm951, %v1197, 0
        %v1291 = vsel %vm951, %v1198, 0
        %v1294 = vsel %vm951, %v1199, 0
        %v1297 = vsel %vm951, %v1200, 0
        %v1300 = vsel %vm951, %v1201, 0
        %v1303 = vsel %vm951, %v1202, 0
        %v1306 = vsel %vm951, %v1203, 0
        %v1309 = vsel %vm951, %v1204, 0
        %v1312 = vsel %vm951, %v1205, 0
        %v1315 = vsel %vm951, %v1206, 0
        %v1318 = vsel %vm951, %v1207, 0
        %v1321 = vsel %vm951, %v1208, 0
        %v1324 = vsel %vm951, %v1209, 0
        %v1327 = vsel %vm951, %v1210, 0
        %v1330 = vsel %vm951, %v1211, 0
        %v1333 = vsel %vm958, %v1011, 0
        %1335 = vmatprep.subr.bf16.mxu0 0
        %1336 = vmatpush1.bf16.msra.mxu0 %v1333
        %1337 = vmatprep.subr.bf16.mxu0 0
        %1338 = vmatpush1.bf16.msra.mxu0 0
        %1339 = vmatprep.subr.bf16.mxu0 0
        %1340 = vmatpush1.bf16.msra.mxu0 0
        %1341 = vmatprep.subr.bf16.mxu0 0
        %1342 = vmatpush1.bf16.msra.mxu0 0
        %1343 = vmatprep.subr.bf16.mxu0 0
        %1344 = vmatpush1.bf16.msra.mxu0 0
        %1345 = vmatprep.subr.bf16.mxu0 0
        %1346 = vmatpush1.bf16.msra.mxu0 0
        %1347 = vmatprep.subr.bf16.mxu0 0
        %1348 = vmatpush1.bf16.msra.mxu0 0
        %1349 = vmatprep.subr.bf16.mxu0 0
        %1350 = vmatpush1.bf16.msra.mxu0 0
        %1351 = vmatprep.subr.bf16.mxu0 0
        %1352 = vmatpush1.bf16.msra.mxu0 0
        %1353 = vmatprep.subr.bf16.mxu0 0
        %1354 = vmatpush1.bf16.msra.mxu0 0
        %1355 = vmatprep.subr.bf16.mxu0 0
        %1356 = vmatpush1.bf16.msra.mxu0 0
        %1357 = vmatprep.subr.bf16.mxu0 0
        %1358 = vmatpush1.bf16.msra.mxu0 0
        %1359 = vmatprep.subr.bf16.mxu0 0
        %1360 = vmatpush1.bf16.msra.mxu0 0
        %1361 = vmatprep.subr.bf16.mxu0 0
        %1362 = vmatpush1.bf16.msra.mxu0 0
        %1363 = vmatprep.subr.bf16.mxu0 0
        %1364 = vmatpush1.bf16.msra.mxu0 0
        %1365 = vmatprep.subr.bf16.mxu0 0
        %1366 = vmatpush1.bf16.msra.mxu0 0
        %1367 = vmatprep.mubr.bf16.mxu0 0
        %1368 = vmatmul.mubr.bf16.gmra.mrb[0].mxu0 %v1213
        %v1369 = vpop.f32.mrb[0].mxu0
        %v1370 = vadd.f32 %v997, %v1369
        %v1371 = vpop.f32.mrb[0].mxu0
        %v1372 = vpop.f32.mrb[0].mxu0
        %v1373 = vadd.f32 %v1000, %v1372
        %v1374 = vpop.f32.mrb[0].mxu0
        %1375 = vmatprep.mubr.bf16.mxu0 0
        %1376 = vmatmul.mubr.bf16.gmra.mrb[0].mxu0 %v1216
        %v1377 = vpop.f32.mrb[0].mxu0
        %v1378 = vadd.f32 %v1005, %v1377
        %v1379 = vpop.f32.mrb[0].mxu0
        %v1380 = vpop.f32.mrb[0].mxu0
        %v1381 = vadd.f32 %v1008, %v1380
        %v1382 = vpop.f32.mrb[0].mxu0
        %1383 = vmatprep.mubr.bf16.mxu0 0
        %1384 = vmatmul.mubr.bf16.gmra.mrb[0].mxu0 %v1219
        %v1385 = vpop.f32.mrb[0].mxu0
        %v1386 = vadd.f32 %v997, %v1385
        %v1387 = vpop.f32.mrb[0].mxu0
        %v1388 = vpop.f32.mrb[0].mxu0
        %v1389 = vadd.f32 %v1000, %v1388
        %v1390 = vpop.f32.mrb[0].mxu0
        %1391 = vmatprep.mubr.bf16.mxu0 0
        %1392 = vmatmul.mubr.bf16.gmra.mrb[0].mxu0 %v1222
        %v1393 = vpop.f32.mrb[0].mxu0
        %v1394 = vadd.f32 %v1005, %v1393
        %v1395 = vpop.f32.mrb[0].mxu0
        %v1396 = vpop.f32.mrb[0].mxu0
        %v1397 = vadd.f32 %v1008, %v1396
        %v1398 = vpop.f32.mrb[0].mxu0
        %1399 = vmatprep.mubr.bf16.mxu0 0
        %1400 = vmatmul.mubr.bf16.gmra.mrb[0].mxu0 %v1225
        %v1401 = vpop.f32.mrb[0].mxu0
        %v1402 = vadd.f32 %v997, %v1401
        %v1403 = vpop.f32.mrb[0].mxu0
        %v1404 = vpop.f32.mrb[0].mxu0
        %v1405 = vadd.f32 %v1000, %v1404
        %v1406 = vpop.f32.mrb[0].mxu0
        %1407 = vmatprep.mubr.bf16.mxu0 0
        %1408 = vmatmul.mubr.bf16.gmra.mrb[0].mxu0 %v1228
        %v1409 = vpop.f32.mrb[0].mxu0
        %v1410 = vadd.f32 %v1005, %v1409
        %v1411 = vpop.f32.mrb[0].mxu0
        %v1412 = vpop.f32.mrb[0].mxu0
        %v1413 = vadd.f32 %v1008, %v1412
        %v1414 = vpop.f32.mrb[0].mxu0
        %1415 = vmatprep.mubr.bf16.mxu0 0
        %1416 = vmatmul.mubr.bf16.gmra.mrb[0].mxu0 %v1231
        %v1417 = vpop.f32.mrb[0].mxu0
        %v1418 = vadd.f32 %v997, %v1417
        %v1419 = vpop.f32.mrb[0].mxu0
        %v1420 = vpop.f32.mrb[0].mxu0
        %v1421 = vadd.f32 %v1000, %v1420
        %v1422 = vpop.f32.mrb[0].mxu0
        %1423 = vmatprep.mubr.bf16.mxu0 0
        %1424 = vmatmul.mubr.bf16.gmra.mrb[0].mxu0 %v1234
        %v1425 = vpop.f32.mrb[0].mxu0
        %v1426 = vadd.f32 %v1005, %v1425
        %v1427 = vpop.f32.mrb[0].mxu0
        %v1428 = vpop.f32.mrb[0].mxu0
        %v1429 = vadd.f32 %v1008, %v1428
        %v1430 = vpop.f32.mrb[0].mxu0
        %1431 = vmatprep.mubr.bf16.mxu0 0
        %1432 = vmatmul.mubr.bf16.gmra.mrb[0].mxu0 %v1237
        %v1433 = vpop.f32.mrb[0].mxu0
        %v1434 = vadd.f32 %v997, %v1433
        %v1435 = vpop.f32.mrb[0].mxu0
        %v1436 = vpop.f32.mrb[0].mxu0
        %v1437 = vadd.f32 %v1000, %v1436
        %v1438 = vpop.f32.mrb[0].mxu0
        %1439 = vmatprep.mubr.bf16.mxu0 0
        %1440 = vmatmul.mubr.bf16.gmra.mrb[0].mxu0 %v1240
        %v1441 = vpop.f32.mrb[0].mxu0
        %v1442 = vadd.f32 %v1005, %v1441
        %v1443 = vpop.f32.mrb[0].mxu0
        %v1444 = vpop.f32.mrb[0].mxu0
        %v1445 = vadd.f32 %v1008, %v1444
        %v1446 = vpop.f32.mrb[0].mxu0
        %1447 = vmatprep.mubr.bf16.mxu0 0
        %1448 = vmatmul.mubr.bf16.gmra.mrb[0].mxu0 %v1243
        %v1449 = vpop.f32.mrb[0].mxu0
        %v1450 = vadd.f32 %v997, %v1449
        %v1451 = vpop.f32.mrb[0].mxu0
        %v1452 = vpop.f32.mrb[0].mxu0
        %v1453 = vadd.f32 %v1000, %v1452
        %v1454 = vpop.f32.mrb[0].mxu0
        %1455 = vmatprep.mubr.bf16.mxu0 0
        %1456 = vmatmul.mubr.bf16.gmra.mrb[0].mxu0 %v1246
        %v1457 = vpop.f32.mrb[0].mxu0
        %v1458 = vadd.f32 %v1005, %v1457
        %v1459 = vpop.f32.mrb[0].mxu0
        %v1460 = vpop.f32.mrb[0].mxu0
        %v1461 = vadd.f32 %v1008, %v1460
        %v1462 = vpop.f32.mrb[0].mxu0
        %1463 = vmatprep.mubr.bf16.mxu0 0
        %1464 = vmatmul.mubr.bf16.gmra.mrb[0].mxu0 %v1249
        %v1465 = vpop.f32.mrb[0].mxu0
        %v1466 = vadd.f32 %v997, %v1465
        %v1467 = vpop.f32.mrb[0].mxu0
        %v1468 = vpop.f32.mrb[0].mxu0
        %v1469 = vadd.f32 %v1000, %v1468
        %v1470 = vpop.f32.mrb[0].mxu0
        %1471 = vmatprep.mubr.bf16.mxu0 0
        %1472 = vmatmul.mubr.bf16.gmra.mrb[0].mxu0 %v1252
        %v1473 = vpop.f32.mrb[0].mxu0
        %v1474 = vadd.f32 %v1005, %v1473
        %v1475 = vpop.f32.mrb[0].mxu0
        %v1476 = vpop.f32.mrb[0].mxu0
        %v1477 = vadd.f32 %v1008, %v1476
        %v1478 = vpop.f32.mrb[0].mxu0
        %1479 = vmatprep.mubr.bf16.mxu0 0
        %1480 = vmatmul.mubr.bf16.gmra.mrb[0].mxu0 %v1255
        %v1481 = vpop.f32.mrb[0].mxu0
        %v1482 = vadd.f32 %v997, %v1481
        %v1483 = vpop.f32.mrb[0].mxu0
        %v1484 = vpop.f32.mrb[0].mxu0
        %v1485 = vadd.f32 %v1000, %v1484
        %v1486 = vpop.f32.mrb[0].mxu0
        %1487 = vmatprep.mubr.bf16.mxu0 0
        %1488 = vmatmul.mubr.bf16.gmra.mrb[0].mxu0 %v1258
        %v1489 = vpop.f32.mrb[0].mxu0
        %v1490 = vadd.f32 %v1005, %v1489
        %v1491 = vpop.f32.mrb[0].mxu0
        %v1492 = vpop.f32.mrb[0].mxu0
        %v1493 = vadd.f32 %v1008, %v1492
        %v1494 = vpop.f32.mrb[0].mxu0
        %1495 = vmatprep.mubr.bf16.mxu0 0
        %1496 = vmatmul.mubr.bf16.gmra.mrb[0].mxu0 %v1261
        %v1497 = vpop.f32.mrb[0].mxu0
        %v1498 = vadd.f32 %v997, %v1497
        %v1499 = vpop.f32.mrb[0].mxu0
        %v1500 = vpop.f32.mrb[0].mxu0
        %v1501 = vadd.f32 %v1000, %v1500
        %v1502 = vpop.f32.mrb[0].mxu0
        %1503 = vmatprep.mubr.bf16.mxu0 0
        %1504 = vmatmul.mubr.bf16.gmra.mrb[0].mxu0 %v1264
        %v1505 = vpop.f32.mrb[0].mxu0
        %v1506 = vadd.f32 %v1005, %v1505
        %v1507 = vpop.f32.mrb[0].mxu0
        %v1508 = vpop.f32.mrb[0].mxu0
        %v1509 = vadd.f32 %v1008, %v1508
        %v1510 = vpop.f32.mrb[0].mxu0
        %1511 = vmatprep.mubr.bf16.mxu0 0
        %1512 = vmatmul.mubr.bf16.gmra.mrb[0].mxu0 %v1267
        %v1513 = vpop.f32.mrb[0].mxu0
        %v1514 = vadd.f32 %v997, %v1513
        %v1515 = vpop.f32.mrb[0].mxu0
        %v1516 = vpop.f32.mrb[0].mxu0
        %v1517 = vadd.f32 %v1000, %v1516
        %v1518 = vpop.f32.mrb[0].mxu0
        %1519 = vmatprep.mubr.bf16.mxu0 0
        %1520 = vmatmul.mubr.bf16.gmra.mrb[0].mxu0 %v1270
        %v1521 = vpop.f32.mrb[0].mxu0
        %v1522 = vadd.f32 %v1005, %v1521
        %v1523 = vpop.f32.mrb[0].mxu0
        %v1524 = vpop.f32.mrb[0].mxu0
        %v1525 = vadd.f32 %v1008, %v1524
        %v1526 = vpop.f32.mrb[0].mxu0
        %1527 = vmatprep.mubr.bf16.mxu0 0
        %1528 = vmatmul.mubr.bf16.gmra.mrb[0].mxu0 %v1273
        %v1529 = vpop.f32.mrb[0].mxu0
        %v1530 = vadd.f32 %v997, %v1529
        %v1531 = vpop.f32.mrb[0].mxu0
        %v1532 = vpop.f32.mrb[0].mxu0
        %v1533 = vadd.f32 %v1000, %v1532
        %v1534 = vpop.f32.mrb[0].mxu0
        %1535 = vmatprep.mubr.bf16.mxu0 0
        %1536 = vmatmul.mubr.bf16.gmra.mrb[0].mxu0 %v1276
        %v1537 = vpop.f32.mrb[0].mxu0
        %v1538 = vadd.f32 %v1005, %v1537
        %v1539 = vpop.f32.mrb[0].mxu0
        %v1540 = vpop.f32.mrb[0].mxu0
        %v1541 = vadd.f32 %v1008, %v1540
        %v1542 = vpop.f32.mrb[0].mxu0
        %1543 = vmatprep.mubr.bf16.mxu0 0
        %1544 = vmatmul.mubr.bf16.gmra.mrb[0].mxu0 %v1279
        %v1545 = vpop.f32.mrb[0].mxu0
        %v1546 = vadd.f32 %v997, %v1545
        %v1547 = vpop.f32.mrb[0].mxu0
        %v1548 = vpop.f32.mrb[0].mxu0
        %v1549 = vadd.f32 %v1000, %v1548
        %v1550 = vpop.f32.mrb[0].mxu0
        %1551 = vmatprep.mubr.bf16.mxu0 0
        %1552 = vmatmul.mubr.bf16.gmra.mrb[0].mxu0 %v1282
        %v1553 = vpop.f32.mrb[0].mxu0
        %v1554 = vadd.f32 %v1005, %v1553
        %v1555 = vpop.f32.mrb[0].mxu0
        %v1556 = vpop.f32.mrb[0].mxu0
        %v1557 = vadd.f32 %v1008, %v1556
        %v1558 = vpop.f32.mrb[0].mxu0
        %1559 = vmatprep.mubr.bf16.mxu0 0
        %1560 = vmatmul.mubr.bf16.gmra.mrb[0].mxu0 %v1285
        %v1561 = vpop.f32.mrb[0].mxu0
        %v1562 = vadd.f32 %v997, %v1561
        %v1563 = vpop.f32.mrb[0].mxu0
        %v1564 = vpop.f32.mrb[0].mxu0
        %v1565 = vadd.f32 %v1000, %v1564
        %v1566 = vpop.f32.mrb[0].mxu0
        %1567 = vmatprep.mubr.bf16.mxu0 0
        %1568 = vmatmul.mubr.bf16.gmra.mrb[0].mxu0 %v1288
        %v1569 = vpop.f32.mrb[0].mxu0
        %v1570 = vadd.f32 %v1005, %v1569
        %v1571 = vpop.f32.mrb[0].mxu0
        %v1572 = vpop.f32.mrb[0].mxu0
        %v1573 = vadd.f32 %v1008, %v1572
        %v1574 = vpop.f32.mrb[0].mxu0
        %1575 = vmatprep.mubr.bf16.mxu0 0
        %1576 = vmatmul.mubr.bf16.gmra.mrb[0].mxu0 %v1291
        %v1577 = vpop.f32.mrb[0].mxu0
        %v1578 = vadd.f32 %v997, %v1577
        %v1579 = vpop.f32.mrb[0].mxu0
        %v1580 = vpop.f32.mrb[0].mxu0
        %v1581 = vadd.f32 %v1000, %v1580
        %v1582 = vpop.f32.mrb[0].mxu0
        %1583 = vmatprep.mubr.bf16.mxu0 0
        %1584 = vmatmul.mubr.bf16.gmra.mrb[0].mxu0 %v1294
        %v1585 = vpop.f32.mrb[0].mxu0
        %v1586 = vadd.f32 %v1005, %v1585
        %v1587 = vpop.f32.mrb[0].mxu0
        %v1588 = vpop.f32.mrb[0].mxu0
        %v1589 = vadd.f32 %v1008, %v1588
        %v1590 = vpop.f32.mrb[0].mxu0
        %1591 = vmatprep.mubr.bf16.mxu0 0
        %1592 = vmatmul.mubr.bf16.gmra.mrb[0].mxu0 %v1297
        %v1593 = vpop.f32.mrb[0].mxu0
        %v1594 = vadd.f32 %v997, %v1593
        %v1595 = vpop.f32.mrb[0].mxu0
        %v1596 = vpop.f32.mrb[0].mxu0
        %v1597 = vadd.f32 %v1000, %v1596
        %v1598 = vpop.f32.mrb[0].mxu0
        %1599 = vmatprep.mubr.bf16.mxu0 0
        %1600 = vmatmul.mubr.bf16.gmra.mrb[0].mxu0 %v1300
        %v1601 = vpop.f32.mrb[0].mxu0
        %v1602 = vadd.f32 %v1005, %v1601
        %v1603 = vpop.f32.mrb[0].mxu0
        %v1604 = vpop.f32.mrb[0].mxu0
        %v1605 = vadd.f32 %v1008, %v1604
        %v1606 = vpop.f32.mrb[0].mxu0
        %1607 = vmatprep.mubr.bf16.mxu0 0
        %1608 = vmatmul.mubr.bf16.gmra.mrb[0].mxu0 %v1303
        %v1609 = vpop.f32.mrb[0].mxu0
        %v1610 = vadd.f32 %v997, %v1609
        %v1611 = vpop.f32.mrb[0].mxu0
        %v1612 = vpop.f32.mrb[0].mxu0
        %v1613 = vadd.f32 %v1000, %v1612
        %v1614 = vpop.f32.mrb[0].mxu0
        %1615 = vmatprep.mubr.bf16.mxu0 0
        %1616 = vmatmul.mubr.bf16.gmra.mrb[0].mxu0 %v1306
        %v1617 = vpop.f32.mrb[0].mxu0
        %v1618 = vadd.f32 %v1005, %v1617
        %v1619 = vpop.f32.mrb[0].mxu0
        %v1620 = vpop.f32.mrb[0].mxu0
        %v1621 = vadd.f32 %v1008, %v1620
        %v1622 = vpop.f32.mrb[0].mxu0
        %1623 = vmatprep.mubr.bf16.mxu0 0
        %1624 = vmatmul.mubr.bf16.gmra.mrb[0].mxu0 %v1309
        %v1625 = vpop.f32.mrb[0].mxu0
        %v1626 = vadd.f32 %v997, %v1625
        %v1627 = vpop.f32.mrb[0].mxu0
        %v1628 = vpop.f32.mrb[0].mxu0
        %v1629 = vadd.f32 %v1000, %v1628
        %v1630 = vpop.f32.mrb[0].mxu0
        %1631 = vmatprep.mubr.bf16.mxu0 0
        %1632 = vmatmul.mubr.bf16.gmra.mrb[0].mxu0 %v1312
        %v1633 = vpop.f32.mrb[0].mxu0
        %v1634 = vadd.f32 %v1005, %v1633
        %v1635 = vpop.f32.mrb[0].mxu0
        %v1636 = vpop.f32.mrb[0].mxu0
        %v1637 = vadd.f32 %v1008, %v1636
        %v1638 = vpop.f32.mrb[0].mxu0
        %1639 = vmatprep.mubr.bf16.mxu0 0
        %1640 = vmatmul.mubr.bf16.gmra.mrb[0].mxu0 %v1315
        %v1641 = vpop.f32.mrb[0].mxu0
        %v1642 = vadd.f32 %v997, %v1641
        %v1643 = vpop.f32.mrb[0].mxu0
        %v1644 = vpop.f32.mrb[0].mxu0
        %v1645 = vadd.f32 %v1000, %v1644
        %v1646 = vpop.f32.mrb[0].mxu0
        %1647 = vmatprep.mubr.bf16.mxu0 0
        %1648 = vmatmul.mubr.bf16.gmra.mrb[0].mxu0 %v1318
        %v1649 = vpop.f32.mrb[0].mxu0
        %v1650 = vadd.f32 %v1005, %v1649
        %v1651 = vpop.f32.mrb[0].mxu0
        %v1652 = vpop.f32.mrb[0].mxu0
        %v1653 = vadd.f32 %v1008, %v1652
        %v1654 = vpop.f32.mrb[0].mxu0
        %1655 = vmatprep.mubr.bf16.mxu0 0
        %1656 = vmatmul.mubr.bf16.gmra.mrb[0].mxu0 %v1321
        %v1657 = vpop.f32.mrb[0].mxu0
        %v1658 = vadd.f32 %v997, %v1657
        %v1659 = vpop.f32.mrb[0].mxu0
        %v1660 = vpop.f32.mrb[0].mxu0
        %v1661 = vadd.f32 %v1000, %v1660
        %v1662 = vpop.f32.mrb[0].mxu0
        %1663 = vmatprep.mubr.bf16.mxu0 0
        %1664 = vmatmul.mubr.bf16.gmra.mrb[0].mxu0 %v1324
        %v1665 = vpop.f32.mrb[0].mxu0
        %v1666 = vadd.f32 %v1005, %v1665
        %v1667 = vpop.f32.mrb[0].mxu0
        %v1668 = vpop.f32.mrb[0].mxu0
        %v1669 = vadd.f32 %v1008, %v1668
        %v1670 = vpop.f32.mrb[0].mxu0
        %1671 = vmatprep.mubr.bf16.mxu0 0
        %1672 = vmatmul.mubr.bf16.gmra.mrb[0].mxu0 %v1327
        %v1673 = vpop.f32.mrb[0].mxu0
        %v1674 = vadd.f32 %v997, %v1673
        %v1675 = vpop.f32.mrb[0].mxu0
        %v1676 = vpop.f32.mrb[0].mxu0
        %v1677 = vadd.f32 %v1000, %v1676
        %v1678 = vpop.f32.mrb[0].mxu0
        %1679 = vmatprep.mubr.bf16.mxu0 0
        %1680 = vmatmul.mubr.bf16.gmra.mrb[0].mxu0 %v1330
        %v1681 = vpop.f32.mrb[0].mxu0
        %v1682 = vadd.f32 %v1005, %v1681
        %v1683 = vpop.f32.mrb[0].mxu0
        %v1684 = vpop.f32.mrb[0].mxu0
        %v1685 = vadd.f32 %v1008, %v1684
        %v1686 = vpop.f32.mrb[0].mxu0
        %1687 = vdwg.mxu0
        %v1688 = vld [vmem:[%s4] sm:$0x1]
        %v1690 = vlaneseq
        %v1691 = vshrl.u32 %v1690, 7
        %v1692 = vsub.s32 0, %v1691
        %v1693 = vrot.slane %v1688, %v1692
        %v1695 = vadd.f32 %v1370, %v1693
        %v1696 = vadd.f32 %v1373, %v1693
        %v1697 = vadd.f32 %v1378, %v1693
        %v1698 = vadd.f32 %v1381, %v1693
        %v1699 = vadd.f32 %v1386, %v1693
        %v1700 = vadd.f32 %v1389, %v1693
        %v1701 = vadd.f32 %v1394, %v1693
        %v1702 = vadd.f32 %v1397, %v1693
        %v1703 = vadd.f32 %v1402, %v1693
        %v1704 = vadd.f32 %v1405, %v1693
        %v1705 = vadd.f32 %v1410, %v1693
        %v1706 = vadd.f32 %v1413, %v1693
        %v1707 = vadd.f32 %v1418, %v1693
        %v1708 = vadd.f32 %v1421, %v1693
        %v1709 = vadd.f32 %v1426, %v1693
        %v1710 = vadd.f32 %v1429, %v1693
        %v1711 = vadd.f32 %v1434, %v1693
        %v1712 = vadd.f32 %v1437, %v1693
        %v1713 = vadd.f32 %v1442, %v1693
        %v1714 = vadd.f32 %v1445, %v1693
        %v1715 = vadd.f32 %v1450, %v1693
        %v1716 = vadd.f32 %v1453, %v1693
        %v1717 = vadd.f32 %v1458, %v1693
        %v1718 = vadd.f32 %v1461, %v1693
        %v1719 = vadd.f32 %v1466, %v1693
        %v1720 = vadd.f32 %v1469, %v1693
        %v1721 = vadd.f32 %v1474, %v1693
        %v1722 = vadd.f32 %v1477, %v1693
        %v1723 = vadd.f32 %v1482, %v1693
        %v1724 = vadd.f32 %v1485, %v1693
        %v1725 = vadd.f32 %v1490, %v1693
        %v1726 = vadd.f32 %v1493, %v1693
        %v1727 = vadd.f32 %v1498, %v1693
        %v1728 = vadd.f32 %v1501, %v1693
        %v1729 = vadd.f32 %v1506, %v1693
        %v1730 = vadd.f32 %v1509, %v1693
        %v1731 = vadd.f32 %v1514, %v1693
        %v1732 = vadd.f32 %v1517, %v1693
        %v1733 = vadd.f32 %v1522, %v1693
        %v1734 = vadd.f32 %v1525, %v1693
        %v1735 = vadd.f32 %v1530, %v1693
        %v1736 = vadd.f32 %v1533, %v1693
        %v1737 = vadd.f32 %v1538, %v1693
        %v1738 = vadd.f32 %v1541, %v1693
        %v1739 = vadd.f32 %v1546, %v1693
        %v1740 = vadd.f32 %v1549, %v1693
        %v1741 = vadd.f32 %v1554, %v1693
        %v1742 = vadd.f32 %v1557, %v1693
        %v1743 = vadd.f32 %v1562, %v1693
        %v1744 = vadd.f32 %v1565, %v1693
        %v1745 = vadd.f32 %v1570, %v1693
        %v1746 = vadd.f32 %v1573, %v1693
        %v1747 = vadd.f32 %v1578, %v1693
        %v1748 = vadd.f32 %v1581, %v1693
        %v1749 = vadd.f32 %v1586, %v1693
        %v1750 = vadd.f32 %v1589, %v1693
        %v1751 = vadd.f32 %v1594, %v1693
        %v1752 = vadd.f32 %v1597, %v1693
        %v1753 = vadd.f32 %v1602, %v1693
        %v1754 = vadd.f32 %v1605, %v1693
        %v1755 = vadd.f32 %v1610, %v1693
        %v1756 = vadd.f32 %v1613, %v1693
        %v1757 = vadd.f32 %v1618, %v1693
        %v1758 = vadd.f32 %v1621, %v1693
        %v1759 = vadd.f32 %v1626, %v1693
        %v1760 = vadd.f32 %v1629, %v1693
        %v1761 = vadd.f32 %v1634, %v1693
        %v1762 = vadd.f32 %v1637, %v1693
        %v1763 = vadd.f32 %v1642, %v1693
        %v1764 = vadd.f32 %v1645, %v1693
        %v1765 = vadd.f32 %v1650, %v1693
        %v1766 = vadd.f32 %v1653, %v1693
        %v1767 = vadd.f32 %v1658, %v1693
        %v1768 = vadd.f32 %v1661, %v1693
        %v1769 = vadd.f32 %v1666, %v1693
        %v1770 = vadd.f32 %v1669, %v1693
        %v1771 = vadd.f32 %v1674, %v1693
        %v1772 = vadd.f32 %v1677, %v1693
        %v1773 = vadd.f32 %v1682, %v1693
        %v1774 = vadd.f32 %v1685, %v1693
        %v1775 = vmax.f32 %v1695, 0.0
        %v1776 = vmax.f32 %v1696, 0.0
        %v1777 = vmax.f32 %v1697, 0.0
        %v1778 = vmax.f32 %v1698, 0.0
        %v1779 = vmax.f32 %v1699, 0.0
        %v1780 = vmax.f32 %v1700, 0.0
        %v1781 = vmax.f32 %v1701, 0.0
        %v1782 = vmax.f32 %v1702, 0.0
        %v1783 = vmax.f32 %v1703, 0.0
        %v1784 = vmax.f32 %v1704, 0.0
        %v1785 = vmax.f32 %v1705, 0.0
        %v1786 = vmax.f32 %v1706, 0.0
        %v1787 = vmax.f32 %v1707, 0.0
        %v1788 = vmax.f32 %v1708, 0.0
        %v1789 = vmax.f32 %v1709, 0.0
        %v1790 = vmax.f32 %v1710, 0.0
        %v1791 = vmax.f32 %v1711, 0.0
        %v1792 = vmax.f32 %v1712, 0.0
        %v1793 = vmax.f32 %v1713, 0.0
        %v1794 = vmax.f32 %v1714, 0.0
        %v1795 = vmax.f32 %v1715, 0.0
        %v1796 = vmax.f32 %v1716, 0.0
        %v1797 = vmax.f32 %v1717, 0.0
        %v1798 = vmax.f32 %v1718, 0.0
        %v1799 = vmax.f32 %v1719, 0.0
        %v1800 = vmax.f32 %v1720, 0.0
        %v1801 = vmax.f32 %v1721, 0.0
        %v1802 = vmax.f32 %v1722, 0.0
        %v1803 = vmax.f32 %v1723, 0.0
        %v1804 = vmax.f32 %v1724, 0.0
        %v1805 = vmax.f32 %v1725, 0.0
        %v1806 = vmax.f32 %v1726, 0.0
        %v1807 = vmax.f32 %v1727, 0.0
        %v1808 = vmax.f32 %v1728, 0.0
        %v1809 = vmax.f32 %v1729, 0.0
        %v1810 = vmax.f32 %v1730, 0.0
        %v1811 = vmax.f32 %v1731, 0.0
        %v1812 = vmax.f32 %v1732, 0.0
        %v1813 = vmax.f32 %v1733, 0.0
        %v1814 = vmax.f32 %v1734, 0.0
        %v1815 = vmax.f32 %v1735, 0.0
        %v1816 = vmax.f32 %v1736, 0.0
        %v1817 = vmax.f32 %v1737, 0.0
        %v1818 = vmax.f32 %v1738, 0.0
        %v1819 = vmax.f32 %v1739, 0.0
        %v1820 = vmax.f32 %v1740, 0.0
        %v1821 = vmax.f32 %v1741, 0.0
        %v1822 = vmax.f32 %v1742, 0.0
        %v1823 = vmax.f32 %v1743, 0.0
        %v1824 = vmax.f32 %v1744, 0.0
        %v1825 = vmax.f32 %v1745, 0.0
        %v1826 = vmax.f32 %v1746, 0.0
        %v1827 = vmax.f32 %v1747, 0.0
        %v1828 = vmax.f32 %v1748, 0.0
        %v1829 = vmax.f32 %v1749, 0.0
        %v1830 = vmax.f32 %v1750, 0.0
        %v1831 = vmax.f32 %v1751, 0.0
        %v1832 = vmax.f32 %v1752, 0.0
        %v1833 = vmax.f32 %v1753, 0.0
        %v1834 = vmax.f32 %v1754, 0.0
        %v1835 = vmax.f32 %v1755, 0.0
        %v1836 = vmax.f32 %v1756, 0.0
        %v1837 = vmax.f32 %v1757, 0.0
        %v1838 = vmax.f32 %v1758, 0.0
        %v1839 = vmax.f32 %v1759, 0.0
        %v1840 = vmax.f32 %v1760, 0.0
        %v1841 = vmax.f32 %v1761, 0.0
        %v1842 = vmax.f32 %v1762, 0.0
        %v1843 = vmax.f32 %v1763, 0.0
        %v1844 = vmax.f32 %v1764, 0.0
        %v1845 = vmax.f32 %v1765, 0.0
        %v1846 = vmax.f32 %v1766, 0.0
        %v1847 = vmax.f32 %v1767, 0.0
        %v1848 = vmax.f32 %v1768, 0.0
        %v1849 = vmax.f32 %v1769, 0.0
        %v1850 = vmax.f32 %v1770, 0.0
        %v1851 = vmax.f32 %v1771, 0.0
        %v1852 = vmax.f32 %v1772, 0.0
        %v1853 = vmax.f32 %v1773, 0.0
        %v1854 = vmax.f32 %v1774, 0.0
        %v1855 = vpack.c.bf16 %v1776, %v1775
        %v1856 = vpack.c.bf16 %v1778, %v1777
        %v1857 = vpack.c.bf16 %v1780, %v1779
        %v1858 = vpack.c.bf16 %v1782, %v1781
        %v1859 = vpack.c.bf16 %v1784, %v1783
        %v1860 = vpack.c.bf16 %v1786, %v1785
        %v1861 = vpack.c.bf16 %v1788, %v1787
        %v1862 = vpack.c.bf16 %v1790, %v1789
        %v1863 = vpack.c.bf16 %v1792, %v1791
        %v1864 = vpack.c.bf16 %v1794, %v1793
        %v1865 = vpack.c.bf16 %v1796, %v1795
        %v1866 = vpack.c.bf16 %v1798, %v1797
        %v1867 = vpack.c.bf16 %v1800, %v1799
        %v1868 = vpack.c.bf16 %v1802, %v1801
        %v1869 = vpack.c.bf16 %v1804, %v1803
        %v1870 = vpack.c.bf16 %v1806, %v1805
        %v1871 = vpack.c.bf16 %v1808, %v1807
        %v1872 = vpack.c.bf16 %v1810, %v1809
        %v1873 = vpack.c.bf16 %v1812, %v1811
        %v1874 = vpack.c.bf16 %v1814, %v1813
        %v1875 = vpack.c.bf16 %v1816, %v1815
        %v1876 = vpack.c.bf16 %v1818, %v1817
        %v1877 = vpack.c.bf16 %v1820, %v1819
        %v1878 = vpack.c.bf16 %v1822, %v1821
        %v1879 = vpack.c.bf16 %v1824, %v1823
        %v1880 = vpack.c.bf16 %v1826, %v1825
        %v1881 = vpack.c.bf16 %v1828, %v1827
        %v1882 = vpack.c.bf16 %v1830, %v1829
        %v1883 = vpack.c.bf16 %v1832, %v1831
        %v1884 = vpack.c.bf16 %v1834, %v1833
        %v1885 = vpack.c.bf16 %v1836, %v1835
        %v1886 = vpack.c.bf16 %v1838, %v1837
        %v1887 = vpack.c.bf16 %v1840, %v1839
        %v1888 = vpack.c.bf16 %v1842, %v1841
        %v1889 = vpack.c.bf16 %v1844, %v1843
        %v1890 = vpack.c.bf16 %v1846, %v1845
        %v1891 = vpack.c.bf16 %v1848, %v1847
        %v1892 = vpack.c.bf16 %v1850, %v1849
        %v1893 = vpack.c.bf16 %v1852, %v1851
        %v1894 = vpack.c.bf16 %v1854, %v1853
        %v1895 = vld [vmem:[%s5] sm:$0xf]
        %v1896 = vld [vmem:[%s5 + $0x4] sm:$0xf]
        %v1897 = vld [vmem:[%s5 + $0x8] sm:$0xf]
        %v1898 = vld [vmem:[%s5 + $0xc] sm:$0xf]
        %v1899 = vld [vmem:[%s5 + $0x10] sm:$0xf]
        %v1900 = vld [vmem:[%s5 + $0x14] sm:$0xf]
        %v1901 = vld [vmem:[%s5 + $0x18] sm:$0xf]
        %v1902 = vld [vmem:[%s5 + $0x1c] sm:$0xf]
        %v1903 = vld [vmem:[%s5 + $0x20] sm:$0xf]
        %v1904 = vld [vmem:[%s5 + $0x24] sm:$0xf]
        %v1905 = vld [vmem:[%s5 + $0x28] sm:$0xf]
        %v1906 = vld [vmem:[%s5 + $0x2c] sm:$0xf]
        %v1907 = vld [vmem:[%s5 + $0x30] sm:$0xf]
        %v1908 = vld [vmem:[%s5 + $0x34] sm:$0xf]
        %v1909 = vld [vmem:[%s5 + $0x38] sm:$0xf]
        %v1910 = vld [vmem:[%s5 + $0x3c] sm:$0xf]
        %v1911 = vld [vmem:[%s6] sm:$0x1]
        %v1913 = vlaneseq
        %v1914 = vshrl.u32 %v1913, 7
        %v1915 = vsub.s32 0, %v1914
        %v1916 = vrot.slane %v1911, %v1915
        %v1934 = vunpack.c.l.b16 %v1895
        %v1935 = vunpack.c.l.b16 %v1896
        %v1936 = vunpack.c.l.b16 %v1897
        %v1937 = vunpack.c.l.b16 %v1898
        %v1938 = vunpack.c.l.b16 %v1899
        %v1939 = vunpack.c.l.b16 %v1900
        %v1940 = vunpack.c.l.b16 %v1901
        %v1941 = vunpack.c.l.b16 %v1902
        %v1942 = vunpack.c.l.b16 %v1903
        %v1943 = vunpack.c.l.b16 %v1904
        %v1944 = vunpack.c.l.b16 %v1905
        %v1945 = vunpack.c.l.b16 %v1906
        %v1946 = vunpack.c.l.b16 %v1907
        %v1947 = vunpack.c.l.b16 %v1908
        %v1948 = vunpack.c.l.b16 %v1909
        %v1949 = vunpack.c.l.b16 %v1910
        %v1950 = vpack.c.b16 %v1935, %v1934
        %v1951 = vpack.c.b16 %v1937, %v1936
        %v1952 = vpack.c.b16 %v1939, %v1938
        %v1953 = vpack.c.b16 %v1941, %v1940
        %v1954 = vpack.c.b16 %v1943, %v1942
        %v1955 = vpack.c.b16 %v1945, %v1944
        %v1956 = vpack.c.b16 %v1947, %v1946
        %v1957 = vpack.c.b16 %v1949, %v1948
        %1966 = vmatprep.subr.bf16.mxu0 0
        %1967 = vmatpush1.bf16.msra.mxu0 %v1950
        %1968 = vmatprep.subr.bf16.mxu0 0
        %1969 = vmatpush1.bf16.msra.mxu0 %v1951
        %1970 = vmatprep.subr.bf16.mxu0 0
        %1971 = vmatpush1.bf16.msra.mxu0 %v1952
        %1972 = vmatprep.subr.bf16.mxu0 0
        %1973 = vmatpush1.bf16.msra.mxu0 %v1953
        %1974 = vmatprep.subr.bf16.mxu0 0
        %1975 = vmatpush1.bf16.msra.mxu0 %v1954
        %1976 = vmatprep.subr.bf16.mxu0 0
        %1977 = vmatpush1.bf16.msra.mxu0 %v1955
        %1978 = vmatprep.subr.bf16.mxu0 0
        %1979 = vmatpush1.bf16.msra.mxu0 %v1956
        %1980 = vmatprep.subr.bf16.mxu0 0
        %1981 = vmatpush1.bf16.msra.mxu0 %v1957
        %1982 = vmatprep.subr.bf16.mxu0 0
        %1983 = vmatpush1.bf16.msra.mxu0 0
        %1984 = vmatprep.subr.bf16.mxu0 0
        %1985 = vmatpush1.bf16.msra.mxu0 0
        %1986 = vmatprep.subr.bf16.mxu0 0
        %1987 = vmatpush1.bf16.msra.mxu0 0
        %1988 = vmatprep.subr.bf16.mxu0 0
        %1989 = vmatpush1.bf16.msra.mxu0 0
        %1990 = vmatprep.subr.bf16.mxu0 0
        %1991 = vmatpush1.bf16.msra.mxu0 0
        %1992 = vmatprep.subr.bf16.mxu0 0
        %1993 = vmatpush1.bf16.msra.mxu0 0
        %1994 = vmatprep.subr.bf16.mxu0 0
        %1995 = vmatpush1.bf16.msra.mxu0 0
        %1996 = vmatprep.subr.bf16.mxu0 0
        %1997 = vmatpush1.bf16.msra.mxu0 0
        %1998 = vmatprep.mubr.bf16.mxu0 0
        %1999 = vmatmul.mubr.bf16.gmra.mrb[0].mxu0 %v1855
        %v2000 = vpop.f32.mrb[0].mxu0
        %v2001 = vadd.f32 %v1916, %v2000
        %v2002 = vpop.f32.mrb[0].mxu0
        %v2003 = vpop.f32.mrb[0].mxu0
        %v2004 = vadd.f32 %v1916, %v2003
        %v2005 = vpop.f32.mrb[0].mxu0
        %2006 = vmatprep.mubr.bf16.mxu0 0
        %2007 = vmatmul.mubr.bf16.gmra.mrb[0].mxu0 %v1856
        %v2008 = vpop.f32.mrb[0].mxu0
        %v2009 = vadd.f32 %v1916, %v2008
        %v2010 = vpop.f32.mrb[0].mxu0
        %v2011 = vpop.f32.mrb[0].mxu0
        %v2012 = vadd.f32 %v1916, %v2011
        %v2013 = vpop.f32.mrb[0].mxu0
        %2014 = vmatprep.mubr.bf16.mxu0 0
        %2015 = vmatmul.mubr.bf16.gmra.mrb[0].mxu0 %v1857
        %v2016 = vpop.f32.mrb[0].mxu0
        %v2017 = vadd.f32 %v1916, %v2016
        %v2018 = vpop.f32.mrb[0].mxu0
        %v2019 = vpop.f32.mrb[0].mxu0
        %v2020 = vadd.f32 %v1916, %v2019
        %v2021 = vpop.f32.mrb[0].mxu0
        %2022 = vmatprep.mubr.bf16.mxu0 0
        %2023 = vmatmul.mubr.bf16.gmra.mrb[0].mxu0 %v1858
        %v2024 = vpop.f32.mrb[0].mxu0
        %v2025 = vadd.f32 %v1916, %v2024
        %v2026 = vpop.f32.mrb[0].mxu0
        %v2027 = vpop.f32.mrb[0].mxu0
        %v2028 = vadd.f32 %v1916, %v2027
        %v2029 = vpop.f32.mrb[0].mxu0
        %2030 = vmatprep.mubr.bf16.mxu0 0
        %2031 = vmatmul.mubr.bf16.gmra.mrb[0].mxu0 %v1859
        %v2032 = vpop.f32.mrb[0].mxu0
        %v2033 = vadd.f32 %v1916, %v2032
        %v2034 = vpop.f32.mrb[0].mxu0
        %v2035 = vpop.f32.mrb[0].mxu0
        %v2036 = vadd.f32 %v1916, %v2035
        %v2037 = vpop.f32.mrb[0].mxu0
        %2038 = vmatprep.mubr.bf16.mxu0 0
        %2039 = vmatmul.mubr.bf16.gmra.mrb[0].mxu0 %v1860
        %v2040 = vpop.f32.mrb[0].mxu0
        %v2041 = vadd.f32 %v1916, %v2040
        %v2042 = vpop.f32.mrb[0].mxu0
        %v2043 = vpop.f32.mrb[0].mxu0
        %v2044 = vadd.f32 %v1916, %v2043
        %v2045 = vpop.f32.mrb[0].mxu0
        %2046 = vmatprep.mubr.bf16.mxu0 0
        %2047 = vmatmul.mubr.bf16.gmra.mrb[0].mxu0 %v1861
        %v2048 = vpop.f32.mrb[0].mxu0
        %v2049 = vadd.f32 %v1916, %v2048
        %v2050 = vpop.f32.mrb[0].mxu0
        %v2051 = vpop.f32.mrb[0].mxu0
        %v2052 = vadd.f32 %v1916, %v2051
        %v2053 = vpop.f32.mrb[0].mxu0
        %2054 = vmatprep.mubr.bf16.mxu0 0
        %2055 = vmatmul.mubr.bf16.gmra.mrb[0].mxu0 %v1862
        %v2056 = vpop.f32.mrb[0].mxu0
        %v2057 = vadd.f32 %v1916, %v2056
        %v2058 = vpop.f32.mrb[0].mxu0
        %v2059 = vpop.f32.mrb[0].mxu0
        %v2060 = vadd.f32 %v1916, %v2059
        %v2061 = vpop.f32.mrb[0].mxu0
        %2062 = vmatprep.mubr.bf16.mxu0 0
        %2063 = vmatmul.mubr.bf16.gmra.mrb[0].mxu0 %v1863
        %v2064 = vpop.f32.mrb[0].mxu0
        %v2065 = vadd.f32 %v1916, %v2064
        %v2066 = vpop.f32.mrb[0].mxu0
        %v2067 = vpop.f32.mrb[0].mxu0
        %v2068 = vadd.f32 %v1916, %v2067
        %v2069 = vpop.f32.mrb[0].mxu0
        %2070 = vmatprep.mubr.bf16.mxu0 0
        %2071 = vmatmul.mubr.bf16.gmra.mrb[0].mxu0 %v1864
        %v2072 = vpop.f32.mrb[0].mxu0
        %v2073 = vadd.f32 %v1916, %v2072
        %v2074 = vpop.f32.mrb[0].mxu0
        %v2075 = vpop.f32.mrb[0].mxu0
        %v2076 = vadd.f32 %v1916, %v2075
        %v2077 = vpop.f32.mrb[0].mxu0
        %2078 = vmatprep.mubr.bf16.mxu0 0
        %2079 = vmatmul.mubr.bf16.gmra.mrb[0].mxu0 %v1865
        %v2080 = vpop.f32.mrb[0].mxu0
        %v2081 = vadd.f32 %v1916, %v2080
        %v2082 = vpop.f32.mrb[0].mxu0
        %v2083 = vpop.f32.mrb[0].mxu0
        %v2084 = vadd.f32 %v1916, %v2083
        %v2085 = vpop.f32.mrb[0].mxu0
        %2086 = vmatprep.mubr.bf16.mxu0 0
        %2087 = vmatmul.mubr.bf16.gmra.mrb[0].mxu0 %v1866
        %v2088 = vpop.f32.mrb[0].mxu0
        %v2089 = vadd.f32 %v1916, %v2088
        %v2090 = vpop.f32.mrb[0].mxu0
        %v2091 = vpop.f32.mrb[0].mxu0
        %v2092 = vadd.f32 %v1916, %v2091
        %v2093 = vpop.f32.mrb[0].mxu0
        %2094 = vmatprep.mubr.bf16.mxu0 0
        %2095 = vmatmul.mubr.bf16.gmra.mrb[0].mxu0 %v1867
        %v2096 = vpop.f32.mrb[0].mxu0
        %v2097 = vadd.f32 %v1916, %v2096
        %v2098 = vpop.f32.mrb[0].mxu0
        %v2099 = vpop.f32.mrb[0].mxu0
        %v2100 = vadd.f32 %v1916, %v2099
        %v2101 = vpop.f32.mrb[0].mxu0
        %2102 = vmatprep.mubr.bf16.mxu0 0
        %2103 = vmatmul.mubr.bf16.gmra.mrb[0].mxu0 %v1868
        %v2104 = vpop.f32.mrb[0].mxu0
        %v2105 = vadd.f32 %v1916, %v2104
        %v2106 = vpop.f32.mrb[0].mxu0
        %v2107 = vpop.f32.mrb[0].mxu0
        %v2108 = vadd.f32 %v1916, %v2107
        %v2109 = vpop.f32.mrb[0].mxu0
        %2110 = vmatprep.mubr.bf16.mxu0 0
        %2111 = vmatmul.mubr.bf16.gmra.mrb[0].mxu0 %v1869
        %v2112 = vpop.f32.mrb[0].mxu0
        %v2113 = vadd.f32 %v1916, %v2112
        %v2114 = vpop.f32.mrb[0].mxu0
        %v2115 = vpop.f32.mrb[0].mxu0
        %v2116 = vadd.f32 %v1916, %v2115
        %v2117 = vpop.f32.mrb[0].mxu0
        %2118 = vmatprep.mubr.bf16.mxu0 0
        %2119 = vmatmul.mubr.bf16.gmra.mrb[0].mxu0 %v1870
        %v2120 = vpop.f32.mrb[0].mxu0
        %v2121 = vadd.f32 %v1916, %v2120
        %v2122 = vpop.f32.mrb[0].mxu0
        %v2123 = vpop.f32.mrb[0].mxu0
        %v2124 = vadd.f32 %v1916, %v2123
        %v2125 = vpop.f32.mrb[0].mxu0
        %2126 = vmatprep.mubr.bf16.mxu0 0
        %2127 = vmatmul.mubr.bf16.gmra.mrb[0].mxu0 %v1871
        %v2128 = vpop.f32.mrb[0].mxu0
        %v2129 = vadd.f32 %v1916, %v2128
        %v2130 = vpop.f32.mrb[0].mxu0
        %v2131 = vpop.f32.mrb[0].mxu0
        %v2132 = vadd.f32 %v1916, %v2131
        %v2133 = vpop.f32.mrb[0].mxu0
        %2134 = vmatprep.mubr.bf16.mxu0 0
        %2135 = vmatmul.mubr.bf16.gmra.mrb[0].mxu0 %v1872
        %v2136 = vpop.f32.mrb[0].mxu0
        %v2137 = vadd.f32 %v1916, %v2136
        %v2138 = vpop.f32.mrb[0].mxu0
        %v2139 = vpop.f32.mrb[0].mxu0
        %v2140 = vadd.f32 %v1916, %v2139
        %v2141 = vpop.f32.mrb[0].mxu0
        %2142 = vmatprep.mubr.bf16.mxu0 0
        %2143 = vmatmul.mubr.bf16.gmra.mrb[0].mxu0 %v1873
        %v2144 = vpop.f32.mrb[0].mxu0
        %v2145 = vadd.f32 %v1916, %v2144
        %v2146 = vpop.f32.mrb[0].mxu0
        %v2147 = vpop.f32.mrb[0].mxu0
        %v2148 = vadd.f32 %v1916, %v2147
        %v2149 = vpop.f32.mrb[0].mxu0
        %2150 = vmatprep.mubr.bf16.mxu0 0
        %2151 = vmatmul.mubr.bf16.gmra.mrb[0].mxu0 %v1874
        %v2152 = vpop.f32.mrb[0].mxu0
        %v2153 = vadd.f32 %v1916, %v2152
        %v2154 = vpop.f32.mrb[0].mxu0
        %v2155 = vpop.f32.mrb[0].mxu0
        %v2156 = vadd.f32 %v1916, %v2155
        %v2157 = vpop.f32.mrb[0].mxu0
        %2158 = vmatprep.mubr.bf16.mxu0 0
        %2159 = vmatmul.mubr.bf16.gmra.mrb[0].mxu0 %v1875
        %v2160 = vpop.f32.mrb[0].mxu0
        %v2161 = vadd.f32 %v1916, %v2160
        %v2162 = vpop.f32.mrb[0].mxu0
        %v2163 = vpop.f32.mrb[0].mxu0
        %v2164 = vadd.f32 %v1916, %v2163
        %v2165 = vpop.f32.mrb[0].mxu0
        %2166 = vmatprep.mubr.bf16.mxu0 0
        %2167 = vmatmul.mubr.bf16.gmra.mrb[0].mxu0 %v1876
        %v2168 = vpop.f32.mrb[0].mxu0
        %v2169 = vadd.f32 %v1916, %v2168
        %v2170 = vpop.f32.mrb[0].mxu0
        %v2171 = vpop.f32.mrb[0].mxu0
        %v2172 = vadd.f32 %v1916, %v2171
        %v2173 = vpop.f32.mrb[0].mxu0
        %2174 = vmatprep.mubr.bf16.mxu0 0
        %2175 = vmatmul.mubr.bf16.gmra.mrb[0].mxu0 %v1877
        %v2176 = vpop.f32.mrb[0].mxu0
        %v2177 = vadd.f32 %v1916, %v2176
        %v2178 = vpop.f32.mrb[0].mxu0
        %v2179 = vpop.f32.mrb[0].mxu0
        %v2180 = vadd.f32 %v1916, %v2179
        %v2181 = vpop.f32.mrb[0].mxu0
        %2182 = vmatprep.mubr.bf16.mxu0 0
        %2183 = vmatmul.mubr.bf16.gmra.mrb[0].mxu0 %v1878
        %v2184 = vpop.f32.mrb[0].mxu0
        %v2185 = vadd.f32 %v1916, %v2184
        %v2186 = vpop.f32.mrb[0].mxu0
        %v2187 = vpop.f32.mrb[0].mxu0
        %v2188 = vadd.f32 %v1916, %v2187
        %v2189 = vpop.f32.mrb[0].mxu0
        %2190 = vmatprep.mubr.bf16.mxu0 0
        %2191 = vmatmul.mubr.bf16.gmra.mrb[0].mxu0 %v1879
        %v2192 = vpop.f32.mrb[0].mxu0
        %v2193 = vadd.f32 %v1916, %v2192
        %v2194 = vpop.f32.mrb[0].mxu0
        %v2195 = vpop.f32.mrb[0].mxu0
        %v2196 = vadd.f32 %v1916, %v2195
        %v2197 = vpop.f32.mrb[0].mxu0
        %2198 = vmatprep.mubr.bf16.mxu0 0
        %2199 = vmatmul.mubr.bf16.gmra.mrb[0].mxu0 %v1880
        %v2200 = vpop.f32.mrb[0].mxu0
        %v2201 = vadd.f32 %v1916, %v2200
        %v2202 = vpop.f32.mrb[0].mxu0
        %v2203 = vpop.f32.mrb[0].mxu0
        %v2204 = vadd.f32 %v1916, %v2203
        %v2205 = vpop.f32.mrb[0].mxu0
        %2206 = vmatprep.mubr.bf16.mxu0 0
        %2207 = vmatmul.mubr.bf16.gmra.mrb[0].mxu0 %v1881
        %v2208 = vpop.f32.mrb[0].mxu0
        %v2209 = vadd.f32 %v1916, %v2208
        %v2210 = vpop.f32.mrb[0].mxu0
        %v2211 = vpop.f32.mrb[0].mxu0
        %v2212 = vadd.f32 %v1916, %v2211
        %v2213 = vpop.f32.mrb[0].mxu0
        %2214 = vmatprep.mubr.bf16.mxu0 0
        %2215 = vmatmul.mubr.bf16.gmra.mrb[0].mxu0 %v1882
        %v2216 = vpop.f32.mrb[0].mxu0
        %v2217 = vadd.f32 %v1916, %v2216
        %v2218 = vpop.f32.mrb[0].mxu0
        %v2219 = vpop.f32.mrb[0].mxu0
        %v2220 = vadd.f32 %v1916, %v2219
        %v2221 = vpop.f32.mrb[0].mxu0
        %2222 = vmatprep.mubr.bf16.mxu0 0
        %2223 = vmatmul.mubr.bf16.gmra.mrb[0].mxu0 %v1883
        %v2224 = vpop.f32.mrb[0].mxu0
        %v2225 = vadd.f32 %v1916, %v2224
        %v2226 = vpop.f32.mrb[0].mxu0
        %v2227 = vpop.f32.mrb[0].mxu0
        %v2228 = vadd.f32 %v1916, %v2227
        %v2229 = vpop.f32.mrb[0].mxu0
        %2230 = vmatprep.mubr.bf16.mxu0 0
        %2231 = vmatmul.mubr.bf16.gmra.mrb[0].mxu0 %v1884
        %v2232 = vpop.f32.mrb[0].mxu0
        %v2233 = vadd.f32 %v1916, %v2232
        %v2234 = vpop.f32.mrb[0].mxu0
        %v2235 = vpop.f32.mrb[0].mxu0
        %v2236 = vadd.f32 %v1916, %v2235
        %v2237 = vpop.f32.mrb[0].mxu0
        %2238 = vmatprep.mubr.bf16.mxu0 0
        %2239 = vmatmul.mubr.bf16.gmra.mrb[0].mxu0 %v1885
        %v2240 = vpop.f32.mrb[0].mxu0
        %v2241 = vadd.f32 %v1916, %v2240
        %v2242 = vpop.f32.mrb[0].mxu0
        %v2243 = vpop.f32.mrb[0].mxu0
        %v2244 = vadd.f32 %v1916, %v2243
        %v2245 = vpop.f32.mrb[0].mxu0
        %2246 = vmatprep.mubr.bf16.mxu0 0
        %2247 = vmatmul.mubr.bf16.gmra.mrb[0].mxu0 %v1886
        %v2248 = vpop.f32.mrb[0].mxu0
        %v2249 = vadd.f32 %v1916, %v2248
        %v2250 = vpop.f32.mrb[0].mxu0
        %v2251 = vpop.f32.mrb[0].mxu0
        %v2252 = vadd.f32 %v1916, %v2251
        %v2253 = vpop.f32.mrb[0].mxu0
        %2254 = vmatprep.mubr.bf16.mxu0 0
        %2255 = vmatmul.mubr.bf16.gmra.mrb[0].mxu0 %v1887
        %v2256 = vpop.f32.mrb[0].mxu0
        %v2257 = vadd.f32 %v1916, %v2256
        %v2258 = vpop.f32.mrb[0].mxu0
        %v2259 = vpop.f32.mrb[0].mxu0
        %v2260 = vadd.f32 %v1916, %v2259
        %v2261 = vpop.f32.mrb[0].mxu0
        %2262 = vmatprep.mubr.bf16.mxu0 0
        %2263 = vmatmul.mubr.bf16.gmra.mrb[0].mxu0 %v1888
        %v2264 = vpop.f32.mrb[0].mxu0
        %v2265 = vadd.f32 %v1916, %v2264
        %v2266 = vpop.f32.mrb[0].mxu0
        %v2267 = vpop.f32.mrb[0].mxu0
        %v2268 = vadd.f32 %v1916, %v2267
        %v2269 = vpop.f32.mrb[0].mxu0
        %2270 = vmatprep.mubr.bf16.mxu0 0
        %2271 = vmatmul.mubr.bf16.gmra.mrb[0].mxu0 %v1889
        %v2272 = vpop.f32.mrb[0].mxu0
        %v2273 = vadd.f32 %v1916, %v2272
        %v2274 = vpop.f32.mrb[0].mxu0
        %v2275 = vpop.f32.mrb[0].mxu0
        %v2276 = vadd.f32 %v1916, %v2275
        %v2277 = vpop.f32.mrb[0].mxu0
        %2278 = vmatprep.mubr.bf16.mxu0 0
        %2279 = vmatmul.mubr.bf16.gmra.mrb[0].mxu0 %v1890
        %v2280 = vpop.f32.mrb[0].mxu0
        %v2281 = vadd.f32 %v1916, %v2280
        %v2282 = vpop.f32.mrb[0].mxu0
        %v2283 = vpop.f32.mrb[0].mxu0
        %v2284 = vadd.f32 %v1916, %v2283
        %v2285 = vpop.f32.mrb[0].mxu0
        %2286 = vmatprep.mubr.bf16.mxu0 0
        %2287 = vmatmul.mubr.bf16.gmra.mrb[0].mxu0 %v1891
        %v2288 = vpop.f32.mrb[0].mxu0
        %v2289 = vadd.f32 %v1916, %v2288
        %v2290 = vpop.f32.mrb[0].mxu0
        %v2291 = vpop.f32.mrb[0].mxu0
        %v2292 = vadd.f32 %v1916, %v2291
        %v2293 = vpop.f32.mrb[0].mxu0
        %2294 = vmatprep.mubr.bf16.mxu0 0
        %2295 = vmatmul.mubr.bf16.gmra.mrb[0].mxu0 %v1892
        %v2296 = vpop.f32.mrb[0].mxu0
        %v2297 = vadd.f32 %v1916, %v2296
        %v2298 = vpop.f32.mrb[0].mxu0
        %v2299 = vpop.f32.mrb[0].mxu0
        %v2300 = vadd.f32 %v1916, %v2299
        %v2301 = vpop.f32.mrb[0].mxu0
        %2302 = vmatprep.mubr.bf16.mxu0 0
        %2303 = vmatmul.mubr.bf16.gmra.mrb[0].mxu0 %v1893
        %v2304 = vpop.f32.mrb[0].mxu0
        %v2305 = vadd.f32 %v1916, %v2304
        %v2306 = vpop.f32.mrb[0].mxu0
        %v2307 = vpop.f32.mrb[0].mxu0
        %v2308 = vadd.f32 %v1916, %v2307
        %v2309 = vpop.f32.mrb[0].mxu0
        %2310 = vmatprep.mubr.bf16.mxu0 0
        %2311 = vmatmul.mubr.bf16.gmra.mrb[0].mxu0 %v1894
        %v2312 = vpop.f32.mrb[0].mxu0
        %v2313 = vadd.f32 %v1916, %v2312
        %v2314 = vpop.f32.mrb[0].mxu0
        %v2315 = vpop.f32.mrb[0].mxu0
        %v2316 = vadd.f32 %v1916, %v2315
        %v2317 = vpop.f32.mrb[0].mxu0
        %2318 = vdwg.mxu0
        %v2319 = vmax.f32 %v2001, 0.0
        %v2320 = vmax.f32 %v2004, 0.0
        %v2321 = vmax.f32 %v2009, 0.0
        %v2322 = vmax.f32 %v2012, 0.0
        %v2323 = vmax.f32 %v2017, 0.0
        %v2324 = vmax.f32 %v2020, 0.0
        %v2325 = vmax.f32 %v2025, 0.0
        %v2326 = vmax.f32 %v2028, 0.0
        %v2327 = vmax.f32 %v2033, 0.0
        %v2328 = vmax.f32 %v2036, 0.0
        %v2329 = vmax.f32 %v2041, 0.0
        %v2330 = vmax.f32 %v2044, 0.0
        %v2331 = vmax.f32 %v2049, 0.0
        %v2332 = vmax.f32 %v2052, 0.0
        %v2333 = vmax.f32 %v2057, 0.0
        %v2334 = vmax.f32 %v2060, 0.0
        %v2335 = vmax.f32 %v2065, 0.0
        %v2336 = vmax.f32 %v2068, 0.0
        %v2337 = vmax.f32 %v2073, 0.0
        %v2338 = vmax.f32 %v2076, 0.0
        %v2339 = vmax.f32 %v2081, 0.0
        %v2340 = vmax.f32 %v2084, 0.0
        %v2341 = vmax.f32 %v2089, 0.0
        %v2342 = vmax.f32 %v2092, 0.0
        %v2343 = vmax.f32 %v2097, 0.0
        %v2344 = vmax.f32 %v2100, 0.0
        %v2345 = vmax.f32 %v2105, 0.0
        %v2346 = vmax.f32 %v2108, 0.0
        %v2347 = vmax.f32 %v2113, 0.0
        %v2348 = vmax.f32 %v2116, 0.0
        %v2349 = vmax.f32 %v2121, 0.0
        %v2350 = vmax.f32 %v2124, 0.0
        %v2351 = vmax.f32 %v2129, 0.0
        %v2352 = vmax.f32 %v2132, 0.0
        %v2353 = vmax.f32 %v2137, 0.0
        %v2354 = vmax.f32 %v2140, 0.0
        %v2355 = vmax.f32 %v2145, 0.0
        %v2356 = vmax.f32 %v2148, 0.0
        %v2357 = vmax.f32 %v2153, 0.0
        %v2358 = vmax.f32 %v2156, 0.0
        %v2359 = vmax.f32 %v2161, 0.0
        %v2360 = vmax.f32 %v2164, 0.0
        %v2361 = vmax.f32 %v2169, 0.0
        %v2362 = vmax.f32 %v2172, 0.0
        %v2363 = vmax.f32 %v2177, 0.0
        %v2364 = vmax.f32 %v2180, 0.0
        %v2365 = vmax.f32 %v2185, 0.0
        %v2366 = vmax.f32 %v2188, 0.0
        %v2367 = vmax.f32 %v2193, 0.0
        %v2368 = vmax.f32 %v2196, 0.0
        %v2369 = vmax.f32 %v2201, 0.0
        %v2370 = vmax.f32 %v2204, 0.0
        %v2371 = vmax.f32 %v2209, 0.0
        %v2372 = vmax.f32 %v2212, 0.0
        %v2373 = vmax.f32 %v2217, 0.0
        %v2374 = vmax.f32 %v2220, 0.0
        %v2375 = vmax.f32 %v2225, 0.0
        %v2376 = vmax.f32 %v2228, 0.0
        %v2377 = vmax.f32 %v2233, 0.0
        %v2378 = vmax.f32 %v2236, 0.0
        %v2379 = vmax.f32 %v2241, 0.0
        %v2380 = vmax.f32 %v2244, 0.0
        %v2381 = vmax.f32 %v2249, 0.0
        %v2382 = vmax.f32 %v2252, 0.0
        %v2383 = vmax.f32 %v2257, 0.0
        %v2384 = vmax.f32 %v2260, 0.0
        %v2385 = vmax.f32 %v2265, 0.0
        %v2386 = vmax.f32 %v2268, 0.0
        %v2387 = vmax.f32 %v2273, 0.0
        %v2388 = vmax.f32 %v2276, 0.0
        %v2389 = vmax.f32 %v2281, 0.0
        %v2390 = vmax.f32 %v2284, 0.0
        %v2391 = vmax.f32 %v2289, 0.0
        %v2392 = vmax.f32 %v2292, 0.0
        %v2393 = vmax.f32 %v2297, 0.0
        %v2394 = vmax.f32 %v2300, 0.0
        %v2395 = vmax.f32 %v2305, 0.0
        %v2396 = vmax.f32 %v2308, 0.0
        %v2397 = vmax.f32 %v2313, 0.0
        %v2398 = vmax.f32 %v2316, 0.0
        %v2399 = vpack.c.bf16 %v2320, %v2319
        %v2400 = vpack.c.bf16 %v2322, %v2321
        %v2401 = vpack.c.bf16 %v2324, %v2323
        %v2402 = vpack.c.bf16 %v2326, %v2325
        %v2403 = vpack.c.bf16 %v2328, %v2327
        %v2404 = vpack.c.bf16 %v2330, %v2329
        %v2405 = vpack.c.bf16 %v2332, %v2331
        %v2406 = vpack.c.bf16 %v2334, %v2333
        %v2407 = vpack.c.bf16 %v2336, %v2335
        %v2408 = vpack.c.bf16 %v2338, %v2337
        %v2409 = vpack.c.bf16 %v2340, %v2339
        %v2410 = vpack.c.bf16 %v2342, %v2341
        %v2411 = vpack.c.bf16 %v2344, %v2343
        %v2412 = vpack.c.bf16 %v2346, %v2345
        %v2413 = vpack.c.bf16 %v2348, %v2347
        %v2414 = vpack.c.bf16 %v2350, %v2349
        %v2415 = vpack.c.bf16 %v2352, %v2351
        %v2416 = vpack.c.bf16 %v2354, %v2353
        %v2417 = vpack.c.bf16 %v2356, %v2355
        %v2418 = vpack.c.bf16 %v2358, %v2357
        %v2419 = vpack.c.bf16 %v2360, %v2359
        %v2420 = vpack.c.bf16 %v2362, %v2361
        %v2421 = vpack.c.bf16 %v2364, %v2363
        %v2422 = vpack.c.bf16 %v2366, %v2365
        %v2423 = vpack.c.bf16 %v2368, %v2367
        %v2424 = vpack.c.bf16 %v2370, %v2369
        %v2425 = vpack.c.bf16 %v2372, %v2371
        %v2426 = vpack.c.bf16 %v2374, %v2373
        %v2427 = vpack.c.bf16 %v2376, %v2375
        %v2428 = vpack.c.bf16 %v2378, %v2377
        %v2429 = vpack.c.bf16 %v2380, %v2379
        %v2430 = vpack.c.bf16 %v2382, %v2381
        %v2431 = vpack.c.bf16 %v2384, %v2383
        %v2432 = vpack.c.bf16 %v2386, %v2385
        %v2433 = vpack.c.bf16 %v2388, %v2387
        %v2434 = vpack.c.bf16 %v2390, %v2389
        %v2435 = vpack.c.bf16 %v2392, %v2391
        %v2436 = vpack.c.bf16 %v2394, %v2393
        %v2437 = vpack.c.bf16 %v2396, %v2395
        %v2438 = vpack.c.bf16 %v2398, %v2397
        %v2439 = vld [vmem:[%s7] sm:$0xf]
        %v2440 = vld [vmem:[%s7 + $0x4] sm:$0xf]
        %v2441 = vld [vmem:[%s7 + $0x8] sm:$0xf]
        %v2442 = vld [vmem:[%s7 + $0xc] sm:$0xf]
        %v2443 = vld [vmem:[%s7 + $0x10] sm:$0xf]
        %v2444 = vld [vmem:[%s7 + $0x14] sm:$0xf]
        %v2445 = vld [vmem:[%s7 + $0x18] sm:$0xf]
        %v2446 = vld [vmem:[%s7 + $0x1c] sm:$0xf]
        %v2447 = vld [vmem:[%s7 + $0x20] sm:$0xf]
        %v2448 = vld [vmem:[%s7 + $0x24] sm:$0xf]
        %v2449 = vld [vmem:[%s7 + $0x28] sm:$0xf]
        %v2450 = vld [vmem:[%s7 + $0x2c] sm:$0xf]
        %v2451 = vld [vmem:[%s7 + $0x30] sm:$0xf]
        %v2452 = vld [vmem:[%s7 + $0x34] sm:$0xf]
        %v2453 = vld [vmem:[%s7 + $0x38] sm:$0xf]
        %v2454 = vld [vmem:[%s7 + $0x3c] sm:$0xf]
        %v2455 = vld [vmem:[%s8] sm:$0x1]
        %v2457 = vlaneseq
        %v2458 = vshrl.u32 %v2457, 7
        %v2459 = vsub.s32 0, %v2458
        %v2460 = vrot.slane %v2455, %v2459
        %v2478 = vunpack.c.l.b16 %v2439
        %v2479 = vunpack.c.l.b16 %v2440
        %v2480 = vunpack.c.l.b16 %v2441
        %v2481 = vunpack.c.l.b16 %v2442
        %v2482 = vunpack.c.l.b16 %v2443
        %v2483 = vunpack.c.l.b16 %v2444
        %v2484 = vunpack.c.l.b16 %v2445
        %v2485 = vunpack.c.l.b16 %v2446
        %v2486 = vunpack.c.l.b16 %v2447
        %v2487 = vunpack.c.l.b16 %v2448
        %v2488 = vunpack.c.l.b16 %v2449
        %v2489 = vunpack.c.l.b16 %v2450
        %v2490 = vunpack.c.l.b16 %v2451
        %v2491 = vunpack.c.l.b16 %v2452
        %v2492 = vunpack.c.l.b16 %v2453
        %v2493 = vunpack.c.l.b16 %v2454
        %v2494 = vpack.c.b16 %v2479, %v2478
        %v2495 = vpack.c.b16 %v2481, %v2480
        %v2496 = vpack.c.b16 %v2483, %v2482
        %v2497 = vpack.c.b16 %v2485, %v2484
        %v2498 = vpack.c.b16 %v2487, %v2486
        %v2499 = vpack.c.b16 %v2489, %v2488
        %v2500 = vpack.c.b16 %v2491, %v2490
        %v2501 = vpack.c.b16 %v2493, %v2492
        %2510 = vmatprep.subr.bf16.mxu0 0
        %2511 = vmatpush1.bf16.msra.mxu0 %v2494
        %2512 = vmatprep.subr.bf16.mxu0 0
        %2513 = vmatpush1.bf16.msra.mxu0 %v2495
        %2514 = vmatprep.subr.bf16.mxu0 0
        %2515 = vmatpush1.bf16.msra.mxu0 %v2496
        %2516 = vmatprep.subr.bf16.mxu0 0
        %2517 = vmatpush1.bf16.msra.mxu0 %v2497
        %2518 = vmatprep.subr.bf16.mxu0 0
        %2519 = vmatpush1.bf16.msra.mxu0 %v2498
        %2520 = vmatprep.subr.bf16.mxu0 0
        %2521 = vmatpush1.bf16.msra.mxu0 %v2499
        %2522 = vmatprep.subr.bf16.mxu0 0
        %2523 = vmatpush1.bf16.msra.mxu0 %v2500
        %2524 = vmatprep.subr.bf16.mxu0 0
        %2525 = vmatpush1.bf16.msra.mxu0 %v2501
        %2526 = vmatprep.subr.bf16.mxu0 0
        %2527 = vmatpush1.bf16.msra.mxu0 0
        %2528 = vmatprep.subr.bf16.mxu0 0
        %2529 = vmatpush1.bf16.msra.mxu0 0
        %2530 = vmatprep.subr.bf16.mxu0 0
        %2531 = vmatpush1.bf16.msra.mxu0 0
        %2532 = vmatprep.subr.bf16.mxu0 0
        %2533 = vmatpush1.bf16.msra.mxu0 0
        %2534 = vmatprep.subr.bf16.mxu0 0
        %2535 = vmatpush1.bf16.msra.mxu0 0
        %2536 = vmatprep.subr.bf16.mxu0 0
        %2537 = vmatpush1.bf16.msra.mxu0 0
        %2538 = vmatprep.subr.bf16.mxu0 0
        %2539 = vmatpush1.bf16.msra.mxu0 0
        %2540 = vmatprep.subr.bf16.mxu0 0
        %2541 = vmatpush1.bf16.msra.mxu0 0
        %2542 = vmatprep.mubr.bf16.mxu0 0
        %2543 = vmatmul.mubr.bf16.gmra.mrb[0].mxu0 %v2399
        %v2544 = vpop.f32.mrb[0].mxu0
        %v2545 = vadd.f32 %v2460, %v2544
        %v2546 = vpop.f32.mrb[0].mxu0
        %v2547 = vpop.f32.mrb[0].mxu0
        %v2548 = vadd.f32 %v2460, %v2547
        %v2549 = vpop.f32.mrb[0].mxu0
        %2550 = vmatprep.mubr.bf16.mxu0 0
        %2551 = vmatmul.mubr.bf16.gmra.mrb[0].mxu0 %v2400
        %v2552 = vpop.f32.mrb[0].mxu0
        %v2553 = vadd.f32 %v2460, %v2552
        %v2554 = vpop.f32.mrb[0].mxu0
        %v2555 = vpop.f32.mrb[0].mxu0
        %v2556 = vadd.f32 %v2460, %v2555
        %v2557 = vpop.f32.mrb[0].mxu0
        %2558 = vmatprep.mubr.bf16.mxu0 0
        %2559 = vmatmul.mubr.bf16.gmra.mrb[0].mxu0 %v2401
        %v2560 = vpop.f32.mrb[0].mxu0
        %v2561 = vadd.f32 %v2460, %v2560
        %v2562 = vpop.f32.mrb[0].mxu0
        %v2563 = vpop.f32.mrb[0].mxu0
        %v2564 = vadd.f32 %v2460, %v2563
        %v2565 = vpop.f32.mrb[0].mxu0
        %2566 = vmatprep.mubr.bf16.mxu0 0
        %2567 = vmatmul.mubr.bf16.gmra.mrb[0].mxu0 %v2402
        %v2568 = vpop.f32.mrb[0].mxu0
        %v2569 = vadd.f32 %v2460, %v2568
        %v2570 = vpop.f32.mrb[0].mxu0
        %v2571 = vpop.f32.mrb[0].mxu0
        %v2572 = vadd.f32 %v2460, %v2571
        %v2573 = vpop.f32.mrb[0].mxu0
        %2574 = vmatprep.mubr.bf16.mxu0 0
        %2575 = vmatmul.mubr.bf16.gmra.mrb[0].mxu0 %v2403
        %v2576 = vpop.f32.mrb[0].mxu0
        %v2577 = vadd.f32 %v2460, %v2576
        %v2578 = vpop.f32.mrb[0].mxu0
        %v2579 = vpop.f32.mrb[0].mxu0
        %v2580 = vadd.f32 %v2460, %v2579
        %v2581 = vpop.f32.mrb[0].mxu0
        %2582 = vmatprep.mubr.bf16.mxu0 0
        %2583 = vmatmul.mubr.bf16.gmra.mrb[0].mxu0 %v2404
        %v2584 = vpop.f32.mrb[0].mxu0
        %v2585 = vadd.f32 %v2460, %v2584
        %v2586 = vpop.f32.mrb[0].mxu0
        %v2587 = vpop.f32.mrb[0].mxu0
        %v2588 = vadd.f32 %v2460, %v2587
        %v2589 = vpop.f32.mrb[0].mxu0
        %2590 = vmatprep.mubr.bf16.mxu0 0
        %2591 = vmatmul.mubr.bf16.gmra.mrb[0].mxu0 %v2405
        %v2592 = vpop.f32.mrb[0].mxu0
        %v2593 = vadd.f32 %v2460, %v2592
        %v2594 = vpop.f32.mrb[0].mxu0
        %v2595 = vpop.f32.mrb[0].mxu0
        %v2596 = vadd.f32 %v2460, %v2595
        %v2597 = vpop.f32.mrb[0].mxu0
        %2598 = vmatprep.mubr.bf16.mxu0 0
        %2599 = vmatmul.mubr.bf16.gmra.mrb[0].mxu0 %v2406
        %v2600 = vpop.f32.mrb[0].mxu0
        %v2601 = vadd.f32 %v2460, %v2600
        %v2602 = vpop.f32.mrb[0].mxu0
        %v2603 = vpop.f32.mrb[0].mxu0
        %v2604 = vadd.f32 %v2460, %v2603
        %v2605 = vpop.f32.mrb[0].mxu0
        %2606 = vmatprep.mubr.bf16.mxu0 0
        %2607 = vmatmul.mubr.bf16.gmra.mrb[0].mxu0 %v2407
        %v2608 = vpop.f32.mrb[0].mxu0
        %v2609 = vadd.f32 %v2460, %v2608
        %v2610 = vpop.f32.mrb[0].mxu0
        %v2611 = vpop.f32.mrb[0].mxu0
        %v2612 = vadd.f32 %v2460, %v2611
        %v2613 = vpop.f32.mrb[0].mxu0
        %2614 = vmatprep.mubr.bf16.mxu0 0
        %2615 = vmatmul.mubr.bf16.gmra.mrb[0].mxu0 %v2408
        %v2616 = vpop.f32.mrb[0].mxu0
        %v2617 = vadd.f32 %v2460, %v2616
        %v2618 = vpop.f32.mrb[0].mxu0
        %v2619 = vpop.f32.mrb[0].mxu0
        %v2620 = vadd.f32 %v2460, %v2619
        %v2621 = vpop.f32.mrb[0].mxu0
        %2622 = vmatprep.mubr.bf16.mxu0 0
        %2623 = vmatmul.mubr.bf16.gmra.mrb[0].mxu0 %v2409
        %v2624 = vpop.f32.mrb[0].mxu0
        %v2625 = vadd.f32 %v2460, %v2624
        %v2626 = vpop.f32.mrb[0].mxu0
        %v2627 = vpop.f32.mrb[0].mxu0
        %v2628 = vadd.f32 %v2460, %v2627
        %v2629 = vpop.f32.mrb[0].mxu0
        %2630 = vmatprep.mubr.bf16.mxu0 0
        %2631 = vmatmul.mubr.bf16.gmra.mrb[0].mxu0 %v2410
        %v2632 = vpop.f32.mrb[0].mxu0
        %v2633 = vadd.f32 %v2460, %v2632
        %v2634 = vpop.f32.mrb[0].mxu0
        %v2635 = vpop.f32.mrb[0].mxu0
        %v2636 = vadd.f32 %v2460, %v2635
        %v2637 = vpop.f32.mrb[0].mxu0
        %2638 = vmatprep.mubr.bf16.mxu0 0
        %2639 = vmatmul.mubr.bf16.gmra.mrb[0].mxu0 %v2411
        %v2640 = vpop.f32.mrb[0].mxu0
        %v2641 = vadd.f32 %v2460, %v2640
        %v2642 = vpop.f32.mrb[0].mxu0
        %v2643 = vpop.f32.mrb[0].mxu0
        %v2644 = vadd.f32 %v2460, %v2643
        %v2645 = vpop.f32.mrb[0].mxu0
        %2646 = vmatprep.mubr.bf16.mxu0 0
        %2647 = vmatmul.mubr.bf16.gmra.mrb[0].mxu0 %v2412
        %v2648 = vpop.f32.mrb[0].mxu0
        %v2649 = vadd.f32 %v2460, %v2648
        %v2650 = vpop.f32.mrb[0].mxu0
        %v2651 = vpop.f32.mrb[0].mxu0
        %v2652 = vadd.f32 %v2460, %v2651
        %v2653 = vpop.f32.mrb[0].mxu0
        %2654 = vmatprep.mubr.bf16.mxu0 0
        %2655 = vmatmul.mubr.bf16.gmra.mrb[0].mxu0 %v2413
        %v2656 = vpop.f32.mrb[0].mxu0
        %v2657 = vadd.f32 %v2460, %v2656
        %v2658 = vpop.f32.mrb[0].mxu0
        %v2659 = vpop.f32.mrb[0].mxu0
        %v2660 = vadd.f32 %v2460, %v2659
        %v2661 = vpop.f32.mrb[0].mxu0
        %2662 = vmatprep.mubr.bf16.mxu0 0
        %2663 = vmatmul.mubr.bf16.gmra.mrb[0].mxu0 %v2414
        %v2664 = vpop.f32.mrb[0].mxu0
        %v2665 = vadd.f32 %v2460, %v2664
        %v2666 = vpop.f32.mrb[0].mxu0
        %v2667 = vpop.f32.mrb[0].mxu0
        %v2668 = vadd.f32 %v2460, %v2667
        %v2669 = vpop.f32.mrb[0].mxu0
        %2670 = vmatprep.mubr.bf16.mxu0 0
        %2671 = vmatmul.mubr.bf16.gmra.mrb[0].mxu0 %v2415
        %v2672 = vpop.f32.mrb[0].mxu0
        %v2673 = vadd.f32 %v2460, %v2672
        %v2674 = vpop.f32.mrb[0].mxu0
        %v2675 = vpop.f32.mrb[0].mxu0
        %v2676 = vadd.f32 %v2460, %v2675
        %v2677 = vpop.f32.mrb[0].mxu0
        %2678 = vmatprep.mubr.bf16.mxu0 0
        %2679 = vmatmul.mubr.bf16.gmra.mrb[0].mxu0 %v2416
        %v2680 = vpop.f32.mrb[0].mxu0
        %v2681 = vadd.f32 %v2460, %v2680
        %v2682 = vpop.f32.mrb[0].mxu0
        %v2683 = vpop.f32.mrb[0].mxu0
        %v2684 = vadd.f32 %v2460, %v2683
        %v2685 = vpop.f32.mrb[0].mxu0
        %2686 = vmatprep.mubr.bf16.mxu0 0
        %2687 = vmatmul.mubr.bf16.gmra.mrb[0].mxu0 %v2417
        %v2688 = vpop.f32.mrb[0].mxu0
        %v2689 = vadd.f32 %v2460, %v2688
        %v2690 = vpop.f32.mrb[0].mxu0
        %v2691 = vpop.f32.mrb[0].mxu0
        %v2692 = vadd.f32 %v2460, %v2691
        %v2693 = vpop.f32.mrb[0].mxu0
        %2694 = vmatprep.mubr.bf16.mxu0 0
        %2695 = vmatmul.mubr.bf16.gmra.mrb[0].mxu0 %v2418
        %v2696 = vpop.f32.mrb[0].mxu0
        %v2697 = vadd.f32 %v2460, %v2696
        %v2698 = vpop.f32.mrb[0].mxu0
        %v2699 = vpop.f32.mrb[0].mxu0
        %v2700 = vadd.f32 %v2460, %v2699
        %v2701 = vpop.f32.mrb[0].mxu0
        %2702 = vmatprep.mubr.bf16.mxu0 0
        %2703 = vmatmul.mubr.bf16.gmra.mrb[0].mxu0 %v2419
        %v2704 = vpop.f32.mrb[0].mxu0
        %v2705 = vadd.f32 %v2460, %v2704
        %v2706 = vpop.f32.mrb[0].mxu0
        %v2707 = vpop.f32.mrb[0].mxu0
        %v2708 = vadd.f32 %v2460, %v2707
        %v2709 = vpop.f32.mrb[0].mxu0
        %2710 = vmatprep.mubr.bf16.mxu0 0
        %2711 = vmatmul.mubr.bf16.gmra.mrb[0].mxu0 %v2420
        %v2712 = vpop.f32.mrb[0].mxu0
        %v2713 = vadd.f32 %v2460, %v2712
        %v2714 = vpop.f32.mrb[0].mxu0
        %v2715 = vpop.f32.mrb[0].mxu0
        %v2716 = vadd.f32 %v2460, %v2715
        %v2717 = vpop.f32.mrb[0].mxu0
        %2718 = vmatprep.mubr.bf16.mxu0 0
        %2719 = vmatmul.mubr.bf16.gmra.mrb[0].mxu0 %v2421
        %v2720 = vpop.f32.mrb[0].mxu0
        %v2721 = vadd.f32 %v2460, %v2720
        %v2722 = vpop.f32.mrb[0].mxu0
        %v2723 = vpop.f32.mrb[0].mxu0
        %v2724 = vadd.f32 %v2460, %v2723
        %v2725 = vpop.f32.mrb[0].mxu0
        %2726 = vmatprep.mubr.bf16.mxu0 0
        %2727 = vmatmul.mubr.bf16.gmra.mrb[0].mxu0 %v2422
        %v2728 = vpop.f32.mrb[0].mxu0
        %v2729 = vadd.f32 %v2460, %v2728
        %v2730 = vpop.f32.mrb[0].mxu0
        %v2731 = vpop.f32.mrb[0].mxu0
        %v2732 = vadd.f32 %v2460, %v2731
        %v2733 = vpop.f32.mrb[0].mxu0
        %2734 = vmatprep.mubr.bf16.mxu0 0
        %2735 = vmatmul.mubr.bf16.gmra.mrb[0].mxu0 %v2423
        %v2736 = vpop.f32.mrb[0].mxu0
        %v2737 = vadd.f32 %v2460, %v2736
        %v2738 = vpop.f32.mrb[0].mxu0
        %v2739 = vpop.f32.mrb[0].mxu0
        %v2740 = vadd.f32 %v2460, %v2739
        %v2741 = vpop.f32.mrb[0].mxu0
        %2742 = vmatprep.mubr.bf16.mxu0 0
        %2743 = vmatmul.mubr.bf16.gmra.mrb[0].mxu0 %v2424
        %v2744 = vpop.f32.mrb[0].mxu0
        %v2745 = vadd.f32 %v2460, %v2744
        %v2746 = vpop.f32.mrb[0].mxu0
        %v2747 = vpop.f32.mrb[0].mxu0
        %v2748 = vadd.f32 %v2460, %v2747
        %v2749 = vpop.f32.mrb[0].mxu0
        %2750 = vmatprep.mubr.bf16.mxu0 0
        %2751 = vmatmul.mubr.bf16.gmra.mrb[0].mxu0 %v2425
        %v2752 = vpop.f32.mrb[0].mxu0
        %v2753 = vadd.f32 %v2460, %v2752
        %v2754 = vpop.f32.mrb[0].mxu0
        %v2755 = vpop.f32.mrb[0].mxu0
        %v2756 = vadd.f32 %v2460, %v2755
        %v2757 = vpop.f32.mrb[0].mxu0
        %2758 = vmatprep.mubr.bf16.mxu0 0
        %2759 = vmatmul.mubr.bf16.gmra.mrb[0].mxu0 %v2426
        %v2760 = vpop.f32.mrb[0].mxu0
        %v2761 = vadd.f32 %v2460, %v2760
        %v2762 = vpop.f32.mrb[0].mxu0
        %v2763 = vpop.f32.mrb[0].mxu0
        %v2764 = vadd.f32 %v2460, %v2763
        %v2765 = vpop.f32.mrb[0].mxu0
        %2766 = vmatprep.mubr.bf16.mxu0 0
        %2767 = vmatmul.mubr.bf16.gmra.mrb[0].mxu0 %v2427
        %v2768 = vpop.f32.mrb[0].mxu0
        %v2769 = vadd.f32 %v2460, %v2768
        %v2770 = vpop.f32.mrb[0].mxu0
        %v2771 = vpop.f32.mrb[0].mxu0
        %v2772 = vadd.f32 %v2460, %v2771
        %v2773 = vpop.f32.mrb[0].mxu0
        %2774 = vmatprep.mubr.bf16.mxu0 0
        %2775 = vmatmul.mubr.bf16.gmra.mrb[0].mxu0 %v2428
        %v2776 = vpop.f32.mrb[0].mxu0
        %v2777 = vadd.f32 %v2460, %v2776
        %v2778 = vpop.f32.mrb[0].mxu0
        %v2779 = vpop.f32.mrb[0].mxu0
        %v2780 = vadd.f32 %v2460, %v2779
        %v2781 = vpop.f32.mrb[0].mxu0
        %2782 = vmatprep.mubr.bf16.mxu0 0
        %2783 = vmatmul.mubr.bf16.gmra.mrb[0].mxu0 %v2429
        %v2784 = vpop.f32.mrb[0].mxu0
        %v2785 = vadd.f32 %v2460, %v2784
        %v2786 = vpop.f32.mrb[0].mxu0
        %v2787 = vpop.f32.mrb[0].mxu0
        %v2788 = vadd.f32 %v2460, %v2787
        %v2789 = vpop.f32.mrb[0].mxu0
        %2790 = vmatprep.mubr.bf16.mxu0 0
        %2791 = vmatmul.mubr.bf16.gmra.mrb[0].mxu0 %v2430
        %v2792 = vpop.f32.mrb[0].mxu0
        %v2793 = vadd.f32 %v2460, %v2792
        %v2794 = vpop.f32.mrb[0].mxu0
        %v2795 = vpop.f32.mrb[0].mxu0
        %v2796 = vadd.f32 %v2460, %v2795
        %v2797 = vpop.f32.mrb[0].mxu0
        %2798 = vmatprep.mubr.bf16.mxu0 0
        %2799 = vmatmul.mubr.bf16.gmra.mrb[0].mxu0 %v2431
        %v2800 = vpop.f32.mrb[0].mxu0
        %v2801 = vadd.f32 %v2460, %v2800
        %v2802 = vpop.f32.mrb[0].mxu0
        %v2803 = vpop.f32.mrb[0].mxu0
        %v2804 = vadd.f32 %v2460, %v2803
        %v2805 = vpop.f32.mrb[0].mxu0
        %2806 = vmatprep.mubr.bf16.mxu0 0
        %2807 = vmatmul.mubr.bf16.gmra.mrb[0].mxu0 %v2432
        %v2808 = vpop.f32.mrb[0].mxu0
        %v2809 = vadd.f32 %v2460, %v2808
        %v2810 = vpop.f32.mrb[0].mxu0
        %v2811 = vpop.f32.mrb[0].mxu0
        %v2812 = vadd.f32 %v2460, %v2811
        %v2813 = vpop.f32.mrb[0].mxu0
        %2814 = vmatprep.mubr.bf16.mxu0 0
        %2815 = vmatmul.mubr.bf16.gmra.mrb[0].mxu0 %v2433
        %v2816 = vpop.f32.mrb[0].mxu0
        %v2817 = vadd.f32 %v2460, %v2816
        %v2818 = vpop.f32.mrb[0].mxu0
        %v2819 = vpop.f32.mrb[0].mxu0
        %v2820 = vadd.f32 %v2460, %v2819
        %v2821 = vpop.f32.mrb[0].mxu0
        %2822 = vmatprep.mubr.bf16.mxu0 0
        %2823 = vmatmul.mubr.bf16.gmra.mrb[0].mxu0 %v2434
        %v2824 = vpop.f32.mrb[0].mxu0
        %v2825 = vadd.f32 %v2460, %v2824
        %v2826 = vpop.f32.mrb[0].mxu0
        %v2827 = vpop.f32.mrb[0].mxu0
        %v2828 = vadd.f32 %v2460, %v2827
        %v2829 = vpop.f32.mrb[0].mxu0
        %2830 = vmatprep.mubr.bf16.mxu0 0
        %2831 = vmatmul.mubr.bf16.gmra.mrb[0].mxu0 %v2435
        %v2832 = vpop.f32.mrb[0].mxu0
        %v2833 = vadd.f32 %v2460, %v2832
        %v2834 = vpop.f32.mrb[0].mxu0
        %v2835 = vpop.f32.mrb[0].mxu0
        %v2836 = vadd.f32 %v2460, %v2835
        %v2837 = vpop.f32.mrb[0].mxu0
        %2838 = vmatprep.mubr.bf16.mxu0 0
        %2839 = vmatmul.mubr.bf16.gmra.mrb[0].mxu0 %v2436
        %v2840 = vpop.f32.mrb[0].mxu0
        %v2841 = vadd.f32 %v2460, %v2840
        %v2842 = vpop.f32.mrb[0].mxu0
        %v2843 = vpop.f32.mrb[0].mxu0
        %v2844 = vadd.f32 %v2460, %v2843
        %v2845 = vpop.f32.mrb[0].mxu0
        %2846 = vmatprep.mubr.bf16.mxu0 0
        %2847 = vmatmul.mubr.bf16.gmra.mrb[0].mxu0 %v2437
        %v2848 = vpop.f32.mrb[0].mxu0
        %v2849 = vadd.f32 %v2460, %v2848
        %v2850 = vpop.f32.mrb[0].mxu0
        %v2851 = vpop.f32.mrb[0].mxu0
        %v2852 = vadd.f32 %v2460, %v2851
        %v2853 = vpop.f32.mrb[0].mxu0
        %2854 = vmatprep.mubr.bf16.mxu0 0
        %2855 = vmatmul.mubr.bf16.gmra.mrb[0].mxu0 %v2438
        %v2856 = vpop.f32.mrb[0].mxu0
        %v2857 = vadd.f32 %v2460, %v2856
        %v2858 = vpop.f32.mrb[0].mxu0
        %v2859 = vpop.f32.mrb[0].mxu0
        %v2860 = vadd.f32 %v2460, %v2859
        %v2861 = vpop.f32.mrb[0].mxu0
        %2862 = vdwg.mxu0
        %v2863 = vmax.f32 %v2545, 0.0
        %v2864 = vmax.f32 %v2548, 0.0
        %v2865 = vmax.f32 %v2553, 0.0
        %v2866 = vmax.f32 %v2556, 0.0
        %v2867 = vmax.f32 %v2561, 0.0
        %v2868 = vmax.f32 %v2564, 0.0
        %v2869 = vmax.f32 %v2569, 0.0
        %v2870 = vmax.f32 %v2572, 0.0
        %v2871 = vmax.f32 %v2577, 0.0
        %v2872 = vmax.f32 %v2580, 0.0
        %v2873 = vmax.f32 %v2585, 0.0
        %v2874 = vmax.f32 %v2588, 0.0
        %v2875 = vmax.f32 %v2593, 0.0
        %v2876 = vmax.f32 %v2596, 0.0
        %v2877 = vmax.f32 %v2601, 0.0
        %v2878 = vmax.f32 %v2604, 0.0
        %v2879 = vmax.f32 %v2609, 0.0
        %v2880 = vmax.f32 %v2612, 0.0
        %v2881 = vmax.f32 %v2617, 0.0
        %v2882 = vmax.f32 %v2620, 0.0
        %v2883 = vmax.f32 %v2625, 0.0
        %v2884 = vmax.f32 %v2628, 0.0
        %v2885 = vmax.f32 %v2633, 0.0
        %v2886 = vmax.f32 %v2636, 0.0
        %v2887 = vmax.f32 %v2641, 0.0
        %v2888 = vmax.f32 %v2644, 0.0
        %v2889 = vmax.f32 %v2649, 0.0
        %v2890 = vmax.f32 %v2652, 0.0
        %v2891 = vmax.f32 %v2657, 0.0
        %v2892 = vmax.f32 %v2660, 0.0
        %v2893 = vmax.f32 %v2665, 0.0
        %v2894 = vmax.f32 %v2668, 0.0
        %v2895 = vmax.f32 %v2673, 0.0
        %v2896 = vmax.f32 %v2676, 0.0
        %v2897 = vmax.f32 %v2681, 0.0
        %v2898 = vmax.f32 %v2684, 0.0
        %v2899 = vmax.f32 %v2689, 0.0
        %v2900 = vmax.f32 %v2692, 0.0
        %v2901 = vmax.f32 %v2697, 0.0
        %v2902 = vmax.f32 %v2700, 0.0
        %v2903 = vmax.f32 %v2705, 0.0
        %v2904 = vmax.f32 %v2708, 0.0
        %v2905 = vmax.f32 %v2713, 0.0
        %v2906 = vmax.f32 %v2716, 0.0
        %v2907 = vmax.f32 %v2721, 0.0
        %v2908 = vmax.f32 %v2724, 0.0
        %v2909 = vmax.f32 %v2729, 0.0
        %v2910 = vmax.f32 %v2732, 0.0
        %v2911 = vmax.f32 %v2737, 0.0
        %v2912 = vmax.f32 %v2740, 0.0
        %v2913 = vmax.f32 %v2745, 0.0
        %v2914 = vmax.f32 %v2748, 0.0
        %v2915 = vmax.f32 %v2753, 0.0
        %v2916 = vmax.f32 %v2756, 0.0
        %v2917 = vmax.f32 %v2761, 0.0
        %v2918 = vmax.f32 %v2764, 0.0
        %v2919 = vmax.f32 %v2769, 0.0
        %v2920 = vmax.f32 %v2772, 0.0
        %v2921 = vmax.f32 %v2777, 0.0
        %v2922 = vmax.f32 %v2780, 0.0
        %v2923 = vmax.f32 %v2785, 0.0
        %v2924 = vmax.f32 %v2788, 0.0
        %v2925 = vmax.f32 %v2793, 0.0
        %v2926 = vmax.f32 %v2796, 0.0
        %v2927 = vmax.f32 %v2801, 0.0
        %v2928 = vmax.f32 %v2804, 0.0
        %v2929 = vmax.f32 %v2809, 0.0
        %v2930 = vmax.f32 %v2812, 0.0
        %v2931 = vmax.f32 %v2817, 0.0
        %v2932 = vmax.f32 %v2820, 0.0
        %v2933 = vmax.f32 %v2825, 0.0
        %v2934 = vmax.f32 %v2828, 0.0
        %v2935 = vmax.f32 %v2833, 0.0
        %v2936 = vmax.f32 %v2836, 0.0
        %v2937 = vmax.f32 %v2841, 0.0
        %v2938 = vmax.f32 %v2844, 0.0
        %v2939 = vmax.f32 %v2849, 0.0
        %v2940 = vmax.f32 %v2852, 0.0
        %v2941 = vmax.f32 %v2857, 0.0
        %v2942 = vmax.f32 %v2860, 0.0
        %v2943 = vmax.f32 %v2863, %v2867
        %v2944 = vmax.f32 %v2864, %v2868
        %v2945 = vmax.f32 %v2865, %v2869
        %v2946 = vmax.f32 %v2866, %v2870
        %v2947 = vmax.f32 %v2943, %v2871
        %v2948 = vmax.f32 %v2944, %v2872
        %v2949 = vmax.f32 %v2945, %v2873
        %v2950 = vmax.f32 %v2946, %v2874
        %v2951 = vmax.f32 %v2947, %v2875
        %v2952 = vmax.f32 %v2948, %v2876
        %v2953 = vmax.f32 %v2949, %v2877
        %v2954 = vmax.f32 %v2950, %v2878
        %v2955 = vmax.f32 %v2951, %v2879
        %v2956 = vmax.f32 %v2952, %v2880
        %v2957 = vmax.f32 %v2953, %v2881
        %v2958 = vmax.f32 %v2954, %v2882
        %v2959 = vmax.f32 %v2955, %v2883
        %v2960 = vmax.f32 %v2956, %v2884
        %v2961 = vmax.f32 %v2957, %v2885
        %v2962 = vmax.f32 %v2958, %v2886
        %v2963 = vmax.f32 %v2959, %v2887
        %v2964 = vmax.f32 %v2960, %v2888
        %v2965 = vmax.f32 %v2961, %v2889
        %v2966 = vmax.f32 %v2962, %v2890
        %v2967 = vmax.f32 %v2963, %v2891
        %v2968 = vmax.f32 %v2964, %v2892
        %v2969 = vmax.f32 %v2965, %v2893
        %v2970 = vmax.f32 %v2966, %v2894
        %v2971 = vmax.f32 %v2967, %v2895
        %v2972 = vmax.f32 %v2968, %v2896
        %v2973 = vmax.f32 %v2969, %v2897
        %v2974 = vmax.f32 %v2970, %v2898
        %v2975 = vmax.f32 %v2971, %v2899
        %v2976 = vmax.f32 %v2972, %v2900
        %v2977 = vmax.f32 %v2973, %v2901
        %v2978 = vmax.f32 %v2974, %v2902
        %v2979 = vmax.f32 %v2975, %v2903
        %v2980 = vmax.f32 %v2976, %v2904
        %v2981 = vmax.f32 %v2977, %v2905
        %v2982 = vmax.f32 %v2978, %v2906
        %v2983 = vmax.f32 %v2979, %v2907
        %v2984 = vmax.f32 %v2980, %v2908
        %v2985 = vmax.f32 %v2981, %v2909
        %v2986 = vmax.f32 %v2982, %v2910
        %v2987 = vmax.f32 %v2983, %v2911
        %v2988 = vmax.f32 %v2984, %v2912
        %v2989 = vmax.f32 %v2985, %v2913
        %v2990 = vmax.f32 %v2986, %v2914
        %v2991 = vmax.f32 %v2987, %v2915
        %v2992 = vmax.f32 %v2988, %v2916
        %v2993 = vmax.f32 %v2989, %v2917
        %v2994 = vmax.f32 %v2990, %v2918
        %v2995 = vmax.f32 %v2991, %v2919
        %v2996 = vmax.f32 %v2992, %v2920
        %v2997 = vmax.f32 %v2993, %v2921
        %v2998 = vmax.f32 %v2994, %v2922
        %v2999 = vmax.f32 %v2995, %v2923
        %v3000 = vmax.f32 %v2996, %v2924
        %v3001 = vmax.f32 %v2997, %v2925
        %v3002 = vmax.f32 %v2998, %v2926
        %v3003 = vmax.f32 %v2999, %v2927
        %v3004 = vmax.f32 %v3000, %v2928
        %v3005 = vmax.f32 %v3001, %v2929
        %v3006 = vmax.f32 %v3002, %v2930
        %v3007 = vmax.f32 %v3003, %v2931
        %v3008 = vmax.f32 %v3004, %v2932
        %v3009 = vmax.f32 %v3005, %v2933
        %v3010 = vmax.f32 %v3006, %v2934
        %v3011 = vmax.f32 %v3007, %v2935
        %v3012 = vmax.f32 %v3008, %v2936
        %v3013 = vmax.f32 %v3009, %v2937
        %v3014 = vmax.f32 %v3010, %v2938
        %v3015 = vmax.f32 %v3011, %v2939
        %v3016 = vmax.f32 %v3012, %v2940
        %v3017 = vmax.f32 %v3013, %v2941
        %v3018 = vmax.f32 %v3014, %v2942
        %v3019 = vpack.c.bf16 %v3016, %v3015
        %v3020 = vpack.c.bf16 %v3018, %v3017
        %v3021 = vld [vmem:[%s9] sm:$0xf]
        %v3022 = vld [vmem:[%s9 + $0x4] sm:$0xf]
        %v3023 = vld [vmem:[%s9 + $0x8] sm:$0xf]
        %v3024 = vld [vmem:[%s9 + $0xc] sm:$0xf]
        %v3025 = vld [vmem:[%s9 + $0x10] sm:$0xf]
        %v3026 = vld [vmem:[%s9 + $0x14] sm:$0xf]
        %v3027 = vld [vmem:[%s9 + $0x18] sm:$0xf]
        %v3028 = vld [vmem:[%s9 + $0x1c] sm:$0xf]
        %v3029 = vld [vmem:[%s9 + $0x20] sm:$0xf]
        %v3030 = vld [vmem:[%s9 + $0x24] sm:$0xf]
        %v3031 = vld [vmem:[%s9 + $0x28] sm:$0xf]
        %v3032 = vld [vmem:[%s9 + $0x2c] sm:$0xf]
        %v3033 = vld [vmem:[%s9 + $0x30] sm:$0xf]
        %v3034 = vld [vmem:[%s9 + $0x34] sm:$0xf]
        %v3035 = vld [vmem:[%s9 + $0x38] sm:$0xf]
        %v3036 = vld [vmem:[%s9 + $0x3c] sm:$0xf]
        %v3037 = vld [vmem:[%s10] sm:$0x1]
        %v3039 = vlaneseq
        %v3040 = vshrl.u32 %v3039, 7
        %v3041 = vsub.s32 0, %v3040
        %v3042 = vrot.slane %v3037, %v3041
        %v3060 = vunpack.c.l.b16 %v3021
        %v3061 = vunpack.c.l.b16 %v3022
        %v3062 = vunpack.c.l.b16 %v3023
        %v3063 = vunpack.c.l.b16 %v3024
        %v3064 = vunpack.c.l.b16 %v3025
        %v3065 = vunpack.c.l.b16 %v3026
        %v3066 = vunpack.c.l.b16 %v3027
        %v3067 = vunpack.c.l.b16 %v3028
        %v3068 = vunpack.c.l.b16 %v3029
        %v3069 = vunpack.c.l.b16 %v3030
        %v3070 = vunpack.c.l.b16 %v3031
        %v3071 = vunpack.c.l.b16 %v3032
        %v3072 = vunpack.c.l.b16 %v3033
        %v3073 = vunpack.c.l.b16 %v3034
        %v3074 = vunpack.c.l.b16 %v3035
        %v3075 = vunpack.c.l.b16 %v3036
        %v3076 = vpack.c.b16 %v3061, %v3060
        %v3077 = vpack.c.b16 %v3063, %v3062
        %v3078 = vpack.c.b16 %v3065, %v3064
        %v3079 = vpack.c.b16 %v3067, %v3066
        %v3080 = vpack.c.b16 %v3069, %v3068
        %v3081 = vpack.c.b16 %v3071, %v3070
        %v3082 = vpack.c.b16 %v3073, %v3072
        %v3083 = vpack.c.b16 %v3075, %v3074
        %3092 = vmatprep.subr.bf16.mxu0 0
        %3093 = vmatpush1.bf16.msra.mxu0 %v3076
        %3094 = vmatprep.subr.bf16.mxu0 0
        %3095 = vmatpush1.bf16.msra.mxu0 %v3077
        %3096 = vmatprep.subr.bf16.mxu0 0
        %3097 = vmatpush1.bf16.msra.mxu0 %v3078
        %3098 = vmatprep.subr.bf16.mxu0 0
        %3099 = vmatpush1.bf16.msra.mxu0 %v3079
        %3100 = vmatprep.subr.bf16.mxu0 0
        %3101 = vmatpush1.bf16.msra.mxu0 %v3080
        %3102 = vmatprep.subr.bf16.mxu0 0
        %3103 = vmatpush1.bf16.msra.mxu0 %v3081
        %3104 = vmatprep.subr.bf16.mxu0 0
        %3105 = vmatpush1.bf16.msra.mxu0 %v3082
        %3106 = vmatprep.subr.bf16.mxu0 0
        %3107 = vmatpush1.bf16.msra.mxu0 %v3083
        %3108 = vmatprep.subr.bf16.mxu0 0
        %3109 = vmatpush1.bf16.msra.mxu0 0
        %3110 = vmatprep.subr.bf16.mxu0 0
        %3111 = vmatpush1.bf16.msra.mxu0 0
        %3112 = vmatprep.subr.bf16.mxu0 0
        %3113 = vmatpush1.bf16.msra.mxu0 0
        %3114 = vmatprep.subr.bf16.mxu0 0
        %3115 = vmatpush1.bf16.msra.mxu0 0
        %3116 = vmatprep.subr.bf16.mxu0 0
        %3117 = vmatpush1.bf16.msra.mxu0 0
        %3118 = vmatprep.subr.bf16.mxu0 0
        %3119 = vmatpush1.bf16.msra.mxu0 0
        %3120 = vmatprep.subr.bf16.mxu0 0
        %3121 = vmatpush1.bf16.msra.mxu0 0
        %3122 = vmatprep.subr.bf16.mxu0 0
        %3123 = vmatpush1.bf16.msra.mxu0 0
        %3124 = vmatprep.mubr.bf16.mxu0 0
        %3125 = vmatmul.mubr.bf16.gmra.mrb[0].mxu0 %v3019
        %v3126 = vpop.f32.mrb[0].mxu0
        %v3127 = vadd.f32 %v3042, %v3126
        %v3128 = vpop.f32.mrb[0].mxu0
        %v3129 = vpop.f32.mrb[0].mxu0
        %v3130 = vadd.f32 %v3042, %v3129
        %v3131 = vpop.f32.mrb[0].mxu0
        %3132 = vmatprep.mubr.bf16.mxu0 0
        %3133 = vmatmul.mubr.bf16.gmra.mrb[0].mxu0 %v3020
        %v3134 = vpop.f32.mrb[0].mxu0
        %v3135 = vadd.f32 %v3042, %v3134
        %v3136 = vpop.f32.mrb[0].mxu0
        %v3137 = vpop.f32.mrb[0].mxu0
        %v3138 = vadd.f32 %v3042, %v3137
        %v3139 = vpop.f32.mrb[0].mxu0
        %3140 = vdwg.mxu0
        %v3141 = vmax.f32 %v3127, 0.0
        %v3142 = vmax.f32 %v3130, 0.0
        %v3143 = vmax.f32 %v3135, 0.0
        %v3144 = vmax.f32 %v3138, 0.0
        %v3145 = vpack.c.bf16 %v3142, %v3141
        %v3146 = vpack.c.bf16 %v3144, %v3143
        %v3147 = vld [vmem:[%s11] sm:$0xff]
        %v3148 = vld [vmem:[%s11 + $0x8] sm:$0xff]
        %v3149 = vld [vmem:[%s11 + $0x10] sm:$0xff]
        %v3150 = vld [vmem:[%s11 + $0x18] sm:$0xff]
        %v3151 = vld [vmem:[%s11 + $0x20] sm:$0xff]
        %v3152 = vld [vmem:[%s11 + $0x28] sm:$0xff]
        %v3153 = vld [vmem:[%s11 + $0x30] sm:$0xff]
        %v3154 = vld [vmem:[%s11 + $0x38] sm:$0xff]
        %v3155 = vld [vmem:[%s11 + $0x40] sm:$0xff]
        %v3156 = vld [vmem:[%s11 + $0x48] sm:$0xff]
        %v3157 = vld [vmem:[%s11 + $0x50] sm:$0xff]
        %v3158 = vld [vmem:[%s11 + $0x58] sm:$0xff]
        %v3159 = vld [vmem:[%s11 + $0x60] sm:$0xff]
        %v3160 = vld [vmem:[%s11 + $0x68] sm:$0xff]
        %v3161 = vld [vmem:[%s11 + $0x70] sm:$0xff]
        %v3162 = vld [vmem:[%s11 + $0x78] sm:$0xff]
        %v3163 = vld [vmem:[%s11 + $0x80] sm:$0xff]
        %v3164 = vld [vmem:[%s11 + $0x88] sm:$0xff]
        %v3165 = vld [vmem:[%s11 + $0x90] sm:$0xff]
        %v3166 = vld [vmem:[%s11 + $0x98] sm:$0xff]
        %v3167 = vld [vmem:[%s11 + $0xa0] sm:$0xff]
        %v3168 = vld [vmem:[%s11 + $0xa8] sm:$0xff]
        %v3169 = vld [vmem:[%s11 + $0xb0] sm:$0xff]
        %v3170 = vld [vmem:[%s11 + $0xb8] sm:$0xff]
        %v3171 = vld [vmem:[%s11 + $0xc0] sm:$0xff]
        %v3172 = vld [vmem:[%s11 + $0xc8] sm:$0xff]
        %v3173 = vld [vmem:[%s11 + $0xd0] sm:$0xff]
        %v3174 = vld [vmem:[%s11 + $0xd8] sm:$0xff]
        %v3175 = vld [vmem:[%s11 + $0xe0] sm:$0xff]
        %v3176 = vld [vmem:[%s11 + $0xe8] sm:$0xff]
        %v3177 = vld [vmem:[%s11 + $0xf0] sm:$0xff]
        %v3178 = vld [vmem:[%s11 + $0xf8] sm:$0xff]
        %v3179 = vld [vmem:[%s11 + $0x100] sm:$0xff]
        %v3180 = vld [vmem:[%s11 + $0x108] sm:$0xff]
        %v3181 = vld [vmem:[%s11 + $0x110] sm:$0xff]
        %v3182 = vld [vmem:[%s11 + $0x118] sm:$0xff]
        %v3183 = vld [vmem:[%s11 + $0x120] sm:$0xff]
        %v3184 = vld [vmem:[%s11 + $0x128] sm:$0xff]
        %v3185 = vld [vmem:[%s11 + $0x130] sm:$0xff]
        %v3186 = vld [vmem:[%s11 + $0x138] sm:$0xff]
        %v3187 = vld [vmem:[%s11 + $0x140] sm:$0xff]
        %v3188 = vld [vmem:[%s11 + $0x148] sm:$0xff]
        %v3189 = vld [vmem:[%s11 + $0x150] sm:$0xff]
        %v3190 = vld [vmem:[%s11 + $0x158] sm:$0xff]
        %v3191 = vld [vmem:[%s11 + $0x160] sm:$0xff]
        %v3192 = vld [vmem:[%s11 + $0x168] sm:$0xff]
        %v3193 = vld [vmem:[%s11 + $0x170] sm:$0xff]
        %v3194 = vld [vmem:[%s11 + $0x178] sm:$0xff]
        %v3195 = vld [vmem:[%s11 + $0x180] sm:$0xff]
        %v3196 = vld [vmem:[%s11 + $0x188] sm:$0xff]
        %v3197 = vld [vmem:[%s11 + $0x190] sm:$0xff]
        %v3198 = vld [vmem:[%s11 + $0x198] sm:$0xff]
        %v3199 = vld [vmem:[%s11 + $0x1a0] sm:$0xff]
        %v3200 = vld [vmem:[%s11 + $0x1a8] sm:$0xff]
        %v3201 = vld [vmem:[%s11 + $0x1b0] sm:$0xff]
        %v3202 = vld [vmem:[%s11 + $0x1b8] sm:$0xff]
        %v3203 = vld [vmem:[%s11 + $0x1c0] sm:$0xff]
        %v3204 = vld [vmem:[%s11 + $0x1c8] sm:$0xff]
        %v3205 = vld [vmem:[%s11 + $0x1d0] sm:$0xff]
        %v3206 = vld [vmem:[%s11 + $0x1d8] sm:$0xff]
        %v3207 = vld [vmem:[%s11 + $0x1e0] sm:$0xff]
        %v3208 = vld [vmem:[%s11 + $0x1e8] sm:$0xff]
        %v3209 = vld [vmem:[%s11 + $0x1f0] sm:$0xff]
        %v3210 = vld [vmem:[%s11 + $0x1f8] sm:$0xff]
        %v3211 = vld [vmem:[%s12] sm:$0xff]
        %v3213 = vlaneseq
        %v3214 = vshrl.u32 %v3213, 7
        %v3215 = vsub.s32 0, %v3214
        %v3216 = vrot.slane %v3211, %v3215
        %v3217 = vlaneseq
        %v3218 = vshrl.u32 %v3217, 7
        %v3219 = vsub.s32 1, %v3218
        %v3220 = vrot.slane %v3211, %v3219
        %v3221 = vlaneseq
        %v3222 = vshrl.u32 %v3221, 7
        %v3223 = vsub.s32 2, %v3222
        %v3224 = vrot.slane %v3211, %v3223
        %v3225 = vlaneseq
        %v3226 = vshrl.u32 %v3225, 7
        %v3227 = vsub.s32 3, %v3226
        %v3228 = vrot.slane %v3211, %v3227
        %v3229 = vlaneseq
        %v3230 = vshrl.u32 %v3229, 7
        %v3231 = vsub.s32 4, %v3230
        %v3232 = vrot.slane %v3211, %v3231
        %v3233 = vlaneseq
        %v3234 = vshrl.u32 %v3233, 7
        %v3235 = vsub.s32 5, %v3234
        %v3236 = vrot.slane %v3211, %v3235
        %v3237 = vlaneseq
        %v3238 = vshrl.u32 %v3237, 7
        %v3239 = vsub.s32 6, %v3238
        %v3240 = vrot.slane %v3211, %v3239
        %v3241 = vlaneseq
        %v3242 = vshrl.u32 %v3241, 7
        %v3243 = vsub.s32 7, %v3242
        %v3244 = vrot.slane %v3211, %v3243
        %v3317 = vunpack.c.l.b16 %v3147
        %v3318 = vunpack.c.h.b16 %v3147
        %v3319 = vunpack.c.l.b16 %v3148
        %v3320 = vunpack.c.h.b16 %v3148
        %v3321 = vunpack.c.l.b16 %v3149
        %v3322 = vunpack.c.h.b16 %v3149
        %v3323 = vunpack.c.l.b16 %v3150
        %v3324 = vunpack.c.h.b16 %v3150
        %v3325 = vunpack.c.l.b16 %v3151
        %v3326 = vunpack.c.h.b16 %v3151
        %v3327 = vunpack.c.l.b16 %v3152
        %v3328 = vunpack.c.h.b16 %v3152
        %v3329 = vunpack.c.l.b16 %v3153
        %v3330 = vunpack.c.h.b16 %v3153
        %v3331 = vunpack.c.l.b16 %v3154
        %v3332 = vunpack.c.h.b16 %v3154
        %v3333 = vunpack.c.l.b16 %v3155
        %v3334 = vunpack.c.h.b16 %v3155
        %v3335 = vunpack.c.l.b16 %v3156
        %v3336 = vunpack.c.h.b16 %v3156
        %v3337 = vunpack.c.l.b16 %v3157
        %v3338 = vunpack.c.h.b16 %v3157
        %v3339 = vunpack.c.l.b16 %v3158
        %v3340 = vunpack.c.h.b16 %v3158
        %v3341 = vunpack.c.l.b16 %v3159
        %v3342 = vunpack.c.h.b16 %v3159
        %v3343 = vunpack.c.l.b16 %v3160
        %v3344 = vunpack.c.h.b16 %v3160
        %v3345 = vunpack.c.l.b16 %v3161
        %v3346 = vunpack.c.h.b16 %v3161
        %v3347 = vunpack.c.l.b16 %v3162
        %v3348 = vunpack.c.h.b16 %v3162
        %v3349 = vunpack.c.l.b16 %v3163
        %v3350 = vunpack.c.h.b16 %v3163
        %v3351 = vunpack.c.l.b16 %v3164
        %v3352 = vunpack.c.h.b16 %v3164
        %v3353 = vunpack.c.l.b16 %v3165
        %v3354 = vunpack.c.h.b16 %v3165
        %v3355 = vunpack.c.l.b16 %v3166
        %v3356 = vunpack.c.h.b16 %v3166
        %v3357 = vunpack.c.l.b16 %v3167
        %v3358 = vunpack.c.h.b16 %v3167
        %v3359 = vunpack.c.l.b16 %v3168
        %v3360 = vunpack.c.h.b16 %v3168
        %v3361 = vunpack.c.l.b16 %v3169
        %v3362 = vunpack.c.h.b16 %v3169
        %v3363 = vunpack.c.l.b16 %v3170
        %v3364 = vunpack.c.h.b16 %v3170
        %v3365 = vunpack.c.l.b16 %v3171
        %v3366 = vunpack.c.h.b16 %v3171
        %v3367 = vunpack.c.l.b16 %v3172
        %v3368 = vunpack.c.h.b16 %v3172
        %v3369 = vunpack.c.l.b16 %v3173
        %v3370 = vunpack.c.h.b16 %v3173
        %v3371 = vunpack.c.l.b16 %v3174
        %v3372 = vunpack.c.h.b16 %v3174
        %v3373 = vunpack.c.l.b16 %v3175
        %v3374 = vunpack.c.h.b16 %v3175
        %v3375 = vunpack.c.l.b16 %v3176
        %v3376 = vunpack.c.h.b16 %v3176
        %v3377 = vunpack.c.l.b16 %v3177
        %v3378 = vunpack.c.h.b16 %v3177
        %v3379 = vunpack.c.l.b16 %v3178
        %v3380 = vunpack.c.h.b16 %v3178
        %v3381 = vunpack.c.l.b16 %v3179
        %v3382 = vunpack.c.h.b16 %v3179
        %v3383 = vunpack.c.l.b16 %v3180
        %v3384 = vunpack.c.h.b16 %v3180
        %v3385 = vunpack.c.l.b16 %v3181
        %v3386 = vunpack.c.h.b16 %v3181
        %v3387 = vunpack.c.l.b16 %v3182
        %v3388 = vunpack.c.h.b16 %v3182
        %v3389 = vunpack.c.l.b16 %v3183
        %v3390 = vunpack.c.h.b16 %v3183
        %v3391 = vunpack.c.l.b16 %v3184
        %v3392 = vunpack.c.h.b16 %v3184
        %v3393 = vunpack.c.l.b16 %v3185
        %v3394 = vunpack.c.h.b16 %v3185
        %v3395 = vunpack.c.l.b16 %v3186
        %v3396 = vunpack.c.h.b16 %v3186
        %v3397 = vunpack.c.l.b16 %v3187
        %v3398 = vunpack.c.h.b16 %v3187
        %v3399 = vunpack.c.l.b16 %v3188
        %v3400 = vunpack.c.h.b16 %v3188
        %v3401 = vunpack.c.l.b16 %v3189
        %v3402 = vunpack.c.h.b16 %v3189
        %v3403 = vunpack.c.l.b16 %v3190
        %v3404 = vunpack.c.h.b16 %v3190
        %v3405 = vunpack.c.l.b16 %v3191
        %v3406 = vunpack.c.h.b16 %v3191
        %v3407 = vunpack.c.l.b16 %v3192
        %v3408 = vunpack.c.h.b16 %v3192
        %v3409 = vunpack.c.l.b16 %v3193
        %v3410 = vunpack.c.h.b16 %v3193
        %v3411 = vunpack.c.l.b16 %v3194
        %v3412 = vunpack.c.h.b16 %v3194
        %v3413 = vunpack.c.l.b16 %v3195
        %v3414 = vunpack.c.h.b16 %v3195
        %v3415 = vunpack.c.l.b16 %v3196
        %v3416 = vunpack.c.h.b16 %v3196
        %v3417 = vunpack.c.l.b16 %v3197
        %v3418 = vunpack.c.h.b16 %v3197
        %v3419 = vunpack.c.l.b16 %v3198
        %v3420 = vunpack.c.h.b16 %v3198
        %v3421 = vunpack.c.l.b16 %v3199
        %v3422 = vunpack.c.h.b16 %v3199
        %v3423 = vunpack.c.l.b16 %v3200
        %v3424 = vunpack.c.h.b16 %v3200
        %v3425 = vunpack.c.l.b16 %v3201
        %v3426 = vunpack.c.h.b16 %v3201
        %v3427 = vunpack.c.l.b16 %v3202
        %v3428 = vunpack.c.h.b16 %v3202
        %v3429 = vunpack.c.l.b16 %v3203
        %v3430 = vunpack.c.h.b16 %v3203
        %v3431 = vunpack.c.l.b16 %v3204
        %v3432 = vunpack.c.h.b16 %v3204
        %v3433 = vunpack.c.l.b16 %v3205
        %v3434 = vunpack.c.h.b16 %v3205
        %v3435 = vunpack.c.l.b16 %v3206
        %v3436 = vunpack.c.h.b16 %v3206
        %v3437 = vunpack.c.l.b16 %v3207
        %v3438 = vunpack.c.h.b16 %v3207
        %v3439 = vunpack.c.l.b16 %v3208
        %v3440 = vunpack.c.h.b16 %v3208
        %v3441 = vunpack.c.l.b16 %v3209
        %v3442 = vunpack.c.h.b16 %v3209
        %v3443 = vunpack.c.l.b16 %v3210
        %v3444 = vunpack.c.h.b16 %v3210
        %v3445 = vpack.c.b16 %v3325, %v3317
        %v3446 = vpack.c.b16 %v3326, %v3318
        %v3447 = vpack.c.b16 %v3327, %v3319
        %v3448 = vpack.c.b16 %v3328, %v3320
        %v3449 = vpack.c.b16 %v3329, %v3321
        %v3450 = vpack.c.b16 %v3330, %v3322
        %v3451 = vpack.c.b16 %v3331, %v3323
        %v3452 = vpack.c.b16 %v3332, %v3324
        %v3453 = vpack.c.b16 %v3341, %v3333
        %v3454 = vpack.c.b16 %v3342, %v3334
        %v3455 = vpack.c.b16 %v3343, %v3335
        %v3456 = vpack.c.b16 %v3344, %v3336
        %v3457 = vpack.c.b16 %v3345, %v3337
        %v3458 = vpack.c.b16 %v3346, %v3338
        %v3459 = vpack.c.b16 %v3347, %v3339
        %v3460 = vpack.c.b16 %v3348, %v3340
        %v3461 = vpack.c.b16 %v3357, %v3349
        %v3462 = vpack.c.b16 %v3358, %v3350
        %v3463 = vpack.c.b16 %v3359, %v3351
        %v3464 = vpack.c.b16 %v3360, %v3352
        %v3465 = vpack.c.b16 %v3361, %v3353
        %v3466 = vpack.c.b16 %v3362, %v3354
        %v3467 = vpack.c.b16 %v3363, %v3355
        %v3468 = vpack.c.b16 %v3364, %v3356
        %v3469 = vpack.c.b16 %v3373, %v3365
        %v3470 = vpack.c.b16 %v3374, %v3366
        %v3471 = vpack.c.b16 %v3375, %v3367
        %v3472 = vpack.c.b16 %v3376, %v3368
        %v3473 = vpack.c.b16 %v3377, %v3369
        %v3474 = vpack.c.b16 %v3378, %v3370
        %v3475 = vpack.c.b16 %v3379, %v3371
        %v3476 = vpack.c.b16 %v3380, %v3372
        %v3477 = vpack.c.b16 %v3389, %v3381
        %v3478 = vpack.c.b16 %v3390, %v3382
        %v3479 = vpack.c.b16 %v3391, %v3383
        %v3480 = vpack.c.b16 %v3392, %v3384
        %v3481 = vpack.c.b16 %v3393, %v3385
        %v3482 = vpack.c.b16 %v3394, %v3386
        %v3483 = vpack.c.b16 %v3395, %v3387
        %v3484 = vpack.c.b16 %v3396, %v3388
        %v3485 = vpack.c.b16 %v3405, %v3397
        %v3486 = vpack.c.b16 %v3406, %v3398
        %v3487 = vpack.c.b16 %v3407, %v3399
        %v3488 = vpack.c.b16 %v3408, %v3400
        %v3489 = vpack.c.b16 %v3409, %v3401
        %v3490 = vpack.c.b16 %v3410, %v3402
        %v3491 = vpack.c.b16 %v3411, %v3403
        %v3492 = vpack.c.b16 %v3412, %v3404
        %v3493 = vpack.c.b16 %v3421, %v3413
        %v3494 = vpack.c.b16 %v3422, %v3414
        %v3495 = vpack.c.b16 %v3423, %v3415
        %v3496 = vpack.c.b16 %v3424, %v3416
        %v3497 = vpack.c.b16 %v3425, %v3417
        %v3498 = vpack.c.b16 %v3426, %v3418
        %v3499 = vpack.c.b16 %v3427, %v3419
        %v3500 = vpack.c.b16 %v3428, %v3420
        %v3501 = vpack.c.b16 %v3437, %v3429
        %v3502 = vpack.c.b16 %v3438, %v3430
        %v3503 = vpack.c.b16 %v3439, %v3431
        %v3504 = vpack.c.b16 %v3440, %v3432
        %v3505 = vpack.c.b16 %v3441, %v3433
        %v3506 = vpack.c.b16 %v3442, %v3434
        %v3507 = vpack.c.b16 %v3443, %v3435
        %v3508 = vpack.c.b16 %v3444, %v3436
        %3573 = vmatprep.subr.bf16.mxu0 %v3446
        %3574 = vmatpush1.bf16.msra.mxu0 %v3445
        %3575 = vmatprep.subr.bf16.mxu0 %v3454
        %3576 = vmatpush1.bf16.msra.mxu0 %v3453
        %3577 = vmatprep.subr.bf16.mxu0 %v3462
        %3578 = vmatpush1.bf16.msra.mxu0 %v3461
        %3579 = vmatprep.subr.bf16.mxu0 %v3470
        %3580 = vmatpush1.bf16.msra.mxu0 %v3469
        %3581 = vmatprep.subr.bf16.mxu0 %v3478
        %3582 = vmatpush1.bf16.msra.mxu0 %v3477
        %3583 = vmatprep.subr.bf16.mxu0 %v3486
        %3584 = vmatpush1.bf16.msra.mxu0 %v3485
        %3585 = vmatprep.subr.bf16.mxu0 %v3494
        %3586 = vmatpush1.bf16.msra.mxu0 %v3493
        %3587 = vmatprep.subr.bf16.mxu0 %v3502
        %3588 = vmatpush1.bf16.msra.mxu0 %v3501
        %3589 = vmatprep.subr.bf16.mxu0 0
        %3590 = vmatpush1.bf16.msra.mxu0 0
        %3591 = vmatprep.subr.bf16.mxu0 0
        %3592 = vmatpush1.bf16.msra.mxu0 0
        %3593 = vmatprep.subr.bf16.mxu0 0
        %3594 = vmatpush1.bf16.msra.mxu0 0
        %3595 = vmatprep.subr.bf16.mxu0 0
        %3596 = vmatpush1.bf16.msra.mxu0 0
        %3597 = vmatprep.subr.bf16.mxu0 0
        %3598 = vmatpush1.bf16.msra.mxu0 0
        %3599 = vmatprep.subr.bf16.mxu0 0
        %3600 = vmatpush1.bf16.msra.mxu0 0
        %3601 = vmatprep.subr.bf16.mxu0 0
        %3602 = vmatpush1.bf16.msra.mxu0 0
        %3603 = vmatprep.subr.bf16.mxu0 0
        %3604 = vmatpush1.bf16.msra.mxu0 0
        %3605 = vmatprep.mubr.bf16.mxu0 0
        %3606 = vmatmul.mubr.bf16.gmra.mrb[0].mxu0 %v3145
        %v3607 = vpop.f32.mrb[0].mxu0
        %v3608 = vadd.f32 %v3216, %v3607
        %v3609 = vpop.f32.mrb[0].mxu0
        %v3610 = vadd.f32 %v3220, %v3609
        %v3611 = vpop.f32.mrb[0].mxu0
        %v3612 = vadd.f32 %v3216, %v3611
        %v3613 = vpop.f32.mrb[0].mxu0
        %v3614 = vadd.f32 %v3220, %v3613
        %3615 = vmatprep.mubr.bf16.mxu0 0
        %3616 = vmatmul.mubr.bf16.gmra.mrb[0].mxu0 %v3146
        %v3617 = vpop.f32.mrb[0].mxu0
        %v3618 = vadd.f32 %v3216, %v3617
        %v3619 = vpop.f32.mrb[0].mxu0
        %v3620 = vadd.f32 %v3220, %v3619
        %v3621 = vpop.f32.mrb[0].mxu0
        %v3622 = vadd.f32 %v3216, %v3621
        %v3623 = vpop.f32.mrb[0].mxu0
        %v3624 = vadd.f32 %v3220, %v3623
        %3625 = vdwg.mxu0
        %3626 = vmatprep.subr.bf16.mxu0 %v3448
        %3627 = vmatpush1.bf16.msra.mxu0 %v3447
        %3628 = vmatprep.subr.bf16.mxu0 %v3456
        %3629 = vmatpush1.bf16.msra.mxu0 %v3455
        %3630 = vmatprep.subr.bf16.mxu0 %v3464
        %3631 = vmatpush1.bf16.msra.mxu0 %v3463
        %3632 = vmatprep.subr.bf16.mxu0 %v3472
        %3633 = vmatpush1.bf16.msra.mxu0 %v3471
        %3634 = vmatprep.subr.bf16.mxu0 %v3480
        %3635 = vmatpush1.bf16.msra.mxu0 %v3479
        %3636 = vmatprep.subr.bf16.mxu0 %v3488
        %3637 = vmatpush1.bf16.msra.mxu0 %v3487
        %3638 = vmatprep.subr.bf16.mxu0 %v3496
        %3639 = vmatpush1.bf16.msra.mxu0 %v3495
        %3640 = vmatprep.subr.bf16.mxu0 %v3504
        %3641 = vmatpush1.bf16.msra.mxu0 %v3503
        %3642 = vmatprep.subr.bf16.mxu0 0
        %3643 = vmatpush1.bf16.msra.mxu0 0
        %3644 = vmatprep.subr.bf16.mxu0 0
        %3645 = vmatpush1.bf16.msra.mxu0 0
        %3646 = vmatprep.subr.bf16.mxu0 0
        %3647 = vmatpush1.bf16.msra.mxu0 0
        %3648 = vmatprep.subr.bf16.mxu0 0
        %3649 = vmatpush1.bf16.msra.mxu0 0
        %3650 = vmatprep.subr.bf16.mxu0 0
        %3651 = vmatpush1.bf16.msra.mxu0 0
        %3652 = vmatprep.subr.bf16.mxu0 0
        %3653 = vmatpush1.bf16.msra.mxu0 0
        %3654 = vmatprep.subr.bf16.mxu0 0
        %3655 = vmatpush1.bf16.msra.mxu0 0
        %3656 = vmatprep.subr.bf16.mxu0 0
        %3657 = vmatpush1.bf16.msra.mxu0 0
        %3658 = vmatprep.mubr.bf16.mxu0 0
        %3659 = vmatmul.mubr.bf16.gmra.mrb[0].mxu0 %v3145
        %v3660 = vpop.f32.mrb[0].mxu0
        %v3661 = vadd.f32 %v3224, %v3660
        %v3662 = vpop.f32.mrb[0].mxu0
        %v3663 = vadd.f32 %v3228, %v3662
        %v3664 = vpop.f32.mrb[0].mxu0
        %v3665 = vadd.f32 %v3224, %v3664
        %v3666 = vpop.f32.mrb[0].mxu0
        %v3667 = vadd.f32 %v3228, %v3666
        %3668 = vmatprep.mubr.bf16.mxu0 0
        %3669 = vmatmul.mubr.bf16.gmra.mrb[0].mxu0 %v3146
        %v3670 = vpop.f32.mrb[0].mxu0
        %v3671 = vadd.f32 %v3224, %v3670
        %v3672 = vpop.f32.mrb[0].mxu0
        %v3673 = vadd.f32 %v3228, %v3672
        %v3674 = vpop.f32.mrb[0].mxu0
        %v3675 = vadd.f32 %v3224, %v3674
        %v3676 = vpop.f32.mrb[0].mxu0
        %v3677 = vadd.f32 %v3228, %v3676
        %3678 = vdwg.mxu0
        %3679 = vmatprep.subr.bf16.mxu0 %v3450
        %3680 = vmatpush1.bf16.msra.mxu0 %v3449
        %3681 = vmatprep.subr.bf16.mxu0 %v3458
        %3682 = vmatpush1.bf16.msra.mxu0 %v3457
        %3683 = vmatprep.subr.bf16.mxu0 %v3466
        %3684 = vmatpush1.bf16.msra.mxu0 %v3465
        %3685 = vmatprep.subr.bf16.mxu0 %v3474
        %3686 = vmatpush1.bf16.msra.mxu0 %v3473
        %3687 = vmatprep.subr.bf16.mxu0 %v3482
        %3688 = vmatpush1.bf16.msra.mxu0 %v3481
        %3689 = vmatprep.subr.bf16.mxu0 %v3490
        %3690 = vmatpush1.bf16.msra.mxu0 %v3489
        %3691 = vmatprep.subr.bf16.mxu0 %v3498
        %3692 = vmatpush1.bf16.msra.mxu0 %v3497
        %3693 = vmatprep.subr.bf16.mxu0 %v3506
        %3694 = vmatpush1.bf16.msra.mxu0 %v3505
        %3695 = vmatprep.subr.bf16.mxu0 0
        %3696 = vmatpush1.bf16.msra.mxu0 0
        %3697 = vmatprep.subr.bf16.mxu0 0
        %3698 = vmatpush1.bf16.msra.mxu0 0
        %3699 = vmatprep.subr.bf16.mxu0 0
        %3700 = vmatpush1.bf16.msra.mxu0 0
        %3701 = vmatprep.subr.bf16.mxu0 0
        %3702 = vmatpush1.bf16.msra.mxu0 0
        %3703 = vmatprep.subr.bf16.mxu0 0
        %3704 = vmatpush1.bf16.msra.mxu0 0
        %3705 = vmatprep.subr.bf16.mxu0 0
        %3706 = vmatpush1.bf16.msra.mxu0 0
        %3707 = vmatprep.subr.bf16.mxu0 0
        %3708 = vmatpush1.bf16.msra.mxu0 0
        %3709 = vmatprep.subr.bf16.mxu0 0
        %3710 = vmatpush1.bf16.msra.mxu0 0
        %3711 = vmatprep.mubr.bf16.mxu0 0
        %3712 = vmatmul.mubr.bf16.gmra.mrb[0].mxu0 %v3145
        %v3713 = vpop.f32.mrb[0].mxu0
        %v3714 = vadd.f32 %v3232, %v3713
        %v3715 = vpop.f32.mrb[0].mxu0
        %v3716 = vadd.f32 %v3236, %v3715
        %v3717 = vpop.f32.mrb[0].mxu0
        %v3718 = vadd.f32 %v3232, %v3717
        %v3719 = vpop.f32.mrb[0].mxu0
        %v3720 = vadd.f32 %v3236, %v3719
        %3721 = vmatprep.mubr.bf16.mxu0 0
        %3722 = vmatmul.mubr.bf16.gmra.mrb[0].mxu0 %v3146
        %v3723 = vpop.f32.mrb[0].mxu0
        %v3724 = vadd.f32 %v3232, %v3723
        %v3725 = vpop.f32.mrb[0].mxu0
        %v3726 = vadd.f32 %v3236, %v3725
        %v3727 = vpop.f32.mrb[0].mxu0
        %v3728 = vadd.f32 %v3232, %v3727
        %v3729 = vpop.f32.mrb[0].mxu0
        %v3730 = vadd.f32 %v3236, %v3729
        %3731 = vdwg.mxu0
        %3732 = vmatprep.subr.bf16.mxu0 %v3452
        %3733 = vmatpush1.bf16.msra.mxu0 %v3451
        %3734 = vmatprep.subr.bf16.mxu0 %v3460
        %3735 = vmatpush1.bf16.msra.mxu0 %v3459
        %3736 = vmatprep.subr.bf16.mxu0 %v3468
        %3737 = vmatpush1.bf16.msra.mxu0 %v3467
        %3738 = vmatprep.subr.bf16.mxu0 %v3476
        %3739 = vmatpush1.bf16.msra.mxu0 %v3475
        %3740 = vmatprep.subr.bf16.mxu0 %v3484
        %3741 = vmatpush1.bf16.msra.mxu0 %v3483
        %3742 = vmatprep.subr.bf16.mxu0 %v3492
        %3743 = vmatpush1.bf16.msra.mxu0 %v3491
        %3744 = vmatprep.subr.bf16.mxu0 %v3500
        %3745 = vmatpush1.bf16.msra.mxu0 %v3499
        %3746 = vmatprep.subr.bf16.mxu0 %v3508
        %3747 = vmatpush1.bf16.msra.mxu0 %v3507
        %3748 = vmatprep.subr.bf16.mxu0 0
        %3749 = vmatpush1.bf16.msra.mxu0 0
        %3750 = vmatprep.subr.bf16.mxu0 0
        %3751 = vmatpush1.bf16.msra.mxu0 0
        %3752 = vmatprep.subr.bf16.mxu0 0
        %3753 = vmatpush1.bf16.msra.mxu0 0
        %3754 = vmatprep.subr.bf16.mxu0 0
        %3755 = vmatpush1.bf16.msra.mxu0 0
        %3756 = vmatprep.subr.bf16.mxu0 0
        %3757 = vmatpush1.bf16.msra.mxu0 0
        %3758 = vmatprep.subr.bf16.mxu0 0
        %3759 = vmatpush1.bf16.msra.mxu0 0
        %3760 = vmatprep.subr.bf16.mxu0 0
        %3761 = vmatpush1.bf16.msra.mxu0 0
        %3762 = vmatprep.subr.bf16.mxu0 0
        %3763 = vmatpush1.bf16.msra.mxu0 0
        %3764 = vmatprep.mubr.bf16.mxu0 0
        %3765 = vmatmul.mubr.bf16.gmra.mrb[0].mxu0 %v3145
        %v3766 = vpop.f32.mrb[0].mxu0
        %v3767 = vadd.f32 %v3240, %v3766
        %v3768 = vpop.f32.mrb[0].mxu0
        %v3769 = vadd.f32 %v3244, %v3768
        %v3770 = vpop.f32.mrb[0].mxu0
        %v3771 = vadd.f32 %v3240, %v3770
        %v3772 = vpop.f32.mrb[0].mxu0
        %v3773 = vadd.f32 %v3244, %v3772
        %3774 = vmatprep.mubr.bf16.mxu0 0
        %3775 = vmatmul.mubr.bf16.gmra.mrb[0].mxu0 %v3146
        %v3776 = vpop.f32.mrb[0].mxu0
        %v3777 = vadd.f32 %v3240, %v3776
        %v3778 = vpop.f32.mrb[0].mxu0
        %v3779 = vadd.f32 %v3244, %v3778
        %v3780 = vpop.f32.mrb[0].mxu0
        %v3781 = vadd.f32 %v3240, %v3780
        %v3782 = vpop.f32.mrb[0].mxu0
        %v3783 = vadd.f32 %v3244, %v3782
        %3784 = vdwg.mxu0
        %v3785 = vmax.f32 %v3608, 0.0
        %v3786 = vmax.f32 %v3610, 0.0
        %v3787 = vmax.f32 %v3661, 0.0
        %v3788 = vmax.f32 %v3663, 0.0
        %v3789 = vmax.f32 %v3714, 0.0
        %v3790 = vmax.f32 %v3716, 0.0
        %v3791 = vmax.f32 %v3767, 0.0
        %v3792 = vmax.f32 %v3769, 0.0
        %v3793 = vmax.f32 %v3612, 0.0
        %v3794 = vmax.f32 %v3614, 0.0
        %v3795 = vmax.f32 %v3665, 0.0
        %v3796 = vmax.f32 %v3667, 0.0
        %v3797 = vmax.f32 %v3718, 0.0
        %v3798 = vmax.f32 %v3720, 0.0
        %v3799 = vmax.f32 %v3771, 0.0
        %v3800 = vmax.f32 %v3773, 0.0
        %v3801 = vmax.f32 %v3618, 0.0
        %v3802 = vmax.f32 %v3620, 0.0
        %v3803 = vmax.f32 %v3671, 0.0
        %v3804 = vmax.f32 %v3673, 0.0
        %v3805 = vmax.f32 %v3724, 0.0
        %v3806 = vmax.f32 %v3726, 0.0
        %v3807 = vmax.f32 %v3777, 0.0
        %v3808 = vmax.f32 %v3779, 0.0
        %v3809 = vmax.f32 %v3622, 0.0
        %v3810 = vmax.f32 %v3624, 0.0
        %v3811 = vmax.f32 %v3675, 0.0
        %v3812 = vmax.f32 %v3677, 0.0
        %v3813 = vmax.f32 %v3728, 0.0
        %v3814 = vmax.f32 %v3730, 0.0
        %v3815 = vmax.f32 %v3781, 0.0
        %v3816 = vmax.f32 %v3783, 0.0
        %v3817 = vmax.f32 %v3785, %v3793
        %v3818 = vmax.f32 %v3817, %v3801
        %v3819 = vmax.f32 %v3818, %v3809
        %v3820 = vrot.slane %v3819, 4
        %v3821 = vmax.f32 %v3819, %v3820
        %v3822 = vrot.slane %v3821, 2
        %v3823 = vmax.f32 %v3821, %v3822
        %v3824 = vrot.slane %v3823, 1
        %v3825 = vmax.f32 %v3823, %v3824
        %v3826 = vmax.f32 %v3786, %v3794
        %v3827 = vmax.f32 %v3826, %v3802
        %v3828 = vmax.f32 %v3827, %v3810
        %v3829 = vrot.slane %v3828, 4
        %v3830 = vmax.f32 %v3828, %v3829
        %v3831 = vrot.slane %v3830, 2
        %v3832 = vmax.f32 %v3830, %v3831
        %v3833 = vrot.slane %v3832, 1
        %v3834 = vmax.f32 %v3832, %v3833
        %v3835 = vmax.f32 %v3787, %v3795
        %v3836 = vmax.f32 %v3835, %v3803
        %v3837 = vmax.f32 %v3836, %v3811
        %v3838 = vrot.slane %v3837, 4
        %v3839 = vmax.f32 %v3837, %v3838
        %v3840 = vrot.slane %v3839, 2
        %v3841 = vmax.f32 %v3839, %v3840
        %v3842 = vrot.slane %v3841, 1
        %v3843 = vmax.f32 %v3841, %v3842
        %v3844 = vmax.f32 %v3788, %v3796
        %v3845 = vmax.f32 %v3844, %v3804
        %v3846 = vmax.f32 %v3845, %v3812
        %v3847 = vrot.slane %v3846, 4
        %v3848 = vmax.f32 %v3846, %v3847
        %v3849 = vrot.slane %v3848, 2
        %v3850 = vmax.f32 %v3848, %v3849
        %v3851 = vrot.slane %v3850, 1
        %v3852 = vmax.f32 %v3850, %v3851
        %v3853 = vmax.f32 %v3789, %v3797
        %v3854 = vmax.f32 %v3853, %v3805
        %v3855 = vmax.f32 %v3854, %v3813
        %v3856 = vrot.slane %v3855, 4
        %v3857 = vmax.f32 %v3855, %v3856
        %v3858 = vrot.slane %v3857, 2
        %v3859 = vmax.f32 %v3857, %v3858
        %v3860 = vrot.slane %v3859, 1
        %v3861 = vmax.f32 %v3859, %v3860
        %v3862 = vmax.f32 %v3790, %v3798
        %v3863 = vmax.f32 %v3862, %v3806
        %v3864 = vmax.f32 %v3863, %v3814
        %v3865 = vrot.slane %v3864, 4
        %v3866 = vmax.f32 %v3864, %v3865
        %v3867 = vrot.slane %v3866, 2
        %v3868 = vmax.f32 %v3866, %v3867
        %v3869 = vrot.slane %v3868, 1
        %v3870 = vmax.f32 %v3868, %v3869
        %v3871 = vmax.f32 %v3791, %v3799
        %v3872 = vmax.f32 %v3871, %v3807
        %v3873 = vmax.f32 %v3872, %v3815
        %v3874 = vrot.slane %v3873, 4
        %v3875 = vmax.f32 %v3873, %v3874
        %v3876 = vrot.slane %v3875, 2
        %v3877 = vmax.f32 %v3875, %v3876
        %v3878 = vrot.slane %v3877, 1
        %v3879 = vmax.f32 %v3877, %v3878
        %v3880 = vmax.f32 %v3792, %v3800
        %v3881 = vmax.f32 %v3880, %v3808
        %v3882 = vmax.f32 %v3881, %v3816
        %v3883 = vrot.slane %v3882, 4
        %v3884 = vmax.f32 %v3882, %v3883
        %v3885 = vrot.slane %v3884, 2
        %v3886 = vmax.f32 %v3884, %v3885
        %v3887 = vrot.slane %v3886, 1
        %v3888 = vmax.f32 %v3886, %v3887
        %v3889 = vld [vmem:[%s849] sm:$0xff]
        %v3898 = vcombine.low %v3825, %v3834
        %v3899 = vcombine.low %v3843, %v3852
        %v3900 = vcombine.low %v3861, %v3870
        %v3901 = vcombine.low %v3879, %v3888
        %v3903 = vunpack.c.l.s4 1966171168
        %v3904 = vunpack.c.0.s8 %v3903
        %v3905 = vlaneseq
        %v3906 = vshrl.u32 %v3905, 7
        %v3907 = vsub.s32 %v3904, %v3906
        %v3908 = vrot.slane %v3898, %v3907
        %v3910 = vunpack.c.l.s4 1966171168
        %v3911 = vunpack.c.0.s8 %v3910
        %v3912 = vlaneseq
        %v3913 = vshrl.u32 %v3912, 7
        %v3914 = vsub.s32 %v3911, %v3913
        %v3915 = vrot.slane %v3899, %v3914
        %v3917 = vunpack.c.l.s4 1966171168
        %v3918 = vunpack.c.0.s8 %v3917
        %v3919 = vlaneseq
        %v3920 = vshrl.u32 %v3919, 7
        %v3921 = vsub.s32 %v3918, %v3920
        %v3922 = vrot.slane %v3900, %v3921
        %v3924 = vunpack.c.l.s4 1966171168
        %v3925 = vunpack.c.0.s8 %v3924
        %v3926 = vlaneseq
        %v3927 = vshrl.u32 %v3926, 7
        %v3928 = vsub.s32 %v3925, %v3927
        %v3929 = vrot.slane %v3901, %v3928
        %v3930 = vcombine.low %v3908, %v3915
        %v3931 = vcombine.low %v3922, %v3929
        %v3933 = vunpack.c.l.s4 1966171168
        %v3934 = vunpack.c.0.s8 %v3933
        %v3935 = vlaneseq
        %v3936 = vshrl.u32 %v3935, 7
        %v3937 = vsub.s32 %v3934, %v3936
        %v3938 = vrot.slane %v3930, %v3937
        %v3940 = vunpack.c.l.s4 1966171168
        %v3941 = vunpack.c.0.s8 %v3940
        %v3942 = vlaneseq
        %v3943 = vshrl.u32 %v3942, 7
        %v3944 = vsub.s32 %v3941, %v3943
        %v3945 = vrot.slane %v3931, %v3944
        %v3946 = vcombine.low %v3938, %v3945
        %v3948 = vmax.f32 %v3889, %v3946
        %3949 = vst [vmem:[%s849] sm:$0xff] %v3948
        %p3950 = scmp.lt.s32.totalorder %s28, 1
        %s3951 = scalar_select %p3950, %s28, 1
        %s3952 = smul.addr %s3951, 8
        %s3953 = scalar_lea.vmem %s13, %s3952
        // Predicated region
        $region118: #{dgcnn_forward.4} parent=108 // pred_check
          %p3954 = pneg %p341
        $region119: #{dgcnn_forward.4} parent=108 // pred_check_branch
          %3956 = sbr.rel (%p3954) target = $region121
        $region120: #{dgcnn_forward.4} parent=108 // pred_region
          _
        $region121: #{dgcnn_forward.4} parent=108 // pred_fallthru
          _
      $region109: #{dgcnn_forward.4} parent=5 // pred_fallthru
        _
      %p3957 = scmp.le.s32.totalorder 2, %s19
      // Predicated region
      $region122: #{dgcnn_forward.4} parent=5 // pred_check
        %p3958 = pneg %p3957
      $region123: #{dgcnn_forward.4} parent=5 // pred_check_branch
        %3960 = sbr.rel (%p3958) target = $region125
      $region124: #{dgcnn_forward.4} parent=5 // pred_region
        %s3961 = ssub.s32 %s19, 2
        // Predicated region
        $region126: #{dgcnn_forward.4} parent=124 // pred_check
          %p3962 = pneg %p347
        $region127: #{dgcnn_forward.4} parent=124 // pred_check_branch
          %3964 = sbr.rel (%p3962) target = $region129
        $region128: #{dgcnn_forward.4} parent=124 // pred_region
          %p3965 = scmp.lt.s32.totalorder %s30, 1
          %s3966 = scalar_select %p3965, %s30, 1
          %s3967 = smul.addr %s3966, 8
          %s3968 = scalar_lea.vmem %s13, %s3967
        $region129: #{dgcnn_forward.4} parent=124 // pred_fallthru
          _
      $region125: #{dgcnn_forward.4} parent=5 // pred_fallthru
        _
    $region6: #{dgcnn_forward.4} parent=1 // loop_footer
      %s23 = sadd.s32 1, %s19
    $region7: #{dgcnn_forward.4} parent=1 // loop_footer_branch
      %18 = sbr.rel target = $region3
    $region8: #{dgcnn_forward.4} parent=1 // loop_exit
      _

// kernel: dgcnn_forward.5
$region0: #{dgcnn_forward.5}
  #allocation0 [shape = 'u32[]', space=smem, size = 0x4, offset = 0x4, fixed_abs, tag = 'smem constant byte address 0x4 - core index']
  #allocation1 [shape = 'u32[144,128]{1,0:T(1,128)}', space=vmem, size = 0x12000, scoped, tag = 'internal scratch']
  %s0 = inlined_call_operand.vmem [shape: f32[2,1024], index: 0, kind: input, shape index: {}]
  %s1 = inlined_call_operand.vmem [shape: bf16[1024,512], index: 1, kind: input, shape index: {}]
  %s2 = inlined_call_operand.vmem [shape: f32[1,512], index: 2, kind: input, shape index: {}]
  %s3 = inlined_call_operand.vmem [shape: bf16[512,256], index: 3, kind: input, shape index: {}]
  %s4 = inlined_call_operand.vmem [shape: f32[1,256], index: 4, kind: input, shape index: {}]
  %s5 = inlined_call_operand.vmem [shape: bf16[256,2], index: 5, kind: input, shape index: {}]
  %s6 = inlined_call_operand.vmem [shape: f32[1,2], index: 6, kind: input, shape index: {}]
  %s7 = inlined_call_operand.hbm [shape: f32[2,2], index: 7, kind: output, shape index: {}]
  %s8 = sld [smem:[#allocation0]]
  $region38: #{dgcnn_forward.5} parent=0
    _
  %s10 = ssub.s32 1, %s8
  %s11 = scalar_select 0, %s10, %s8
  $region1: #{dgcnn_forward.5} parent=0
    #allocation2 [shape = 'u8[1024]{0}', space=vmem, size = 0x400, scoped, tag = 'output window, operand 0, single buffered']
    #allocation3 [shape = 's32[1]{0}', space=sflag, size = 0x4, scoped, tag = 'scoped memory for dgcnn_forward.5']
    %12 = vsyncpa [#allocation3], 0
    // Predicated region
    $region2: #{dgcnn_forward.5} parent=1 // pred_check
      _
    $region3: #{dgcnn_forward.5} parent=1 // pred_check_branch
      %14 = sbr.rel (0) target = $region5
    $region4: #{dgcnn_forward.5} parent=1 // pred_region
      _
    $region5: #{dgcnn_forward.5} parent=1 // pred_fallthru
      _
    // Predicated region
    $region6: #{dgcnn_forward.5} parent=1 // pred_check
      _
    $region7: #{dgcnn_forward.5} parent=1 // pred_check_branch
      %16 = sbr.rel (0) target = $region9
    $region8: #{dgcnn_forward.5} parent=1 // pred_region
      _
    $region9: #{dgcnn_forward.5} parent=1 // pred_fallthru
      _
    // Predicated region
    $region10: #{dgcnn_forward.5} parent=1 // pred_check
      _
    $region11: #{dgcnn_forward.5} parent=1 // pred_check_branch
      %18 = sbr.rel (0) target = $region13
    $region12: #{dgcnn_forward.5} parent=1 // pred_region
      _
    $region13: #{dgcnn_forward.5} parent=1 // pred_fallthru
      _
    // Predicated region
    $region14: #{dgcnn_forward.5} parent=1 // pred_check
      _
    $region15: #{dgcnn_forward.5} parent=1 // pred_check_branch
      %20 = sbr.rel (0) target = $region17
    $region16: #{dgcnn_forward.5} parent=1 // pred_region
      _
    $region17: #{dgcnn_forward.5} parent=1 // pred_fallthru
      _
    // Predicated region
    $region18: #{dgcnn_forward.5} parent=1 // pred_check
      _
    $region19: #{dgcnn_forward.5} parent=1 // pred_check_branch
      %22 = sbr.rel (0) target = $region21
    $region20: #{dgcnn_forward.5} parent=1 // pred_region
      _
    $region21: #{dgcnn_forward.5} parent=1 // pred_fallthru
      _
    // Predicated region
    $region22: #{dgcnn_forward.5} parent=1 // pred_check
      _
    $region23: #{dgcnn_forward.5} parent=1 // pred_check_branch
      %24 = sbr.rel (0) target = $region25
    $region24: #{dgcnn_forward.5} parent=1 // pred_region
      _
    $region25: #{dgcnn_forward.5} parent=1 // pred_fallthru
      _
    // Predicated region
    $region26: #{dgcnn_forward.5} parent=1 // pred_check
      _
    $region27: #{dgcnn_forward.5} parent=1 // pred_check_branch
      %26 = sbr.rel (0) target = $region29
    $region28: #{dgcnn_forward.5} parent=1 // pred_region
      _
    $region29: #{dgcnn_forward.5} parent=1 // pred_fallthru
      _
    %v28 = vld [vmem:[%s0] sm:$0xff]
    %v29 = vld [vmem:[%s0 + $0x8] sm:$0xff]
    %v32 = vcombine.high %v28, %v28
    %v34 = vunpack.c.l.s4 1983009808
    %v35 = vunpack.c.0.s8 %v34
    %v36 = vlaneseq
    %v37 = vshrl.u32 %v36, 7
    %v38 = vsub.s32 %v35, %v37
    %v39 = vrot.slane %v28, %v38
    %v41 = vunpack.c.l.s4 1983009808
    %v42 = vunpack.c.0.s8 %v41
    %v43 = vlaneseq
    %v44 = vshrl.u32 %v43, 7
    %v45 = vsub.s32 %v42, %v44
    %v46 = vrot.slane %v32, %v45
    %v47 = vcombine.high %v39, %v39
    %v48 = vcombine.high %v46, %v46
    %v49 = vcombine.high %v29, %v29
    %v51 = vunpack.c.l.s4 1983009808
    %v52 = vunpack.c.0.s8 %v51
    %v53 = vlaneseq
    %v54 = vshrl.u32 %v53, 7
    %v55 = vsub.s32 %v52, %v54
    %v56 = vrot.slane %v29, %v55
    %v58 = vunpack.c.l.s4 1983009808
    %v59 = vunpack.c.0.s8 %v58
    %v60 = vlaneseq
    %v61 = vshrl.u32 %v60, 7
    %v62 = vsub.s32 %v59, %v61
    %v63 = vrot.slane %v49, %v62
    %v64 = vcombine.high %v56, %v56
    %v65 = vcombine.high %v63, %v63
    %v74 = vpack.c.bf16 %v39, %v39
    %v75 = vpack.c.bf16 %v47, %v47
    %v76 = vpack.c.bf16 %v46, %v46
    %v77 = vpack.c.bf16 %v48, %v48
    %v78 = vpack.c.bf16 %v56, %v56
    %v79 = vpack.c.bf16 %v64, %v64
    %v80 = vpack.c.bf16 %v63, %v63
    %v81 = vpack.c.bf16 %v65, %v65
    %v82 = vld [vmem:[%s1] sm:$0xff]
    %v83 = vld [vmem:[%s1 + $0x8] sm:$0xff]
    %v84 = vld [vmem:[%s1 + $0x10] sm:$0xff]
    %v85 = vld [vmem:[%s1 + $0x18] sm:$0xff]
    %v86 = vld [vmem:[%s1 + $0x20] sm:$0xff]
    %v87 = vld [vmem:[%s1 + $0x28] sm:$0xff]
    %v88 = vld [vmem:[%s1 + $0x30] sm:$0xff]
    %v89 = vld [vmem:[%s1 + $0x38] sm:$0xff]
    %v90 = vld [vmem:[%s1 + $0x40] sm:$0xff]
    %v91 = vld [vmem:[%s1 + $0x48] sm:$0xff]
    %v92 = vld [vmem:[%s1 + $0x50] sm:$0xff]
    %v93 = vld [vmem:[%s1 + $0x58] sm:$0xff]
    %v94 = vld [vmem:[%s1 + $0x60] sm:$0xff]
    %v95 = vld [vmem:[%s1 + $0x68] sm:$0xff]
    %v96 = vld [vmem:[%s1 + $0x70] sm:$0xff]
    %v97 = vld [vmem:[%s1 + $0x78] sm:$0xff]
    %v98 = vld [vmem:[%s1 + $0x80] sm:$0xff]
    %v99 = vld [vmem:[%s1 + $0x88] sm:$0xff]
    %v100 = vld [vmem:[%s1 + $0x90] sm:$0xff]
    %v101 = vld [vmem:[%s1 + $0x98] sm:$0xff]
    %v102 = vld [vmem:[%s1 + $0xa0] sm:$0xff]
    %v103 = vld [vmem:[%s1 + $0xa8] sm:$0xff]
    %v104 = vld [vmem:[%s1 + $0xb0] sm:$0xff]
    %v105 = vld [vmem:[%s1 + $0xb8] sm:$0xff]
    %v106 = vld [vmem:[%s1 + $0xc0] sm:$0xff]
    %v107 = vld [vmem:[%s1 + $0xc8] sm:$0xff]
    %v108 = vld [vmem:[%s1 + $0xd0] sm:$0xff]
    %v109 = vld [vmem:[%s1 + $0xd8] sm:$0xff]
    %v110 = vld [vmem:[%s1 + $0xe0] sm:$0xff]
    %v111 = vld [vmem:[%s1 + $0xe8] sm:$0xff]
    %v112 = vld [vmem:[%s1 + $0xf0] sm:$0xff]
    %v113 = vld [vmem:[%s1 + $0xf8] sm:$0xff]
    %v114 = vld [vmem:[%s1 + $0x100] sm:$0xff]
    %v115 = vld [vmem:[%s1 + $0x108] sm:$0xff]
    %v116 = vld [vmem:[%s1 + $0x110] sm:$0xff]
    %v117 = vld [vmem:[%s1 + $0x118] sm:$0xff]
    %v118 = vld [vmem:[%s1 + $0x120] sm:$0xff]
    %v119 = vld [vmem:[%s1 + $0x128] sm:$0xff]
    %v120 = vld [vmem:[%s1 + $0x130] sm:$0xff]
    %v121 = vld [vmem:[%s1 + $0x138] sm:$0xff]
    %v122 = vld [vmem:[%s1 + $0x140] sm:$0xff]
    %v123 = vld [vmem:[%s1 + $0x148] sm:$0xff]
    %v124 = vld [vmem:[%s1 + $0x150] sm:$0xff]
    %v125 = vld [vmem:[%s1 + $0x158] sm:$0xff]
    %v126 = vld [vmem:[%s1 + $0x160] sm:$0xff]
    %v127 = vld [vmem:[%s1 + $0x168] sm:$0xff]
    %v128 = vld [vmem:[%s1 + $0x170] sm:$0xff]
    %v129 = vld [vmem:[%s1 + $0x178] sm:$0xff]
    %v130 = vld [vmem:[%s1 + $0x180] sm:$0xff]
    %v131 = vld [vmem:[%s1 + $0x188] sm:$0xff]
    %v132 = vld [vmem:[%s1 + $0x190] sm:$0xff]
    %v133 = vld [vmem:[%s1 + $0x198] sm:$0xff]
    %v134 = vld [vmem:[%s1 + $0x1a0] sm:$0xff]
    %v135 = vld [vmem:[%s1 + $0x1a8] sm:$0xff]
    %v136 = vld [vmem:[%s1 + $0x1b0] sm:$0xff]
    %v137 = vld [vmem:[%s1 + $0x1b8] sm:$0xff]
    %v138 = vld [vmem:[%s1 + $0x1c0] sm:$0xff]
    %v139 = vld [vmem:[%s1 + $0x1c8] sm:$0xff]
    %v140 = vld [vmem:[%s1 + $0x1d0] sm:$0xff]
    %v141 = vld [vmem:[%s1 + $0x1d8] sm:$0xff]
    %v142 = vld [vmem:[%s1 + $0x1e0] sm:$0xff]
    %v143 = vld [vmem:[%s1 + $0x1e8] sm:$0xff]
    %v144 = vld [vmem:[%s1 + $0x1f0] sm:$0xff]
    %v145 = vld [vmem:[%s1 + $0x1f8] sm:$0xff]
    %v146 = vld [vmem:[%s1 + $0x200] sm:$0xff]
    %v147 = vld [vmem:[%s1 + $0x208] sm:$0xff]
    %v148 = vld [vmem:[%s1 + $0x210] sm:$0xff]
    %v149 = vld [vmem:[%s1 + $0x218] sm:$0xff]
    %v150 = vld [vmem:[%s1 + $0x220] sm:$0xff]
    %v151 = vld [vmem:[%s1 + $0x228] sm:$0xff]
    %v152 = vld [vmem:[%s1 + $0x230] sm:$0xff]
    %v153 = vld [vmem:[%s1 + $0x238] sm:$0xff]
    %v154 = vld [vmem:[%s1 + $0x240] sm:$0xff]
    %v155 = vld [vmem:[%s1 + $0x248] sm:$0xff]
    %v156 = vld [vmem:[%s1 + $0x250] sm:$0xff]
    %v157 = vld [vmem:[%s1 + $0x258] sm:$0xff]
    %v158 = vld [vmem:[%s1 + $0x260] sm:$0xff]
    %v159 = vld [vmem:[%s1 + $0x268] sm:$0xff]
    %v160 = vld [vmem:[%s1 + $0x270] sm:$0xff]
    %v161 = vld [vmem:[%s1 + $0x278] sm:$0xff]
    %v162 = vld [vmem:[%s1 + $0x280] sm:$0xff]
    %v163 = vld [vmem:[%s1 + $0x288] sm:$0xff]
    %v164 = vld [vmem:[%s1 + $0x290] sm:$0xff]
    %v165 = vld [vmem:[%s1 + $0x298] sm:$0xff]
    %v166 = vld [vmem:[%s1 + $0x2a0] sm:$0xff]
    %v167 = vld [vmem:[%s1 + $0x2a8] sm:$0xff]
    %v168 = vld [vmem:[%s1 + $0x2b0] sm:$0xff]
    %v169 = vld [vmem:[%s1 + $0x2b8] sm:$0xff]
    %v170 = vld [vmem:[%s1 + $0x2c0] sm:$0xff]
    %v171 = vld [vmem:[%s1 + $0x2c8] sm:$0xff]
    %v172 = vld [vmem:[%s1 + $0x2d0] sm:$0xff]
    %v173 = vld [vmem:[%s1 + $0x2d8] sm:$0xff]
    %v174 = vld [vmem:[%s1 + $0x2e0] sm:$0xff]
    %v175 = vld [vmem:[%s1 + $0x2e8] sm:$0xff]
    %v176 = vld [vmem:[%s1 + $0x2f0] sm:$0xff]
    %v177 = vld [vmem:[%s1 + $0x2f8] sm:$0xff]
    %v178 = vld [vmem:[%s1 + $0x300] sm:$0xff]
    %v179 = vld [vmem:[%s1 + $0x308] sm:$0xff]
    %v180 = vld [vmem:[%s1 + $0x310] sm:$0xff]
    %v181 = vld [vmem:[%s1 + $0x318] sm:$0xff]
    %v182 = vld [vmem:[%s1 + $0x320] sm:$0xff]
    %v183 = vld [vmem:[%s1 + $0x328] sm:$0xff]
    %v184 = vld [vmem:[%s1 + $0x330] sm:$0xff]
    %v185 = vld [vmem:[%s1 + $0x338] sm:$0xff]
    %v186 = vld [vmem:[%s1 + $0x340] sm:$0xff]
    %v187 = vld [vmem:[%s1 + $0x348] sm:$0xff]
    %v188 = vld [vmem:[%s1 + $0x350] sm:$0xff]
    %v189 = vld [vmem:[%s1 + $0x358] sm:$0xff]
    %v190 = vld [vmem:[%s1 + $0x360] sm:$0xff]
    %v191 = vld [vmem:[%s1 + $0x368] sm:$0xff]
    %v192 = vld [vmem:[%s1 + $0x370] sm:$0xff]
    %v193 = vld [vmem:[%s1 + $0x378] sm:$0xff]
    %v194 = vld [vmem:[%s1 + $0x380] sm:$0xff]
    %v195 = vld [vmem:[%s1 + $0x388] sm:$0xff]
    %v196 = vld [vmem:[%s1 + $0x390] sm:$0xff]
    %v197 = vld [vmem:[%s1 + $0x398] sm:$0xff]
    %v198 = vld [vmem:[%s1 + $0x3a0] sm:$0xff]
    %v199 = vld [vmem:[%s1 + $0x3a8] sm:$0xff]
    %v200 = vld [vmem:[%s1 + $0x3b0] sm:$0xff]
    %v201 = vld [vmem:[%s1 + $0x3b8] sm:$0xff]
    %v202 = vld [vmem:[%s1 + $0x3c0] sm:$0xff]
    %v203 = vld [vmem:[%s1 + $0x3c8] sm:$0xff]
    %v204 = vld [vmem:[%s1 + $0x3d0] sm:$0xff]
    %v205 = vld [vmem:[%s1 + $0x3d8] sm:$0xff]
    %v206 = vld [vmem:[%s1 + $0x3e0] sm:$0xff]
    %v207 = vld [vmem:[%s1 + $0x3e8] sm:$0xff]
    %v208 = vld [vmem:[%s1 + $0x3f0] sm:$0xff]
    %v209 = vld [vmem:[%s1 + $0x3f8] sm:$0xff]
    %v210 = vld [vmem:[%s1 + $0x400] sm:$0xff]
    %v211 = vld [vmem:[%s1 + $0x408] sm:$0xff]
    %v212 = vld [vmem:[%s1 + $0x410] sm:$0xff]
    %v213 = vld [vmem:[%s1 + $0x418] sm:$0xff]
    %v214 = vld [vmem:[%s1 + $0x420] sm:$0xff]
    %v215 = vld [vmem:[%s1 + $0x428] sm:$0xff]
    %v216 = vld [vmem:[%s1 + $0x430] sm:$0xff]
    %v217 = vld [vmem:[%s1 + $0x438] sm:$0xff]
    %v218 = vld [vmem:[%s1 + $0x440] sm:$0xff]
    %v219 = vld [vmem:[%s1 + $0x448] sm:$0xff]
    %v220 = vld [vmem:[%s1 + $0x450] sm:$0xff]
    %v221 = vld [vmem:[%s1 + $0x458] sm:$0xff]
    %v222 = vld [vmem:[%s1 + $0x460] sm:$0xff]
    %v223 = vld [vmem:[%s1 + $0x468] sm:$0xff]
    %v224 = vld [vmem:[%s1 + $0x470] sm:$0xff]
    %v225 = vld [vmem:[%s1 + $0x478] sm:$0xff]
    %v226 = vld [vmem:[%s1 + $0x480] sm:$0xff]
    %v227 = vld [vmem:[%s1 + $0x488] sm:$0xff]
    %v228 = vld [vmem:[%s1 + $0x490] sm:$0xff]
    %v229 = vld [vmem:[%s1 + $0x498] sm:$0xff]
    %v230 = vld [vmem:[%s1 + $0x4a0] sm:$0xff]
    %v231 = vld [vmem:[%s1 + $0x4a8] sm:$0xff]
    %v232 = vld [vmem:[%s1 + $0x4b0] sm:$0xff]
    %v233 = vld [vmem:[%s1 + $0x4b8] sm:$0xff]
    %v234 = vld [vmem:[%s1 + $0x4c0] sm:$0xff]
    %v235 = vld [vmem:[%s1 + $0x4c8] sm:$0xff]
    %v236 = vld [vmem:[%s1 + $0x4d0] sm:$0xff]
    %v237 = vld [vmem:[%s1 + $0x4d8] sm:$0xff]
    %v238 = vld [vmem:[%s1 + $0x4e0] sm:$0xff]
    %v239 = vld [vmem:[%s1 + $0x4e8] sm:$0xff]
    %v240 = vld [vmem:[%s1 + $0x4f0] sm:$0xff]
    %v241 = vld [vmem:[%s1 + $0x4f8] sm:$0xff]
    %v242 = vld [vmem:[%s1 + $0x500] sm:$0xff]
    %v243 = vld [vmem:[%s1 + $0x508] sm:$0xff]
    %v244 = vld [vmem:[%s1 + $0x510] sm:$0xff]
    %v245 = vld [vmem:[%s1 + $0x518] sm:$0xff]
    %v246 = vld [vmem:[%s1 + $0x520] sm:$0xff]
    %v247 = vld [vmem:[%s1 + $0x528] sm:$0xff]
    %v248 = vld [vmem:[%s1 + $0x530] sm:$0xff]
    %v249 = vld [vmem:[%s1 + $0x538] sm:$0xff]
    %v250 = vld [vmem:[%s1 + $0x540] sm:$0xff]
    %v251 = vld [vmem:[%s1 + $0x548] sm:$0xff]
    %v252 = vld [vmem:[%s1 + $0x550] sm:$0xff]
    %v253 = vld [vmem:[%s1 + $0x558] sm:$0xff]
    %v254 = vld [vmem:[%s1 + $0x560] sm:$0xff]
    %v255 = vld [vmem:[%s1 + $0x568] sm:$0xff]
    %v256 = vld [vmem:[%s1 + $0x570] sm:$0xff]
    %v257 = vld [vmem:[%s1 + $0x578] sm:$0xff]
    %v258 = vld [vmem:[%s1 + $0x580] sm:$0xff]
    %v259 = vld [vmem:[%s1 + $0x588] sm:$0xff]
    %v260 = vld [vmem:[%s1 + $0x590] sm:$0xff]
    %v261 = vld [vmem:[%s1 + $0x598] sm:$0xff]
    %v262 = vld [vmem:[%s1 + $0x5a0] sm:$0xff]
    %v263 = vld [vmem:[%s1 + $0x5a8] sm:$0xff]
    %v264 = vld [vmem:[%s1 + $0x5b0] sm:$0xff]
    %v265 = vld [vmem:[%s1 + $0x5b8] sm:$0xff]
    %v266 = vld [vmem:[%s1 + $0x5c0] sm:$0xff]
    %v267 = vld [vmem:[%s1 + $0x5c8] sm:$0xff]
    %v268 = vld [vmem:[%s1 + $0x5d0] sm:$0xff]
    %v269 = vld [vmem:[%s1 + $0x5d8] sm:$0xff]
    %v270 = vld [vmem:[%s1 + $0x5e0] sm:$0xff]
    %v271 = vld [vmem:[%s1 + $0x5e8] sm:$0xff]
    %v272 = vld [vmem:[%s1 + $0x5f0] sm:$0xff]
    %v273 = vld [vmem:[%s1 + $0x5f8] sm:$0xff]
    %v274 = vld [vmem:[%s1 + $0x600] sm:$0xff]
    %v275 = vld [vmem:[%s1 + $0x608] sm:$0xff]
    %v276 = vld [vmem:[%s1 + $0x610] sm:$0xff]
    %v277 = vld [vmem:[%s1 + $0x618] sm:$0xff]
    %v278 = vld [vmem:[%s1 + $0x620] sm:$0xff]
    %v279 = vld [vmem:[%s1 + $0x628] sm:$0xff]
    %v280 = vld [vmem:[%s1 + $0x630] sm:$0xff]
    %v281 = vld [vmem:[%s1 + $0x638] sm:$0xff]
    %v282 = vld [vmem:[%s1 + $0x640] sm:$0xff]
    %v283 = vld [vmem:[%s1 + $0x648] sm:$0xff]
    %v284 = vld [vmem:[%s1 + $0x650] sm:$0xff]
    %v285 = vld [vmem:[%s1 + $0x658] sm:$0xff]
    %v286 = vld [vmem:[%s1 + $0x660] sm:$0xff]
    %v287 = vld [vmem:[%s1 + $0x668] sm:$0xff]
    %v288 = vld [vmem:[%s1 + $0x670] sm:$0xff]
    %v289 = vld [vmem:[%s1 + $0x678] sm:$0xff]
    %v290 = vld [vmem:[%s1 + $0x680] sm:$0xff]
    %v291 = vld [vmem:[%s1 + $0x688] sm:$0xff]
    %v292 = vld [vmem:[%s1 + $0x690] sm:$0xff]
    %v293 = vld [vmem:[%s1 + $0x698] sm:$0xff]
    %v294 = vld [vmem:[%s1 + $0x6a0] sm:$0xff]
    %v295 = vld [vmem:[%s1 + $0x6a8] sm:$0xff]
    %v296 = vld [vmem:[%s1 + $0x6b0] sm:$0xff]
    %v297 = vld [vmem:[%s1 + $0x6b8] sm:$0xff]
    %v298 = vld [vmem:[%s1 + $0x6c0] sm:$0xff]
    %v299 = vld [vmem:[%s1 + $0x6c8] sm:$0xff]
    %v300 = vld [vmem:[%s1 + $0x6d0] sm:$0xff]
    %v301 = vld [vmem:[%s1 + $0x6d8] sm:$0xff]
    %v302 = vld [vmem:[%s1 + $0x6e0] sm:$0xff]
    %v303 = vld [vmem:[%s1 + $0x6e8] sm:$0xff]
    %v304 = vld [vmem:[%s1 + $0x6f0] sm:$0xff]
    %v305 = vld [vmem:[%s1 + $0x6f8] sm:$0xff]
    %v306 = vld [vmem:[%s1 + $0x700] sm:$0xff]
    %v307 = vld [vmem:[%s1 + $0x708] sm:$0xff]
    %v308 = vld [vmem:[%s1 + $0x710] sm:$0xff]
    %v309 = vld [vmem:[%s1 + $0x718] sm:$0xff]
    %v310 = vld [vmem:[%s1 + $0x720] sm:$0xff]
    %v311 = vld [vmem:[%s1 + $0x728] sm:$0xff]
    %v312 = vld [vmem:[%s1 + $0x730] sm:$0xff]
    %v313 = vld [vmem:[%s1 + $0x738] sm:$0xff]
    %v314 = vld [vmem:[%s1 + $0x740] sm:$0xff]
    %v315 = vld [vmem:[%s1 + $0x748] sm:$0xff]
    %v316 = vld [vmem:[%s1 + $0x750] sm:$0xff]
    %v317 = vld [vmem:[%s1 + $0x758] sm:$0xff]
    %v318 = vld [vmem:[%s1 + $0x760] sm:$0xff]
    %v319 = vld [vmem:[%s1 + $0x768] sm:$0xff]
    %v320 = vld [vmem:[%s1 + $0x770] sm:$0xff]
    %v321 = vld [vmem:[%s1 + $0x778] sm:$0xff]
    %v322 = vld [vmem:[%s1 + $0x780] sm:$0xff]
    %v323 = vld [vmem:[%s1 + $0x788] sm:$0xff]
    %v324 = vld [vmem:[%s1 + $0x790] sm:$0xff]
    %v325 = vld [vmem:[%s1 + $0x798] sm:$0xff]
    %v326 = vld [vmem:[%s1 + $0x7a0] sm:$0xff]
    %v327 = vld [vmem:[%s1 + $0x7a8] sm:$0xff]
    %v328 = vld [vmem:[%s1 + $0x7b0] sm:$0xff]
    %v329 = vld [vmem:[%s1 + $0x7b8] sm:$0xff]
    %v330 = vld [vmem:[%s1 + $0x7c0] sm:$0xff]
    %v331 = vld [vmem:[%s1 + $0x7c8] sm:$0xff]
    %v332 = vld [vmem:[%s1 + $0x7d0] sm:$0xff]
    %v333 = vld [vmem:[%s1 + $0x7d8] sm:$0xff]
    %v334 = vld [vmem:[%s1 + $0x7e0] sm:$0xff]
    %v335 = vld [vmem:[%s1 + $0x7e8] sm:$0xff]
    %v336 = vld [vmem:[%s1 + $0x7f0] sm:$0xff]
    %v337 = vld [vmem:[%s1 + $0x7f8] sm:$0xff]
    %v338 = vld [vmem:[%s2] sm:$0xf]
    %v340 = vlaneseq
    %v341 = vshrl.u32 %v340, 7
    %v342 = vsub.s32 0, %v341
    %v343 = vrot.slane %v338, %v342
    %v344 = vlaneseq
    %v345 = vshrl.u32 %v344, 7
    %v346 = vsub.s32 1, %v345
    %v347 = vrot.slane %v338, %v346
    %v348 = vlaneseq
    %v349 = vshrl.u32 %v348, 7
    %v350 = vsub.s32 2, %v349
    %v351 = vrot.slane %v338, %v350
    %v352 = vlaneseq
    %v353 = vshrl.u32 %v352, 7
    %v354 = vsub.s32 3, %v353
    %v355 = vrot.slane %v338, %v354
    %v616 = vunpack.c.l.b16 %v82
    %v617 = vunpack.c.h.b16 %v82
    %v618 = vunpack.c.l.b16 %v83
    %v619 = vunpack.c.h.b16 %v83
    %v620 = vunpack.c.l.b16 %v84
    %v621 = vunpack.c.h.b16 %v84
    %v622 = vunpack.c.l.b16 %v85
    %v623 = vunpack.c.h.b16 %v85
    %v624 = vunpack.c.l.b16 %v86
    %v625 = vunpack.c.h.b16 %v86
    %v626 = vunpack.c.l.b16 %v87
    %v627 = vunpack.c.h.b16 %v87
    %v628 = vunpack.c.l.b16 %v88
    %v629 = vunpack.c.h.b16 %v88
    %v630 = vunpack.c.l.b16 %v89
    %v631 = vunpack.c.h.b16 %v89
    %v632 = vunpack.c.l.b16 %v90
    %v633 = vunpack.c.h.b16 %v90
    %v634 = vunpack.c.l.b16 %v91
    %v635 = vunpack.c.h.b16 %v91
    %v636 = vunpack.c.l.b16 %v92
    %v637 = vunpack.c.h.b16 %v92
    %v638 = vunpack.c.l.b16 %v93
    %v639 = vunpack.c.h.b16 %v93
    %v640 = vunpack.c.l.b16 %v94
    %v641 = vunpack.c.h.b16 %v94
    %v642 = vunpack.c.l.b16 %v95
    %v643 = vunpack.c.h.b16 %v95
    %v644 = vunpack.c.l.b16 %v96
    %v645 = vunpack.c.h.b16 %v96
    %v646 = vunpack.c.l.b16 %v97
    %v647 = vunpack.c.h.b16 %v97
    %v648 = vunpack.c.l.b16 %v98
    %v649 = vunpack.c.h.b16 %v98
    %v650 = vunpack.c.l.b16 %v99
    %v651 = vunpack.c.h.b16 %v99
    %v652 = vunpack.c.l.b16 %v100
    %v653 = vunpack.c.h.b16 %v100
    %v654 = vunpack.c.l.b16 %v101
    %v655 = vunpack.c.h.b16 %v101
    %v656 = vunpack.c.l.b16 %v102
    %v657 = vunpack.c.h.b16 %v102
    %v658 = vunpack.c.l.b16 %v103
    %v659 = vunpack.c.h.b16 %v103
    %v660 = vunpack.c.l.b16 %v104
    %v661 = vunpack.c.h.b16 %v104
    %v662 = vunpack.c.l.b16 %v105
    %v663 = vunpack.c.h.b16 %v105
    %v664 = vunpack.c.l.b16 %v106
    %v665 = vunpack.c.h.b16 %v106
    %v666 = vunpack.c.l.b16 %v107
    %v667 = vunpack.c.h.b16 %v107
    %v668 = vunpack.c.l.b16 %v108
    %v669 = vunpack.c.h.b16 %v108
    %v670 = vunpack.c.l.b16 %v109
    %v671 = vunpack.c.h.b16 %v109
    %v672 = vunpack.c.l.b16 %v110
    %v673 = vunpack.c.h.b16 %v110
    %v674 = vunpack.c.l.b16 %v111
    %v675 = vunpack.c.h.b16 %v111
    %v676 = vunpack.c.l.b16 %v112
    %v677 = vunpack.c.h.b16 %v112
    %v678 = vunpack.c.l.b16 %v113
    %v679 = vunpack.c.h.b16 %v113
    %v680 = vunpack.c.l.b16 %v114
    %v681 = vunpack.c.h.b16 %v114
    %v682 = vunpack.c.l.b16 %v115
    %v683 = vunpack.c.h.b16 %v115
    %v684 = vunpack.c.l.b16 %v116
    %v685 = vunpack.c.h.b16 %v116
    %v686 = vunpack.c.l.b16 %v117
    %v687 = vunpack.c.h.b16 %v117
    %v688 = vunpack.c.l.b16 %v118
    %v689 = vunpack.c.h.b16 %v118
    %v690 = vunpack.c.l.b16 %v119
    %v691 = vunpack.c.h.b16 %v119
    %v692 = vunpack.c.l.b16 %v120
    %v693 = vunpack.c.h.b16 %v120
    %v694 = vunpack.c.l.b16 %v121
    %v695 = vunpack.c.h.b16 %v121
    %v696 = vunpack.c.l.b16 %v122
    %v697 = vunpack.c.h.b16 %v122
    %v698 = vunpack.c.l.b16 %v123
    %v699 = vunpack.c.h.b16 %v123
    %v700 = vunpack.c.l.b16 %v124
    %v701 = vunpack.c.h.b16 %v124
    %v702 = vunpack.c.l.b16 %v125
    %v703 = vunpack.c.h.b16 %v125
    %v704 = vunpack.c.l.b16 %v126
    %v705 = vunpack.c.h.b16 %v126
    %v706 = vunpack.c.l.b16 %v127
    %v707 = vunpack.c.h.b16 %v127
    %v708 = vunpack.c.l.b16 %v128
    %v709 = vunpack.c.h.b16 %v128
    %v710 = vunpack.c.l.b16 %v129
    %v711 = vunpack.c.h.b16 %v129
    %v712 = vunpack.c.l.b16 %v130
    %v713 = vunpack.c.h.b16 %v130
    %v714 = vunpack.c.l.b16 %v131
    %v715 = vunpack.c.h.b16 %v131
    %v716 = vunpack.c.l.b16 %v132
    %v717 = vunpack.c.h.b16 %v132
    %v718 = vunpack.c.l.b16 %v133
    %v719 = vunpack.c.h.b16 %v133
    %v720 = vunpack.c.l.b16 %v134
    %v721 = vunpack.c.h.b16 %v134
    %v722 = vunpack.c.l.b16 %v135
    %v723 = vunpack.c.h.b16 %v135
    %v724 = vunpack.c.l.b16 %v136
    %v725 = vunpack.c.h.b16 %v136
    %v726 = vunpack.c.l.b16 %v137
    %v727 = vunpack.c.h.b16 %v137
    %v728 = vunpack.c.l.b16 %v138
    %v729 = vunpack.c.h.b16 %v138
    %v730 = vunpack.c.l.b16 %v139
    %v731 = vunpack.c.h.b16 %v139
    %v732 = vunpack.c.l.b16 %v140
    %v733 = vunpack.c.h.b16 %v140
    %v734 = vunpack.c.l.b16 %v141
    %v735 = vunpack.c.h.b16 %v141
    %v736 = vunpack.c.l.b16 %v142
    %v737 = vunpack.c.h.b16 %v142
    %v738 = vunpack.c.l.b16 %v143
    %v739 = vunpack.c.h.b16 %v143
    %v740 = vunpack.c.l.b16 %v144
    %v741 = vunpack.c.h.b16 %v144
    %v742 = vunpack.c.l.b16 %v145
    %v743 = vunpack.c.h.b16 %v145
    %v744 = vunpack.c.l.b16 %v146
    %v745 = vunpack.c.h.b16 %v146
    %v746 = vunpack.c.l.b16 %v147
    %v747 = vunpack.c.h.b16 %v147
    %v748 = vunpack.c.l.b16 %v148
    %v749 = vunpack.c.h.b16 %v148
    %v750 = vunpack.c.l.b16 %v149
    %v751 = vunpack.c.h.b16 %v149
    %v752 = vunpack.c.l.b16 %v150
    %v753 = vunpack.c.h.b16 %v150
    %v754 = vunpack.c.l.b16 %v151
    %v755 = vunpack.c.h.b16 %v151
    %v756 = vunpack.c.l.b16 %v152
    %v757 = vunpack.c.h.b16 %v152
    %v758 = vunpack.c.l.b16 %v153
    %v759 = vunpack.c.h.b16 %v153
    %v760 = vunpack.c.l.b16 %v154
    %v761 = vunpack.c.h.b16 %v154
    %v762 = vunpack.c.l.b16 %v155
    %v763 = vunpack.c.h.b16 %v155
    %v764 = vunpack.c.l.b16 %v156
    %v765 = vunpack.c.h.b16 %v156
    %v766 = vunpack.c.l.b16 %v157
    %v767 = vunpack.c.h.b16 %v157
    %v768 = vunpack.c.l.b16 %v158
    %v769 = vunpack.c.h.b16 %v158
    %v770 = vunpack.c.l.b16 %v159
    %v771 = vunpack.c.h.b16 %v159
    %v772 = vunpack.c.l.b16 %v160
    %v773 = vunpack.c.h.b16 %v160
    %v774 = vunpack.c.l.b16 %v161
    %v775 = vunpack.c.h.b16 %v161
    %v776 = vunpack.c.l.b16 %v162
    %v777 = vunpack.c.h.b16 %v162
    %v778 = vunpack.c.l.b16 %v163
    %v779 = vunpack.c.h.b16 %v163
    %v780 = vunpack.c.l.b16 %v164
    %v781 = vunpack.c.h.b16 %v164
    %v782 = vunpack.c.l.b16 %v165
    %v783 = vunpack.c.h.b16 %v165
    %v784 = vunpack.c.l.b16 %v166
    %v785 = vunpack.c.h.b16 %v166
    %v786 = vunpack.c.l.b16 %v167
    %v787 = vunpack.c.h.b16 %v167
    %v788 = vunpack.c.l.b16 %v168
    %v789 = vunpack.c.h.b16 %v168
    %v790 = vunpack.c.l.b16 %v169
    %v791 = vunpack.c.h.b16 %v169
    %v792 = vunpack.c.l.b16 %v170
    %v793 = vunpack.c.h.b16 %v170
    %v794 = vunpack.c.l.b16 %v171
    %v795 = vunpack.c.h.b16 %v171
    %v796 = vunpack.c.l.b16 %v172
    %v797 = vunpack.c.h.b16 %v172
    %v798 = vunpack.c.l.b16 %v173
    %v799 = vunpack.c.h.b16 %v173
    %v800 = vunpack.c.l.b16 %v174
    %v801 = vunpack.c.h.b16 %v174
    %v802 = vunpack.c.l.b16 %v175
    %v803 = vunpack.c.h.b16 %v175
    %v804 = vunpack.c.l.b16 %v176
    %v805 = vunpack.c.h.b16 %v176
    %v806 = vunpack.c.l.b16 %v177
    %v807 = vunpack.c.h.b16 %v177
    %v808 = vunpack.c.l.b16 %v178
    %v809 = vunpack.c.h.b16 %v178
    %v810 = vunpack.c.l.b16 %v179
    %v811 = vunpack.c.h.b16 %v179
    %v812 = vunpack.c.l.b16 %v180
    %v813 = vunpack.c.h.b16 %v180
    %v814 = vunpack.c.l.b16 %v181
    %v815 = vunpack.c.h.b16 %v181
    %v816 = vunpack.c.l.b16 %v182
    %v817 = vunpack.c.h.b16 %v182
    %v818 = vunpack.c.l.b16 %v183
    %v819 = vunpack.c.h.b16 %v183
    %v820 = vunpack.c.l.b16 %v184
    %v821 = vunpack.c.h.b16 %v184
    %v822 = vunpack.c.l.b16 %v185
    %v823 = vunpack.c.h.b16 %v185
    %v824 = vunpack.c.l.b16 %v186
    %v825 = vunpack.c.h.b16 %v186
    %v826 = vunpack.c.l.b16 %v187
    %v827 = vunpack.c.h.b16 %v187
    %v828 = vunpack.c.l.b16 %v188
    %v829 = vunpack.c.h.b16 %v188
    %v830 = vunpack.c.l.b16 %v189
    %v831 = vunpack.c.h.b16 %v189
    %v832 = vunpack.c.l.b16 %v190
    %v833 = vunpack.c.h.b16 %v190
    %v834 = vunpack.c.l.b16 %v191
    %v835 = vunpack.c.h.b16 %v191
    %v836 = vunpack.c.l.b16 %v192
    %v837 = vunpack.c.h.b16 %v192
    %v838 = vunpack.c.l.b16 %v193
    %v839 = vunpack.c.h.b16 %v193
    %v840 = vunpack.c.l.b16 %v194
    %v841 = vunpack.c.h.b16 %v194
    %v842 = vunpack.c.l.b16 %v195
    %v843 = vunpack.c.h.b16 %v195
    %v844 = vunpack.c.l.b16 %v196
    %v845 = vunpack.c.h.b16 %v196
    %v846 = vunpack.c.l.b16 %v197
    %v847 = vunpack.c.h.b16 %v197
    %v848 = vunpack.c.l.b16 %v198
    %v849 = vunpack.c.h.b16 %v198
    %v850 = vunpack.c.l.b16 %v199
    %v851 = vunpack.c.h.b16 %v199
    %v852 = vunpack.c.l.b16 %v200
    %v853 = vunpack.c.h.b16 %v200
    %v854 = vunpack.c.l.b16 %v201
    %v855 = vunpack.c.h.b16 %v201
    %v856 = vunpack.c.l.b16 %v202
    %v857 = vunpack.c.h.b16 %v202
    %v858 = vunpack.c.l.b16 %v203
    %v859 = vunpack.c.h.b16 %v203
    %v860 = vunpack.c.l.b16 %v204
    %v861 = vunpack.c.h.b16 %v204
    %v862 = vunpack.c.l.b16 %v205
    %v863 = vunpack.c.h.b16 %v205
    %v864 = vunpack.c.l.b16 %v206
    %v865 = vunpack.c.h.b16 %v206
    %v866 = vunpack.c.l.b16 %v207
    %v867 = vunpack.c.h.b16 %v207
    %v868 = vunpack.c.l.b16 %v208
    %v869 = vunpack.c.h.b16 %v208
    %v870 = vunpack.c.l.b16 %v209
    %v871 = vunpack.c.h.b16 %v209
    %v872 = vunpack.c.l.b16 %v210
    %v873 = vunpack.c.h.b16 %v210
    %v874 = vunpack.c.l.b16 %v211
    %v875 = vunpack.c.h.b16 %v211
    %v876 = vunpack.c.l.b16 %v212
    %v877 = vunpack.c.h.b16 %v212
    %v878 = vunpack.c.l.b16 %v213
    %v879 = vunpack.c.h.b16 %v213
    %v880 = vunpack.c.l.b16 %v214
    %v881 = vunpack.c.h.b16 %v214
    %v882 = vunpack.c.l.b16 %v215
    %v883 = vunpack.c.h.b16 %v215
    %v884 = vunpack.c.l.b16 %v216
    %v885 = vunpack.c.h.b16 %v216
    %v886 = vunpack.c.l.b16 %v217
    %v887 = vunpack.c.h.b16 %v217
    %v888 = vunpack.c.l.b16 %v218
    %v889 = vunpack.c.h.b16 %v218
    %v890 = vunpack.c.l.b16 %v219
    %v891 = vunpack.c.h.b16 %v219
    %v892 = vunpack.c.l.b16 %v220
    %v893 = vunpack.c.h.b16 %v220
    %v894 = vunpack.c.l.b16 %v221
    %v895 = vunpack.c.h.b16 %v221
    %v896 = vunpack.c.l.b16 %v222
    %v897 = vunpack.c.h.b16 %v222
    %v898 = vunpack.c.l.b16 %v223
    %v899 = vunpack.c.h.b16 %v223
    %v900 = vunpack.c.l.b16 %v224
    %v901 = vunpack.c.h.b16 %v224
    %v902 = vunpack.c.l.b16 %v225
    %v903 = vunpack.c.h.b16 %v225
    %v904 = vunpack.c.l.b16 %v226
    %v905 = vunpack.c.h.b16 %v226
    %v906 = vunpack.c.l.b16 %v227
    %v907 = vunpack.c.h.b16 %v227
    %v908 = vunpack.c.l.b16 %v228
    %v909 = vunpack.c.h.b16 %v228
    %v910 = vunpack.c.l.b16 %v229
    %v911 = vunpack.c.h.b16 %v229
    %v912 = vunpack.c.l.b16 %v230
    %v913 = vunpack.c.h.b16 %v230
    %v914 = vunpack.c.l.b16 %v231
    %v915 = vunpack.c.h.b16 %v231
    %v916 = vunpack.c.l.b16 %v232
    %v917 = vunpack.c.h.b16 %v232
    %v918 = vunpack.c.l.b16 %v233
    %v919 = vunpack.c.h.b16 %v233
    %v920 = vunpack.c.l.b16 %v234
    %v921 = vunpack.c.h.b16 %v234
    %v922 = vunpack.c.l.b16 %v235
    %v923 = vunpack.c.h.b16 %v235
    %v924 = vunpack.c.l.b16 %v236
    %v925 = vunpack.c.h.b16 %v236
    %v926 = vunpack.c.l.b16 %v237
    %v927 = vunpack.c.h.b16 %v237
    %v928 = vunpack.c.l.b16 %v238
    %v929 = vunpack.c.h.b16 %v238
    %v930 = vunpack.c.l.b16 %v239
    %v931 = vunpack.c.h.b16 %v239
    %v932 = vunpack.c.l.b16 %v240
    %v933 = vunpack.c.h.b16 %v240
    %v934 = vunpack.c.l.b16 %v241
    %v935 = vunpack.c.h.b16 %v241
    %v936 = vunpack.c.l.b16 %v242
    %v937 = vunpack.c.h.b16 %v242
    %v938 = vunpack.c.l.b16 %v243
    %v939 = vunpack.c.h.b16 %v243
    %v940 = vunpack.c.l.b16 %v244
    %v941 = vunpack.c.h.b16 %v244
    %v942 = vunpack.c.l.b16 %v245
    %v943 = vunpack.c.h.b16 %v245
    %v944 = vunpack.c.l.b16 %v246
    %v945 = vunpack.c.h.b16 %v246
    %v946 = vunpack.c.l.b16 %v247
    %v947 = vunpack.c.h.b16 %v247
    %v948 = vunpack.c.l.b16 %v248
    %v949 = vunpack.c.h.b16 %v248
    %v950 = vunpack.c.l.b16 %v249
    %v951 = vunpack.c.h.b16 %v249
    %v952 = vunpack.c.l.b16 %v250
    %v953 = vunpack.c.h.b16 %v250
    %v954 = vunpack.c.l.b16 %v251
    %v955 = vunpack.c.h.b16 %v251
    %v956 = vunpack.c.l.b16 %v252
    %v957 = vunpack.c.h.b16 %v252
    %v958 = vunpack.c.l.b16 %v253
    %v959 = vunpack.c.h.b16 %v253
    %v960 = vunpack.c.l.b16 %v254
    %v961 = vunpack.c.h.b16 %v254
    %v962 = vunpack.c.l.b16 %v255
    %v963 = vunpack.c.h.b16 %v255
    %v964 = vunpack.c.l.b16 %v256
    %v965 = vunpack.c.h.b16 %v256
    %v966 = vunpack.c.l.b16 %v257
    %v967 = vunpack.c.h.b16 %v257
    %v968 = vunpack.c.l.b16 %v258
    %v969 = vunpack.c.h.b16 %v258
    %v970 = vunpack.c.l.b16 %v259
    %v971 = vunpack.c.h.b16 %v259
    %v972 = vunpack.c.l.b16 %v260
    %v973 = vunpack.c.h.b16 %v260
    %v974 = vunpack.c.l.b16 %v261
    %v975 = vunpack.c.h.b16 %v261
    %v976 = vunpack.c.l.b16 %v262
    %v977 = vunpack.c.h.b16 %v262
    %v978 = vunpack.c.l.b16 %v263
    %v979 = vunpack.c.h.b16 %v263
    %v980 = vunpack.c.l.b16 %v264
    %v981 = vunpack.c.h.b16 %v264
    %v982 = vunpack.c.l.b16 %v265
    %v983 = vunpack.c.h.b16 %v265
    %v984 = vunpack.c.l.b16 %v266
    %v985 = vunpack.c.h.b16 %v266
    %v986 = vunpack.c.l.b16 %v267
    %v987 = vunpack.c.h.b16 %v267
    %v988 = vunpack.c.l.b16 %v268
    %v989 = vunpack.c.h.b16 %v268
    %v990 = vunpack.c.l.b16 %v269
    %v991 = vunpack.c.h.b16 %v269
    %v992 = vunpack.c.l.b16 %v270
    %v993 = vunpack.c.h.b16 %v270
    %v994 = vunpack.c.l.b16 %v271
    %v995 = vunpack.c.h.b16 %v271
    %v996 = vunpack.c.l.b16 %v272
    %v997 = vunpack.c.h.b16 %v272
    %v998 = vunpack.c.l.b16 %v273
    %v999 = vunpack.c.h.b16 %v273
    %v1000 = vunpack.c.l.b16 %v274
    %v1001 = vunpack.c.h.b16 %v274
    %v1002 = vunpack.c.l.b16 %v275
    %v1003 = vunpack.c.h.b16 %v275
    %v1004 = vunpack.c.l.b16 %v276
    %v1005 = vunpack.c.h.b16 %v276
    %v1006 = vunpack.c.l.b16 %v277
    %v1007 = vunpack.c.h.b16 %v277
    %v1008 = vunpack.c.l.b16 %v278
    %v1009 = vunpack.c.h.b16 %v278
    %v1010 = vunpack.c.l.b16 %v279
    %v1011 = vunpack.c.h.b16 %v279
    %v1012 = vunpack.c.l.b16 %v280
    %v1013 = vunpack.c.h.b16 %v280
    %v1014 = vunpack.c.l.b16 %v281
    %v1015 = vunpack.c.h.b16 %v281
    %v1016 = vunpack.c.l.b16 %v282
    %v1017 = vunpack.c.h.b16 %v282
    %v1018 = vunpack.c.l.b16 %v283
    %v1019 = vunpack.c.h.b16 %v283
    %v1020 = vunpack.c.l.b16 %v284
    %v1021 = vunpack.c.h.b16 %v284
    %v1022 = vunpack.c.l.b16 %v285
    %v1023 = vunpack.c.h.b16 %v285
    %v1024 = vunpack.c.l.b16 %v286
    %v1025 = vunpack.c.h.b16 %v286
    %v1026 = vunpack.c.l.b16 %v287
    %v1027 = vunpack.c.h.b16 %v287
    %v1028 = vunpack.c.l.b16 %v288
    %v1029 = vunpack.c.h.b16 %v288
    %v1030 = vunpack.c.l.b16 %v289
    %v1031 = vunpack.c.h.b16 %v289
    %v1032 = vunpack.c.l.b16 %v290
    %v1033 = vunpack.c.h.b16 %v290
    %v1034 = vunpack.c.l.b16 %v291
    %v1035 = vunpack.c.h.b16 %v291
    %v1036 = vunpack.c.l.b16 %v292
    %v1037 = vunpack.c.h.b16 %v292
    %v1038 = vunpack.c.l.b16 %v293
    %v1039 = vunpack.c.h.b16 %v293
    %v1040 = vunpack.c.l.b16 %v294
    %v1041 = vunpack.c.h.b16 %v294
    %v1042 = vunpack.c.l.b16 %v295
    %v1043 = vunpack.c.h.b16 %v295
    %v1044 = vunpack.c.l.b16 %v296
    %v1045 = vunpack.c.h.b16 %v296
    %v1046 = vunpack.c.l.b16 %v297
    %v1047 = vunpack.c.h.b16 %v297
    %v1048 = vunpack.c.l.b16 %v298
    %v1049 = vunpack.c.h.b16 %v298
    %v1050 = vunpack.c.l.b16 %v299
    %v1051 = vunpack.c.h.b16 %v299
    %v1052 = vunpack.c.l.b16 %v300
    %v1053 = vunpack.c.h.b16 %v300
    %v1054 = vunpack.c.l.b16 %v301
    %v1055 = vunpack.c.h.b16 %v301
    %v1056 = vunpack.c.l.b16 %v302
    %v1057 = vunpack.c.h.b16 %v302
    %v1058 = vunpack.c.l.b16 %v303
    %v1059 = vunpack.c.h.b16 %v303
    %v1060 = vunpack.c.l.b16 %v304
    %v1061 = vunpack.c.h.b16 %v304
    %v1062 = vunpack.c.l.b16 %v305
    %v1063 = vunpack.c.h.b16 %v305
    %v1064 = vunpack.c.l.b16 %v306
    %v1065 = vunpack.c.h.b16 %v306
    %v1066 = vunpack.c.l.b16 %v307
    %v1067 = vunpack.c.h.b16 %v307
    %v1068 = vunpack.c.l.b16 %v308
    %v1069 = vunpack.c.h.b16 %v308
    %v1070 = vunpack.c.l.b16 %v309
    %v1071 = vunpack.c.h.b16 %v309
    %v1072 = vunpack.c.l.b16 %v310
    %v1073 = vunpack.c.h.b16 %v310
    %v1074 = vunpack.c.l.b16 %v311
    %v1075 = vunpack.c.h.b16 %v311
    %v1076 = vunpack.c.l.b16 %v312
    %v1077 = vunpack.c.h.b16 %v312
    %v1078 = vunpack.c.l.b16 %v313
    %v1079 = vunpack.c.h.b16 %v313
    %v1080 = vunpack.c.l.b16 %v314
    %v1081 = vunpack.c.h.b16 %v314
    %v1082 = vunpack.c.l.b16 %v315
    %v1083 = vunpack.c.h.b16 %v315
    %v1084 = vunpack.c.l.b16 %v316
    %v1085 = vunpack.c.h.b16 %v316
    %v1086 = vunpack.c.l.b16 %v317
    %v1087 = vunpack.c.h.b16 %v317
    %v1088 = vunpack.c.l.b16 %v318
    %v1089 = vunpack.c.h.b16 %v318
    %v1090 = vunpack.c.l.b16 %v319
    %v1091 = vunpack.c.h.b16 %v319
    %v1092 = vunpack.c.l.b16 %v320
    %v1093 = vunpack.c.h.b16 %v320
    %v1094 = vunpack.c.l.b16 %v321
    %v1095 = vunpack.c.h.b16 %v321
    %v1096 = vunpack.c.l.b16 %v322
    %v1097 = vunpack.c.h.b16 %v322
    %v1098 = vunpack.c.l.b16 %v323
    %v1099 = vunpack.c.h.b16 %v323
    %v1100 = vunpack.c.l.b16 %v324
    %v1101 = vunpack.c.h.b16 %v324
    %v1102 = vunpack.c.l.b16 %v325
    %v1103 = vunpack.c.h.b16 %v325
    %v1104 = vunpack.c.l.b16 %v326
    %v1105 = vunpack.c.h.b16 %v326
    %v1106 = vunpack.c.l.b16 %v327
    %v1107 = vunpack.c.h.b16 %v327
    %v1108 = vunpack.c.l.b16 %v328
    %v1109 = vunpack.c.h.b16 %v328
    %v1110 = vunpack.c.l.b16 %v329
    %v1111 = vunpack.c.h.b16 %v329
    %v1112 = vunpack.c.l.b16 %v330
    %v1113 = vunpack.c.h.b16 %v330
    %v1114 = vunpack.c.l.b16 %v331
    %v1115 = vunpack.c.h.b16 %v331
    %v1116 = vunpack.c.l.b16 %v332
    %v1117 = vunpack.c.h.b16 %v332
    %v1118 = vunpack.c.l.b16 %v333
    %v1119 = vunpack.c.h.b16 %v333
    %v1120 = vunpack.c.l.b16 %v334
    %v1121 = vunpack.c.h.b16 %v334
    %v1122 = vunpack.c.l.b16 %v335
    %v1123 = vunpack.c.h.b16 %v335
    %v1124 = vunpack.c.l.b16 %v336
    %v1125 = vunpack.c.h.b16 %v336
    %v1126 = vunpack.c.l.b16 %v337
    %v1127 = vunpack.c.h.b16 %v337
    %v1128 = vpack.c.b16 %v620, %v616
    %v1129 = vpack.c.b16 %v621, %v617
    %v1130 = vpack.c.b16 %v622, %v618
    %v1131 = vpack.c.b16 %v623, %v619
    %v1132 = vpack.c.b16 %v628, %v624
    %v1133 = vpack.c.b16 %v629, %v625
    %v1134 = vpack.c.b16 %v630, %v626
    %v1135 = vpack.c.b16 %v631, %v627
    %v1136 = vpack.c.b16 %v636, %v632
    %v1137 = vpack.c.b16 %v637, %v633
    %v1138 = vpack.c.b16 %v638, %v634
    %v1139 = vpack.c.b16 %v639, %v635
    %v1140 = vpack.c.b16 %v644, %v640
    %v1141 = vpack.c.b16 %v645, %v641
    %v1142 = vpack.c.b16 %v646, %v642
    %v1143 = vpack.c.b16 %v647, %v643
    %v1144 = vpack.c.b16 %v652, %v648
    %v1145 = vpack.c.b16 %v653, %v649
    %v1146 = vpack.c.b16 %v654, %v650
    %v1147 = vpack.c.b16 %v655, %v651
    %v1148 = vpack.c.b16 %v660, %v656
    %v1149 = vpack.c.b16 %v661, %v657
    %v1150 = vpack.c.b16 %v662, %v658
    %v1151 = vpack.c.b16 %v663, %v659
    %v1152 = vpack.c.b16 %v668, %v664
    %v1153 = vpack.c.b16 %v669, %v665
    %v1154 = vpack.c.b16 %v670, %v666
    %v1155 = vpack.c.b16 %v671, %v667
    %v1156 = vpack.c.b16 %v676, %v672
    %v1157 = vpack.c.b16 %v677, %v673
    %v1158 = vpack.c.b16 %v678, %v674
    %v1159 = vpack.c.b16 %v679, %v675
    %v1160 = vpack.c.b16 %v684, %v680
    %v1161 = vpack.c.b16 %v685, %v681
    %v1162 = vpack.c.b16 %v686, %v682
    %v1163 = vpack.c.b16 %v687, %v683
    %v1164 = vpack.c.b16 %v692, %v688
    %v1165 = vpack.c.b16 %v693, %v689
    %v1166 = vpack.c.b16 %v694, %v690
    %v1167 = vpack.c.b16 %v695, %v691
    %v1168 = vpack.c.b16 %v700, %v696
    %v1169 = vpack.c.b16 %v701, %v697
    %v1170 = vpack.c.b16 %v702, %v698
    %v1171 = vpack.c.b16 %v703, %v699
    %v1172 = vpack.c.b16 %v708, %v704
    %v1173 = vpack.c.b16 %v709, %v705
    %v1174 = vpack.c.b16 %v710, %v706
    %v1175 = vpack.c.b16 %v711, %v707
    %v1176 = vpack.c.b16 %v716, %v712
    %v1177 = vpack.c.b16 %v717, %v713
    %v1178 = vpack.c.b16 %v718, %v714
    %v1179 = vpack.c.b16 %v719, %v715
    %v1180 = vpack.c.b16 %v724, %v720
    %v1181 = vpack.c.b16 %v725, %v721
    %v1182 = vpack.c.b16 %v726, %v722
    %v1183 = vpack.c.b16 %v727, %v723
    %v1184 = vpack.c.b16 %v732, %v728
    %v1185 = vpack.c.b16 %v733, %v729
    %v1186 = vpack.c.b16 %v734, %v730
    %v1187 = vpack.c.b16 %v735, %v731
    %v1188 = vpack.c.b16 %v740, %v736
    %v1189 = vpack.c.b16 %v741, %v737
    %v1190 = vpack.c.b16 %v742, %v738
    %v1191 = vpack.c.b16 %v743, %v739
    %v1192 = vpack.c.b16 %v748, %v744
    %v1193 = vpack.c.b16 %v749, %v745
    %v1194 = vpack.c.b16 %v750, %v746
    %v1195 = vpack.c.b16 %v751, %v747
    %v1196 = vpack.c.b16 %v756, %v752
    %v1197 = vpack.c.b16 %v757, %v753
    %v1198 = vpack.c.b16 %v758, %v754
    %v1199 = vpack.c.b16 %v759, %v755
    %v1200 = vpack.c.b16 %v764, %v760
    %v1201 = vpack.c.b16 %v765, %v761
    %v1202 = vpack.c.b16 %v766, %v762
    %v1203 = vpack.c.b16 %v767, %v763
    %v1204 = vpack.c.b16 %v772, %v768
    %v1205 = vpack.c.b16 %v773, %v769
    %v1206 = vpack.c.b16 %v774, %v770
    %v1207 = vpack.c.b16 %v775, %v771
    %v1208 = vpack.c.b16 %v780, %v776
    %v1209 = vpack.c.b16 %v781, %v777
    %v1210 = vpack.c.b16 %v782, %v778
    %v1211 = vpack.c.b16 %v783, %v779
    %v1212 = vpack.c.b16 %v788, %v784
    %v1213 = vpack.c.b16 %v789, %v785
    %v1214 = vpack.c.b16 %v790, %v786
    %v1215 = vpack.c.b16 %v791, %v787
    %v1216 = vpack.c.b16 %v796, %v792
    %v1217 = vpack.c.b16 %v797, %v793
    %v1218 = vpack.c.b16 %v798, %v794
    %v1219 = vpack.c.b16 %v799, %v795
    %v1220 = vpack.c.b16 %v804, %v800
    %v1221 = vpack.c.b16 %v805, %v801
    %v1222 = vpack.c.b16 %v806, %v802
    %v1223 = vpack.c.b16 %v807, %v803
    %v1224 = vpack.c.b16 %v812, %v808
    %v1225 = vpack.c.b16 %v813, %v809
    %v1226 = vpack.c.b16 %v814, %v810
    %v1227 = vpack.c.b16 %v815, %v811
    %v1228 = vpack.c.b16 %v820, %v816
    %v1229 = vpack.c.b16 %v821, %v817
    %v1230 = vpack.c.b16 %v822, %v818
    %v1231 = vpack.c.b16 %v823, %v819
    %v1232 = vpack.c.b16 %v828, %v824
    %v1233 = vpack.c.b16 %v829, %v825
    %v1234 = vpack.c.b16 %v830, %v826
    %v1235 = vpack.c.b16 %v831, %v827
    %v1236 = vpack.c.b16 %v836, %v832
    %v1237 = vpack.c.b16 %v837, %v833
    %v1238 = vpack.c.b16 %v838, %v834
    %v1239 = vpack.c.b16 %v839, %v835
    %v1240 = vpack.c.b16 %v844, %v840
    %v1241 = vpack.c.b16 %v845, %v841
    %v1242 = vpack.c.b16 %v846, %v842
    %v1243 = vpack.c.b16 %v847, %v843
    %v1244 = vpack.c.b16 %v852, %v848
    %v1245 = vpack.c.b16 %v853, %v849
    %v1246 = vpack.c.b16 %v854, %v850
    %v1247 = vpack.c.b16 %v855, %v851
    %v1248 = vpack.c.b16 %v860, %v856
    %v1249 = vpack.c.b16 %v861, %v857
    %v1250 = vpack.c.b16 %v862, %v858
    %v1251 = vpack.c.b16 %v863, %v859
    %v1252 = vpack.c.b16 %v868, %v864
    %v1253 = vpack.c.b16 %v869, %v865
    %v1254 = vpack.c.b16 %v870, %v866
    %v1255 = vpack.c.b16 %v871, %v867
    %v1256 = vpack.c.b16 %v876, %v872
    %v1257 = vpack.c.b16 %v877, %v873
    %v1258 = vpack.c.b16 %v878, %v874
    %v1259 = vpack.c.b16 %v879, %v875
    %v1260 = vpack.c.b16 %v884, %v880
    %v1261 = vpack.c.b16 %v885, %v881
    %v1262 = vpack.c.b16 %v886, %v882
    %v1263 = vpack.c.b16 %v887, %v883
    %v1264 = vpack.c.b16 %v892, %v888
    %v1265 = vpack.c.b16 %v893, %v889
    %v1266 = vpack.c.b16 %v894, %v890
    %v1267 = vpack.c.b16 %v895, %v891
    %v1268 = vpack.c.b16 %v900, %v896
    %v1269 = vpack.c.b16 %v901, %v897
    %v1270 = vpack.c.b16 %v902, %v898
    %v1271 = vpack.c.b16 %v903, %v899
    %v1272 = vpack.c.b16 %v908, %v904
    %v1273 = vpack.c.b16 %v909, %v905
    %v1274 = vpack.c.b16 %v910, %v906
    %v1275 = vpack.c.b16 %v911, %v907
    %v1276 = vpack.c.b16 %v916, %v912
    %v1277 = vpack.c.b16 %v917, %v913
    %v1278 = vpack.c.b16 %v918, %v914
    %v1279 = vpack.c.b16 %v919, %v915
    %v1280 = vpack.c.b16 %v924, %v920
    %v1281 = vpack.c.b16 %v925, %v921
    %v1282 = vpack.c.b16 %v926, %v922
    %v1283 = vpack.c.b16 %v927, %v923
    %v1284 = vpack.c.b16 %v932, %v928
    %v1285 = vpack.c.b16 %v933, %v929
    %v1286 = vpack.c.b16 %v934, %v930
    %v1287 = vpack.c.b16 %v935, %v931
    %v1288 = vpack.c.b16 %v940, %v936
    %v1289 = vpack.c.b16 %v941, %v937
    %v1290 = vpack.c.b16 %v942, %v938
    %v1291 = vpack.c.b16 %v943, %v939
    %v1292 = vpack.c.b16 %v948, %v944
    %v1293 = vpack.c.b16 %v949, %v945
    %v1294 = vpack.c.b16 %v950, %v946
    %v1295 = vpack.c.b16 %v951, %v947
    %v1296 = vpack.c.b16 %v956, %v952
    %v1297 = vpack.c.b16 %v957, %v953
    %v1298 = vpack.c.b16 %v958, %v954
    %v1299 = vpack.c.b16 %v959, %v955
    %v1300 = vpack.c.b16 %v964, %v960
    %v1301 = vpack.c.b16 %v965, %v961
    %v1302 = vpack.c.b16 %v966, %v962
    %v1303 = vpack.c.b16 %v967, %v963
    %v1304 = vpack.c.b16 %v972, %v968
    %v1305 = vpack.c.b16 %v973, %v969
    %v1306 = vpack.c.b16 %v974, %v970
    %v1307 = vpack.c.b16 %v975, %v971
    %v1308 = vpack.c.b16 %v980, %v976
    %v1309 = vpack.c.b16 %v981, %v977
    %v1310 = vpack.c.b16 %v982, %v978
    %v1311 = vpack.c.b16 %v983, %v979
    %v1312 = vpack.c.b16 %v988, %v984
    %v1313 = vpack.c.b16 %v989, %v985
    %v1314 = vpack.c.b16 %v990, %v986
    %v1315 = vpack.c.b16 %v991, %v987
    %v1316 = vpack.c.b16 %v996, %v992
    %v1317 = vpack.c.b16 %v997, %v993
    %v1318 = vpack.c.b16 %v998, %v994
    %v1319 = vpack.c.b16 %v999, %v995
    %v1320 = vpack.c.b16 %v1004, %v1000
    %v1321 = vpack.c.b16 %v1005, %v1001
    %v1322 = vpack.c.b16 %v1006, %v1002
    %v1323 = vpack.c.b16 %v1007, %v1003
    %v1324 = vpack.c.b16 %v1012, %v1008
    %v1325 = vpack.c.b16 %v1013, %v1009
    %v1326 = vpack.c.b16 %v1014, %v1010
    %v1327 = vpack.c.b16 %v1015, %v1011
    %v1328 = vpack.c.b16 %v1020, %v1016
    %v1329 = vpack.c.b16 %v1021, %v1017
    %v1330 = vpack.c.b16 %v1022, %v1018
    %v1331 = vpack.c.b16 %v1023, %v1019
    %v1332 = vpack.c.b16 %v1028, %v1024
    %v1333 = vpack.c.b16 %v1029, %v1025
    %v1334 = vpack.c.b16 %v1030, %v1026
    %v1335 = vpack.c.b16 %v1031, %v1027
    %v1336 = vpack.c.b16 %v1036, %v1032
    %v1337 = vpack.c.b16 %v1037, %v1033
    %v1338 = vpack.c.b16 %v1038, %v1034
    %v1339 = vpack.c.b16 %v1039, %v1035
    %v1340 = vpack.c.b16 %v1044, %v1040
    %v1341 = vpack.c.b16 %v1045, %v1041
    %v1342 = vpack.c.b16 %v1046, %v1042
    %v1343 = vpack.c.b16 %v1047, %v1043
    %v1344 = vpack.c.b16 %v1052, %v1048
    %v1345 = vpack.c.b16 %v1053, %v1049
    %v1346 = vpack.c.b16 %v1054, %v1050
    %v1347 = vpack.c.b16 %v1055, %v1051
    %v1348 = vpack.c.b16 %v1060, %v1056
    %v1349 = vpack.c.b16 %v1061, %v1057
    %v1350 = vpack.c.b16 %v1062, %v1058
    %v1351 = vpack.c.b16 %v1063, %v1059
    %v1352 = vpack.c.b16 %v1068, %v1064
    %v1353 = vpack.c.b16 %v1069, %v1065
    %v1354 = vpack.c.b16 %v1070, %v1066
    %v1355 = vpack.c.b16 %v1071, %v1067
    %v1356 = vpack.c.b16 %v1076, %v1072
    %v1357 = vpack.c.b16 %v1077, %v1073
    %v1358 = vpack.c.b16 %v1078, %v1074
    %v1359 = vpack.c.b16 %v1079, %v1075
    %v1360 = vpack.c.b16 %v1084, %v1080
    %v1361 = vpack.c.b16 %v1085, %v1081
    %v1362 = vpack.c.b16 %v1086, %v1082
    %v1363 = vpack.c.b16 %v1087, %v1083
    %v1364 = vpack.c.b16 %v1092, %v1088
    %v1365 = vpack.c.b16 %v1093, %v1089
    %v1366 = vpack.c.b16 %v1094, %v1090
    %v1367 = vpack.c.b16 %v1095, %v1091
    %v1368 = vpack.c.b16 %v1100, %v1096
    %v1369 = vpack.c.b16 %v1101, %v1097
    %v1370 = vpack.c.b16 %v1102, %v1098
    %v1371 = vpack.c.b16 %v1103, %v1099
    %v1372 = vpack.c.b16 %v1108, %v1104
    %v1373 = vpack.c.b16 %v1109, %v1105
    %v1374 = vpack.c.b16 %v1110, %v1106
    %v1375 = vpack.c.b16 %v1111, %v1107
    %v1376 = vpack.c.b16 %v1116, %v1112
    %v1377 = vpack.c.b16 %v1117, %v1113
    %v1378 = vpack.c.b16 %v1118, %v1114
    %v1379 = vpack.c.b16 %v1119, %v1115
    %v1380 = vpack.c.b16 %v1124, %v1120
    %v1381 = vpack.c.b16 %v1125, %v1121
    %v1382 = vpack.c.b16 %v1126, %v1122
    %v1383 = vpack.c.b16 %v1127, %v1123
    %1640 = vmatprep.subr.bf16.mxu0 %v1129
    %1641 = vmatpush1.bf16.msra.mxu0 %v1128
    %1642 = vmatprep.subr.bf16.mxu0 %v1133
    %1643 = vmatpush1.bf16.msra.mxu0 %v1132
    %1644 = vmatprep.subr.bf16.mxu0 %v1137
    %1645 = vmatpush1.bf16.msra.mxu0 %v1136
    %1646 = vmatprep.subr.bf16.mxu0 %v1141
    %1647 = vmatpush1.bf16.msra.mxu0 %v1140
    %1648 = vmatprep.subr.bf16.mxu0 %v1145
    %1649 = vmatpush1.bf16.msra.mxu0 %v1144
    %1650 = vmatprep.subr.bf16.mxu0 %v1149
    %1651 = vmatpush1.bf16.msra.mxu0 %v1148
    %1652 = vmatprep.subr.bf16.mxu0 %v1153
    %1653 = vmatpush1.bf16.msra.mxu0 %v1152
    %1654 = vmatprep.subr.bf16.mxu0 %v1157
    %1655 = vmatpush1.bf16.msra.mxu0 %v1156
    %1656 = vmatprep.subr.bf16.mxu0 %v1161
    %1657 = vmatpush1.bf16.msra.mxu0 %v1160
    %1658 = vmatprep.subr.bf16.mxu0 %v1165
    %1659 = vmatpush1.bf16.msra.mxu0 %v1164
    %1660 = vmatprep.subr.bf16.mxu0 %v1169
    %1661 = vmatpush1.bf16.msra.mxu0 %v1168
    %1662 = vmatprep.subr.bf16.mxu0 %v1173
    %1663 = vmatpush1.bf16.msra.mxu0 %v1172
    %1664 = vmatprep.subr.bf16.mxu0 %v1177
    %1665 = vmatpush1.bf16.msra.mxu0 %v1176
    %1666 = vmatprep.subr.bf16.mxu0 %v1181
    %1667 = vmatpush1.bf16.msra.mxu0 %v1180
    %1668 = vmatprep.subr.bf16.mxu0 %v1185
    %1669 = vmatpush1.bf16.msra.mxu0 %v1184
    %1670 = vmatprep.subr.bf16.mxu0 %v1189
    %1671 = vmatpush1.bf16.msra.mxu0 %v1188
    %1672 = vmatprep.mubr.bf16.mxu0 %v75
    %1673 = vmatmul.mubr.bf16.gmra.mrb[0].mxu0 %v74
    %v1674 = vpop.f32.mrb[0].mxu0
    %v1675 = vadd.f32 %v343, %v1674
    %v1676 = vpop.f32.mrb[0].mxu0
    %v1677 = vadd.f32 %v347, %v1676
    %v1678 = vpop.f32.mrb[0].mxu0
    %v1679 = vpop.f32.mrb[0].mxu0
    %1680 = vdwg.mxu0
    %1681 = vmatprep.subr.bf16.mxu0 %v1193
    %1682 = vmatpush1.bf16.msra.mxu0 %v1192
    %1683 = vmatprep.subr.bf16.mxu0 %v1197
    %1684 = vmatpush1.bf16.msra.mxu0 %v1196
    %1685 = vmatprep.subr.bf16.mxu0 %v1201
    %1686 = vmatpush1.bf16.msra.mxu0 %v1200
    %1687 = vmatprep.subr.bf16.mxu0 %v1205
    %1688 = vmatpush1.bf16.msra.mxu0 %v1204
    %1689 = vmatprep.subr.bf16.mxu0 %v1209
    %1690 = vmatpush1.bf16.msra.mxu0 %v1208
    %1691 = vmatprep.subr.bf16.mxu0 %v1213
    %1692 = vmatpush1.bf16.msra.mxu0 %v1212
    %1693 = vmatprep.subr.bf16.mxu0 %v1217
    %1694 = vmatpush1.bf16.msra.mxu0 %v1216
    %1695 = vmatprep.subr.bf16.mxu0 %v1221
    %1696 = vmatpush1.bf16.msra.mxu0 %v1220
    %1697 = vmatprep.subr.bf16.mxu0 %v1225
    %1698 = vmatpush1.bf16.msra.mxu0 %v1224
    %1699 = vmatprep.subr.bf16.mxu0 %v1229
    %1700 = vmatpush1.bf16.msra.mxu0 %v1228
    %1701 = vmatprep.subr.bf16.mxu0 %v1233
    %1702 = vmatpush1.bf16.msra.mxu0 %v1232
    %1703 = vmatprep.subr.bf16.mxu0 %v1237
    %1704 = vmatpush1.bf16.msra.mxu0 %v1236
    %1705 = vmatprep.subr.bf16.mxu0 %v1241
    %1706 = vmatpush1.bf16.msra.mxu0 %v1240
    %1707 = vmatprep.subr.bf16.mxu0 %v1245
    %1708 = vmatpush1.bf16.msra.mxu0 %v1244
    %1709 = vmatprep.subr.bf16.mxu0 %v1249
    %1710 = vmatpush1.bf16.msra.mxu0 %v1248
    %1711 = vmatprep.subr.bf16.mxu0 %v1253
    %1712 = vmatpush1.bf16.msra.mxu0 %v1252
    %1713 = vmatprep.mubr.bf16.mxu0 %v77
    %1714 = vmatmul.mubr.bf16.gmra.mrb[0].mxu0 %v76
    %v1715 = vpop.f32.mrb[0].mxu0
    %v1716 = vadd.f32 %v1675, %v1715
    %v1717 = vpop.f32.mrb[0].mxu0
    %v1718 = vadd.f32 %v1677, %v1717
    %v1719 = vpop.f32.mrb[0].mxu0
    %v1720 = vpop.f32.mrb[0].mxu0
    %1721 = vdwg.mxu0
    %1722 = vmatprep.subr.bf16.mxu0 %v1257
    %1723 = vmatpush1.bf16.msra.mxu0 %v1256
    %1724 = vmatprep.subr.bf16.mxu0 %v1261
    %1725 = vmatpush1.bf16.msra.mxu0 %v1260
    %1726 = vmatprep.subr.bf16.mxu0 %v1265
    %1727 = vmatpush1.bf16.msra.mxu0 %v1264
    %1728 = vmatprep.subr.bf16.mxu0 %v1269
    %1729 = vmatpush1.bf16.msra.mxu0 %v1268
    %1730 = vmatprep.subr.bf16.mxu0 %v1273
    %1731 = vmatpush1.bf16.msra.mxu0 %v1272
    %1732 = vmatprep.subr.bf16.mxu0 %v1277
    %1733 = vmatpush1.bf16.msra.mxu0 %v1276
    %1734 = vmatprep.subr.bf16.mxu0 %v1281
    %1735 = vmatpush1.bf16.msra.mxu0 %v1280
    %1736 = vmatprep.subr.bf16.mxu0 %v1285
    %1737 = vmatpush1.bf16.msra.mxu0 %v1284
    %1738 = vmatprep.subr.bf16.mxu0 %v1289
    %1739 = vmatpush1.bf16.msra.mxu0 %v1288
    %1740 = vmatprep.subr.bf16.mxu0 %v1293
    %1741 = vmatpush1.bf16.msra.mxu0 %v1292
    %1742 = vmatprep.subr.bf16.mxu0 %v1297
    %1743 = vmatpush1.bf16.msra.mxu0 %v1296
    %1744 = vmatprep.subr.bf16.mxu0 %v1301
    %1745 = vmatpush1.bf16.msra.mxu0 %v1300
    %1746 = vmatprep.subr.bf16.mxu0 %v1305
    %1747 = vmatpush1.bf16.msra.mxu0 %v1304
    %1748 = vmatprep.subr.bf16.mxu0 %v1309
    %1749 = vmatpush1.bf16.msra.mxu0 %v1308
    %1750 = vmatprep.subr.bf16.mxu0 %v1313
    %1751 = vmatpush1.bf16.msra.mxu0 %v1312
    %1752 = vmatprep.subr.bf16.mxu0 %v1317
    %1753 = vmatpush1.bf16.msra.mxu0 %v1316
    %1754 = vmatprep.mubr.bf16.mxu0 %v79
    %1755 = vmatmul.mubr.bf16.gmra.mrb[0].mxu0 %v78
    %v1756 = vpop.f32.mrb[0].mxu0
    %v1757 = vadd.f32 %v1716, %v1756
    %v1758 = vpop.f32.mrb[0].mxu0
    %v1759 = vadd.f32 %v1718, %v1758
    %v1760 = vpop.f32.mrb[0].mxu0
    %v1761 = vpop.f32.mrb[0].mxu0
    %1762 = vdwg.mxu0
    %1763 = vmatprep.subr.bf16.mxu0 %v1321
    %1764 = vmatpush1.bf16.msra.mxu0 %v1320
    %1765 = vmatprep.subr.bf16.mxu0 %v1325
    %1766 = vmatpush1.bf16.msra.mxu0 %v1324
    %1767 = vmatprep.subr.bf16.mxu0 %v1329
    %1768 = vmatpush1.bf16.msra.mxu0 %v1328
    %1769 = vmatprep.subr.bf16.mxu0 %v1333
    %1770 = vmatpush1.bf16.msra.mxu0 %v1332
    %1771 = vmatprep.subr.bf16.mxu0 %v1337
    %1772 = vmatpush1.bf16.msra.mxu0 %v1336
    %1773 = vmatprep.subr.bf16.mxu0 %v1341
    %1774 = vmatpush1.bf16.msra.mxu0 %v1340
    %1775 = vmatprep.subr.bf16.mxu0 %v1345
    %1776 = vmatpush1.bf16.msra.mxu0 %v1344
    %1777 = vmatprep.subr.bf16.mxu0 %v1349
    %1778 = vmatpush1.bf16.msra.mxu0 %v1348
    %1779 = vmatprep.subr.bf16.mxu0 %v1353
    %1780 = vmatpush1.bf16.msra.mxu0 %v1352
    %1781 = vmatprep.subr.bf16.mxu0 %v1357
    %1782 = vmatpush1.bf16.msra.mxu0 %v1356
    %1783 = vmatprep.subr.bf16.mxu0 %v1361
    %1784 = vmatpush1.bf16.msra.mxu0 %v1360
    %1785 = vmatprep.subr.bf16.mxu0 %v1365
    %1786 = vmatpush1.bf16.msra.mxu0 %v1364
    %1787 = vmatprep.subr.bf16.mxu0 %v1369
    %1788 = vmatpush1.bf16.msra.mxu0 %v1368
    %1789 = vmatprep.subr.bf16.mxu0 %v1373
    %1790 = vmatpush1.bf16.msra.mxu0 %v1372
    %1791 = vmatprep.subr.bf16.mxu0 %v1377
    %1792 = vmatpush1.bf16.msra.mxu0 %v1376
    %1793 = vmatprep.subr.bf16.mxu0 %v1381
    %1794 = vmatpush1.bf16.msra.mxu0 %v1380
    %1795 = vmatprep.mubr.bf16.mxu0 %v81
    %1796 = vmatmul.mubr.bf16.gmra.mrb[0].mxu0 %v80
    %v1797 = vpop.f32.mrb[0].mxu0
    %v1798 = vadd.f32 %v1757, %v1797
    %v1799 = vpop.f32.mrb[0].mxu0
    %v1800 = vadd.f32 %v1759, %v1799
    %v1801 = vpop.f32.mrb[0].mxu0
    %v1802 = vpop.f32.mrb[0].mxu0
    %1803 = vdwg.mxu0
    %1804 = vmatprep.subr.bf16.mxu0 %v1131
    %1805 = vmatpush1.bf16.msra.mxu0 %v1130
    %1806 = vmatprep.subr.bf16.mxu0 %v1135
    %1807 = vmatpush1.bf16.msra.mxu0 %v1134
    %1808 = vmatprep.subr.bf16.mxu0 %v1139
    %1809 = vmatpush1.bf16.msra.mxu0 %v1138
    %1810 = vmatprep.subr.bf16.mxu0 %v1143
    %1811 = vmatpush1.bf16.msra.mxu0 %v1142
    %1812 = vmatprep.subr.bf16.mxu0 %v1147
    %1813 = vmatpush1.bf16.msra.mxu0 %v1146
    %1814 = vmatprep.subr.bf16.mxu0 %v1151
    %1815 = vmatpush1.bf16.msra.mxu0 %v1150
    %1816 = vmatprep.subr.bf16.mxu0 %v1155
    %1817 = vmatpush1.bf16.msra.mxu0 %v1154
    %1818 = vmatprep.subr.bf16.mxu0 %v1159
    %1819 = vmatpush1.bf16.msra.mxu0 %v1158
    %1820 = vmatprep.subr.bf16.mxu0 %v1163
    %1821 = vmatpush1.bf16.msra.mxu0 %v1162
    %1822 = vmatprep.subr.bf16.mxu0 %v1167
    %1823 = vmatpush1.bf16.msra.mxu0 %v1166
    %1824 = vmatprep.subr.bf16.mxu0 %v1171
    %1825 = vmatpush1.bf16.msra.mxu0 %v1170
    %1826 = vmatprep.subr.bf16.mxu0 %v1175
    %1827 = vmatpush1.bf16.msra.mxu0 %v1174
    %1828 = vmatprep.subr.bf16.mxu0 %v1179
    %1829 = vmatpush1.bf16.msra.mxu0 %v1178
    %1830 = vmatprep.subr.bf16.mxu0 %v1183
    %1831 = vmatpush1.bf16.msra.mxu0 %v1182
    %1832 = vmatprep.subr.bf16.mxu0 %v1187
    %1833 = vmatpush1.bf16.msra.mxu0 %v1186
    %1834 = vmatprep.subr.bf16.mxu0 %v1191
    %1835 = vmatpush1.bf16.msra.mxu0 %v1190
    %1836 = vmatprep.mubr.bf16.mxu0 %v75
    %1837 = vmatmul.mubr.bf16.gmra.mrb[0].mxu0 %v74
    %v1838 = vpop.f32.mrb[0].mxu0
    %v1839 = vadd.f32 %v351, %v1838
    %v1840 = vpop.f32.mrb[0].mxu0
    %v1841 = vadd.f32 %v355, %v1840
    %v1842 = vpop.f32.mrb[0].mxu0
    %v1843 = vpop.f32.mrb[0].mxu0
    %1844 = vdwg.mxu0
    %1845 = vmatprep.subr.bf16.mxu0 %v1195
    %1846 = vmatpush1.bf16.msra.mxu0 %v1194
    %1847 = vmatprep.subr.bf16.mxu0 %v1199
    %1848 = vmatpush1.bf16.msra.mxu0 %v1198
    %1849 = vmatprep.subr.bf16.mxu0 %v1203
    %1850 = vmatpush1.bf16.msra.mxu0 %v1202
    %1851 = vmatprep.subr.bf16.mxu0 %v1207
    %1852 = vmatpush1.bf16.msra.mxu0 %v1206
    %1853 = vmatprep.subr.bf16.mxu0 %v1211
    %1854 = vmatpush1.bf16.msra.mxu0 %v1210
    %1855 = vmatprep.subr.bf16.mxu0 %v1215
    %1856 = vmatpush1.bf16.msra.mxu0 %v1214
    %1857 = vmatprep.subr.bf16.mxu0 %v1219
    %1858 = vmatpush1.bf16.msra.mxu0 %v1218
    %1859 = vmatprep.subr.bf16.mxu0 %v1223
    %1860 = vmatpush1.bf16.msra.mxu0 %v1222
    %1861 = vmatprep.subr.bf16.mxu0 %v1227
    %1862 = vmatpush1.bf16.msra.mxu0 %v1226
    %1863 = vmatprep.subr.bf16.mxu0 %v1231
    %1864 = vmatpush1.bf16.msra.mxu0 %v1230
    %1865 = vmatprep.subr.bf16.mxu0 %v1235
    %1866 = vmatpush1.bf16.msra.mxu0 %v1234
    %1867 = vmatprep.subr.bf16.mxu0 %v1239
    %1868 = vmatpush1.bf16.msra.mxu0 %v1238
    %1869 = vmatprep.subr.bf16.mxu0 %v1243
    %1870 = vmatpush1.bf16.msra.mxu0 %v1242
    %1871 = vmatprep.subr.bf16.mxu0 %v1247
    %1872 = vmatpush1.bf16.msra.mxu0 %v1246
    %1873 = vmatprep.subr.bf16.mxu0 %v1251
    %1874 = vmatpush1.bf16.msra.mxu0 %v1250
    %1875 = vmatprep.subr.bf16.mxu0 %v1255
    %1876 = vmatpush1.bf16.msra.mxu0 %v1254
    %1877 = vmatprep.mubr.bf16.mxu0 %v77
    %1878 = vmatmul.mubr.bf16.gmra.mrb[0].mxu0 %v76
    %v1879 = vpop.f32.mrb[0].mxu0
    %v1880 = vadd.f32 %v1839, %v1879
    %v1881 = vpop.f32.mrb[0].mxu0
    %v1882 = vadd.f32 %v1841, %v1881
    %v1883 = vpop.f32.mrb[0].mxu0
    %v1884 = vpop.f32.mrb[0].mxu0
    %1885 = vdwg.mxu0
    %1886 = vmatprep.subr.bf16.mxu0 %v1259
    %1887 = vmatpush1.bf16.msra.mxu0 %v1258
    %1888 = vmatprep.subr.bf16.mxu0 %v1263
    %1889 = vmatpush1.bf16.msra.mxu0 %v1262
    %1890 = vmatprep.subr.bf16.mxu0 %v1267
    %1891 = vmatpush1.bf16.msra.mxu0 %v1266
    %1892 = vmatprep.subr.bf16.mxu0 %v1271
    %1893 = vmatpush1.bf16.msra.mxu0 %v1270
    %1894 = vmatprep.subr.bf16.mxu0 %v1275
    %1895 = vmatpush1.bf16.msra.mxu0 %v1274
    %1896 = vmatprep.subr.bf16.mxu0 %v1279
    %1897 = vmatpush1.bf16.msra.mxu0 %v1278
    %1898 = vmatprep.subr.bf16.mxu0 %v1283
    %1899 = vmatpush1.bf16.msra.mxu0 %v1282
    %1900 = vmatprep.subr.bf16.mxu0 %v1287
    %1901 = vmatpush1.bf16.msra.mxu0 %v1286
    %1902 = vmatprep.subr.bf16.mxu0 %v1291
    %1903 = vmatpush1.bf16.msra.mxu0 %v1290
    %1904 = vmatprep.subr.bf16.mxu0 %v1295
    %1905 = vmatpush1.bf16.msra.mxu0 %v1294
    %1906 = vmatprep.subr.bf16.mxu0 %v1299
    %1907 = vmatpush1.bf16.msra.mxu0 %v1298
    %1908 = vmatprep.subr.bf16.mxu0 %v1303
    %1909 = vmatpush1.bf16.msra.mxu0 %v1302
    %1910 = vmatprep.subr.bf16.mxu0 %v1307
    %1911 = vmatpush1.bf16.msra.mxu0 %v1306
    %1912 = vmatprep.subr.bf16.mxu0 %v1311
    %1913 = vmatpush1.bf16.msra.mxu0 %v1310
    %1914 = vmatprep.subr.bf16.mxu0 %v1315
    %1915 = vmatpush1.bf16.msra.mxu0 %v1314
    %1916 = vmatprep.subr.bf16.mxu0 %v1319
    %1917 = vmatpush1.bf16.msra.mxu0 %v1318
    %1918 = vmatprep.mubr.bf16.mxu0 %v79
    %1919 = vmatmul.mubr.bf16.gmra.mrb[0].mxu0 %v78
    %v1920 = vpop.f32.mrb[0].mxu0
    %v1921 = vadd.f32 %v1880, %v1920
    %v1922 = vpop.f32.mrb[0].mxu0
    %v1923 = vadd.f32 %v1882, %v1922
    %v1924 = vpop.f32.mrb[0].mxu0
    %v1925 = vpop.f32.mrb[0].mxu0
    %1926 = vdwg.mxu0
    %1927 = vmatprep.subr.bf16.mxu0 %v1323
    %1928 = vmatpush1.bf16.msra.mxu0 %v1322
    %1929 = vmatprep.subr.bf16.mxu0 %v1327
    %1930 = vmatpush1.bf16.msra.mxu0 %v1326
    %1931 = vmatprep.subr.bf16.mxu0 %v1331
    %1932 = vmatpush1.bf16.msra.mxu0 %v1330
    %1933 = vmatprep.subr.bf16.mxu0 %v1335
    %1934 = vmatpush1.bf16.msra.mxu0 %v1334
    %1935 = vmatprep.subr.bf16.mxu0 %v1339
    %1936 = vmatpush1.bf16.msra.mxu0 %v1338
    %1937 = vmatprep.subr.bf16.mxu0 %v1343
    %1938 = vmatpush1.bf16.msra.mxu0 %v1342
    %1939 = vmatprep.subr.bf16.mxu0 %v1347
    %1940 = vmatpush1.bf16.msra.mxu0 %v1346
    %1941 = vmatprep.subr.bf16.mxu0 %v1351
    %1942 = vmatpush1.bf16.msra.mxu0 %v1350
    %1943 = vmatprep.subr.bf16.mxu0 %v1355
    %1944 = vmatpush1.bf16.msra.mxu0 %v1354
    %1945 = vmatprep.subr.bf16.mxu0 %v1359
    %1946 = vmatpush1.bf16.msra.mxu0 %v1358
    %1947 = vmatprep.subr.bf16.mxu0 %v1363
    %1948 = vmatpush1.bf16.msra.mxu0 %v1362
    %1949 = vmatprep.subr.bf16.mxu0 %v1367
    %1950 = vmatpush1.bf16.msra.mxu0 %v1366
    %1951 = vmatprep.subr.bf16.mxu0 %v1371
    %1952 = vmatpush1.bf16.msra.mxu0 %v1370
    %1953 = vmatprep.subr.bf16.mxu0 %v1375
    %1954 = vmatpush1.bf16.msra.mxu0 %v1374
    %1955 = vmatprep.subr.bf16.mxu0 %v1379
    %1956 = vmatpush1.bf16.msra.mxu0 %v1378
    %1957 = vmatprep.subr.bf16.mxu0 %v1383
    %1958 = vmatpush1.bf16.msra.mxu0 %v1382
    %1959 = vmatprep.mubr.bf16.mxu0 %v81
    %1960 = vmatmul.mubr.bf16.gmra.mrb[0].mxu0 %v80
    %v1961 = vpop.f32.mrb[0].mxu0
    %v1962 = vadd.f32 %v1921, %v1961
    %v1963 = vpop.f32.mrb[0].mxu0
    %v1964 = vadd.f32 %v1923, %v1963
    %v1965 = vpop.f32.mrb[0].mxu0
    %v1966 = vpop.f32.mrb[0].mxu0
    %1967 = vdwg.mxu0
    %v1968 = vmax.f32 %v1798, 0.0
    %v1969 = vmax.f32 %v1800, 0.0
    %v1970 = vmax.f32 %v1962, 0.0
    %v1971 = vmax.f32 %v1964, 0.0
    %v1972 = vpack.c.bf16 %v1968, %v1968
    %v1973 = vpack.c.bf16 %v1969, %v1969
    %v1974 = vpack.c.bf16 %v1970, %v1970
    %v1975 = vpack.c.bf16 %v1971, %v1971
    %v1976 = vld [vmem:[%s3] sm:$0xff]
    %v1977 = vld [vmem:[%s3 + $0x8] sm:$0xff]
    %v1978 = vld [vmem:[%s3 + $0x10] sm:$0xff]
    %v1979 = vld [vmem:[%s3 + $0x18] sm:$0xff]
    %v1980 = vld [vmem:[%s3 + $0x20] sm:$0xff]
    %v1981 = vld [vmem:[%s3 + $0x28] sm:$0xff]
    %v1982 = vld [vmem:[%s3 + $0x30] sm:$0xff]
    %v1983 = vld [vmem:[%s3 + $0x38] sm:$0xff]
    %v1984 = vld [vmem:[%s3 + $0x40] sm:$0xff]
    %v1985 = vld [vmem:[%s3 + $0x48] sm:$0xff]
    %v1986 = vld [vmem:[%s3 + $0x50] sm:$0xff]
    %v1987 = vld [vmem:[%s3 + $0x58] sm:$0xff]
    %v1988 = vld [vmem:[%s3 + $0x60] sm:$0xff]
    %v1989 = vld [vmem:[%s3 + $0x68] sm:$0xff]
    %v1990 = vld [vmem:[%s3 + $0x70] sm:$0xff]
    %v1991 = vld [vmem:[%s3 + $0x78] sm:$0xff]
    %v1992 = vld [vmem:[%s3 + $0x80] sm:$0xff]
    %v1993 = vld [vmem:[%s3 + $0x88] sm:$0xff]
    %v1994 = vld [vmem:[%s3 + $0x90] sm:$0xff]
    %v1995 = vld [vmem:[%s3 + $0x98] sm:$0xff]
    %v1996 = vld [vmem:[%s3 + $0xa0] sm:$0xff]
    %v1997 = vld [vmem:[%s3 + $0xa8] sm:$0xff]
    %v1998 = vld [vmem:[%s3 + $0xb0] sm:$0xff]
    %v1999 = vld [vmem:[%s3 + $0xb8] sm:$0xff]
    %v2000 = vld [vmem:[%s3 + $0xc0] sm:$0xff]
    %v2001 = vld [vmem:[%s3 + $0xc8] sm:$0xff]
    %v2002 = vld [vmem:[%s3 + $0xd0] sm:$0xff]
    %v2003 = vld [vmem:[%s3 + $0xd8] sm:$0xff]
    %v2004 = vld [vmem:[%s3 + $0xe0] sm:$0xff]
    %v2005 = vld [vmem:[%s3 + $0xe8] sm:$0xff]
    %v2006 = vld [vmem:[%s3 + $0xf0] sm:$0xff]
    %v2007 = vld [vmem:[%s3 + $0xf8] sm:$0xff]
    %v2008 = vld [vmem:[%s3 + $0x100] sm:$0xff]
    %v2009 = vld [vmem:[%s3 + $0x108] sm:$0xff]
    %v2010 = vld [vmem:[%s3 + $0x110] sm:$0xff]
    %v2011 = vld [vmem:[%s3 + $0x118] sm:$0xff]
    %v2012 = vld [vmem:[%s3 + $0x120] sm:$0xff]
    %v2013 = vld [vmem:[%s3 + $0x128] sm:$0xff]
    %v2014 = vld [vmem:[%s3 + $0x130] sm:$0xff]
    %v2015 = vld [vmem:[%s3 + $0x138] sm:$0xff]
    %v2016 = vld [vmem:[%s3 + $0x140] sm:$0xff]
    %v2017 = vld [vmem:[%s3 + $0x148] sm:$0xff]
    %v2018 = vld [vmem:[%s3 + $0x150] sm:$0xff]
    %v2019 = vld [vmem:[%s3 + $0x158] sm:$0xff]
    %v2020 = vld [vmem:[%s3 + $0x160] sm:$0xff]
    %v2021 = vld [vmem:[%s3 + $0x168] sm:$0xff]
    %v2022 = vld [vmem:[%s3 + $0x170] sm:$0xff]
    %v2023 = vld [vmem:[%s3 + $0x178] sm:$0xff]
    %v2024 = vld [vmem:[%s3 + $0x180] sm:$0xff]
    %v2025 = vld [vmem:[%s3 + $0x188] sm:$0xff]
    %v2026 = vld [vmem:[%s3 + $0x190] sm:$0xff]
    %v2027 = vld [vmem:[%s3 + $0x198] sm:$0xff]
    %v2028 = vld [vmem:[%s3 + $0x1a0] sm:$0xff]
    %v2029 = vld [vmem:[%s3 + $0x1a8] sm:$0xff]
    %v2030 = vld [vmem:[%s3 + $0x1b0] sm:$0xff]
    %v2031 = vld [vmem:[%s3 + $0x1b8] sm:$0xff]
    %v2032 = vld [vmem:[%s3 + $0x1c0] sm:$0xff]
    %v2033 = vld [vmem:[%s3 + $0x1c8] sm:$0xff]
    %v2034 = vld [vmem:[%s3 + $0x1d0] sm:$0xff]
    %v2035 = vld [vmem:[%s3 + $0x1d8] sm:$0xff]
    %v2036 = vld [vmem:[%s3 + $0x1e0] sm:$0xff]
    %v2037 = vld [vmem:[%s3 + $0x1e8] sm:$0xff]
    %v2038 = vld [vmem:[%s3 + $0x1f0] sm:$0xff]
    %v2039 = vld [vmem:[%s3 + $0x1f8] sm:$0xff]
    %v2040 = vld [vmem:[%s4] sm:$0x3]
    %v2042 = vlaneseq
    %v2043 = vshrl.u32 %v2042, 7
    %v2044 = vsub.s32 0, %v2043
    %v2045 = vrot.slane %v2040, %v2044
    %v2046 = vlaneseq
    %v2047 = vshrl.u32 %v2046, 7
    %v2048 = vsub.s32 1, %v2047
    %v2049 = vrot.slane %v2040, %v2048
    %v2116 = vunpack.c.l.b16 %v1976
    %v2117 = vunpack.c.h.b16 %v1976
    %v2118 = vunpack.c.l.b16 %v1977
    %v2119 = vunpack.c.h.b16 %v1977
    %v2120 = vunpack.c.l.b16 %v1978
    %v2121 = vunpack.c.h.b16 %v1978
    %v2122 = vunpack.c.l.b16 %v1979
    %v2123 = vunpack.c.h.b16 %v1979
    %v2124 = vunpack.c.l.b16 %v1980
    %v2125 = vunpack.c.h.b16 %v1980
    %v2126 = vunpack.c.l.b16 %v1981
    %v2127 = vunpack.c.h.b16 %v1981
    %v2128 = vunpack.c.l.b16 %v1982
    %v2129 = vunpack.c.h.b16 %v1982
    %v2130 = vunpack.c.l.b16 %v1983
    %v2131 = vunpack.c.h.b16 %v1983
    %v2132 = vunpack.c.l.b16 %v1984
    %v2133 = vunpack.c.h.b16 %v1984
    %v2134 = vunpack.c.l.b16 %v1985
    %v2135 = vunpack.c.h.b16 %v1985
    %v2136 = vunpack.c.l.b16 %v1986
    %v2137 = vunpack.c.h.b16 %v1986
    %v2138 = vunpack.c.l.b16 %v1987
    %v2139 = vunpack.c.h.b16 %v1987
    %v2140 = vunpack.c.l.b16 %v1988
    %v2141 = vunpack.c.h.b16 %v1988
    %v2142 = vunpack.c.l.b16 %v1989
    %v2143 = vunpack.c.h.b16 %v1989
    %v2144 = vunpack.c.l.b16 %v1990
    %v2145 = vunpack.c.h.b16 %v1990
    %v2146 = vunpack.c.l.b16 %v1991
    %v2147 = vunpack.c.h.b16 %v1991
    %v2148 = vunpack.c.l.b16 %v1992
    %v2149 = vunpack.c.h.b16 %v1992
    %v2150 = vunpack.c.l.b16 %v1993
    %v2151 = vunpack.c.h.b16 %v1993
    %v2152 = vunpack.c.l.b16 %v1994
    %v2153 = vunpack.c.h.b16 %v1994
    %v2154 = vunpack.c.l.b16 %v1995
    %v2155 = vunpack.c.h.b16 %v1995
    %v2156 = vunpack.c.l.b16 %v1996
    %v2157 = vunpack.c.h.b16 %v1996
    %v2158 = vunpack.c.l.b16 %v1997
    %v2159 = vunpack.c.h.b16 %v1997
    %v2160 = vunpack.c.l.b16 %v1998
    %v2161 = vunpack.c.h.b16 %v1998
    %v2162 = vunpack.c.l.b16 %v1999
    %v2163 = vunpack.c.h.b16 %v1999
    %v2164 = vunpack.c.l.b16 %v2000
    %v2165 = vunpack.c.h.b16 %v2000
    %v2166 = vunpack.c.l.b16 %v2001
    %v2167 = vunpack.c.h.b16 %v2001
    %v2168 = vunpack.c.l.b16 %v2002
    %v2169 = vunpack.c.h.b16 %v2002
    %v2170 = vunpack.c.l.b16 %v2003
    %v2171 = vunpack.c.h.b16 %v2003
    %v2172 = vunpack.c.l.b16 %v2004
    %v2173 = vunpack.c.h.b16 %v2004
    %v2174 = vunpack.c.l.b16 %v2005
    %v2175 = vunpack.c.h.b16 %v2005
    %v2176 = vunpack.c.l.b16 %v2006
    %v2177 = vunpack.c.h.b16 %v2006
    %v2178 = vunpack.c.l.b16 %v2007
    %v2179 = vunpack.c.h.b16 %v2007
    %v2180 = vunpack.c.l.b16 %v2008
    %v2181 = vunpack.c.h.b16 %v2008
    %v2182 = vunpack.c.l.b16 %v2009
    %v2183 = vunpack.c.h.b16 %v2009
    %v2184 = vunpack.c.l.b16 %v2010
    %v2185 = vunpack.c.h.b16 %v2010
    %v2186 = vunpack.c.l.b16 %v2011
    %v2187 = vunpack.c.h.b16 %v2011
    %v2188 = vunpack.c.l.b16 %v2012
    %v2189 = vunpack.c.h.b16 %v2012
    %v2190 = vunpack.c.l.b16 %v2013
    %v2191 = vunpack.c.h.b16 %v2013
    %v2192 = vunpack.c.l.b16 %v2014
    %v2193 = vunpack.c.h.b16 %v2014
    %v2194 = vunpack.c.l.b16 %v2015
    %v2195 = vunpack.c.h.b16 %v2015
    %v2196 = vunpack.c.l.b16 %v2016
    %v2197 = vunpack.c.h.b16 %v2016
    %v2198 = vunpack.c.l.b16 %v2017
    %v2199 = vunpack.c.h.b16 %v2017
    %v2200 = vunpack.c.l.b16 %v2018
    %v2201 = vunpack.c.h.b16 %v2018
    %v2202 = vunpack.c.l.b16 %v2019
    %v2203 = vunpack.c.h.b16 %v2019
    %v2204 = vunpack.c.l.b16 %v2020
    %v2205 = vunpack.c.h.b16 %v2020
    %v2206 = vunpack.c.l.b16 %v2021
    %v2207 = vunpack.c.h.b16 %v2021
    %v2208 = vunpack.c.l.b16 %v2022
    %v2209 = vunpack.c.h.b16 %v2022
    %v2210 = vunpack.c.l.b16 %v2023
    %v2211 = vunpack.c.h.b16 %v2023
    %v2212 = vunpack.c.l.b16 %v2024
    %v2213 = vunpack.c.h.b16 %v2024
    %v2214 = vunpack.c.l.b16 %v2025
    %v2215 = vunpack.c.h.b16 %v2025
    %v2216 = vunpack.c.l.b16 %v2026
    %v2217 = vunpack.c.h.b16 %v2026
    %v2218 = vunpack.c.l.b16 %v2027
    %v2219 = vunpack.c.h.b16 %v2027
    %v2220 = vunpack.c.l.b16 %v2028
    %v2221 = vunpack.c.h.b16 %v2028
    %v2222 = vunpack.c.l.b16 %v2029
    %v2223 = vunpack.c.h.b16 %v2029
    %v2224 = vunpack.c.l.b16 %v2030
    %v2225 = vunpack.c.h.b16 %v2030
    %v2226 = vunpack.c.l.b16 %v2031
    %v2227 = vunpack.c.h.b16 %v2031
    %v2228 = vunpack.c.l.b16 %v2032
    %v2229 = vunpack.c.h.b16 %v2032
    %v2230 = vunpack.c.l.b16 %v2033
    %v2231 = vunpack.c.h.b16 %v2033
    %v2232 = vunpack.c.l.b16 %v2034
    %v2233 = vunpack.c.h.b16 %v2034
    %v2234 = vunpack.c.l.b16 %v2035
    %v2235 = vunpack.c.h.b16 %v2035
    %v2236 = vunpack.c.l.b16 %v2036
    %v2237 = vunpack.c.h.b16 %v2036
    %v2238 = vunpack.c.l.b16 %v2037
    %v2239 = vunpack.c.h.b16 %v2037
    %v2240 = vunpack.c.l.b16 %v2038
    %v2241 = vunpack.c.h.b16 %v2038
    %v2242 = vunpack.c.l.b16 %v2039
    %v2243 = vunpack.c.h.b16 %v2039
    %v2244 = vpack.c.b16 %v2118, %v2116
    %v2245 = vpack.c.b16 %v2119, %v2117
    %v2246 = vpack.c.b16 %v2122, %v2120
    %v2247 = vpack.c.b16 %v2123, %v2121
    %v2248 = vpack.c.b16 %v2126, %v2124
    %v2249 = vpack.c.b16 %v2127, %v2125
    %v2250 = vpack.c.b16 %v2130, %v2128
    %v2251 = vpack.c.b16 %v2131, %v2129
    %v2252 = vpack.c.b16 %v2134, %v2132
    %v2253 = vpack.c.b16 %v2135, %v2133
    %v2254 = vpack.c.b16 %v2138, %v2136
    %v2255 = vpack.c.b16 %v2139, %v2137
    %v2256 = vpack.c.b16 %v2142, %v2140
    %v2257 = vpack.c.b16 %v2143, %v2141
    %v2258 = vpack.c.b16 %v2146, %v2144
    %v2259 = vpack.c.b16 %v2147, %v2145
    %v2260 = vpack.c.b16 %v2150, %v2148
    %v2261 = vpack.c.b16 %v2151, %v2149
    %v2262 = vpack.c.b16 %v2154, %v2152
    %v2263 = vpack.c.b16 %v2155, %v2153
    %v2264 = vpack.c.b16 %v2158, %v2156
    %v2265 = vpack.c.b16 %v2159, %v2157
    %v2266 = vpack.c.b16 %v2162, %v2160
    %v2267 = vpack.c.b16 %v2163, %v2161
    %v2268 = vpack.c.b16 %v2166, %v2164
    %v2269 = vpack.c.b16 %v2167, %v2165
    %v2270 = vpack.c.b16 %v2170, %v2168
    %v2271 = vpack.c.b16 %v2171, %v2169
    %v2272 = vpack.c.b16 %v2174, %v2172
    %v2273 = vpack.c.b16 %v2175, %v2173
    %v2274 = vpack.c.b16 %v2178, %v2176
    %v2275 = vpack.c.b16 %v2179, %v2177
    %v2276 = vpack.c.b16 %v2182, %v2180
    %v2277 = vpack.c.b16 %v2183, %v2181
    %v2278 = vpack.c.b16 %v2186, %v2184
    %v2279 = vpack.c.b16 %v2187, %v2185
    %v2280 = vpack.c.b16 %v2190, %v2188
    %v2281 = vpack.c.b16 %v2191, %v2189
    %v2282 = vpack.c.b16 %v2194, %v2192
    %v2283 = vpack.c.b16 %v2195, %v2193
    %v2284 = vpack.c.b16 %v2198, %v2196
    %v2285 = vpack.c.b16 %v2199, %v2197
    %v2286 = vpack.c.b16 %v2202, %v2200
    %v2287 = vpack.c.b16 %v2203, %v2201
    %v2288 = vpack.c.b16 %v2206, %v2204
    %v2289 = vpack.c.b16 %v2207, %v2205
    %v2290 = vpack.c.b16 %v2210, %v2208
    %v2291 = vpack.c.b16 %v2211, %v2209
    %v2292 = vpack.c.b16 %v2214, %v2212
    %v2293 = vpack.c.b16 %v2215, %v2213
    %v2294 = vpack.c.b16 %v2218, %v2216
    %v2295 = vpack.c.b16 %v2219, %v2217
    %v2296 = vpack.c.b16 %v2222, %v2220
    %v2297 = vpack.c.b16 %v2223, %v2221
    %v2298 = vpack.c.b16 %v2226, %v2224
    %v2299 = vpack.c.b16 %v2227, %v2225
    %v2300 = vpack.c.b16 %v2230, %v2228
    %v2301 = vpack.c.b16 %v2231, %v2229
    %v2302 = vpack.c.b16 %v2234, %v2232
    %v2303 = vpack.c.b16 %v2235, %v2233
    %v2304 = vpack.c.b16 %v2238, %v2236
    %v2305 = vpack.c.b16 %v2239, %v2237
    %v2306 = vpack.c.b16 %v2242, %v2240
    %v2307 = vpack.c.b16 %v2243, %v2241
    %2372 = vmatprep.subr.bf16.mxu0 %v2245
    %2373 = vmatpush1.bf16.msra.mxu0 %v2244
    %2374 = vmatprep.subr.bf16.mxu0 %v2247
    %2375 = vmatpush1.bf16.msra.mxu0 %v2246
    %2376 = vmatprep.subr.bf16.mxu0 %v2249
    %2377 = vmatpush1.bf16.msra.mxu0 %v2248
    %2378 = vmatprep.subr.bf16.mxu0 %v2251
    %2379 = vmatpush1.bf16.msra.mxu0 %v2250
    %2380 = vmatprep.subr.bf16.mxu0 %v2253
    %2381 = vmatpush1.bf16.msra.mxu0 %v2252
    %2382 = vmatprep.subr.bf16.mxu0 %v2255
    %2383 = vmatpush1.bf16.msra.mxu0 %v2254
    %2384 = vmatprep.subr.bf16.mxu0 %v2257
    %2385 = vmatpush1.bf16.msra.mxu0 %v2256
    %2386 = vmatprep.subr.bf16.mxu0 %v2259
    %2387 = vmatpush1.bf16.msra.mxu0 %v2258
    %2388 = vmatprep.subr.bf16.mxu0 %v2261
    %2389 = vmatpush1.bf16.msra.mxu0 %v2260
    %2390 = vmatprep.subr.bf16.mxu0 %v2263
    %2391 = vmatpush1.bf16.msra.mxu0 %v2262
    %2392 = vmatprep.subr.bf16.mxu0 %v2265
    %2393 = vmatpush1.bf16.msra.mxu0 %v2264
    %2394 = vmatprep.subr.bf16.mxu0 %v2267
    %2395 = vmatpush1.bf16.msra.mxu0 %v2266
    %2396 = vmatprep.subr.bf16.mxu0 %v2269
    %2397 = vmatpush1.bf16.msra.mxu0 %v2268
    %2398 = vmatprep.subr.bf16.mxu0 %v2271
    %2399 = vmatpush1.bf16.msra.mxu0 %v2270
    %2400 = vmatprep.subr.bf16.mxu0 %v2273
    %2401 = vmatpush1.bf16.msra.mxu0 %v2272
    %2402 = vmatprep.subr.bf16.mxu0 %v2275
    %2403 = vmatpush1.bf16.msra.mxu0 %v2274
    %2404 = vmatprep.mubr.bf16.mxu0 %v1973
    %2405 = vmatmul.mubr.bf16.gmra.mrb[0].mxu0 %v1972
    %v2406 = vpop.f32.mrb[0].mxu0
    %v2407 = vadd.f32 %v2045, %v2406
    %v2408 = vpop.f32.mrb[0].mxu0
    %v2409 = vadd.f32 %v2049, %v2408
    %v2410 = vpop.f32.mrb[0].mxu0
    %v2411 = vpop.f32.mrb[0].mxu0
    %2412 = vdwg.mxu0
    %2413 = vmatprep.subr.bf16.mxu0 %v2277
    %2414 = vmatpush1.bf16.msra.mxu0 %v2276
    %2415 = vmatprep.subr.bf16.mxu0 %v2279
    %2416 = vmatpush1.bf16.msra.mxu0 %v2278
    %2417 = vmatprep.subr.bf16.mxu0 %v2281
    %2418 = vmatpush1.bf16.msra.mxu0 %v2280
    %2419 = vmatprep.subr.bf16.mxu0 %v2283
    %2420 = vmatpush1.bf16.msra.mxu0 %v2282
    %2421 = vmatprep.subr.bf16.mxu0 %v2285
    %2422 = vmatpush1.bf16.msra.mxu0 %v2284
    %2423 = vmatprep.subr.bf16.mxu0 %v2287
    %2424 = vmatpush1.bf16.msra.mxu0 %v2286
    %2425 = vmatprep.subr.bf16.mxu0 %v2289
    %2426 = vmatpush1.bf16.msra.mxu0 %v2288
    %2427 = vmatprep.subr.bf16.mxu0 %v2291
    %2428 = vmatpush1.bf16.msra.mxu0 %v2290
    %2429 = vmatprep.subr.bf16.mxu0 %v2293
    %2430 = vmatpush1.bf16.msra.mxu0 %v2292
    %2431 = vmatprep.subr.bf16.mxu0 %v2295
    %2432 = vmatpush1.bf16.msra.mxu0 %v2294
    %2433 = vmatprep.subr.bf16.mxu0 %v2297
    %2434 = vmatpush1.bf16.msra.mxu0 %v2296
    %2435 = vmatprep.subr.bf16.mxu0 %v2299
    %2436 = vmatpush1.bf16.msra.mxu0 %v2298
    %2437 = vmatprep.subr.bf16.mxu0 %v2301
    %2438 = vmatpush1.bf16.msra.mxu0 %v2300
    %2439 = vmatprep.subr.bf16.mxu0 %v2303
    %2440 = vmatpush1.bf16.msra.mxu0 %v2302
    %2441 = vmatprep.subr.bf16.mxu0 %v2305
    %2442 = vmatpush1.bf16.msra.mxu0 %v2304
    %2443 = vmatprep.subr.bf16.mxu0 %v2307
    %2444 = vmatpush1.bf16.msra.mxu0 %v2306
    %2445 = vmatprep.mubr.bf16.mxu0 %v1975
    %2446 = vmatmul.mubr.bf16.gmra.mrb[0].mxu0 %v1974
    %v2447 = vpop.f32.mrb[0].mxu0
    %v2448 = vadd.f32 %v2407, %v2447
    %v2449 = vpop.f32.mrb[0].mxu0
    %v2450 = vadd.f32 %v2409, %v2449
    %v2451 = vpop.f32.mrb[0].mxu0
    %v2452 = vpop.f32.mrb[0].mxu0
    %2453 = vdwg.mxu0
    %v2454 = vmax.f32 %v2448, 0.0
    %v2455 = vmax.f32 %v2450, 0.0
    %v2456 = vpack.c.bf16 %v2454, %v2454
    %v2457 = vpack.c.bf16 %v2455, %v2455
    %v2458 = vld [vmem:[%s5] sm:$0xf]
    %v2459 = vld [vmem:[%s5 + $0x4] sm:$0xf]
    %v2460 = vld [vmem:[%s5 + $0x8] sm:$0xf]
    %v2461 = vld [vmem:[%s5 + $0xc] sm:$0xf]
    %v2462 = vld [vmem:[%s5 + $0x10] sm:$0xf]
    %v2463 = vld [vmem:[%s5 + $0x14] sm:$0xf]
    %v2464 = vld [vmem:[%s5 + $0x18] sm:$0xf]
    %v2465 = vld [vmem:[%s5 + $0x1c] sm:$0xf]
    %v2466 = vld [vmem:[%s5 + $0x20] sm:$0xf]
    %v2467 = vld [vmem:[%s5 + $0x24] sm:$0xf]
    %v2468 = vld [vmem:[%s5 + $0x28] sm:$0xf]
    %v2469 = vld [vmem:[%s5 + $0x2c] sm:$0xf]
    %v2470 = vld [vmem:[%s5 + $0x30] sm:$0xf]
    %v2471 = vld [vmem:[%s5 + $0x34] sm:$0xf]
    %v2472 = vld [vmem:[%s5 + $0x38] sm:$0xf]
    %v2473 = vld [vmem:[%s5 + $0x3c] sm:$0xf]
    %v2474 = vld [vmem:[%s5 + $0x40] sm:$0xf]
    %v2475 = vld [vmem:[%s5 + $0x44] sm:$0xf]
    %v2476 = vld [vmem:[%s5 + $0x48] sm:$0xf]
    %v2477 = vld [vmem:[%s5 + $0x4c] sm:$0xf]
    %v2478 = vld [vmem:[%s5 + $0x50] sm:$0xf]
    %v2479 = vld [vmem:[%s5 + $0x54] sm:$0xf]
    %v2480 = vld [vmem:[%s5 + $0x58] sm:$0xf]
    %v2481 = vld [vmem:[%s5 + $0x5c] sm:$0xf]
    %v2482 = vld [vmem:[%s5 + $0x60] sm:$0xf]
    %v2483 = vld [vmem:[%s5 + $0x64] sm:$0xf]
    %v2484 = vld [vmem:[%s5 + $0x68] sm:$0xf]
    %v2485 = vld [vmem:[%s5 + $0x6c] sm:$0xf]
    %v2486 = vld [vmem:[%s5 + $0x70] sm:$0xf]
    %v2487 = vld [vmem:[%s5 + $0x74] sm:$0xf]
    %v2488 = vld [vmem:[%s5 + $0x78] sm:$0xf]
    %v2489 = vld [vmem:[%s5 + $0x7c] sm:$0xf]
    %v2490 = vld [vmem:[%s6] sm:$0x1]
    %v2492 = vlaneseq
    %v2493 = vshrl.u32 %v2492, 7
    %v2494 = vsub.s32 0, %v2493
    %v2495 = vrot.slane %v2490, %v2494
    %v2529 = vunpack.c.l.b16 %v2458
    %v2530 = vunpack.c.l.b16 %v2459
    %v2531 = vunpack.c.l.b16 %v2460
    %v2532 = vunpack.c.l.b16 %v2461
    %v2533 = vunpack.c.l.b16 %v2462
    %v2534 = vunpack.c.l.b16 %v2463
    %v2535 = vunpack.c.l.b16 %v2464
    %v2536 = vunpack.c.l.b16 %v2465
    %v2537 = vunpack.c.l.b16 %v2466
    %v2538 = vunpack.c.l.b16 %v2467
    %v2539 = vunpack.c.l.b16 %v2468
    %v2540 = vunpack.c.l.b16 %v2469
    %v2541 = vunpack.c.l.b16 %v2470
    %v2542 = vunpack.c.l.b16 %v2471
    %v2543 = vunpack.c.l.b16 %v2472
    %v2544 = vunpack.c.l.b16 %v2473
    %v2545 = vunpack.c.l.b16 %v2474
    %v2546 = vunpack.c.l.b16 %v2475
    %v2547 = vunpack.c.l.b16 %v2476
    %v2548 = vunpack.c.l.b16 %v2477
    %v2549 = vunpack.c.l.b16 %v2478
    %v2550 = vunpack.c.l.b16 %v2479
    %v2551 = vunpack.c.l.b16 %v2480
    %v2552 = vunpack.c.l.b16 %v2481
    %v2553 = vunpack.c.l.b16 %v2482
    %v2554 = vunpack.c.l.b16 %v2483
    %v2555 = vunpack.c.l.b16 %v2484
    %v2556 = vunpack.c.l.b16 %v2485
    %v2557 = vunpack.c.l.b16 %v2486
    %v2558 = vunpack.c.l.b16 %v2487
    %v2559 = vunpack.c.l.b16 %v2488
    %v2560 = vunpack.c.l.b16 %v2489
    %v2561 = vpack.c.b16 %v2530, %v2529
    %v2562 = vpack.c.b16 %v2532, %v2531
    %v2563 = vpack.c.b16 %v2534, %v2533
    %v2564 = vpack.c.b16 %v2536, %v2535
    %v2565 = vpack.c.b16 %v2538, %v2537
    %v2566 = vpack.c.b16 %v2540, %v2539
    %v2567 = vpack.c.b16 %v2542, %v2541
    %v2568 = vpack.c.b16 %v2544, %v2543
    %v2569 = vpack.c.b16 %v2546, %v2545
    %v2570 = vpack.c.b16 %v2548, %v2547
    %v2571 = vpack.c.b16 %v2550, %v2549
    %v2572 = vpack.c.b16 %v2552, %v2551
    %v2573 = vpack.c.b16 %v2554, %v2553
    %v2574 = vpack.c.b16 %v2556, %v2555
    %v2575 = vpack.c.b16 %v2558, %v2557
    %v2576 = vpack.c.b16 %v2560, %v2559
    %2593 = vmatprep.subr.bf16.mxu0 0
    %2594 = vmatpush1.bf16.msra.mxu0 %v2561
    %2595 = vmatprep.subr.bf16.mxu0 0
    %2596 = vmatpush1.bf16.msra.mxu0 %v2562
    %2597 = vmatprep.subr.bf16.mxu0 0
    %2598 = vmatpush1.bf16.msra.mxu0 %v2563
    %2599 = vmatprep.subr.bf16.mxu0 0
    %2600 = vmatpush1.bf16.msra.mxu0 %v2564
    %2601 = vmatprep.subr.bf16.mxu0 0
    %2602 = vmatpush1.bf16.msra.mxu0 %v2565
    %2603 = vmatprep.subr.bf16.mxu0 0
    %2604 = vmatpush1.bf16.msra.mxu0 %v2566
    %2605 = vmatprep.subr.bf16.mxu0 0
    %2606 = vmatpush1.bf16.msra.mxu0 %v2567
    %2607 = vmatprep.subr.bf16.mxu0 0
    %2608 = vmatpush1.bf16.msra.mxu0 %v2568
    %2609 = vmatprep.subr.bf16.mxu0 0
    %2610 = vmatpush1.bf16.msra.mxu0 %v2569
    %2611 = vmatprep.subr.bf16.mxu0 0
    %2612 = vmatpush1.bf16.msra.mxu0 %v2570
    %2613 = vmatprep.subr.bf16.mxu0 0
    %2614 = vmatpush1.bf16.msra.mxu0 %v2571
    %2615 = vmatprep.subr.bf16.mxu0 0
    %2616 = vmatpush1.bf16.msra.mxu0 %v2572
    %2617 = vmatprep.subr.bf16.mxu0 0
    %2618 = vmatpush1.bf16.msra.mxu0 %v2573
    %2619 = vmatprep.subr.bf16.mxu0 0
    %2620 = vmatpush1.bf16.msra.mxu0 %v2574
    %2621 = vmatprep.subr.bf16.mxu0 0
    %2622 = vmatpush1.bf16.msra.mxu0 %v2575
    %2623 = vmatprep.subr.bf16.mxu0 0
    %2624 = vmatpush1.bf16.msra.mxu0 %v2576
    %2625 = vmatprep.mubr.bf16.mxu0 %v2457
    %2626 = vmatmul.mubr.bf16.gmra.mrb[0].mxu0 %v2456
    %v2627 = vpop.f32.mrb[0].mxu0
    %v2628 = vadd.f32 %v2495, %v2627
    %v2629 = vpop.f32.mrb[0].mxu0
    %v2630 = vpop.f32.mrb[0].mxu0
    %v2631 = vpop.f32.mrb[0].mxu0
    %2632 = vdwg.mxu0
    %vm2633 = vcmask 9216
    %v2634 = vsel %vm2633, %v2628, -inf
    %2635 = vmax.xlane.f32.xlu0 %v2634
    %v2636 = vpop.xlane.xlu0 %2635
    %v2637 = vsub.f32 %v2628, %v2636
    %v2638 = vmul.f32 %v2637, 1.442695
    %v2639 = vpow.pop %v2638
    %v2640 = vsel %vm2633, %v2639, 0.0
    %2641 = vadd.xlane.f32.xlu0 %v2640
    %v2642 = vpop.xlane.xlu0 %2641
    %v2643 = vrcp.pop %v2642
    %v2644 = vmul.f32 %v2639, %v2643
    %2645 = vst.msk [vmem:[#allocation2] sm:$0x3] %vm2633, %v2644
    // Predicated region
    $region30: #{dgcnn_forward.5} parent=1 // pred_check
      _
    $region31: #{dgcnn_forward.5} parent=1 // pred_check_branch
      %2647 = sbr.rel (0) target = $region33
    $region32: #{dgcnn_forward.5} parent=1 // pred_region
      %s2649 = ssub.s32 32, 32
      %2650 = vsyncadd [#allocation3], %s2649
      %s2652 = sshll.u32 [#allocation2], 4
      %s2653 = int_to_ptr.vmem [resolvable:$true] %s2652
      %2655 = dma.vmem_to_hbm [thread:$0]  %s2653, 32, %s7, [#allocation3]
    $region33: #{dgcnn_forward.5} parent=1 // pred_fallthru
      _
    // Predicated region
    $region34: #{dgcnn_forward.5} parent=1 // pred_check
      _
    $region35: #{dgcnn_forward.5} parent=1 // pred_check_branch
      %2657 = sbr.rel (0) target = $region37
    $region36: #{dgcnn_forward.5} parent=1 // pred_region
      %2658 = dma.done [#allocation3], 32
    $region37: #{dgcnn_forward.5} parent=1 // pred_fallthru
      _
    %2659 = vsyncpa [#allocation3], 1

</llo_original>
